<compile_context>
chip_gen: v6e
topology: v6e:2x2x1
jax: 0.10.0
libtpu: 0.0.40
codegen_flags: <defaults>
</compile_context>

<pallas_src>
import numpy as np
import jax
import jax.numpy as jnp
from jax.experimental import pallas as pl
from jax.experimental.pallas import tpu as pltpu


# --------------------------------------------------------------------------
# Small helpers (generation detection, tiling choices)
# --------------------------------------------------------------------------
def _round_up(x, m):
    return ((x + m - 1) // m) * m


def _tpu_generation():
    try:
        kind = jax.devices()[0].device_kind.lower()
    except Exception:
        return None
    for g in ("v7", "v6", "v5", "v4", "v3", "v2"):
        if g in kind:
            return g
    return None


def _vmem_limit_bytes():
    gen = _tpu_generation()
    if gen == "v7":
        return 56 * 1024 * 1024       # 64 MiB physical per TC; leave headroom
    if gen in ("v5", "v6"):
        return 100 * 1024 * 1024      # 128 MiB physical; use most of it
    return None                       # unknown chip: keep compiler default


def _compiler_params(dim_sem):
    kw = dict(dimension_semantics=dim_sem)
    v = _vmem_limit_bytes()
    if v is not None:
        kw["vmem_limit_bytes"] = v
    return pltpu.CompilerParams(**kw)


def _pick_row_block(n, cap=512):
    """Largest divisor of n that is <= cap and a multiple of 8 (else n)."""
    best = None
    d = 8
    top = min(n, cap)
    while d <= top:
        if n % d == 0:
            best = d
        d += 8
    return best if best is not None else n


def _pick_batch_tile(B):
    """BT = B on single-TC chips (max MXU row occupancy); BT = B/2 on v7x so
    the 'parallel' batch-tile grid shards across the two TensorCores."""
    if _tpu_generation() == "v7" and B % 2 == 0 and (B // 2) % 8 == 0:
        bt = B // 2
    else:
        bt = B
    # bound the tile for very large batches (keeps VMEM in check); halving
    # keeps BT a divisor of B and a multiple of 8
    while bt > 512 and bt % 2 == 0 and (bt // 2) % 8 == 0:
        bt //= 2
    return bt


# --------------------------------------------------------------------------
# Kernel A: fused Linear + ReLU   (embed_feats hot path: img_embed/att_embed)
# Row-tiled, "parallel" grid; bf16 operands, f32 accumulation.
# --------------------------------------------------------------------------
def _linear_relu_kernel(x_ref, w_ref, b_ref, o_ref):
    y = jnp.dot(x_ref[...], w_ref[...], preferred_element_type=jnp.float32)
    o_ref[...] = jnp.maximum(y + b_ref[...], 0.0)


def linear_relu(x_bf16, w_bf16, b_f32):
    """x:[N,F] @ w:[F,E] + b:[E], ReLU.  Row-tiled parallel Pallas kernel."""
    N, F = x_bf16.shape
    E = w_bf16.shape[1]
    bn = _pick_row_block(N)
    return pl.pallas_call(
        _linear_relu_kernel,
        out_shape=jax.ShapeDtypeStruct((N, E), jnp.float32),
        grid_spec=pltpu.PrefetchScalarGridSpec(
            num_scalar_prefetch=0,
            grid=(N // bn,),
            in_specs=[
                pl.BlockSpec((bn, F), lambda i: (i, 0)),
                pl.BlockSpec((F, E), lambda i: (0, 0)),
                pl.BlockSpec((1, E), lambda i: (0, 0)),
            ],
            out_specs=pl.BlockSpec((bn, E), lambda i: (i, 0)),
        ),
        compiler_params=_compiler_params(("parallel",)),
    )(x_bf16, w_bf16, b_f32.reshape(1, E))


# --------------------------------------------------------------------------
# Kernel B: the recurrence for one batch tile (hidden states only).
# Grid = batch tiles ("parallel"); the time loop is a bounded-unroll
# lax.fori_loop inside the kernel.  h/c live in VMEM scratch; one fused gate
# matmul per step; attention scores/context on the VPU/XLU (small A).
# --------------------------------------------------------------------------
def _mixer_core_kernel(xs_ref, att_ref, h0_ref,
                       wq_ref, wg_ref, bg_ref,
                       hs_ref, h_sc, c_sc):
    T = xs_ref.shape[0]
    BT, R = h_sc.shape

    # Hoist loop-invariant loads/casts out of the time loop.
    att_f = att_ref[...].astype(jnp.float32)   # [BT, A, E]  f32 for VPU math
    wq = wq_ref[...]                           # [R, E]      bf16
    wg = wg_ref[...]                           # [2E+R, 4R]  bf16
    bg = bg_ref[...]                           # [1, 4R]     f32

    # init_hidden: both h and c are initialized from the (embedded) fc_feats.
    h_sc[...] = h0_ref[...]
    c_sc[...] = h0_ref[...]

    def _sigmoid(v):                           # stable, EUP tanh
        return 0.5 * (jnp.tanh(0.5 * v) + 1.0)

    def step(t, carry):
        xt = xs_ref[t]                         # [BT, E] bf16
        h = h_sc[...]                          # [BT, R] f32
        c = c_sc[...]
        h_b = h.astype(jnp.bfloat16)

        # ---- attention over att_feats: query on MXU, scores/ctx on VPU/XLU --
        q = jnp.dot(h_b, wq, preferred_element_type=jnp.float32)      # [BT, E]
        s = jnp.sum(q[:, None, :] * att_f, axis=-1)                   # [BT, A]
        s = s - jnp.max(s, axis=-1, keepdims=True)
        p = jnp.exp(s)
        alpha = p * pl.reciprocal(jnp.sum(p, axis=-1, keepdims=True),
                                  approx=True)                        # [BT, A]
        ctx = jnp.sum(alpha[:, :, None] * att_f, axis=1)              # [BT, E]

        # ---- LSTM cell: single fused gate matmul (MXU, f32 accumulation) ----
        z = jnp.concatenate([xt, ctx.astype(jnp.bfloat16), h_b], axis=-1)
        gates = jnp.dot(z, wg, preferred_element_type=jnp.float32) + bg  # [BT,4R]
        ifo = _sigmoid(gates[:, :3 * R])       # one contiguous EUP block
        i_g = ifo[:, 0 * R:1 * R]
        f_g = ifo[:, 1 * R:2 * R]
        o_g = ifo[:, 2 * R:3 * R]
        g_g = jnp.tanh(gates[:, 3 * R:])
        c_new = f_g * c + i_g * g_g
        h_new = o_g * jnp.tanh(c_new)

        hs_ref[t] = h_new                      # only the R-wide state leaves
        h_sc[...] = h_new
        c_sc[...] = c_new
        return carry

    unroll = True if T <= 8 else 2             # bounded unroll for long T
    jax.lax.fori_loop(0, T, step, 0, unroll=unroll)


def run_recurrence(xs, att, h0, params, *, batch_tile):
    T, B, E = xs.shape
    A = att.shape[1]
    R = h0.shape[1]
    K = params["wg"].shape[0]
    BT = batch_tile
    assert B % BT == 0

    const2 = lambda b: (0, 0)

    return pl.pallas_call(
        _mixer_core_kernel,
        out_shape=jax.ShapeDtypeStruct((T, B, R), jnp.float32),
        grid_spec=pltpu.PrefetchScalarGridSpec(
            num_scalar_prefetch=0,
            grid=(B // BT,),                                  # batch tiles
            in_specs=[
                pl.BlockSpec((T, BT, E), lambda b: (0, b, 0)),   # xs (all T)
                pl.BlockSpec((BT, A, E), lambda b: (b, 0, 0)),   # att_feats
                pl.BlockSpec((BT, R), lambda b: (b, 0)),         # h0 (= fc embed)
                pl.BlockSpec((R, E), const2),                    # wq
                pl.BlockSpec((K, 4 * R), const2),                # fused gate W
                pl.BlockSpec((1, 4 * R), const2),                # gate bias
            ],
            out_specs=pl.BlockSpec((T, BT, R), lambda b: (0, b, 0)),
            scratch_shapes=[
                pltpu.VMEM((BT, R), jnp.float32),                # h state
                pltpu.VMEM((BT, R), jnp.float32),                # c state
            ],
        ),
        compiler_params=_compiler_params(("parallel",)),
    )(xs, att, h0,
      params["wq"], params["wg"], params["bg"].reshape(1, -1))


# --------------------------------------------------------------------------
# Kernel C: logit head + log_softmax over (B*T) rows x Vp lane-dense columns.
# No recurrence dependency -> pipelines with big MXU-friendly row tiles.
# All bias / softmax math in f32 (keeps the -1e30 pad bias finite).
# --------------------------------------------------------------------------
def _logit_kernel(h_ref, wl_ref, bl_ref, o_ref):
    logits = jnp.dot(h_ref[...], wl_ref[...],
                     preferred_element_type=jnp.float32) + bl_ref[...]
    m = jnp.max(logits, axis=-1, keepdims=True)
    lse = jnp.log(jnp.sum(jnp.exp(logits - m), axis=-1, keepdims=True)) + m
    o_ref[...] = logits - lse


def logit_log_softmax(h_bf16, wl_bf16, bl_f32):
    N, R = h_bf16.shape
    Vp = wl_bf16.shape[1]
    bn = _pick_row_block(N, cap=512)
    return pl.pallas_call(
        _logit_kernel,
        out_shape=jax.ShapeDtypeStruct((N, Vp), jnp.float32),
        grid_spec=pltpu.PrefetchScalarGridSpec(
            num_scalar_prefetch=0,
            grid=(N // bn,),
            in_specs=[
                pl.BlockSpec((bn, R), lambda i: (i, 0)),
                pl.BlockSpec((R, Vp), lambda i: (0, 0)),
                pl.BlockSpec((1, Vp), lambda i: (0, 0)),
            ],
            out_specs=pl.BlockSpec((bn, Vp), lambda i: (i, 0)),
        ),
        compiler_params=_compiler_params(("parallel",)),
    )(h_bf16, wl_bf16, bl_f32.reshape(1, Vp))


# --------------------------------------------------------------------------
# MixerModel wrapper (parameter setup + embedding gather + skip logic = glue)
# --------------------------------------------------------------------------
class MixerModelPallas:
    def __init__(self, vocab_size, input_encoding_size, rnn_size,
                 att_size, seq_length, fc_feat_size, att_feat_size, key):
        assert rnn_size == input_encoding_size, \
            "init_hidden copies fc_feats into the rnn state -> sizes must match"
        self.V = vocab_size + 1
        self.Vp = _round_up(self.V, 128)       # lane-dense logit/store width
        self.E = input_encoding_size
        self.R = rnn_size
        self.A = att_size
        self.seq_length = seq_length
        self.FC = fc_feat_size
        self.ATTF = att_feat_size

        E, R, V, Vp = self.E, self.R, self.V, self.Vp
        ks = jax.random.split(key, 8)
        u = lambda k, shape: jax.random.uniform(k, shape, jnp.float32, -0.1, 0.1)

        wl = u(ks[6], (R, V))
        wl_pad = jnp.zeros((R, Vp), jnp.float32).at[:, :V].set(wl)
        # padded logit columns get -1e30 bias -> effectively -inf, so
        # log_softmax over Vp equals log_softmax over V on the valid columns.
        # (bl and the softmax math stay f32; -1e30 would overflow in bf16.)
        bl_pad = jnp.full((Vp,), -1e30, jnp.float32).at[:V].set(0.0)

        self.params = {
            # matmul operands in bf16, f32 accumulation in-kernel
            "embed":  u(ks[0], (V, E)).astype(jnp.bfloat16),      # nn.Embedding
            "img_w":  u(ks[1], (self.FC, E)).astype(jnp.bfloat16),
            "img_b":  u(ks[2], (E,)),
            "att_w":  u(ks[3], (self.ATTF, E)).astype(jnp.bfloat16),
            "att_b":  u(ks[4], (E,)),
            # synthetic core weights (see TODO(synk) above)
            "wq": u(ks[5], (R, E)).astype(jnp.bfloat16),
            # fused [W_x | W_ctx | W_h] along the K dim: [2E+R, 4R]
            "wg": u(ks[7], (2 * E + R, 4 * R)).astype(jnp.bfloat16),
            "bg": jnp.zeros((4 * R,), jnp.float32),
            "wl": wl_pad.astype(jnp.bfloat16),
            "bl": bl_pad,                                         # f32!
        }
        self._jit_forward = jax.jit(self._forward_impl)

    # -------- jitted, fixed-shape device path --------
    def _forward_impl(self, params, fc_feats, att_feats, tokens):
        B = fc_feats.shape[0]
        # bf16 inputs -> half the HBM traffic of the memory-bound embed GEMMs
        fc_e = linear_relu(fc_feats.astype(jnp.bfloat16),
                           params["img_w"], params["img_b"])            # [B,E] f32
        att_flat = att_feats.reshape(-1, self.ATTF).astype(jnp.bfloat16)
        att_e = linear_relu(att_flat, params["att_w"], params["att_b"])
        att_e = att_e.reshape(B, self.A, self.E).astype(jnp.bfloat16)   # [B,A,E]

        # time-major per-step inputs: [T, B, E] bf16
        bos = jnp.broadcast_to(params["embed"][0][None, :], (B, self.E))
        tok_e = jnp.transpose(jnp.take(params["embed"], tokens, axis=0),
                              (1, 0, 2))                                # [n,B,E]
        xs = jnp.concatenate(
            [fc_e.astype(jnp.bfloat16)[None], bos[None], tok_e], axis=0)
        T = xs.shape[0]

        BT = _pick_batch_tile(B)
        hs = run_recurrence(xs, att_e, fc_e, params, batch_tile=BT)     # [T,B,R]

        # Logit head outside the serial recurrence.  Only the small R-wide
        # hidden-state tensor gets transposed; the big [B,T,Vp] log-prob
        # tensor is emitted batch-major directly by the logit kernel.
        h_rows = jnp.transpose(hs, (1, 0, 2)).reshape(B * T, self.R)
        lp = logit_log_softmax(h_rows.astype(jnp.bfloat16),
                               params["wl"], params["bl"])              # [B*T,Vp]
        return lp.reshape(B, T, self.Vp)[:, :, :self.V]                 # [B,T,V]

    def forward(self, fc_feats, att_feats, seq, is_reinforce=False):
        # TODO(synk): is_reinforce=True needs multinomial sampling fed back into
        # the recurrence (data-dependent); only the teacher-forced path is done.
        assert not is_reinforce
        # can_skip decision computed ONCE on host (single sync), not per step.
        # The PyTorch loop skips ANY all-zero column (it does not break), so
        # filtering all zero columns here matches its semantics exactly.
        seq_np = np.asarray(seq)
        keep = [t for t in range(self.seq_length)
                if int(seq_np[:, t].sum()) != 0]
        tokens = jnp.asarray(seq_np[:, keep].astype(np.int32))          # [B,n_keep]
        return self._jit_forward(self.params, fc_feats, att_feats, tokens)


# --------------------------------------------------------------------------
if __name__ == "__main__":
    # small shapes; E/R/Vp multiples of 128 keep vregs / gate slices lane-dense
    B = 16
    vocab_size = 50            # -> V = 51, padded to 128 lanes in-kernel
    input_encoding_size = 128
    rnn_size = 128
    att_size = 8
    seq_length = 6
    fc_feat_size = 64
    att_feat_size = 48

    key = jax.random.PRNGKey(0)
    k_model, k_fc, k_att, k_seq = jax.random.split(key, 4)

    model = MixerModelPallas(vocab_size, input_encoding_size, rnn_size,
                             att_size, seq_length, fc_feat_size,
                             att_feat_size, k_model)

    fc_feats = jax.random.normal(k_fc, (B, fc_feat_size), jnp.float32)
    att_feats = jax.random.normal(k_att, (B, att_size, att_feat_size), jnp.float32)
    seq = jax.random.randint(k_seq, (B, seq_length), 1, vocab_size + 1, jnp.int32)

    out = model.forward(fc_feats, att_feats, seq, is_reinforce=False)
    out = jax.block_until_ready(out)

    assert out.shape == (B, seq_length + 2, vocab_size + 1), out.shape
    assert bool(jnp.all(jnp.isfinite(out)))
    # log_softmax rows must sum to 1 in prob space (pad columns contribute 0)
    assert bool(jnp.allclose(jnp.sum(jnp.exp(out), axis=-1), 1.0, atol=1e-4))
    print("KERNEL_OK")
</pallas_src>

<mosaic_0001>
module attributes {stable_mosaic.version = 11 : i64} {
  func.func @_linear_relu_kernel(%arg0: i32, %arg1: memref<16x64xbf16, #tpu.memory_space<vmem>>, %arg2: memref<64x128xbf16, #tpu.memory_space<vmem>>, %arg3: memref<1x128xf32, #tpu.memory_space<vmem>>, %arg4: memref<16x128xf32, #tpu.memory_space<vmem>>) attributes {dimension_semantics = [#tpu.dimension_semantics<parallel>], iteration_bounds = array<i64: 1>, scalar_prefetch = 0 : i64, scratch_operands = 0 : i64, tpu.core_type = #tpu.core_type<tc>, window_params = [{transform_indices = @transform_0, window_bounds = array<i64: 16, 64>}, {pipeline_mode = #tpu.pipeline_mode<synchronous>, transform_indices = @transform_1, window_bounds = array<i64: 64, 128>}, {pipeline_mode = #tpu.pipeline_mode<synchronous>, transform_indices = @transform_2, window_bounds = array<i64: 1, 128>}, {transform_indices = @transform_3, window_bounds = array<i64: 16, 128>}]} {
    %c0 = arith.constant 0 : index
    %c0_0 = arith.constant 0 : index
    %0 = vector.load %arg1[%c0, %c0_0] : memref<16x64xbf16, #tpu.memory_space<vmem>>, vector<16x64xbf16>
    %c0_1 = arith.constant 0 : index
    %c0_2 = arith.constant 0 : index
    %1 = vector.load %arg2[%c0_1, %c0_2] : memref<64x128xbf16, #tpu.memory_space<vmem>>, vector<64x128xbf16>
    %cst = arith.constant dense<0.000000e+00> : vector<16x128xf32>
    %2 = tpu.matmul %0, %1, %cst {dimension_numbers = #tpu.dot_dimension_numbers<[1], [0], [0], [1], [0, 0, 1, 1], [], []>} : vector<16x64xbf16>, vector<64x128xbf16>, vector<16x128xf32> -> vector<16x128xf32>
    %c0_3 = arith.constant 0 : index
    %c0_4 = arith.constant 0 : index
    %3 = vector.load %arg3[%c0_3, %c0_4] : memref<1x128xf32, #tpu.memory_space<vmem>>, vector<1x128xf32>
    %4 = vector.broadcast %3 : vector<1x128xf32> to vector<16x128xf32>
    %5 = arith.addf %2, %4 : vector<16x128xf32>
    %cst_5 = arith.constant 0.000000e+00 : f32
    %6 = vector.broadcast %cst_5 : f32 to vector<16x128xf32>
    %7 = arith.maximumf %5, %6 : vector<16x128xf32>
    %c0_6 = arith.constant 0 : index
    %c0_7 = arith.constant 0 : index
    %8 = vector.load %arg4[%c0_6, %c0_7] : memref<16x128xf32, #tpu.memory_space<vmem>>, vector<16x128xf32>
    tpu.vector_store %arg4[%c0_6, %c0_7], %7 {strides = array<i32>} : memref<16x128xf32, #tpu.memory_space<vmem>>, vector<16x128xf32>,
    return
  }
  func.func @transform_0(%arg0: i32) -> (i32, i32) {
    %c0_i32 = arith.constant 0 : i32
    %c0_i32_0 = arith.constant 0 : i32
    return %arg0, %c0_i32 : i32, i32
  }
  func.func @transform_1(%arg0: i32) -> (i32, i32) {
    %c0_i32 = arith.constant 0 : i32
    %c0_i32_0 = arith.constant 0 : i32
    %c0_i32_1 = arith.constant 0 : i32
    return %c0_i32, %c0_i32_0 : i32, i32
  }
  func.func @transform_2(%arg0: i32) -> (i32, i32) {
    %c0_i32 = arith.constant 0 : i32
    %c0_i32_0 = arith.constant 0 : i32
    %c0_i32_1 = arith.constant 0 : i32
    return %c0_i32, %c0_i32_0 : i32, i32
  }
  func.func @transform_3(%arg0: i32) -> (i32, i32) {
    %c0_i32 = arith.constant 0 : i32
    %c0_i32_0 = arith.constant 0 : i32
    return %arg0, %c0_i32 : i32, i32
  }
}

module attributes {stable_mosaic.version = 11 : i64} {
  func.func @_linear_relu_kernel(%arg0: i32, %arg1: memref<128x48xbf16, #tpu.memory_space<vmem>>, %arg2: memref<48x128xbf16, #tpu.memory_space<vmem>>, %arg3: memref<1x128xf32, #tpu.memory_space<vmem>>, %arg4: memref<128x128xf32, #tpu.memory_space<vmem>>) attributes {dimension_semantics = [#tpu.dimension_semantics<parallel>], iteration_bounds = array<i64: 1>, scalar_prefetch = 0 : i64, scratch_operands = 0 : i64, tpu.core_type = #tpu.core_type<tc>, window_params = [{transform_indices = @transform_0, window_bounds = array<i64: 128, 48>}, {pipeline_mode = #tpu.pipeline_mode<synchronous>, transform_indices = @transform_1, window_bounds = array<i64: 48, 128>}, {pipeline_mode = #tpu.pipeline_mode<synchronous>, transform_indices = @transform_2, window_bounds = array<i64: 1, 128>}, {transform_indices = @transform_3, window_bounds = array<i64: 128, 128>}]} {
    %c0 = arith.constant 0 : index
    %c0_0 = arith.constant 0 : index
    %0 = vector.load %arg1[%c0, %c0_0] : memref<128x48xbf16, #tpu.memory_space<vmem>>, vector<128x48xbf16>
    %c0_1 = arith.constant 0 : index
    %c0_2 = arith.constant 0 : index
    %1 = vector.load %arg2[%c0_1, %c0_2] : memref<48x128xbf16, #tpu.memory_space<vmem>>, vector<48x128xbf16>
    %cst = arith.constant dense<0.000000e+00> : vector<128x128xf32>
    %2 = tpu.matmul %0, %1, %cst {dimension_numbers = #tpu.dot_dimension_numbers<[1], [0], [0], [1], [0, 0, 1, 1], [], []>} : vector<128x48xbf16>, vector<48x128xbf16>, vector<128x128xf32> -> vector<128x128xf32>
    %c0_3 = arith.constant 0 : index
    %c0_4 = arith.constant 0 : index
    %3 = vector.load %arg3[%c0_3, %c0_4] : memref<1x128xf32, #tpu.memory_space<vmem>>, vector<1x128xf32>
    %4 = vector.broadcast %3 : vector<1x128xf32> to vector<128x128xf32>
    %5 = arith.addf %2, %4 : vector<128x128xf32>
    %cst_5 = arith.constant 0.000000e+00 : f32
    %6 = vector.broadcast %cst_5 : f32 to vector<128x128xf32>
    %7 = arith.maximumf %5, %6 : vector<128x128xf32>
    %c0_6 = arith.constant 0 : index
    %c0_7 = arith.constant 0 : index
    %8 = vector.load %arg4[%c0_6, %c0_7] : memref<128x128xf32, #tpu.memory_space<vmem>>, vector<128x128xf32>
    tpu.vector_store %arg4[%c0_6, %c0_7], %7 {strides = array<i32>} : memref<128x128xf32, #tpu.memory_space<vmem>>, vector<128x128xf32>,
    return
  }
  func.func @transform_0(%arg0: i32) -> (i32, i32) {
    %c0_i32 = arith.constant 0 : i32
    %c0_i32_0 = arith.constant 0 : i32
    return %arg0, %c0_i32 : i32, i32
  }
  func.func @transform_1(%arg0: i32) -> (i32, i32) {
    %c0_i32 = arith.constant 0 : i32
    %c0_i32_0 = arith.constant 0 : i32
    %c0_i32_1 = arith.constant 0 : i32
    return %c0_i32, %c0_i32_0 : i32, i32
  }
  func.func @transform_2(%arg0: i32) -> (i32, i32) {
    %c0_i32 = arith.constant 0 : i32
    %c0_i32_0 = arith.constant 0 : i32
    %c0_i32_1 = arith.constant 0 : i32
    return %c0_i32, %c0_i32_0 : i32, i32
  }
  func.func @transform_3(%arg0: i32) -> (i32, i32) {
    %c0_i32 = arith.constant 0 : i32
    %c0_i32_0 = arith.constant 0 : i32
    return %arg0, %c0_i32 : i32, i32
  }
}

module attributes {stable_mosaic.version = 11 : i64} {
  func.func @_mixer_core_kernel(%arg0: i32, %arg1: memref<8x16x128xbf16, #tpu.memory_space<vmem>>, %arg2: memref<16x8x128xbf16, #tpu.memory_space<vmem>>, %arg3: memref<16x128xf32, #tpu.memory_space<vmem>>, %arg4: memref<128x128xbf16, #tpu.memory_space<vmem>>, %arg5: memref<384x512xbf16, #tpu.memory_space<vmem>>, %arg6: memref<1x512xf32, #tpu.memory_space<vmem>>, %arg7: memref<8x16x128xf32, #tpu.memory_space<vmem>>, %arg8: memref<16x128xf32, #tpu.memory_space<vmem>>, %arg9: memref<16x128xf32, #tpu.memory_space<vmem>>) attributes {dimension_semantics = [#tpu.dimension_semantics<parallel>], iteration_bounds = array<i64: 1>, scalar_prefetch = 0 : i64, scratch_operands = 2 : i64, tpu.core_type = #tpu.core_type<tc>, window_params = [{transform_indices = @transform_0, window_bounds = array<i64: 8, 16, 128>}, {transform_indices = @transform_1, window_bounds = array<i64: 16, 8, 128>}, {transform_indices = @transform_2, window_bounds = array<i64: 16, 128>}, {pipeline_mode = #tpu.pipeline_mode<synchronous>, transform_indices = @transform_3, window_bounds = array<i64: 128, 128>}, {pipeline_mode = #tpu.pipeline_mode<synchronous>, transform_indices = @transform_4, window_bounds = array<i64: 384, 512>}, {pipeline_mode = #tpu.pipeline_mode<synchronous>, transform_indices = @transform_5, window_bounds = array<i64: 1, 512>}, {transform_indices = @transform_6, window_bounds = array<i64: 8, 16, 128>}]} {
    %c0 = arith.constant 0 : index
    %c0_0 = arith.constant 0 : index
    %c0_1 = arith.constant 0 : index
    %0 = vector.load %arg2[%c0, %c0_0, %c0_1] : memref<16x8x128xbf16, #tpu.memory_space<vmem>>, vector<16x8x128xbf16>
    %1 = arith.extf %0 : vector<16x8x128xbf16> to vector<16x8x128xf32>
    %c0_2 = arith.constant 0 : index
    %c0_3 = arith.constant 0 : index
    %2 = vector.load %arg4[%c0_2, %c0_3] : memref<128x128xbf16, #tpu.memory_space<vmem>>, vector<128x128xbf16>
    %c0_4 = arith.constant 0 : index
    %c0_5 = arith.constant 0 : index
    %3 = vector.load %arg5[%c0_4, %c0_5] : memref<384x512xbf16, #tpu.memory_space<vmem>>, vector<384x512xbf16>
    %c0_6 = arith.constant 0 : index
    %c0_7 = arith.constant 0 : index
    %4 = vector.load %arg6[%c0_6, %c0_7] : memref<1x512xf32, #tpu.memory_space<vmem>>, vector<1x512xf32>
    %c0_8 = arith.constant 0 : index
    %c0_9 = arith.constant 0 : index
    %5 = vector.load %arg3[%c0_8, %c0_9] : memref<16x128xf32, #tpu.memory_space<vmem>>, vector<16x128xf32>
    %c0_10 = arith.constant 0 : index
    %c0_11 = arith.constant 0 : index
    %6 = vector.load %arg8[%c0_10, %c0_11] : memref<16x128xf32, #tpu.memory_space<vmem>>, vector<16x128xf32>
    tpu.vector_store %arg8[%c0_10, %c0_11], %5 {strides = array<i32>} : memref<16x128xf32, #tpu.memory_space<vmem>>, vector<16x128xf32>,
    %c0_12 = arith.constant 0 : index
    %c0_13 = arith.constant 0 : index
    %7 = vector.load %arg3[%c0_12, %c0_13] : memref<16x128xf32, #tpu.memory_space<vmem>>, vector<16x128xf32>
    %c0_14 = arith.constant 0 : index
    %c0_15 = arith.constant 0 : index
    %8 = vector.load %arg9[%c0_14, %c0_15] : memref<16x128xf32, #tpu.memory_space<vmem>>, vector<16x128xf32>
    tpu.vector_store %arg9[%c0_14, %c0_15], %7 {strides = array<i32>} : memref<16x128xf32, #tpu.memory_space<vmem>>, vector<16x128xf32>,
    %c0_i32 = arith.constant 0 : i32
    %9 = arith.index_cast %c0_i32 : i32 to index
    %c0_16 = arith.constant 0 : index
    %c0_17 = arith.constant 0 : index
    %10 = vector.load %arg1[%9, %c0_16, %c0_17] : memref<8x16x128xbf16, #tpu.memory_space<vmem>>, vector<1x16x128xbf16>
    %11 = vector.shape_cast %10 : vector<1x16x128xbf16> to vector<16x128xbf16>
    %c0_18 = arith.constant 0 : index
    %c0_19 = arith.constant 0 : index
    %12 = vector.load %arg8[%c0_18, %c0_19] : memref<16x128xf32, #tpu.memory_space<vmem>>, vector<16x128xf32>
    %c0_20 = arith.constant 0 : index
    %c0_21 = arith.constant 0 : index
    %13 = vector.load %arg9[%c0_20, %c0_21] : memref<16x128xf32, #tpu.memory_space<vmem>>, vector<16x128xf32>
    %14 = arith.truncf %12 : vector<16x128xf32> to vector<16x128xbf16>
    %cst = arith.constant dense<0.000000e+00> : vector<16x128xf32>
    %15 = tpu.matmul %14, %2, %cst {dimension_numbers = #tpu.dot_dimension_numbers<[1], [0], [0], [1], [0, 0, 1, 1], [], []>} : vector<16x128xbf16>, vector<128x128xbf16>, vector<16x128xf32> -> vector<16x128xf32>
    %16 = vector.shape_cast %15 : vector<16x128xf32> to vector<16x1x128xf32>
    %17 = vector.broadcast %16 : vector<16x1x128xf32> to vector<16x8x128xf32>
    %18 = arith.mulf %17, %1 : vector<16x8x128xf32>
    %cst_22 = arith.constant dense<0.000000e+00> : vector<16x8xf32>
    %19 = vector.multi_reduction <add>, %18, %cst_22 [2] : vector<16x8x128xf32> to vector<16x8xf32>
    %cst_23 = arith.constant dense<0xFF800000> : vector<16xf32>
    %20 = vector.multi_reduction <maximumf>, %19, %cst_23 [1] : vector<16x8xf32> to vector<16xf32>
    %21 = vector.shape_cast %20 : vector<16xf32> to vector<16x1xf32>
    %22 = vector.broadcast %21 : vector<16x1xf32> to vector<16x8xf32>
    %23 = arith.subf %19, %22 : vector<16x8xf32>
    %24 = math.exp %23 : vector<16x8xf32>
    %cst_24 = arith.constant dense<0.000000e+00> : vector<16xf32>
    %25 = vector.multi_reduction <add>, %24, %cst_24 [1] : vector<16x8xf32> to vector<16xf32>
    %26 = vector.shape_cast %25 : vector<16xf32> to vector<16x1xf32>
    %27 = tpu.reciprocal %26 {approx = true} : vector<16x1xf32> -> vector<16x1xf32>
    %28 = vector.broadcast %27 : vector<16x1xf32> to vector<16x8xf32>
    %29 = arith.mulf %24, %28 : vector<16x8xf32>
    %30 = vector.shape_cast %29 : vector<16x8xf32> to vector<16x8x1xf32>
    %31 = vector.broadcast %30 : vector<16x8x1xf32> to vector<16x8x128xf32>
    %32 = arith.mulf %31, %1 : vector<16x8x128xf32>
    %cst_25 = arith.constant dense<0.000000e+00> : vector<16x128xf32>
    %33 = vector.multi_reduction <add>, %32, %cst_25 [1] : vector<16x8x128xf32> to vector<16x128xf32>
    %34 = arith.truncf %33 : vector<16x128xf32> to vector<16x128xbf16>
    %35 = tpu.concatenate %11, %34, %14 in 1 : vector<16x128xbf16>, vector<16x128xbf16>, vector<16x128xbf16> -> vector<16x384xbf16>
    %cst_26 = arith.constant dense<0.000000e+00> : vector<16x512xf32>
    %36 = tpu.matmul %35, %3, %cst_26 {dimension_numbers = #tpu.dot_dimension_numbers<[1], [0], [0], [1], [0, 0, 1, 1], [], []>} : vector<16x384xbf16>, vector<384x512xbf16>, vector<16x512xf32> -> vector<16x512xf32>
    %37 = vector.broadcast %4 : vector<1x512xf32> to vector<16x512xf32>
    %38 = arith.addf %36, %37 : vector<16x512xf32>
    %39 = vector.extract_strided_slice %38 {offsets = [0, 0], sizes = [16, 384], strides = [1, 1]} : vector<16x512xf32> to vector<16x384xf32>
    %cst_27 = arith.constant 5.000000e-01 : f32
    %40 = vector.broadcast %cst_27 : f32 to vector<16x384xf32>
    %41 = arith.mulf %40, %39 : vector<16x384xf32>
    %42 = math.tanh %41 : vector<16x384xf32>
    %cst_28 = arith.constant 1.000000e+00 : f32
    %43 = vector.broadcast %cst_28 : f32 to vector<16x384xf32>
    %44 = arith.addf %42, %43 : vector<16x384xf32>
    %cst_29 = arith.constant 5.000000e-01 : f32
    %45 = vector.broadcast %cst_29 : f32 to vector<16x384xf32>
    %46 = arith.mulf %45, %44 : vector<16x384xf32>
    %47 = vector.extract_strided_slice %46 {offsets = [0, 0], sizes = [16, 128], strides = [1, 1]} : vector<16x384xf32> to vector<16x128xf32>
    %48 = vector.extract_strided_slice %46 {offsets = [0, 128], sizes = [16, 128], strides = [1, 1]} : vector<16x384xf32> to vector<16x128xf32>
    %49 = vector.extract_strided_slice %46 {offsets = [0, 256], sizes = [16, 128], strides = [1, 1]} : vector<16x384xf32> to vector<16x128xf32>
    %50 = vector.extract_strided_slice %38 {offsets = [0, 384], sizes = [16, 128], strides = [1, 1]} : vector<16x512xf32> to vector<16x128xf32>
    %51 = math.tanh %50 : vector<16x128xf32>
    %52 = arith.mulf %48, %13 : vector<16x128xf32>
    %53 = arith.mulf %47, %51 : vector<16x128xf32>
    %54 = arith.addf %52, %53 : vector<16x128xf32>
    %55 = math.tanh %54 : vector<16x128xf32>
    %56 = arith.mulf %49, %55 : vector<16x128xf32>
    %57 = arith.index_cast %c0_i32 : i32 to index
    %c0_30 = arith.constant 0 : index
    %c0_31 = arith.constant 0 : index
    %58 = vector.load %arg7[%57, %c0_30, %c0_31] : memref<8x16x128xf32, #tpu.memory_space<vmem>>, vector<1x16x128xf32>
    %59 = vector.shape_cast %58 : vector<1x16x128xf32> to vector<16x128xf32>
    %60 = vector.shape_cast %56 : vector<16x128xf32> to vector<1x16x128xf32>
    tpu.vector_store %arg7[%57, %c0_30, %c0_31], %60 {strides = array<i32>} : memref<8x16x128xf32, #tpu.memory_space<vmem>>, vector<1x16x128xf32>,
    %c0_32 = arith.constant 0 : index
    %c0_33 = arith.constant 0 : index
    %61 = vector.load %arg8[%c0_32, %c0_33] : memref<16x128xf32, #tpu.memory_space<vmem>>, vector<16x128xf32>
    tpu.vector_store %arg8[%c0_32, %c0_33], %56 {strides = array<i32>} : memref<16x128xf32, #tpu.memory_space<vmem>>, vector<16x128xf32>,
    %c0_34 = arith.constant 0 : index
    %c0_35 = arith.constant 0 : index
    %62 = vector.load %arg9[%c0_34, %c0_35] : memref<16x128xf32, #tpu.memory_space<vmem>>, vector<16x128xf32>
    tpu.vector_store %arg9[%c0_34, %c0_35], %54 {strides = array<i32>} : memref<16x128xf32, #tpu.memory_space<vmem>>, vector<16x128xf32>,
    %c1_i32 = arith.constant 1 : i32
    %63 = arith.index_cast %c1_i32 : i32 to index
    %c0_36 = arith.constant 0 : index
    %c0_37 = arith.constant 0 : index
    %64 = vector.load %arg1[%63, %c0_36, %c0_37] : memref<8x16x128xbf16, #tpu.memory_space<vmem>>, vector<1x16x128xbf16>
    %65 = vector.shape_cast %64 : vector<1x16x128xbf16> to vector<16x128xbf16>
    %c0_38 = arith.constant 0 : index
    %c0_39 = arith.constant 0 : index
    %66 = vector.load %arg8[%c0_38, %c0_39] : memref<16x128xf32, #tpu.memory_space<vmem>>, vector<16x128xf32>
    %c0_40 = arith.constant 0 : index
    %c0_41 = arith.constant 0 : index
    %67 = vector.load %arg9[%c0_40, %c0_41] : memref<16x128xf32, #tpu.memory_space<vmem>>, vector<16x128xf32>
    %68 = arith.truncf %66 : vector<16x128xf32> to vector<16x128xbf16>
    %cst_42 = arith.constant dense<0.000000e+00> : vector<16x128xf32>
    %69 = tpu.matmul %68, %2, %cst_42 {dimension_numbers = #tpu.dot_dimension_numbers<[1], [0], [0], [1], [0, 0, 1, 1], [], []>} : vector<16x128xbf16>, vector<128x128xbf16>, vector<16x128xf32> -> vector<16x128xf32>
    %70 = vector.shape_cast %69 : vector<16x128xf32> to vector<16x1x128xf32>
    %71 = vector.broadcast %70 : vector<16x1x128xf32> to vector<16x8x128xf32>
    %72 = arith.mulf %71, %1 : vector<16x8x128xf32>
    %cst_43 = arith.constant dense<0.000000e+00> : vector<16x8xf32>
    %73 = vector.multi_reduction <add>, %72, %cst_43 [2] : vector<16x8x128xf32> to vector<16x8xf32>
    %cst_44 = arith.constant dense<0xFF800000> : vector<16xf32>
    %74 = vector.multi_reduction <maximumf>, %73, %cst_44 [1] : vector<16x8xf32> to vector<16xf32>
    %75 = vector.shape_cast %74 : vector<16xf32> to vector<16x1xf32>
    %76 = vector.broadcast %75 : vector<16x1xf32> to vector<16x8xf32>
    %77 = arith.subf %73, %76 : vector<16x8xf32>
    %78 = math.exp %77 : vector<16x8xf32>
    %cst_45 = arith.constant dense<0.000000e+00> : vector<16xf32>
    %79 = vector.multi_reduction <add>, %78, %cst_45 [1] : vector<16x8xf32> to vector<16xf32>
    %80 = vector.shape_cast %79 : vector<16xf32> to vector<16x1xf32>
    %81 = tpu.reciprocal %80 {approx = true} : vector<16x1xf32> -> vector<16x1xf32>
    %82 = vector.broadcast %81 : vector<16x1xf32> to vector<16x8xf32>
    %83 = arith.mulf %78, %82 : vector<16x8xf32>
    %84 = vector.shape_cast %83 : vector<16x8xf32> to vector<16x8x1xf32>
    %85 = vector.broadcast %84 : vector<16x8x1xf32> to vector<16x8x128xf32>
    %86 = arith.mulf %85, %1 : vector<16x8x128xf32>
    %cst_46 = arith.constant dense<0.000000e+00> : vector<16x128xf32>
    %87 = vector.multi_reduction <add>, %86, %cst_46 [1] : vector<16x8x128xf32> to vector<16x128xf32>
    %88 = arith.truncf %87 : vector<16x128xf32> to vector<16x128xbf16>
    %89 = tpu.concatenate %65, %88, %68 in 1 : vector<16x128xbf16>, vector<16x128xbf16>, vector<16x128xbf16> -> vector<16x384xbf16>
    %cst_47 = arith.constant dense<0.000000e+00> : vector<16x512xf32>
    %90 = tpu.matmul %89, %3, %cst_47 {dimension_numbers = #tpu.dot_dimension_numbers<[1], [0], [0], [1], [0, 0, 1, 1], [], []>} : vector<16x384xbf16>, vector<384x512xbf16>, vector<16x512xf32> -> vector<16x512xf32>
    %91 = vector.broadcast %4 : vector<1x512xf32> to vector<16x512xf32>
    %92 = arith.addf %90, %91 : vector<16x512xf32>
    %93 = vector.extract_strided_slice %92 {offsets = [0, 0], sizes = [16, 384], strides = [1, 1]} : vector<16x512xf32> to vector<16x384xf32>
    %cst_48 = arith.constant 5.000000e-01 : f32
    %94 = vector.broadcast %cst_48 : f32 to vector<16x384xf32>
    %95 = arith.mulf %94, %93 : vector<16x384xf32>
    %96 = math.tanh %95 : vector<16x384xf32>
    %cst_49 = arith.constant 1.000000e+00 : f32
    %97 = vector.broadcast %cst_49 : f32 to vector<16x384xf32>
    %98 = arith.addf %96, %97 : vector<16x384xf32>
    %cst_50 = arith.constant 5.000000e-01 : f32
    %99 = vector.broadcast %cst_50 : f32 to vector<16x384xf32>
    %100 = arith.mulf %99, %98 : vector<16x384xf32>
    %101 = vector.extract_strided_slice %100 {offsets = [0, 0], sizes = [16, 128], strides = [1, 1]} : vector<16x384xf32> to vector<16x128xf32>
    %102 = vector.extract_strided_slice %100 {offsets = [0, 128], sizes = [16, 128], strides = [1, 1]} : vector<16x384xf32> to vector<16x128xf32>
    %103 = vector.extract_strided_slice %100 {offsets = [0, 256], sizes = [16, 128], strides = [1, 1]} : vector<16x384xf32> to vector<16x128xf32>
    %104 = vector.extract_strided_slice %92 {offsets = [0, 384], sizes = [16, 128], strides = [1, 1]} : vector<16x512xf32> to vector<16x128xf32>
    %105 = math.tanh %104 : vector<16x128xf32>
    %106 = arith.mulf %102, %67 : vector<16x128xf32>
    %107 = arith.mulf %101, %105 : vector<16x128xf32>
    %108 = arith.addf %106, %107 : vector<16x128xf32>
    %109 = math.tanh %108 : vector<16x128xf32>
    %110 = arith.mulf %103, %109 : vector<16x128xf32>
    %111 = arith.index_cast %c1_i32 : i32 to index
    %c0_51 = arith.constant 0 : index
    %c0_52 = arith.constant 0 : index
    %112 = vector.load %arg7[%111, %c0_51, %c0_52] : memref<8x16x128xf32, #tpu.memory_space<vmem>>, vector<1x16x128xf32>
    %113 = vector.shape_cast %112 : vector<1x16x128xf32> to vector<16x128xf32>
    %114 = vector.shape_cast %110 : vector<16x128xf32> to vector<1x16x128xf32>
    tpu.vector_store %arg7[%111, %c0_51, %c0_52], %114 {strides = array<i32>} : memref<8x16x128xf32, #tpu.memory_space<vmem>>, vector<1x16x128xf32>,
    %c0_53 = arith.constant 0 : index
    %c0_54 = arith.constant 0 : index
    %115 = vector.load %arg8[%c0_53, %c0_54] : memref<16x128xf32, #tpu.memory_space<vmem>>, vector<16x128xf32>
    tpu.vector_store %arg8[%c0_53, %c0_54], %110 {strides = array<i32>} : memref<16x128xf32, #tpu.memory_space<vmem>>, vector<16x128xf32>,
    %c0_55 = arith.constant 0 : index
    %c0_56 = arith.constant 0 : index
    %116 = vector.load %arg9[%c0_55, %c0_56] : memref<16x128xf32, #tpu.memory_space<vmem>>, vector<16x128xf32>
    tpu.vector_store %arg9[%c0_55, %c0_56], %108 {strides = array<i32>} : memref<16x128xf32, #tpu.memory_space<vmem>>, vector<16x128xf32>,
    %c2_i32 = arith.constant 2 : i32
    %117 = arith.index_cast %c2_i32 : i32 to index
    %c0_57 = arith.constant 0 : index
    %c0_58 = arith.constant 0 : index
    %118 = vector.load %arg1[%117, %c0_57, %c0_58] : memref<8x16x128xbf16, #tpu.memory_space<vmem>>, vector<1x16x128xbf16>
    %119 = vector.shape_cast %118 : vector<1x16x128xbf16> to vector<16x128xbf16>
    %c0_59 = arith.constant 0 : index
    %c0_60 = arith.constant 0 : index
    %120 = vector.load %arg8[%c0_59, %c0_60] : memref<16x128xf32, #tpu.memory_space<vmem>>, vector<16x128xf32>
    %c0_61 = arith.constant 0 : index
    %c0_62 = arith.constant 0 : index
    %121 = vector.load %arg9[%c0_61, %c0_62] : memref<16x128xf32, #tpu.memory_space<vmem>>, vector<16x128xf32>
    %122 = arith.truncf %120 : vector<16x128xf32> to vector<16x128xbf16>
    %cst_63 = arith.constant dense<0.000000e+00> : vector<16x128xf32>
    %123 = tpu.matmul %122, %2, %cst_63 {dimension_numbers = #tpu.dot_dimension_numbers<[1], [0], [0], [1], [0, 0, 1, 1], [], []>} : vector<16x128xbf16>, vector<128x128xbf16>, vector<16x128xf32> -> vector<16x128xf32>
    %124 = vector.shape_cast %123 : vector<16x128xf32> to vector<16x1x128xf32>
    %125 = vector.broadcast %124 : vector<16x1x128xf32> to vector<16x8x128xf32>
    %126 = arith.mulf %125, %1 : vector<16x8x128xf32>
    %cst_64 = arith.constant dense<0.000000e+00> : vector<16x8xf32>
    %127 = vector.multi_reduction <add>, %126, %cst_64 [2] : vector<16x8x128xf32> to vector<16x8xf32>
    %cst_65 = arith.constant dense<0xFF800000> : vector<16xf32>
    %128 = vector.multi_reduction <maximumf>, %127, %cst_65 [1] : vector<16x8xf32> to vector<16xf32>
    %129 = vector.shape_cast %128 : vector<16xf32> to vector<16x1xf32>
    %130 = vector.broadcast %129 : vector<16x1xf32> to vector<16x8xf32>
    %131 = arith.subf %127, %130 : vector<16x8xf32>
    %132 = math.exp %131 : vector<16x8xf32>
    %cst_66 = arith.constant dense<0.000000e+00> : vector<16xf32>
    %133 = vector.multi_reduction <add>, %132, %cst_66 [1] : vector<16x8xf32> to vector<16xf32>
    %134 = vector.shape_cast %133 : vector<16xf32> to vector<16x1xf32>
    %135 = tpu.reciprocal %134 {approx = true} : vector<16x1xf32> -> vector<16x1xf32>
    %136 = vector.broadcast %135 : vector<16x1xf32> to vector<16x8xf32>
    %137 = arith.mulf %132, %136 : vector<16x8xf32>
    %138 = vector.shape_cast %137 : vector<16x8xf32> to vector<16x8x1xf32>
    %139 = vector.broadcast %138 : vector<16x8x1xf32> to vector<16x8x128xf32>
    %140 = arith.mulf %139, %1 : vector<16x8x128xf32>
    %cst_67 = arith.constant dense<0.000000e+00> : vector<16x128xf32>
    %141 = vector.multi_reduction <add>, %140, %cst_67 [1] : vector<16x8x128xf32> to vector<16x128xf32>
    %142 = arith.truncf %141 : vector<16x128xf32> to vector<16x128xbf16>
    %143 = tpu.concatenate %119, %142, %122 in 1 : vector<16x128xbf16>, vector<16x128xbf16>, vector<16x128xbf16> -> vector<16x384xbf16>
    %cst_68 = arith.constant dense<0.000000e+00> : vector<16x512xf32>
    %144 = tpu.matmul %143, %3, %cst_68 {dimension_numbers = #tpu.dot_dimension_numbers<[1], [0], [0], [1], [0, 0, 1, 1], [], []>} : vector<16x384xbf16>, vector<384x512xbf16>, vector<16x512xf32> -> vector<16x512xf32>
    %145 = vector.broadcast %4 : vector<1x512xf32> to vector<16x512xf32>
    %146 = arith.addf %144, %145 : vector<16x512xf32>
    %147 = vector.extract_strided_slice %146 {offsets = [0, 0], sizes = [16, 384], strides = [1, 1]} : vector<16x512xf32> to vector<16x384xf32>
    %cst_69 = arith.constant 5.000000e-01 : f32
    %148 = vector.broadcast %cst_69 : f32 to vector<16x384xf32>
    %149 = arith.mulf %148, %147 : vector<16x384xf32>
    %150 = math.tanh %149 : vector<16x384xf32>
    %cst_70 = arith.constant 1.000000e+00 : f32
    %151 = vector.broadcast %cst_70 : f32 to vector<16x384xf32>
    %152 = arith.addf %150, %151 : vector<16x384xf32>
    %cst_71 = arith.constant 5.000000e-01 : f32
    %153 = vector.broadcast %cst_71 : f32 to vector<16x384xf32>
    %154 = arith.mulf %153, %152 : vector<16x384xf32>
    %155 = vector.extract_strided_slice %154 {offsets = [0, 0], sizes = [16, 128], strides = [1, 1]} : vector<16x384xf32> to vector<16x128xf32>
    %156 = vector.extract_strided_slice %154 {offsets = [0, 128], sizes = [16, 128], strides = [1, 1]} : vector<16x384xf32> to vector<16x128xf32>
    %157 = vector.extract_strided_slice %154 {offsets = [0, 256], sizes = [16, 128], strides = [1, 1]} : vector<16x384xf32> to vector<16x128xf32>
    %158 = vector.extract_strided_slice %146 {offsets = [0, 384], sizes = [16, 128], strides = [1, 1]} : vector<16x512xf32> to vector<16x128xf32>
    %159 = math.tanh %158 : vector<16x128xf32>
    %160 = arith.mulf %156, %121 : vector<16x128xf32>
    %161 = arith.mulf %155, %159 : vector<16x128xf32>
    %162 = arith.addf %160, %161 : vector<16x128xf32>
    %163 = math.tanh %162 : vector<16x128xf32>
    %164 = arith.mulf %157, %163 : vector<16x128xf32>
    %165 = arith.index_cast %c2_i32 : i32 to index
    %c0_72 = arith.constant 0 : index
    %c0_73 = arith.constant 0 : index
    %166 = vector.load %arg7[%165, %c0_72, %c0_73] : memref<8x16x128xf32, #tpu.memory_space<vmem>>, vector<1x16x128xf32>
    %167 = vector.shape_cast %166 : vector<1x16x128xf32> to vector<16x128xf32>
    %168 = vector.shape_cast %164 : vector<16x128xf32> to vector<1x16x128xf32>
    tpu.vector_store %arg7[%165, %c0_72, %c0_73], %168 {strides = array<i32>} : memref<8x16x128xf32, #tpu.memory_space<vmem>>, vector<1x16x128xf32>,
    %c0_74 = arith.constant 0 : index
    %c0_75 = arith.constant 0 : index
    %169 = vector.load %arg8[%c0_74, %c0_75] : memref<16x128xf32, #tpu.memory_space<vmem>>, vector<16x128xf32>
    tpu.vector_store %arg8[%c0_74, %c0_75], %164 {strides = array<i32>} : memref<16x128xf32, #tpu.memory_space<vmem>>, vector<16x128xf32>,
    %c0_76 = arith.constant 0 : index
    %c0_77 = arith.constant 0 : index
    %170 = vector.load %arg9[%c0_76, %c0_77] : memref<16x128xf32, #tpu.memory_space<vmem>>, vector<16x128xf32>
    tpu.vector_store %arg9[%c0_76, %c0_77], %162 {strides = array<i32>} : memref<16x128xf32, #tpu.memory_space<vmem>>, vector<16x128xf32>,
    %c3_i32 = arith.constant 3 : i32
    %171 = arith.index_cast %c3_i32 : i32 to index
    %c0_78 = arith.constant 0 : index
    %c0_79 = arith.constant 0 : index
    %172 = vector.load %arg1[%171, %c0_78, %c0_79] : memref<8x16x128xbf16, #tpu.memory_space<vmem>>, vector<1x16x128xbf16>
    %173 = vector.shape_cast %172 : vector<1x16x128xbf16> to vector<16x128xbf16>
    %c0_80 = arith.constant 0 : index
    %c0_81 = arith.constant 0 : index
    %174 = vector.load %arg8[%c0_80, %c0_81] : memref<16x128xf32, #tpu.memory_space<vmem>>, vector<16x128xf32>
    %c0_82 = arith.constant 0 : index
    %c0_83 = arith.constant 0 : index
    %175 = vector.load %arg9[%c0_82, %c0_83] : memref<16x128xf32, #tpu.memory_space<vmem>>, vector<16x128xf32>
    %176 = arith.truncf %174 : vector<16x128xf32> to vector<16x128xbf16>
    %cst_84 = arith.constant dense<0.000000e+00> : vector<16x128xf32>
    %177 = tpu.matmul %176, %2, %cst_84 {dimension_numbers = #tpu.dot_dimension_numbers<[1], [0], [0], [1], [0, 0, 1, 1], [], []>} : vector<16x128xbf16>, vector<128x128xbf16>, vector<16x128xf32> -> vector<16x128xf32>
    %178 = vector.shape_cast %177 : vector<16x128xf32> to vector<16x1x128xf32>
    %179 = vector.broadcast %178 : vector<16x1x128xf32> to vector<16x8x128xf32>
    %180 = arith.mulf %179, %1 : vector<16x8x128xf32>
    %cst_85 = arith.constant dense<0.000000e+00> : vector<16x8xf32>
    %181 = vector.multi_reduction <add>, %180, %cst_85 [2] : vector<16x8x128xf32> to vector<16x8xf32>
    %cst_86 = arith.constant dense<0xFF800000> : vector<16xf32>
    %182 = vector.multi_reduction <maximumf>, %181, %cst_86 [1] : vector<16x8xf32> to vector<16xf32>
    %183 = vector.shape_cast %182 : vector<16xf32> to vector<16x1xf32>
    %184 = vector.broadcast %183 : vector<16x1xf32> to vector<16x8xf32>
    %185 = arith.subf %181, %184 : vector<16x8xf32>
    %186 = math.exp %185 : vector<16x8xf32>
    %cst_87 = arith.constant dense<0.000000e+00> : vector<16xf32>
    %187 = vector.multi_reduction <add>, %186, %cst_87 [1] : vector<16x8xf32> to vector<16xf32>
    %188 = vector.shape_cast %187 : vector<16xf32> to vector<16x1xf32>
    %189 = tpu.reciprocal %188 {approx = true} : vector<16x1xf32> -> vector<16x1xf32>
    %190 = vector.broadcast %189 : vector<16x1xf32> to vector<16x8xf32>
    %191 = arith.mulf %186, %190 : vector<16x8xf32>
    %192 = vector.shape_cast %191 : vector<16x8xf32> to vector<16x8x1xf32>
    %193 = vector.broadcast %192 : vector<16x8x1xf32> to vector<16x8x128xf32>
    %194 = arith.mulf %193, %1 : vector<16x8x128xf32>
    %cst_88 = arith.constant dense<0.000000e+00> : vector<16x128xf32>
    %195 = vector.multi_reduction <add>, %194, %cst_88 [1] : vector<16x8x128xf32> to vector<16x128xf32>
    %196 = arith.truncf %195 : vector<16x128xf32> to vector<16x128xbf16>
    %197 = tpu.concatenate %173, %196, %176 in 1 : vector<16x128xbf16>, vector<16x128xbf16>, vector<16x128xbf16> -> vector<16x384xbf16>
    %cst_89 = arith.constant dense<0.000000e+00> : vector<16x512xf32>
    %198 = tpu.matmul %197, %3, %cst_89 {dimension_numbers = #tpu.dot_dimension_numbers<[1], [0], [0], [1], [0, 0, 1, 1], [], []>} : vector<16x384xbf16>, vector<384x512xbf16>, vector<16x512xf32> -> vector<16x512xf32>
    %199 = vector.broadcast %4 : vector<1x512xf32> to vector<16x512xf32>
    %200 = arith.addf %198, %199 : vector<16x512xf32>
    %201 = vector.extract_strided_slice %200 {offsets = [0, 0], sizes = [16, 384], strides = [1, 1]} : vector<16x512xf32> to vector<16x384xf32>
    %cst_90 = arith.constant 5.000000e-01 : f32
    %202 = vector.broadcast %cst_90 : f32 to vector<16x384xf32>
    %203 = arith.mulf %202, %201 : vector<16x384xf32>
    %204 = math.tanh %203 : vector<16x384xf32>
    %cst_91 = arith.constant 1.000000e+00 : f32
    %205 = vector.broadcast %cst_91 : f32 to vector<16x384xf32>
    %206 = arith.addf %204, %205 : vector<16x384xf32>
    %cst_92 = arith.constant 5.000000e-01 : f32
    %207 = vector.broadcast %cst_92 : f32 to vector<16x384xf32>
    %208 = arith.mulf %207, %206 : vector<16x384xf32>
    %209 = vector.extract_strided_slice %208 {offsets = [0, 0], sizes = [16, 128], strides = [1, 1]} : vector<16x384xf32> to vector<16x128xf32>
    %210 = vector.extract_strided_slice %208 {offsets = [0, 128], sizes = [16, 128], strides = [1, 1]} : vector<16x384xf32> to vector<16x128xf32>
    %211 = vector.extract_strided_slice %208 {offsets = [0, 256], sizes = [16, 128], strides = [1, 1]} : vector<16x384xf32> to vector<16x128xf32>
    %212 = vector.extract_strided_slice %200 {offsets = [0, 384], sizes = [16, 128], strides = [1, 1]} : vector<16x512xf32> to vector<16x128xf32>
    %213 = math.tanh %212 : vector<16x128xf32>
    %214 = arith.mulf %210, %175 : vector<16x128xf32>
    %215 = arith.mulf %209, %213 : vector<16x128xf32>
    %216 = arith.addf %214, %215 : vector<16x128xf32>
    %217 = math.tanh %216 : vector<16x128xf32>
    %218 = arith.mulf %211, %217 : vector<16x128xf32>
    %219 = arith.index_cast %c3_i32 : i32 to index
    %c0_93 = arith.constant 0 : index
    %c0_94 = arith.constant 0 : index
    %220 = vector.load %arg7[%219, %c0_93, %c0_94] : memref<8x16x128xf32, #tpu.memory_space<vmem>>, vector<1x16x128xf32>
    %221 = vector.shape_cast %220 : vector<1x16x128xf32> to vector<16x128xf32>
    %222 = vector.shape_cast %218 : vector<16x128xf32> to vector<1x16x128xf32>
    tpu.vector_store %arg7[%219, %c0_93, %c0_94], %222 {strides = array<i32>} : memref<8x16x128xf32, #tpu.memory_space<vmem>>, vector<1x16x128xf32>,
    %c0_95 = arith.constant 0 : index
    %c0_96 = arith.constant 0 : index
    %223 = vector.load %arg8[%c0_95, %c0_96] : memref<16x128xf32, #tpu.memory_space<vmem>>, vector<16x128xf32>
    tpu.vector_store %arg8[%c0_95, %c0_96], %218 {strides = array<i32>} : memref<16x128xf32, #tpu.memory_space<vmem>>, vector<16x128xf32>,
    %c0_97 = arith.constant 0 : index
    %c0_98 = arith.constant 0 : index
    %224 = vector.load %arg9[%c0_97, %c0_98] : memref<16x128xf32, #tpu.memory_space<vmem>>, vector<16x128xf32>
    tpu.vector_store %arg9[%c0_97, %c0_98], %216 {strides = array<i32>} : memref<16x128xf32, #tpu.memory_space<vmem>>, vector<16x128xf32>,
    %c4_i32 = arith.constant 4 : i32
    %225 = arith.index_cast %c4_i32 : i32 to index
    %c0_99 = arith.constant 0 : index
    %c0_100 = arith.constant 0 : index
    %226 = vector.load %arg1[%225, %c0_99, %c0_100] : memref<8x16x128xbf16, #tpu.memory_space<vmem>>, vector<1x16x128xbf16>
    %227 = vector.shape_cast %226 : vector<1x16x128xbf16> to vector<16x128xbf16>
    %c0_101 = arith.constant 0 : index
    %c0_102 = arith.constant 0 : index
    %228 = vector.load %arg8[%c0_101, %c0_102] : memref<16x128xf32, #tpu.memory_space<vmem>>, vector<16x128xf32>
    %c0_103 = arith.constant 0 : index
    %c0_104 = arith.constant 0 : index
    %229 = vector.load %arg9[%c0_103, %c0_104] : memref<16x128xf32, #tpu.memory_space<vmem>>, vector<16x128xf32>
    %230 = arith.truncf %228 : vector<16x128xf32> to vector<16x128xbf16>
    %cst_105 = arith.constant dense<0.000000e+00> : vector<16x128xf32>
    %231 = tpu.matmul %230, %2, %cst_105 {dimension_numbers = #tpu.dot_dimension_numbers<[1], [0], [0], [1], [0, 0, 1, 1], [], []>} : vector<16x128xbf16>, vector<128x128xbf16>, vector<16x128xf32> -> vector<16x128xf32>
    %232 = vector.shape_cast %231 : vector<16x128xf32> to vector<16x1x128xf32>
    %233 = vector.broadcast %232 : vector<16x1x128xf32> to vector<16x8x128xf32>
    %234 = arith.mulf %233, %1 : vector<16x8x128xf32>
    %cst_106 = arith.constant dense<0.000000e+00> : vector<16x8xf32>
    %235 = vector.multi_reduction <add>, %234, %cst_106 [2] : vector<16x8x128xf32> to vector<16x8xf32>
    %cst_107 = arith.constant dense<0xFF800000> : vector<16xf32>
    %236 = vector.multi_reduction <maximumf>, %235, %cst_107 [1] : vector<16x8xf32> to vector<16xf32>
    %237 = vector.shape_cast %236 : vector<16xf32> to vector<16x1xf32>
    %238 = vector.broadcast %237 : vector<16x1xf32> to vector<16x8xf32>
    %239 = arith.subf %235, %238 : vector<16x8xf32>
    %240 = math.exp %239 : vector<16x8xf32>
    %cst_108 = arith.constant dense<0.000000e+00> : vector<16xf32>
    %241 = vector.multi_reduction <add>, %240, %cst_108 [1] : vector<16x8xf32> to vector<16xf32>
    %242 = vector.shape_cast %241 : vector<16xf32> to vector<16x1xf32>
    %243 = tpu.reciprocal %242 {approx = true} : vector<16x1xf32> -> vector<16x1xf32>
    %244 = vector.broadcast %243 : vector<16x1xf32> to vector<16x8xf32>
    %245 = arith.mulf %240, %244 : vector<16x8xf32>
    %246 = vector.shape_cast %245 : vector<16x8xf32> to vector<16x8x1xf32>
    %247 = vector.broadcast %246 : vector<16x8x1xf32> to vector<16x8x128xf32>
    %248 = arith.mulf %247, %1 : vector<16x8x128xf32>
    %cst_109 = arith.constant dense<0.000000e+00> : vector<16x128xf32>
    %249 = vector.multi_reduction <add>, %248, %cst_109 [1] : vector<16x8x128xf32> to vector<16x128xf32>
    %250 = arith.truncf %249 : vector<16x128xf32> to vector<16x128xbf16>
    %251 = tpu.concatenate %227, %250, %230 in 1 : vector<16x128xbf16>, vector<16x128xbf16>, vector<16x128xbf16> -> vector<16x384xbf16>
    %cst_110 = arith.constant dense<0.000000e+00> : vector<16x512xf32>
    %252 = tpu.matmul %251, %3, %cst_110 {dimension_numbers = #tpu.dot_dimension_numbers<[1], [0], [0], [1], [0, 0, 1, 1], [], []>} : vector<16x384xbf16>, vector<384x512xbf16>, vector<16x512xf32> -> vector<16x512xf32>
    %253 = vector.broadcast %4 : vector<1x512xf32> to vector<16x512xf32>
    %254 = arith.addf %252, %253 : vector<16x512xf32>
    %255 = vector.extract_strided_slice %254 {offsets = [0, 0], sizes = [16, 384], strides = [1, 1]} : vector<16x512xf32> to vector<16x384xf32>
    %cst_111 = arith.constant 5.000000e-01 : f32
    %256 = vector.broadcast %cst_111 : f32 to vector<16x384xf32>
    %257 = arith.mulf %256, %255 : vector<16x384xf32>
    %258 = math.tanh %257 : vector<16x384xf32>
    %cst_112 = arith.constant 1.000000e+00 : f32
    %259 = vector.broadcast %cst_112 : f32 to vector<16x384xf32>
    %260 = arith.addf %258, %259 : vector<16x384xf32>
    %cst_113 = arith.constant 5.000000e-01 : f32
    %261 = vector.broadcast %cst_113 : f32 to vector<16x384xf32>
    %262 = arith.mulf %261, %260 : vector<16x384xf32>
    %263 = vector.extract_strided_slice %262 {offsets = [0, 0], sizes = [16, 128], strides = [1, 1]} : vector<16x384xf32> to vector<16x128xf32>
    %264 = vector.extract_strided_slice %262 {offsets = [0, 128], sizes = [16, 128], strides = [1, 1]} : vector<16x384xf32> to vector<16x128xf32>
    %265 = vector.extract_strided_slice %262 {offsets = [0, 256], sizes = [16, 128], strides = [1, 1]} : vector<16x384xf32> to vector<16x128xf32>
    %266 = vector.extract_strided_slice %254 {offsets = [0, 384], sizes = [16, 128], strides = [1, 1]} : vector<16x512xf32> to vector<16x128xf32>
    %267 = math.tanh %266 : vector<16x128xf32>
    %268 = arith.mulf %264, %229 : vector<16x128xf32>
    %269 = arith.mulf %263, %267 : vector<16x128xf32>
    %270 = arith.addf %268, %269 : vector<16x128xf32>
    %271 = math.tanh %270 : vector<16x128xf32>
    %272 = arith.mulf %265, %271 : vector<16x128xf32>
    %273 = arith.index_cast %c4_i32 : i32 to index
    %c0_114 = arith.constant 0 : index
    %c0_115 = arith.constant 0 : index
    %274 = vector.load %arg7[%273, %c0_114, %c0_115] : memref<8x16x128xf32, #tpu.memory_space<vmem>>, vector<1x16x128xf32>
    %275 = vector.shape_cast %274 : vector<1x16x128xf32> to vector<16x128xf32>
    %276 = vector.shape_cast %272 : vector<16x128xf32> to vector<1x16x128xf32>
    tpu.vector_store %arg7[%273, %c0_114, %c0_115], %276 {strides = array<i32>} : memref<8x16x128xf32, #tpu.memory_space<vmem>>, vector<1x16x128xf32>,
    %c0_116 = arith.constant 0 : index
    %c0_117 = arith.constant 0 : index
    %277 = vector.load %arg8[%c0_116, %c0_117] : memref<16x128xf32, #tpu.memory_space<vmem>>, vector<16x128xf32>
    tpu.vector_store %arg8[%c0_116, %c0_117], %272 {strides = array<i32>} : memref<16x128xf32, #tpu.memory_space<vmem>>, vector<16x128xf32>,
    %c0_118 = arith.constant 0 : index
    %c0_119 = arith.constant 0 : index
    %278 = vector.load %arg9[%c0_118, %c0_119] : memref<16x128xf32, #tpu.memory_space<vmem>>, vector<16x128xf32>
    tpu.vector_store %arg9[%c0_118, %c0_119], %270 {strides = array<i32>} : memref<16x128xf32, #tpu.memory_space<vmem>>, vector<16x128xf32>,
    %c5_i32 = arith.constant 5 : i32
    %279 = arith.index_cast %c5_i32 : i32 to index
    %c0_120 = arith.constant 0 : index
    %c0_121 = arith.constant 0 : index
    %280 = vector.load %arg1[%279, %c0_120, %c0_121] : memref<8x16x128xbf16, #tpu.memory_space<vmem>>, vector<1x16x128xbf16>
    %281 = vector.shape_cast %280 : vector<1x16x128xbf16> to vector<16x128xbf16>
    %c0_122 = arith.constant 0 : index
    %c0_123 = arith.constant 0 : index
    %282 = vector.load %arg8[%c0_122, %c0_123] : memref<16x128xf32, #tpu.memory_space<vmem>>, vector<16x128xf32>
    %c0_124 = arith.constant 0 : index
    %c0_125 = arith.constant 0 : index
    %283 = vector.load %arg9[%c0_124, %c0_125] : memref<16x128xf32, #tpu.memory_space<vmem>>, vector<16x128xf32>
    %284 = arith.truncf %282 : vector<16x128xf32> to vector<16x128xbf16>
    %cst_126 = arith.constant dense<0.000000e+00> : vector<16x128xf32>
    %285 = tpu.matmul %284, %2, %cst_126 {dimension_numbers = #tpu.dot_dimension_numbers<[1], [0], [0], [1], [0, 0, 1, 1], [], []>} : vector<16x128xbf16>, vector<128x128xbf16>, vector<16x128xf32> -> vector<16x128xf32>
    %286 = vector.shape_cast %285 : vector<16x128xf32> to vector<16x1x128xf32>
    %287 = vector.broadcast %286 : vector<16x1x128xf32> to vector<16x8x128xf32>
    %288 = arith.mulf %287, %1 : vector<16x8x128xf32>
    %cst_127 = arith.constant dense<0.000000e+00> : vector<16x8xf32>
    %289 = vector.multi_reduction <add>, %288, %cst_127 [2] : vector<16x8x128xf32> to vector<16x8xf32>
    %cst_128 = arith.constant dense<0xFF800000> : vector<16xf32>
    %290 = vector.multi_reduction <maximumf>, %289, %cst_128 [1] : vector<16x8xf32> to vector<16xf32>
    %291 = vector.shape_cast %290 : vector<16xf32> to vector<16x1xf32>
    %292 = vector.broadcast %291 : vector<16x1xf32> to vector<16x8xf32>
    %293 = arith.subf %289, %292 : vector<16x8xf32>
    %294 = math.exp %293 : vector<16x8xf32>
    %cst_129 = arith.constant dense<0.000000e+00> : vector<16xf32>
    %295 = vector.multi_reduction <add>, %294, %cst_129 [1] : vector<16x8xf32> to vector<16xf32>
    %296 = vector.shape_cast %295 : vector<16xf32> to vector<16x1xf32>
    %297 = tpu.reciprocal %296 {approx = true} : vector<16x1xf32> -> vector<16x1xf32>
    %298 = vector.broadcast %297 : vector<16x1xf32> to vector<16x8xf32>
    %299 = arith.mulf %294, %298 : vector<16x8xf32>
    %300 = vector.shape_cast %299 : vector<16x8xf32> to vector<16x8x1xf32>
    %301 = vector.broadcast %300 : vector<16x8x1xf32> to vector<16x8x128xf32>
    %302 = arith.mulf %301, %1 : vector<16x8x128xf32>
    %cst_130 = arith.constant dense<0.000000e+00> : vector<16x128xf32>
    %303 = vector.multi_reduction <add>, %302, %cst_130 [1] : vector<16x8x128xf32> to vector<16x128xf32>
    %304 = arith.truncf %303 : vector<16x128xf32> to vector<16x128xbf16>
    %305 = tpu.concatenate %281, %304, %284 in 1 : vector<16x128xbf16>, vector<16x128xbf16>, vector<16x128xbf16> -> vector<16x384xbf16>
    %cst_131 = arith.constant dense<0.000000e+00> : vector<16x512xf32>
    %306 = tpu.matmul %305, %3, %cst_131 {dimension_numbers = #tpu.dot_dimension_numbers<[1], [0], [0], [1], [0, 0, 1, 1], [], []>} : vector<16x384xbf16>, vector<384x512xbf16>, vector<16x512xf32> -> vector<16x512xf32>
    %307 = vector.broadcast %4 : vector<1x512xf32> to vector<16x512xf32>
    %308 = arith.addf %306, %307 : vector<16x512xf32>
    %309 = vector.extract_strided_slice %308 {offsets = [0, 0], sizes = [16, 384], strides = [1, 1]} : vector<16x512xf32> to vector<16x384xf32>
    %cst_132 = arith.constant 5.000000e-01 : f32
    %310 = vector.broadcast %cst_132 : f32 to vector<16x384xf32>
    %311 = arith.mulf %310, %309 : vector<16x384xf32>
    %312 = math.tanh %311 : vector<16x384xf32>
    %cst_133 = arith.constant 1.000000e+00 : f32
    %313 = vector.broadcast %cst_133 : f32 to vector<16x384xf32>
    %314 = arith.addf %312, %313 : vector<16x384xf32>
    %cst_134 = arith.constant 5.000000e-01 : f32
    %315 = vector.broadcast %cst_134 : f32 to vector<16x384xf32>
    %316 = arith.mulf %315, %314 : vector<16x384xf32>
    %317 = vector.extract_strided_slice %316 {offsets = [0, 0], sizes = [16, 128], strides = [1, 1]} : vector<16x384xf32> to vector<16x128xf32>
    %318 = vector.extract_strided_slice %316 {offsets = [0, 128], sizes = [16, 128], strides = [1, 1]} : vector<16x384xf32> to vector<16x128xf32>
    %319 = vector.extract_strided_slice %316 {offsets = [0, 256], sizes = [16, 128], strides = [1, 1]} : vector<16x384xf32> to vector<16x128xf32>
    %320 = vector.extract_strided_slice %308 {offsets = [0, 384], sizes = [16, 128], strides = [1, 1]} : vector<16x512xf32> to vector<16x128xf32>
    %321 = math.tanh %320 : vector<16x128xf32>
    %322 = arith.mulf %318, %283 : vector<16x128xf32>
    %323 = arith.mulf %317, %321 : vector<16x128xf32>
    %324 = arith.addf %322, %323 : vector<16x128xf32>
    %325 = math.tanh %324 : vector<16x128xf32>
    %326 = arith.mulf %319, %325 : vector<16x128xf32>
    %327 = arith.index_cast %c5_i32 : i32 to index
    %c0_135 = arith.constant 0 : index
    %c0_136 = arith.constant 0 : index
    %328 = vector.load %arg7[%327, %c0_135, %c0_136] : memref<8x16x128xf32, #tpu.memory_space<vmem>>, vector<1x16x128xf32>
    %329 = vector.shape_cast %328 : vector<1x16x128xf32> to vector<16x128xf32>
    %330 = vector.shape_cast %326 : vector<16x128xf32> to vector<1x16x128xf32>
    tpu.vector_store %arg7[%327, %c0_135, %c0_136], %330 {strides = array<i32>} : memref<8x16x128xf32, #tpu.memory_space<vmem>>, vector<1x16x128xf32>,
    %c0_137 = arith.constant 0 : index
    %c0_138 = arith.constant 0 : index
    %331 = vector.load %arg8[%c0_137, %c0_138] : memref<16x128xf32, #tpu.memory_space<vmem>>, vector<16x128xf32>
    tpu.vector_store %arg8[%c0_137, %c0_138], %326 {strides = array<i32>} : memref<16x128xf32, #tpu.memory_space<vmem>>, vector<16x128xf32>,
    %c0_139 = arith.constant 0 : index
    %c0_140 = arith.constant 0 : index
    %332 = vector.load %arg9[%c0_139, %c0_140] : memref<16x128xf32, #tpu.memory_space<vmem>>, vector<16x128xf32>
    tpu.vector_store %arg9[%c0_139, %c0_140], %324 {strides = array<i32>} : memref<16x128xf32, #tpu.memory_space<vmem>>, vector<16x128xf32>,
    %c6_i32 = arith.constant 6 : i32
    %333 = arith.index_cast %c6_i32 : i32 to index
    %c0_141 = arith.constant 0 : index
    %c0_142 = arith.constant 0 : index
    %334 = vector.load %arg1[%333, %c0_141, %c0_142] : memref<8x16x128xbf16, #tpu.memory_space<vmem>>, vector<1x16x128xbf16>
    %335 = vector.shape_cast %334 : vector<1x16x128xbf16> to vector<16x128xbf16>
    %c0_143 = arith.constant 0 : index
    %c0_144 = arith.constant 0 : index
    %336 = vector.load %arg8[%c0_143, %c0_144] : memref<16x128xf32, #tpu.memory_space<vmem>>, vector<16x128xf32>
    %c0_145 = arith.constant 0 : index
    %c0_146 = arith.constant 0 : index
    %337 = vector.load %arg9[%c0_145, %c0_146] : memref<16x128xf32, #tpu.memory_space<vmem>>, vector<16x128xf32>
    %338 = arith.truncf %336 : vector<16x128xf32> to vector<16x128xbf16>
    %cst_147 = arith.constant dense<0.000000e+00> : vector<16x128xf32>
    %339 = tpu.matmul %338, %2, %cst_147 {dimension_numbers = #tpu.dot_dimension_numbers<[1], [0], [0], [1], [0, 0, 1, 1], [], []>} : vector<16x128xbf16>, vector<128x128xbf16>, vector<16x128xf32> -> vector<16x128xf32>
    %340 = vector.shape_cast %339 : vector<16x128xf32> to vector<16x1x128xf32>
    %341 = vector.broadcast %340 : vector<16x1x128xf32> to vector<16x8x128xf32>
    %342 = arith.mulf %341, %1 : vector<16x8x128xf32>
    %cst_148 = arith.constant dense<0.000000e+00> : vector<16x8xf32>
    %343 = vector.multi_reduction <add>, %342, %cst_148 [2] : vector<16x8x128xf32> to vector<16x8xf32>
    %cst_149 = arith.constant dense<0xFF800000> : vector<16xf32>
    %344 = vector.multi_reduction <maximumf>, %343, %cst_149 [1] : vector<16x8xf32> to vector<16xf32>
    %345 = vector.shape_cast %344 : vector<16xf32> to vector<16x1xf32>
    %346 = vector.broadcast %345 : vector<16x1xf32> to vector<16x8xf32>
    %347 = arith.subf %343, %346 : vector<16x8xf32>
    %348 = math.exp %347 : vector<16x8xf32>
    %cst_150 = arith.constant dense<0.000000e+00> : vector<16xf32>
    %349 = vector.multi_reduction <add>, %348, %cst_150 [1] : vector<16x8xf32> to vector<16xf32>
    %350 = vector.shape_cast %349 : vector<16xf32> to vector<16x1xf32>
    %351 = tpu.reciprocal %350 {approx = true} : vector<16x1xf32> -> vector<16x1xf32>
    %352 = vector.broadcast %351 : vector<16x1xf32> to vector<16x8xf32>
    %353 = arith.mulf %348, %352 : vector<16x8xf32>
    %354 = vector.shape_cast %353 : vector<16x8xf32> to vector<16x8x1xf32>
    %355 = vector.broadcast %354 : vector<16x8x1xf32> to vector<16x8x128xf32>
    %356 = arith.mulf %355, %1 : vector<16x8x128xf32>
    %cst_151 = arith.constant dense<0.000000e+00> : vector<16x128xf32>
    %357 = vector.multi_reduction <add>, %356, %cst_151 [1] : vector<16x8x128xf32> to vector<16x128xf32>
    %358 = arith.truncf %357 : vector<16x128xf32> to vector<16x128xbf16>
    %359 = tpu.concatenate %335, %358, %338 in 1 : vector<16x128xbf16>, vector<16x128xbf16>, vector<16x128xbf16> -> vector<16x384xbf16>
    %cst_152 = arith.constant dense<0.000000e+00> : vector<16x512xf32>
    %360 = tpu.matmul %359, %3, %cst_152 {dimension_numbers = #tpu.dot_dimension_numbers<[1], [0], [0], [1], [0, 0, 1, 1], [], []>} : vector<16x384xbf16>, vector<384x512xbf16>, vector<16x512xf32> -> vector<16x512xf32>
    %361 = vector.broadcast %4 : vector<1x512xf32> to vector<16x512xf32>
    %362 = arith.addf %360, %361 : vector<16x512xf32>
    %363 = vector.extract_strided_slice %362 {offsets = [0, 0], sizes = [16, 384], strides = [1, 1]} : vector<16x512xf32> to vector<16x384xf32>
    %cst_153 = arith.constant 5.000000e-01 : f32
    %364 = vector.broadcast %cst_153 : f32 to vector<16x384xf32>
    %365 = arith.mulf %364, %363 : vector<16x384xf32>
    %366 = math.tanh %365 : vector<16x384xf32>
    %cst_154 = arith.constant 1.000000e+00 : f32
    %367 = vector.broadcast %cst_154 : f32 to vector<16x384xf32>
    %368 = arith.addf %366, %367 : vector<16x384xf32>
    %cst_155 = arith.constant 5.000000e-01 : f32
    %369 = vector.broadcast %cst_155 : f32 to vector<16x384xf32>
    %370 = arith.mulf %369, %368 : vector<16x384xf32>
    %371 = vector.extract_strided_slice %370 {offsets = [0, 0], sizes = [16, 128], strides = [1, 1]} : vector<16x384xf32> to vector<16x128xf32>
    %372 = vector.extract_strided_slice %370 {offsets = [0, 128], sizes = [16, 128], strides = [1, 1]} : vector<16x384xf32> to vector<16x128xf32>
    %373 = vector.extract_strided_slice %370 {offsets = [0, 256], sizes = [16, 128], strides = [1, 1]} : vector<16x384xf32> to vector<16x128xf32>
    %374 = vector.extract_strided_slice %362 {offsets = [0, 384], sizes = [16, 128], strides = [1, 1]} : vector<16x512xf32> to vector<16x128xf32>
    %375 = math.tanh %374 : vector<16x128xf32>
    %376 = arith.mulf %372, %337 : vector<16x128xf32>
    %377 = arith.mulf %371, %375 : vector<16x128xf32>
    %378 = arith.addf %376, %377 : vector<16x128xf32>
    %379 = math.tanh %378 : vector<16x128xf32>
    %380 = arith.mulf %373, %379 : vector<16x128xf32>
    %381 = arith.index_cast %c6_i32 : i32 to index
    %c0_156 = arith.constant 0 : index
    %c0_157 = arith.constant 0 : index
    %382 = vector.load %arg7[%381, %c0_156, %c0_157] : memref<8x16x128xf32, #tpu.memory_space<vmem>>, vector<1x16x128xf32>
    %383 = vector.shape_cast %382 : vector<1x16x128xf32> to vector<16x128xf32>
    %384 = vector.shape_cast %380 : vector<16x128xf32> to vector<1x16x128xf32>
    tpu.vector_store %arg7[%381, %c0_156, %c0_157], %384 {strides = array<i32>} : memref<8x16x128xf32, #tpu.memory_space<vmem>>, vector<1x16x128xf32>,
    %c0_158 = arith.constant 0 : index
    %c0_159 = arith.constant 0 : index
    %385 = vector.load %arg8[%c0_158, %c0_159] : memref<16x128xf32, #tpu.memory_space<vmem>>, vector<16x128xf32>
    tpu.vector_store %arg8[%c0_158, %c0_159], %380 {strides = array<i32>} : memref<16x128xf32, #tpu.memory_space<vmem>>, vector<16x128xf32>,
    %c0_160 = arith.constant 0 : index
    %c0_161 = arith.constant 0 : index
    %386 = vector.load %arg9[%c0_160, %c0_161] : memref<16x128xf32, #tpu.memory_space<vmem>>, vector<16x128xf32>
    tpu.vector_store %arg9[%c0_160, %c0_161], %378 {strides = array<i32>} : memref<16x128xf32, #tpu.memory_space<vmem>>, vector<16x128xf32>,
    %c7_i32 = arith.constant 7 : i32
    %387 = arith.index_cast %c7_i32 : i32 to index
    %c0_162 = arith.constant 0 : index
    %c0_163 = arith.constant 0 : index
    %388 = vector.load %arg1[%387, %c0_162, %c0_163] : memref<8x16x128xbf16, #tpu.memory_space<vmem>>, vector<1x16x128xbf16>
    %389 = vector.shape_cast %388 : vector<1x16x128xbf16> to vector<16x128xbf16>
    %c0_164 = arith.constant 0 : index
    %c0_165 = arith.constant 0 : index
    %390 = vector.load %arg8[%c0_164, %c0_165] : memref<16x128xf32, #tpu.memory_space<vmem>>, vector<16x128xf32>
    %c0_166 = arith.constant 0 : index
    %c0_167 = arith.constant 0 : index
    %391 = vector.load %arg9[%c0_166, %c0_167] : memref<16x128xf32, #tpu.memory_space<vmem>>, vector<16x128xf32>
    %392 = arith.truncf %390 : vector<16x128xf32> to vector<16x128xbf16>
    %cst_168 = arith.constant dense<0.000000e+00> : vector<16x128xf32>
    %393 = tpu.matmul %392, %2, %cst_168 {dimension_numbers = #tpu.dot_dimension_numbers<[1], [0], [0], [1], [0, 0, 1, 1], [], []>} : vector<16x128xbf16>, vector<128x128xbf16>, vector<16x128xf32> -> vector<16x128xf32>
    %394 = vector.shape_cast %393 : vector<16x128xf32> to vector<16x1x128xf32>
    %395 = vector.broadcast %394 : vector<16x1x128xf32> to vector<16x8x128xf32>
    %396 = arith.mulf %395, %1 : vector<16x8x128xf32>
    %cst_169 = arith.constant dense<0.000000e+00> : vector<16x8xf32>
    %397 = vector.multi_reduction <add>, %396, %cst_169 [2] : vector<16x8x128xf32> to vector<16x8xf32>
    %cst_170 = arith.constant dense<0xFF800000> : vector<16xf32>
    %398 = vector.multi_reduction <maximumf>, %397, %cst_170 [1] : vector<16x8xf32> to vector<16xf32>
    %399 = vector.shape_cast %398 : vector<16xf32> to vector<16x1xf32>
    %400 = vector.broadcast %399 : vector<16x1xf32> to vector<16x8xf32>
    %401 = arith.subf %397, %400 : vector<16x8xf32>
    %402 = math.exp %401 : vector<16x8xf32>
    %cst_171 = arith.constant dense<0.000000e+00> : vector<16xf32>
    %403 = vector.multi_reduction <add>, %402, %cst_171 [1] : vector<16x8xf32> to vector<16xf32>
    %404 = vector.shape_cast %403 : vector<16xf32> to vector<16x1xf32>
    %405 = tpu.reciprocal %404 {approx = true} : vector<16x1xf32> -> vector<16x1xf32>
    %406 = vector.broadcast %405 : vector<16x1xf32> to vector<16x8xf32>
    %407 = arith.mulf %402, %406 : vector<16x8xf32>
    %408 = vector.shape_cast %407 : vector<16x8xf32> to vector<16x8x1xf32>
    %409 = vector.broadcast %408 : vector<16x8x1xf32> to vector<16x8x128xf32>
    %410 = arith.mulf %409, %1 : vector<16x8x128xf32>
    %cst_172 = arith.constant dense<0.000000e+00> : vector<16x128xf32>
    %411 = vector.multi_reduction <add>, %410, %cst_172 [1] : vector<16x8x128xf32> to vector<16x128xf32>
    %412 = arith.truncf %411 : vector<16x128xf32> to vector<16x128xbf16>
    %413 = tpu.concatenate %389, %412, %392 in 1 : vector<16x128xbf16>, vector<16x128xbf16>, vector<16x128xbf16> -> vector<16x384xbf16>
    %cst_173 = arith.constant dense<0.000000e+00> : vector<16x512xf32>
    %414 = tpu.matmul %413, %3, %cst_173 {dimension_numbers = #tpu.dot_dimension_numbers<[1], [0], [0], [1], [0, 0, 1, 1], [], []>} : vector<16x384xbf16>, vector<384x512xbf16>, vector<16x512xf32> -> vector<16x512xf32>
    %415 = vector.broadcast %4 : vector<1x512xf32> to vector<16x512xf32>
    %416 = arith.addf %414, %415 : vector<16x512xf32>
    %417 = vector.extract_strided_slice %416 {offsets = [0, 0], sizes = [16, 384], strides = [1, 1]} : vector<16x512xf32> to vector<16x384xf32>
    %cst_174 = arith.constant 5.000000e-01 : f32
    %418 = vector.broadcast %cst_174 : f32 to vector<16x384xf32>
    %419 = arith.mulf %418, %417 : vector<16x384xf32>
    %420 = math.tanh %419 : vector<16x384xf32>
    %cst_175 = arith.constant 1.000000e+00 : f32
    %421 = vector.broadcast %cst_175 : f32 to vector<16x384xf32>
    %422 = arith.addf %420, %421 : vector<16x384xf32>
    %cst_176 = arith.constant 5.000000e-01 : f32
    %423 = vector.broadcast %cst_176 : f32 to vector<16x384xf32>
    %424 = arith.mulf %423, %422 : vector<16x384xf32>
    %425 = vector.extract_strided_slice %424 {offsets = [0, 0], sizes = [16, 128], strides = [1, 1]} : vector<16x384xf32> to vector<16x128xf32>
    %426 = vector.extract_strided_slice %424 {offsets = [0, 128], sizes = [16, 128], strides = [1, 1]} : vector<16x384xf32> to vector<16x128xf32>
    %427 = vector.extract_strided_slice %424 {offsets = [0, 256], sizes = [16, 128], strides = [1, 1]} : vector<16x384xf32> to vector<16x128xf32>
    %428 = vector.extract_strided_slice %416 {offsets = [0, 384], sizes = [16, 128], strides = [1, 1]} : vector<16x512xf32> to vector<16x128xf32>
    %429 = math.tanh %428 : vector<16x128xf32>
    %430 = arith.mulf %426, %391 : vector<16x128xf32>
    %431 = arith.mulf %425, %429 : vector<16x128xf32>
    %432 = arith.addf %430, %431 : vector<16x128xf32>
    %433 = math.tanh %432 : vector<16x128xf32>
    %434 = arith.mulf %427, %433 : vector<16x128xf32>
    %435 = arith.index_cast %c7_i32 : i32 to index
    %c0_177 = arith.constant 0 : index
    %c0_178 = arith.constant 0 : index
    %436 = vector.load %arg7[%435, %c0_177, %c0_178] : memref<8x16x128xf32, #tpu.memory_space<vmem>>, vector<1x16x128xf32>
    %437 = vector.shape_cast %436 : vector<1x16x128xf32> to vector<16x128xf32>
    %438 = vector.shape_cast %434 : vector<16x128xf32> to vector<1x16x128xf32>
    tpu.vector_store %arg7[%435, %c0_177, %c0_178], %438 {strides = array<i32>} : memref<8x16x128xf32, #tpu.memory_space<vmem>>, vector<1x16x128xf32>,
    %c0_179 = arith.constant 0 : index
    %c0_180 = arith.constant 0 : index
    %439 = vector.load %arg8[%c0_179, %c0_180] : memref<16x128xf32, #tpu.memory_space<vmem>>, vector<16x128xf32>
    tpu.vector_store %arg8[%c0_179, %c0_180], %434 {strides = array<i32>} : memref<16x128xf32, #tpu.memory_space<vmem>>, vector<16x128xf32>,
    %c0_181 = arith.constant 0 : index
    %c0_182 = arith.constant 0 : index
    %440 = vector.load %arg9[%c0_181, %c0_182] : memref<16x128xf32, #tpu.memory_space<vmem>>, vector<16x128xf32>
    tpu.vector_store %arg9[%c0_181, %c0_182], %432 {strides = array<i32>} : memref<16x128xf32, #tpu.memory_space<vmem>>, vector<16x128xf32>,
    %c8_i32 = arith.constant 8 : i32
    return
  }
  func.func @transform_0(%arg0: i32) -> (i32, i32, i32) {
    %c0_i32 = arith.constant 0 : i32
    %c0_i32_0 = arith.constant 0 : i32
    %c0_i32_1 = arith.constant 0 : i32
    return %c0_i32, %arg0, %c0_i32_0 : i32, i32, i32
  }
  func.func @transform_1(%arg0: i32) -> (i32, i32, i32) {
    %c0_i32 = arith.constant 0 : i32
    %c0_i32_0 = arith.constant 0 : i32
    %c0_i32_1 = arith.constant 0 : i32
    return %arg0, %c0_i32, %c0_i32_0 : i32, i32, i32
  }
  func.func @transform_2(%arg0: i32) -> (i32, i32) {
    %c0_i32 = arith.constant 0 : i32
    %c0_i32_0 = arith.constant 0 : i32
    return %arg0, %c0_i32 : i32, i32
  }
  func.func @transform_3(%arg0: i32) -> (i32, i32) {
    %c0_i32 = arith.constant 0 : i32
    %c0_i32_0 = arith.constant 0 : i32
    %c0_i32_1 = arith.constant 0 : i32
    return %c0_i32, %c0_i32_0 : i32, i32
  }
  func.func @transform_4(%arg0: i32) -> (i32, i32) {
    %c0_i32 = arith.constant 0 : i32
    %c0_i32_0 = arith.constant 0 : i32
    %c0_i32_1 = arith.constant 0 : i32
    return %c0_i32, %c0_i32_0 : i32, i32
  }
  func.func @transform_5(%arg0: i32) -> (i32, i32) {
    %c0_i32 = arith.constant 0 : i32
    %c0_i32_0 = arith.constant 0 : i32
    %c0_i32_1 = arith.constant 0 : i32
    return %c0_i32, %c0_i32_0 : i32, i32
  }
  func.func @transform_6(%arg0: i32) -> (i32, i32, i32) {
    %c0_i32 = arith.constant 0 : i32
    %c0_i32_0 = arith.constant 0 : i32
    %c0_i32_1 = arith.constant 0 : i32
    return %c0_i32, %arg0, %c0_i32_0 : i32, i32, i32
  }
}

module attributes {stable_mosaic.version = 11 : i64} {
  func.func @_logit_kernel(%arg0: i32, %arg1: memref<128x128xbf16, #tpu.memory_space<vmem>>, %arg2: memref<128x128xbf16, #tpu.memory_space<vmem>>, %arg3: memref<1x128xf32, #tpu.memory_space<vmem>>, %arg4: memref<128x128xf32, #tpu.memory_space<vmem>>) attributes {dimension_semantics = [#tpu.dimension_semantics<parallel>], iteration_bounds = array<i64: 1>, scalar_prefetch = 0 : i64, scratch_operands = 0 : i64, tpu.core_type = #tpu.core_type<tc>, window_params = [{transform_indices = @transform_0, window_bounds = array<i64: 128, 128>}, {pipeline_mode = #tpu.pipeline_mode<synchronous>, transform_indices = @transform_1, window_bounds = array<i64: 128, 128>}, {pipeline_mode = #tpu.pipeline_mode<synchronous>, transform_indices = @transform_2, window_bounds = array<i64: 1, 128>}, {transform_indices = @transform_3, window_bounds = array<i64: 128, 128>}]} {
    %c0 = arith.constant 0 : index
    %c0_0 = arith.constant 0 : index
    %0 = vector.load %arg1[%c0, %c0_0] : memref<128x128xbf16, #tpu.memory_space<vmem>>, vector<128x128xbf16>
    %c0_1 = arith.constant 0 : index
    %c0_2 = arith.constant 0 : index
    %1 = vector.load %arg2[%c0_1, %c0_2] : memref<128x128xbf16, #tpu.memory_space<vmem>>, vector<128x128xbf16>
    %cst = arith.constant dense<0.000000e+00> : vector<128x128xf32>
    %2 = tpu.matmul %0, %1, %cst {dimension_numbers = #tpu.dot_dimension_numbers<[1], [0], [0], [1], [0, 0, 1, 1], [], []>} : vector<128x128xbf16>, vector<128x128xbf16>, vector<128x128xf32> -> vector<128x128xf32>
    %c0_3 = arith.constant 0 : index
    %c0_4 = arith.constant 0 : index
    %3 = vector.load %arg3[%c0_3, %c0_4] : memref<1x128xf32, #tpu.memory_space<vmem>>, vector<1x128xf32>
    %4 = vector.broadcast %3 : vector<1x128xf32> to vector<128x128xf32>
    %5 = arith.addf %2, %4 : vector<128x128xf32>
    %cst_5 = arith.constant dense<0xFF800000> : vector<128xf32>
    %6 = vector.multi_reduction <maximumf>, %5, %cst_5 [1] : vector<128x128xf32> to vector<128xf32>
    %7 = vector.shape_cast %6 : vector<128xf32> to vector<128x1xf32>
    %8 = vector.broadcast %7 : vector<128x1xf32> to vector<128x128xf32>
    %9 = arith.subf %5, %8 : vector<128x128xf32>
    %10 = math.exp %9 : vector<128x128xf32>
    %cst_6 = arith.constant dense<0.000000e+00> : vector<128xf32>
    %11 = vector.multi_reduction <add>, %10, %cst_6 [1] : vector<128x128xf32> to vector<128xf32>
    %12 = vector.shape_cast %11 : vector<128xf32> to vector<128x1xf32>
    %13 = math.log %12 : vector<128x1xf32>
    %14 = arith.addf %13, %7 : vector<128x1xf32>
    %15 = vector.broadcast %14 : vector<128x1xf32> to vector<128x128xf32>
    %16 = arith.subf %5, %15 : vector<128x128xf32>
    %c0_7 = arith.constant 0 : index
    %c0_8 = arith.constant 0 : index
    %17 = vector.load %arg4[%c0_7, %c0_8] : memref<128x128xf32, #tpu.memory_space<vmem>>, vector<128x128xf32>
    tpu.vector_store %arg4[%c0_7, %c0_8], %16 {strides = array<i32>} : memref<128x128xf32, #tpu.memory_space<vmem>>, vector<128x128xf32>,
    return
  }
  func.func @transform_0(%arg0: i32) -> (i32, i32) {
    %c0_i32 = arith.constant 0 : i32
    %c0_i32_0 = arith.constant 0 : i32
    return %arg0, %c0_i32 : i32, i32
  }
  func.func @transform_1(%arg0: i32) -> (i32, i32) {
    %c0_i32 = arith.constant 0 : i32
    %c0_i32_0 = arith.constant 0 : i32
    %c0_i32_1 = arith.constant 0 : i32
    return %c0_i32, %c0_i32_0 : i32, i32
  }
  func.func @transform_2(%arg0: i32) -> (i32, i32) {
    %c0_i32 = arith.constant 0 : i32
    %c0_i32_0 = arith.constant 0 : i32
    %c0_i32_1 = arith.constant 0 : i32
    return %c0_i32, %c0_i32_0 : i32, i32
  }
  func.func @transform_3(%arg0: i32) -> (i32, i32) {
    %c0_i32 = arith.constant 0 : i32
    %c0_i32_0 = arith.constant 0 : i32
    return %arg0, %c0_i32 : i32, i32
  }
}

</mosaic_0001>

<llo_original>
// kernel: _forward_impl.5
$region0: #{_forward_impl.5}
  #allocation0 [shape = 'u32[]', space=smem, size = 0x4, offset = 0x4, fixed_abs, tag = 'smem constant byte address 0x4 - core index']
  #allocation1 [shape = 'u32[144,128]{1,0:T(1,128)}', space=vmem, size = 0x12000, scoped, tag = 'internal scratch']
  %s0 = inlined_call_operand.vmem [shape: bf16[128,48], index: 0, kind: input, shape index: {}]
  %s1 = inlined_call_operand.vmem [shape: bf16[48,128], index: 1, kind: input, shape index: {}]
  %s2 = inlined_call_operand.vmem [shape: f32[1,128], index: 2, kind: input, shape index: {}]
  %s3 = inlined_call_operand.vmem [shape: f32[128,128], index: 3, kind: output, shape index: {}]
  %s4 = sld [smem:[#allocation0]]
  $region22: #{_forward_impl.5} parent=0
    _
  %s6 = ssub.s32 1, %s4
  %s7 = scalar_select 0, %s6, %s4
  // Predicated region
  $region2: #{_forward_impl.5} parent=0 // pred_check
    _
  $region3: #{_forward_impl.5} parent=0 // pred_check_branch
    %9 = sbr.rel (0) target = $region5
  $region4: #{_forward_impl.5} parent=0 // pred_region
    _
  $region5: #{_forward_impl.5} parent=0 // pred_fallthru
    _
  // Predicated region
  $region6: #{_forward_impl.5} parent=0 // pred_check
    _
  $region7: #{_forward_impl.5} parent=0 // pred_check_branch
    %11 = sbr.rel (0) target = $region9
  $region8: #{_forward_impl.5} parent=0 // pred_region
    _
  $region9: #{_forward_impl.5} parent=0 // pred_fallthru
    _
  // Predicated region
  $region10: #{_forward_impl.5} parent=0 // pred_check
    _
  $region11: #{_forward_impl.5} parent=0 // pred_check_branch
    %13 = sbr.rel (0) target = $region13
  $region12: #{_forward_impl.5} parent=0 // pred_region
    _
  $region13: #{_forward_impl.5} parent=0 // pred_fallthru
    _
  %v15 = vld [vmem:[%s0] sm:$0xf]
  %v16 = vld [vmem:[%s0 + $0x4] sm:$0xf]
  %v17 = vld [vmem:[%s0 + $0x8] sm:$0xf]
  %v18 = vld [vmem:[%s0 + $0xc] sm:$0xf]
  %v19 = vld [vmem:[%s0 + $0x10] sm:$0xf]
  %v20 = vld [vmem:[%s0 + $0x14] sm:$0xf]
  %v21 = vld [vmem:[%s0 + $0x18] sm:$0xf]
  %v22 = vld [vmem:[%s0 + $0x1c] sm:$0xf]
  %v23 = vld [vmem:[%s0 + $0x20] sm:$0xf]
  %v24 = vld [vmem:[%s0 + $0x24] sm:$0xf]
  %v25 = vld [vmem:[%s0 + $0x28] sm:$0xf]
  %v26 = vld [vmem:[%s0 + $0x2c] sm:$0xf]
  %v27 = vld [vmem:[%s0 + $0x30] sm:$0xf]
  %v28 = vld [vmem:[%s0 + $0x34] sm:$0xf]
  %v29 = vld [vmem:[%s0 + $0x38] sm:$0xf]
  %v30 = vld [vmem:[%s0 + $0x3c] sm:$0xf]
  %v31 = vld [vmem:[%s1] sm:$0xf]
  %v32 = vld [vmem:[%s1 + $0x4] sm:$0xf]
  %v33 = vld [vmem:[%s1 + $0x8] sm:$0xf]
  %v34 = vld [vmem:[%s1 + $0xc] sm:$0xf]
  %v35 = vld [vmem:[%s1 + $0x10] sm:$0xf]
  %v36 = vld [vmem:[%s1 + $0x14] sm:$0xf]
  %v37 = vld [vmem:[%s2] sm:$0x1]
  %v39 = vlaneseq
  %v40 = vshrl.u32 %v39, 7
  %v41 = vsub.s32 0, %v40
  %v42 = vrot.slane %v37, %v41
  %v60 = vunpack.c.l.b16 %v15
  %v61 = vunpack.c.l.b16 %v16
  %v62 = vunpack.c.l.b16 %v17
  %v63 = vunpack.c.l.b16 %v18
  %v64 = vunpack.c.l.b16 %v19
  %v65 = vunpack.c.l.b16 %v20
  %v66 = vunpack.c.l.b16 %v21
  %v67 = vunpack.c.l.b16 %v22
  %v68 = vunpack.c.l.b16 %v23
  %v69 = vunpack.c.l.b16 %v24
  %v70 = vunpack.c.l.b16 %v25
  %v71 = vunpack.c.l.b16 %v26
  %v72 = vunpack.c.l.b16 %v27
  %v73 = vunpack.c.l.b16 %v28
  %v74 = vunpack.c.l.b16 %v29
  %v75 = vunpack.c.l.b16 %v30
  %v76 = vpack.c.b16 %v61, %v60
  %v77 = vpack.c.b16 %v63, %v62
  %v78 = vpack.c.b16 %v65, %v64
  %v79 = vpack.c.b16 %v67, %v66
  %v80 = vpack.c.b16 %v69, %v68
  %v81 = vpack.c.b16 %v71, %v70
  %v82 = vpack.c.b16 %v73, %v72
  %v83 = vpack.c.b16 %v75, %v74
  %v90 = vunpack.c.l.b16 %v31
  %v91 = vunpack.c.l.b16 %v32
  %v92 = vunpack.c.l.b16 %v33
  %v93 = vunpack.c.l.b16 %v34
  %v94 = vunpack.c.l.b16 %v35
  %v95 = vunpack.c.l.b16 %v36
  %v96 = vpack.c.b16 %v91, %v90
  %v97 = vpack.c.b16 %v93, %v92
  %v98 = vpack.c.b16 %v95, %v94
  %vm102 = vcmask 392192
  %v104 = vsel %vm102, %v76, 0
  %v107 = vsel %vm102, %v77, 0
  %v110 = vsel %vm102, %v78, 0
  %v113 = vsel %vm102, %v79, 0
  %v116 = vsel %vm102, %v80, 0
  %v119 = vsel %vm102, %v81, 0
  %v122 = vsel %vm102, %v82, 0
  %v125 = vsel %vm102, %v83, 0
  %127 = vmatprep.subr.bf16.mxu0 0
  %128 = vmatpush1.bf16.msra.mxu0 0
  %129 = vmatprep.subr.bf16.mxu0 0
  %130 = vmatpush1.bf16.msra.mxu0 0
  %131 = vmatprep.subr.bf16.mxu0 0
  %132 = vmatpush1.bf16.msra.mxu0 0
  %133 = vmatprep.subr.bf16.mxu0 0
  %134 = vmatpush1.bf16.msra.mxu0 0
  %135 = vmatprep.subr.bf16.mxu0 0
  %136 = vmatpush1.bf16.msra.mxu0 0
  %137 = vmatprep.subr.bf16.mxu0 0
  %138 = vmatpush1.bf16.msra.mxu0 %v98
  %139 = vmatprep.subr.bf16.mxu0 0
  %140 = vmatpush1.bf16.msra.mxu0 %v97
  %141 = vmatprep.subr.bf16.mxu0 0
  %142 = vmatpush1.bf16.msra.mxu0 %v96
  %143 = vmatprep.subr.bf16.mxu0 0
  %144 = vmatpush2.bf16.msra.mxu0 0
  %145 = vmatprep.subr.bf16.mxu0 0
  %146 = vmatpush2.bf16.msra.mxu0 0
  %147 = vmatprep.subr.bf16.mxu0 0
  %148 = vmatpush2.bf16.msra.mxu0 0
  %149 = vmatprep.subr.bf16.mxu0 0
  %150 = vmatpush2.bf16.msra.mxu0 0
  %151 = vmatprep.subr.bf16.mxu0 0
  %152 = vmatpush2.bf16.msra.mxu0 0
  %153 = vmatprep.subr.bf16.mxu0 0
  %154 = vmatpush2.bf16.msra.mxu0 0
  %155 = vmatprep.subr.bf16.mxu0 0
  %156 = vmatpush2.bf16.msra.mxu0 0
  %157 = vmatprep.subr.bf16.mxu0 0
  %158 = vmatpush2.bf16.msra.mxu0 0
  %159 = vmatprep.mubr.bf16.mxu0 0
  %160 = vmatmul.mubr.bf16.gmra.mxu0 %v104
  %v161 = vpop.f32.mrf.mxu0
  %v162 = vadd.f32 %v42, %v161
  %v163 = vpop.f32.mrf.mxu0
  %v164 = vpop.f32.mrf.mxu0
  %v165 = vadd.f32 %v42, %v164
  %v166 = vpop.f32.mrf.mxu0
  %167 = vmatprep.mubr.bf16.mxu0 0
  %168 = vmatmul.mubr.bf16.gmra.mxu0 %v107
  %v169 = vpop.f32.mrf.mxu0
  %v170 = vadd.f32 %v42, %v169
  %v171 = vpop.f32.mrf.mxu0
  %v172 = vpop.f32.mrf.mxu0
  %v173 = vadd.f32 %v42, %v172
  %v174 = vpop.f32.mrf.mxu0
  %175 = vmatprep.mubr.bf16.mxu0 0
  %176 = vmatmul.mubr.bf16.gmra.mxu0 %v110
  %v177 = vpop.f32.mrf.mxu0
  %v178 = vadd.f32 %v42, %v177
  %v179 = vpop.f32.mrf.mxu0
  %v180 = vpop.f32.mrf.mxu0
  %v181 = vadd.f32 %v42, %v180
  %v182 = vpop.f32.mrf.mxu0
  %183 = vmatprep.mubr.bf16.mxu0 0
  %184 = vmatmul.mubr.bf16.gmra.mxu0 %v113
  %v185 = vpop.f32.mrf.mxu0
  %v186 = vadd.f32 %v42, %v185
  %v187 = vpop.f32.mrf.mxu0
  %v188 = vpop.f32.mrf.mxu0
  %v189 = vadd.f32 %v42, %v188
  %v190 = vpop.f32.mrf.mxu0
  %191 = vmatprep.mubr.bf16.mxu0 0
  %192 = vmatmul.mubr.bf16.gmra.mxu0 %v116
  %v193 = vpop.f32.mrf.mxu0
  %v194 = vadd.f32 %v42, %v193
  %v195 = vpop.f32.mrf.mxu0
  %v196 = vpop.f32.mrf.mxu0
  %v197 = vadd.f32 %v42, %v196
  %v198 = vpop.f32.mrf.mxu0
  %199 = vmatprep.mubr.bf16.mxu0 0
  %200 = vmatmul.mubr.bf16.gmra.mxu0 %v119
  %v201 = vpop.f32.mrf.mxu0
  %v202 = vadd.f32 %v42, %v201
  %v203 = vpop.f32.mrf.mxu0
  %v204 = vpop.f32.mrf.mxu0
  %v205 = vadd.f32 %v42, %v204
  %v206 = vpop.f32.mrf.mxu0
  %207 = vmatprep.mubr.bf16.mxu0 0
  %208 = vmatmul.mubr.bf16.gmra.mxu0 %v122
  %v209 = vpop.f32.mrf.mxu0
  %v210 = vadd.f32 %v42, %v209
  %v211 = vpop.f32.mrf.mxu0
  %v212 = vpop.f32.mrf.mxu0
  %v213 = vadd.f32 %v42, %v212
  %v214 = vpop.f32.mrf.mxu0
  %215 = vmatprep.mubr.bf16.mxu0 0
  %216 = vmatmul.mubr.bf16.gmra.mxu0 %v125
  %v217 = vpop.f32.mrf.mxu0
  %v218 = vadd.f32 %v42, %v217
  %v219 = vpop.f32.mrf.mxu0
  %v220 = vpop.f32.mrf.mxu0
  %v221 = vadd.f32 %v42, %v220
  %v222 = vpop.f32.mrf.mxu0
  %223 = vdwg.mxu0
  %v224 = vmax.f32 %v162, 0.0
  %v225 = vmax.f32 %v165, 0.0
  %v226 = vmax.f32 %v170, 0.0
  %v227 = vmax.f32 %v173, 0.0
  %v228 = vmax.f32 %v178, 0.0
  %v229 = vmax.f32 %v181, 0.0
  %v230 = vmax.f32 %v186, 0.0
  %v231 = vmax.f32 %v189, 0.0
  %v232 = vmax.f32 %v194, 0.0
  %v233 = vmax.f32 %v197, 0.0
  %v234 = vmax.f32 %v202, 0.0
  %v235 = vmax.f32 %v205, 0.0
  %v236 = vmax.f32 %v210, 0.0
  %v237 = vmax.f32 %v213, 0.0
  %v238 = vmax.f32 %v218, 0.0
  %v239 = vmax.f32 %v221, 0.0
  %240 = vst [vmem:[%s3] sm:$0xff] %v224
  %241 = vst [vmem:[%s3 + $0x8] sm:$0xff] %v225
  %242 = vst [vmem:[%s3 + $0x10] sm:$0xff] %v226
  %243 = vst [vmem:[%s3 + $0x18] sm:$0xff] %v227
  %244 = vst [vmem:[%s3 + $0x20] sm:$0xff] %v228
  %245 = vst [vmem:[%s3 + $0x28] sm:$0xff] %v229
  %246 = vst [vmem:[%s3 + $0x30] sm:$0xff] %v230
  %247 = vst [vmem:[%s3 + $0x38] sm:$0xff] %v231
  %248 = vst [vmem:[%s3 + $0x40] sm:$0xff] %v232
  %249 = vst [vmem:[%s3 + $0x48] sm:$0xff] %v233
  %250 = vst [vmem:[%s3 + $0x50] sm:$0xff] %v234
  %251 = vst [vmem:[%s3 + $0x58] sm:$0xff] %v235
  %252 = vst [vmem:[%s3 + $0x60] sm:$0xff] %v236
  %253 = vst [vmem:[%s3 + $0x68] sm:$0xff] %v237
  %254 = vst [vmem:[%s3 + $0x70] sm:$0xff] %v238
  %255 = vst [vmem:[%s3 + $0x78] sm:$0xff] %v239
  // Predicated region
  $region14: #{_forward_impl.5} parent=0 // pred_check
    _
  $region15: #{_forward_impl.5} parent=0 // pred_check_branch
    %257 = sbr.rel (0) target = $region17
  $region16: #{_forward_impl.5} parent=0 // pred_region
    _
  $region17: #{_forward_impl.5} parent=0 // pred_fallthru
    _
  // Predicated region
  $region18: #{_forward_impl.5} parent=0 // pred_check
    _
  $region19: #{_forward_impl.5} parent=0 // pred_check_branch
    %259 = sbr.rel (0) target = $region21
  $region20: #{_forward_impl.5} parent=0 // pred_region
    _
  $region21: #{_forward_impl.5} parent=0 // pred_fallthru
    _

// kernel: _forward_impl.4
$region0: #{_forward_impl.4}
  #allocation0 [shape = 'u32[]', space=smem, size = 0x4, offset = 0x4, fixed_abs, tag = 'smem constant byte address 0x4 - core index']
  #allocation1 [shape = 'u32[144,128]{1,0:T(1,128)}', space=vmem, size = 0x12000, scoped, tag = 'internal scratch']
  %s0 = inlined_call_operand.vmem [shape: bf16[16,64], index: 0, kind: input, shape index: {}]
  %s1 = inlined_call_operand.vmem [shape: bf16[64,128], index: 1, kind: input, shape index: {}]
  %s2 = inlined_call_operand.vmem [shape: f32[1,128], index: 2, kind: input, shape index: {}]
  %s3 = inlined_call_operand.vmem [shape: f32[16,128], index: 3, kind: output, shape index: {}]
  %s4 = sld [smem:[#allocation0]]
  $region22: #{_forward_impl.4} parent=0
    _
  %s6 = ssub.s32 1, %s4
  %s7 = scalar_select 0, %s6, %s4
  // Predicated region
  $region2: #{_forward_impl.4} parent=0 // pred_check
    _
  $region3: #{_forward_impl.4} parent=0 // pred_check_branch
    %9 = sbr.rel (0) target = $region5
  $region4: #{_forward_impl.4} parent=0 // pred_region
    _
  $region5: #{_forward_impl.4} parent=0 // pred_fallthru
    _
  // Predicated region
  $region6: #{_forward_impl.4} parent=0 // pred_check
    _
  $region7: #{_forward_impl.4} parent=0 // pred_check_branch
    %11 = sbr.rel (0) target = $region9
  $region8: #{_forward_impl.4} parent=0 // pred_region
    _
  $region9: #{_forward_impl.4} parent=0 // pred_fallthru
    _
  // Predicated region
  $region10: #{_forward_impl.4} parent=0 // pred_check
    _
  $region11: #{_forward_impl.4} parent=0 // pred_check_branch
    %13 = sbr.rel (0) target = $region13
  $region12: #{_forward_impl.4} parent=0 // pred_region
    _
  $region13: #{_forward_impl.4} parent=0 // pred_fallthru
    _
  %v15 = vld [vmem:[%s0] sm:$0xf]
  %v16 = vld [vmem:[%s0 + $0x4] sm:$0xf]
  %v17 = vld [vmem:[%s1] sm:$0xf]
  %v18 = vld [vmem:[%s1 + $0x4] sm:$0xf]
  %v19 = vld [vmem:[%s1 + $0x8] sm:$0xf]
  %v20 = vld [vmem:[%s1 + $0xc] sm:$0xf]
  %v21 = vld [vmem:[%s1 + $0x10] sm:$0xf]
  %v22 = vld [vmem:[%s1 + $0x14] sm:$0xf]
  %v23 = vld [vmem:[%s1 + $0x18] sm:$0xf]
  %v24 = vld [vmem:[%s1 + $0x1c] sm:$0xf]
  %v25 = vld [vmem:[%s2] sm:$0x1]
  %v27 = vlaneseq
  %v28 = vshrl.u32 %v27, 7
  %v29 = vsub.s32 0, %v28
  %v30 = vrot.slane %v25, %v29
  %v34 = vunpack.c.l.b16 %v15
  %v35 = vunpack.c.l.b16 %v16
  %v36 = vpack.c.b16 %v35, %v34
  %v45 = vunpack.c.l.b16 %v17
  %v46 = vunpack.c.l.b16 %v18
  %v47 = vunpack.c.l.b16 %v19
  %v48 = vunpack.c.l.b16 %v20
  %v49 = vunpack.c.l.b16 %v21
  %v50 = vunpack.c.l.b16 %v22
  %v51 = vunpack.c.l.b16 %v23
  %v52 = vunpack.c.l.b16 %v24
  %v53 = vpack.c.b16 %v46, %v45
  %v54 = vpack.c.b16 %v48, %v47
  %v55 = vpack.c.b16 %v50, %v49
  %v56 = vpack.c.b16 %v52, %v51
  %vm61 = vcmask 523264
  %v63 = vsel %vm61, %v36, 0
  %65 = vmatprep.subr.bf16.mxu0 0
  %66 = vmatpush1.bf16.msra.mxu0 0
  %67 = vmatprep.subr.bf16.mxu0 0
  %68 = vmatpush1.bf16.msra.mxu0 0
  %69 = vmatprep.subr.bf16.mxu0 0
  %70 = vmatpush1.bf16.msra.mxu0 0
  %71 = vmatprep.subr.bf16.mxu0 0
  %72 = vmatpush1.bf16.msra.mxu0 0
  %73 = vmatprep.subr.bf16.mxu0 0
  %74 = vmatpush1.bf16.msra.mxu0 %v56
  %75 = vmatprep.subr.bf16.mxu0 0
  %76 = vmatpush1.bf16.msra.mxu0 %v55
  %77 = vmatprep.subr.bf16.mxu0 0
  %78 = vmatpush1.bf16.msra.mxu0 %v54
  %79 = vmatprep.subr.bf16.mxu0 0
  %80 = vmatpush1.bf16.msra.mxu0 %v53
  %81 = vmatprep.subr.bf16.mxu0 0
  %82 = vmatpush2.bf16.msra.mxu0 0
  %83 = vmatprep.subr.bf16.mxu0 0
  %84 = vmatpush2.bf16.msra.mxu0 0
  %85 = vmatprep.subr.bf16.mxu0 0
  %86 = vmatpush2.bf16.msra.mxu0 0
  %87 = vmatprep.subr.bf16.mxu0 0
  %88 = vmatpush2.bf16.msra.mxu0 0
  %89 = vmatprep.subr.bf16.mxu0 0
  %90 = vmatpush2.bf16.msra.mxu0 0
  %91 = vmatprep.subr.bf16.mxu0 0
  %92 = vmatpush2.bf16.msra.mxu0 0
  %93 = vmatprep.subr.bf16.mxu0 0
  %94 = vmatpush2.bf16.msra.mxu0 0
  %95 = vmatprep.subr.bf16.mxu0 0
  %96 = vmatpush2.bf16.msra.mxu0 0
  %97 = vmatprep.mubr.bf16.mxu0 0
  %98 = vmatmul.mubr.bf16.gmra.mxu0 %v63
  %v99 = vpop.f32.mrf.mxu0
  %v100 = vadd.f32 %v30, %v99
  %v101 = vpop.f32.mrf.mxu0
  %v102 = vpop.f32.mrf.mxu0
  %v103 = vadd.f32 %v30, %v102
  %v104 = vpop.f32.mrf.mxu0
  %105 = vdwg.mxu0
  %v106 = vmax.f32 %v100, 0.0
  %v107 = vmax.f32 %v103, 0.0
  %108 = vst [vmem:[%s3] sm:$0xff] %v106
  %109 = vst [vmem:[%s3 + $0x8] sm:$0xff] %v107
  // Predicated region
  $region14: #{_forward_impl.4} parent=0 // pred_check
    _
  $region15: #{_forward_impl.4} parent=0 // pred_check_branch
    %111 = sbr.rel (0) target = $region17
  $region16: #{_forward_impl.4} parent=0 // pred_region
    _
  $region17: #{_forward_impl.4} parent=0 // pred_fallthru
    _
  // Predicated region
  $region18: #{_forward_impl.4} parent=0 // pred_check
    _
  $region19: #{_forward_impl.4} parent=0 // pred_check_branch
    %113 = sbr.rel (0) target = $region21
  $region20: #{_forward_impl.4} parent=0 // pred_region
    _
  $region21: #{_forward_impl.4} parent=0 // pred_fallthru
    _

// kernel: _forward_impl.7
$region0: #{_forward_impl.7}
  #allocation0 [shape = 'u32[]', space=smem, size = 0x4, offset = 0x4, fixed_abs, tag = 'smem constant byte address 0x4 - core index']
  #allocation1 [shape = 'u32[144,128]{1,0:T(1,128)}', space=vmem, size = 0x12000, scoped, tag = 'internal scratch']
  %s0 = inlined_call_operand.vmem [shape: bf16[128,128], index: 0, kind: input, shape index: {}]
  %s1 = inlined_call_operand.vmem [shape: bf16[128,128], index: 1, kind: input, shape index: {}]
  %s2 = inlined_call_operand.vmem [shape: f32[1,128], index: 2, kind: input, shape index: {}]
  %s3 = inlined_call_operand.hbm [shape: f32[128,128], index: 3, kind: output, shape index: {}]
  %s4 = sld [smem:[#allocation0]]
  $region22: #{_forward_impl.7} parent=0
    _
  %s6 = ssub.s32 1, %s4
  %s7 = scalar_select 0, %s6, %s4
  $region1: #{_forward_impl.7} parent=0
    #allocation2 [shape = 'u8[65536]{0}', space=vmem, size = 0x10000, scoped, tag = 'output window, operand 0, single buffered']
    #allocation3 [shape = 's32[1]{0}', space=sflag, size = 0x4, scoped, tag = 'scoped memory for _forward_impl.7']
    %8 = vsyncpa [#allocation3], 0
    // Predicated region
    $region2: #{_forward_impl.7} parent=1 // pred_check
      _
    $region3: #{_forward_impl.7} parent=1 // pred_check_branch
      %10 = sbr.rel (0) target = $region5
    $region4: #{_forward_impl.7} parent=1 // pred_region
      _
    $region5: #{_forward_impl.7} parent=1 // pred_fallthru
      _
    // Predicated region
    $region6: #{_forward_impl.7} parent=1 // pred_check
      _
    $region7: #{_forward_impl.7} parent=1 // pred_check_branch
      %12 = sbr.rel (0) target = $region9
    $region8: #{_forward_impl.7} parent=1 // pred_region
      _
    $region9: #{_forward_impl.7} parent=1 // pred_fallthru
      _
    // Predicated region
    $region10: #{_forward_impl.7} parent=1 // pred_check
      _
    $region11: #{_forward_impl.7} parent=1 // pred_check_branch
      %14 = sbr.rel (0) target = $region13
    $region12: #{_forward_impl.7} parent=1 // pred_region
      _
    $region13: #{_forward_impl.7} parent=1 // pred_fallthru
      _
    %v16 = vld [vmem:[%s0] sm:$0xf]
    %v17 = vld [vmem:[%s0 + $0x4] sm:$0xf]
    %v18 = vld [vmem:[%s0 + $0x8] sm:$0xf]
    %v19 = vld [vmem:[%s0 + $0xc] sm:$0xf]
    %v20 = vld [vmem:[%s0 + $0x10] sm:$0xf]
    %v21 = vld [vmem:[%s0 + $0x14] sm:$0xf]
    %v22 = vld [vmem:[%s0 + $0x18] sm:$0xf]
    %v23 = vld [vmem:[%s0 + $0x1c] sm:$0xf]
    %v24 = vld [vmem:[%s0 + $0x20] sm:$0xf]
    %v25 = vld [vmem:[%s0 + $0x24] sm:$0xf]
    %v26 = vld [vmem:[%s0 + $0x28] sm:$0xf]
    %v27 = vld [vmem:[%s0 + $0x2c] sm:$0xf]
    %v28 = vld [vmem:[%s0 + $0x30] sm:$0xf]
    %v29 = vld [vmem:[%s0 + $0x34] sm:$0xf]
    %v30 = vld [vmem:[%s0 + $0x38] sm:$0xf]
    %v31 = vld [vmem:[%s0 + $0x3c] sm:$0xf]
    %v32 = vld [vmem:[%s1] sm:$0xf]
    %v33 = vld [vmem:[%s1 + $0x4] sm:$0xf]
    %v34 = vld [vmem:[%s1 + $0x8] sm:$0xf]
    %v35 = vld [vmem:[%s1 + $0xc] sm:$0xf]
    %v36 = vld [vmem:[%s1 + $0x10] sm:$0xf]
    %v37 = vld [vmem:[%s1 + $0x14] sm:$0xf]
    %v38 = vld [vmem:[%s1 + $0x18] sm:$0xf]
    %v39 = vld [vmem:[%s1 + $0x1c] sm:$0xf]
    %v40 = vld [vmem:[%s1 + $0x20] sm:$0xf]
    %v41 = vld [vmem:[%s1 + $0x24] sm:$0xf]
    %v42 = vld [vmem:[%s1 + $0x28] sm:$0xf]
    %v43 = vld [vmem:[%s1 + $0x2c] sm:$0xf]
    %v44 = vld [vmem:[%s1 + $0x30] sm:$0xf]
    %v45 = vld [vmem:[%s1 + $0x34] sm:$0xf]
    %v46 = vld [vmem:[%s1 + $0x38] sm:$0xf]
    %v47 = vld [vmem:[%s1 + $0x3c] sm:$0xf]
    %v48 = vld [vmem:[%s2] sm:$0x1]
    %v50 = vlaneseq
    %v51 = vshrl.u32 %v50, 7
    %v52 = vsub.s32 0, %v51
    %v53 = vrot.slane %v48, %v52
    %v71 = vunpack.c.l.b16 %v16
    %v72 = vunpack.c.l.b16 %v17
    %v73 = vunpack.c.l.b16 %v18
    %v74 = vunpack.c.l.b16 %v19
    %v75 = vunpack.c.l.b16 %v20
    %v76 = vunpack.c.l.b16 %v21
    %v77 = vunpack.c.l.b16 %v22
    %v78 = vunpack.c.l.b16 %v23
    %v79 = vunpack.c.l.b16 %v24
    %v80 = vunpack.c.l.b16 %v25
    %v81 = vunpack.c.l.b16 %v26
    %v82 = vunpack.c.l.b16 %v27
    %v83 = vunpack.c.l.b16 %v28
    %v84 = vunpack.c.l.b16 %v29
    %v85 = vunpack.c.l.b16 %v30
    %v86 = vunpack.c.l.b16 %v31
    %v87 = vpack.c.b16 %v72, %v71
    %v88 = vpack.c.b16 %v74, %v73
    %v89 = vpack.c.b16 %v76, %v75
    %v90 = vpack.c.b16 %v78, %v77
    %v91 = vpack.c.b16 %v80, %v79
    %v92 = vpack.c.b16 %v82, %v81
    %v93 = vpack.c.b16 %v84, %v83
    %v94 = vpack.c.b16 %v86, %v85
    %v119 = vunpack.c.l.b16 %v32
    %v120 = vunpack.c.l.b16 %v33
    %v121 = vunpack.c.l.b16 %v34
    %v122 = vunpack.c.l.b16 %v35
    %v123 = vunpack.c.l.b16 %v36
    %v124 = vunpack.c.l.b16 %v37
    %v125 = vunpack.c.l.b16 %v38
    %v126 = vunpack.c.l.b16 %v39
    %v127 = vunpack.c.l.b16 %v40
    %v128 = vunpack.c.l.b16 %v41
    %v129 = vunpack.c.l.b16 %v42
    %v130 = vunpack.c.l.b16 %v43
    %v131 = vunpack.c.l.b16 %v44
    %v132 = vunpack.c.l.b16 %v45
    %v133 = vunpack.c.l.b16 %v46
    %v134 = vunpack.c.l.b16 %v47
    %v135 = vpack.c.b16 %v120, %v119
    %v136 = vpack.c.b16 %v122, %v121
    %v137 = vpack.c.b16 %v124, %v123
    %v138 = vpack.c.b16 %v126, %v125
    %v139 = vpack.c.b16 %v128, %v127
    %v140 = vpack.c.b16 %v130, %v129
    %v141 = vpack.c.b16 %v132, %v131
    %v142 = vpack.c.b16 %v134, %v133
    %151 = vmatprep.subr.bf16.mxu0 0
    %152 = vmatpush1.bf16.msra.mxu0 %v142
    %153 = vmatprep.subr.bf16.mxu0 0
    %154 = vmatpush1.bf16.msra.mxu0 %v141
    %155 = vmatprep.subr.bf16.mxu0 0
    %156 = vmatpush1.bf16.msra.mxu0 %v140
    %157 = vmatprep.subr.bf16.mxu0 0
    %158 = vmatpush1.bf16.msra.mxu0 %v139
    %159 = vmatprep.subr.bf16.mxu0 0
    %160 = vmatpush1.bf16.msra.mxu0 %v138
    %161 = vmatprep.subr.bf16.mxu0 0
    %162 = vmatpush1.bf16.msra.mxu0 %v137
    %163 = vmatprep.subr.bf16.mxu0 0
    %164 = vmatpush1.bf16.msra.mxu0 %v136
    %165 = vmatprep.subr.bf16.mxu0 0
    %166 = vmatpush1.bf16.msra.mxu0 %v135
    %167 = vmatprep.subr.bf16.mxu0 0
    %168 = vmatpush2.bf16.msra.mxu0 0
    %169 = vmatprep.subr.bf16.mxu0 0
    %170 = vmatpush2.bf16.msra.mxu0 0
    %171 = vmatprep.subr.bf16.mxu0 0
    %172 = vmatpush2.bf16.msra.mxu0 0
    %173 = vmatprep.subr.bf16.mxu0 0
    %174 = vmatpush2.bf16.msra.mxu0 0
    %175 = vmatprep.subr.bf16.mxu0 0
    %176 = vmatpush2.bf16.msra.mxu0 0
    %177 = vmatprep.subr.bf16.mxu0 0
    %178 = vmatpush2.bf16.msra.mxu0 0
    %179 = vmatprep.subr.bf16.mxu0 0
    %180 = vmatpush2.bf16.msra.mxu0 0
    %181 = vmatprep.subr.bf16.mxu0 0
    %182 = vmatpush2.bf16.msra.mxu0 0
    %183 = vmatprep.mubr.bf16.mxu0 0
    %184 = vmatmul.mubr.bf16.gmra.mxu0 %v87
    %v185 = vpop.f32.mrf.mxu0
    %v186 = vadd.f32 %v53, %v185
    %v187 = vpop.f32.mrf.mxu0
    %v188 = vpop.f32.mrf.mxu0
    %v189 = vadd.f32 %v53, %v188
    %v190 = vpop.f32.mrf.mxu0
    %191 = vmatprep.mubr.bf16.mxu0 0
    %192 = vmatmul.mubr.bf16.gmra.mxu0 %v88
    %v193 = vpop.f32.mrf.mxu0
    %v194 = vadd.f32 %v53, %v193
    %v195 = vpop.f32.mrf.mxu0
    %v196 = vpop.f32.mrf.mxu0
    %v197 = vadd.f32 %v53, %v196
    %v198 = vpop.f32.mrf.mxu0
    %199 = vmatprep.mubr.bf16.mxu0 0
    %200 = vmatmul.mubr.bf16.gmra.mxu0 %v89
    %v201 = vpop.f32.mrf.mxu0
    %v202 = vadd.f32 %v53, %v201
    %v203 = vpop.f32.mrf.mxu0
    %v204 = vpop.f32.mrf.mxu0
    %v205 = vadd.f32 %v53, %v204
    %v206 = vpop.f32.mrf.mxu0
    %207 = vmatprep.mubr.bf16.mxu0 0
    %208 = vmatmul.mubr.bf16.gmra.mxu0 %v90
    %v209 = vpop.f32.mrf.mxu0
    %v210 = vadd.f32 %v53, %v209
    %v211 = vpop.f32.mrf.mxu0
    %v212 = vpop.f32.mrf.mxu0
    %v213 = vadd.f32 %v53, %v212
    %v214 = vpop.f32.mrf.mxu0
    %215 = vmatprep.mubr.bf16.mxu0 0
    %216 = vmatmul.mubr.bf16.gmra.mxu0 %v91
    %v217 = vpop.f32.mrf.mxu0
    %v218 = vadd.f32 %v53, %v217
    %v219 = vpop.f32.mrf.mxu0
    %v220 = vpop.f32.mrf.mxu0
    %v221 = vadd.f32 %v53, %v220
    %v222 = vpop.f32.mrf.mxu0
    %223 = vmatprep.mubr.bf16.mxu0 0
    %224 = vmatmul.mubr.bf16.gmra.mxu0 %v92
    %v225 = vpop.f32.mrf.mxu0
    %v226 = vadd.f32 %v53, %v225
    %v227 = vpop.f32.mrf.mxu0
    %v228 = vpop.f32.mrf.mxu0
    %v229 = vadd.f32 %v53, %v228
    %v230 = vpop.f32.mrf.mxu0
    %231 = vmatprep.mubr.bf16.mxu0 0
    %232 = vmatmul.mubr.bf16.gmra.mxu0 %v93
    %v233 = vpop.f32.mrf.mxu0
    %v234 = vadd.f32 %v53, %v233
    %v235 = vpop.f32.mrf.mxu0
    %v236 = vpop.f32.mrf.mxu0
    %v237 = vadd.f32 %v53, %v236
    %v238 = vpop.f32.mrf.mxu0
    %239 = vmatprep.mubr.bf16.mxu0 0
    %240 = vmatmul.mubr.bf16.gmra.mxu0 %v94
    %v241 = vpop.f32.mrf.mxu0
    %v242 = vadd.f32 %v53, %v241
    %v243 = vpop.f32.mrf.mxu0
    %v244 = vpop.f32.mrf.mxu0
    %v245 = vadd.f32 %v53, %v244
    %v246 = vpop.f32.mrf.mxu0
    %247 = vdwg.mxu0
    %248 = vmax.xlane.f32.xlu0 %v186
    %v249 = vpop.xlane.xlu0 %248
    %250 = vmax.xlane.f32.xlu0 %v189
    %v251 = vpop.xlane.xlu0 %250
    %252 = vmax.xlane.f32.xlu0 %v194
    %v253 = vpop.xlane.xlu0 %252
    %254 = vmax.xlane.f32.xlu0 %v197
    %v255 = vpop.xlane.xlu0 %254
    %256 = vmax.xlane.f32.xlu0 %v202
    %v257 = vpop.xlane.xlu0 %256
    %258 = vmax.xlane.f32.xlu0 %v205
    %v259 = vpop.xlane.xlu0 %258
    %260 = vmax.xlane.f32.xlu0 %v210
    %v261 = vpop.xlane.xlu0 %260
    %262 = vmax.xlane.f32.xlu0 %v213
    %v263 = vpop.xlane.xlu0 %262
    %264 = vmax.xlane.f32.xlu0 %v218
    %v265 = vpop.xlane.xlu0 %264
    %266 = vmax.xlane.f32.xlu0 %v221
    %v267 = vpop.xlane.xlu0 %266
    %268 = vmax.xlane.f32.xlu0 %v226
    %v269 = vpop.xlane.xlu0 %268
    %270 = vmax.xlane.f32.xlu0 %v229
    %v271 = vpop.xlane.xlu0 %270
    %272 = vmax.xlane.f32.xlu0 %v234
    %v273 = vpop.xlane.xlu0 %272
    %274 = vmax.xlane.f32.xlu0 %v237
    %v275 = vpop.xlane.xlu0 %274
    %276 = vmax.xlane.f32.xlu0 %v242
    %v277 = vpop.xlane.xlu0 %276
    %278 = vmax.xlane.f32.xlu0 %v245
    %v279 = vpop.xlane.xlu0 %278
    %v280 = vsub.f32 %v186, %v249
    %v281 = vsub.f32 %v189, %v251
    %v282 = vsub.f32 %v194, %v253
    %v283 = vsub.f32 %v197, %v255
    %v284 = vsub.f32 %v202, %v257
    %v285 = vsub.f32 %v205, %v259
    %v286 = vsub.f32 %v210, %v261
    %v287 = vsub.f32 %v213, %v263
    %v288 = vsub.f32 %v218, %v265
    %v289 = vsub.f32 %v221, %v267
    %v290 = vsub.f32 %v226, %v269
    %v291 = vsub.f32 %v229, %v271
    %v292 = vsub.f32 %v234, %v273
    %v293 = vsub.f32 %v237, %v275
    %v294 = vsub.f32 %v242, %v277
    %v295 = vsub.f32 %v245, %v279
    %v296 = vmul.f32 %v280, 1.442695
    %v297 = vpow.pop %v296
    %v298 = vmul.f32 %v281, 1.442695
    %v299 = vpow.pop %v298
    %v300 = vmul.f32 %v282, 1.442695
    %v301 = vpow.pop %v300
    %v302 = vmul.f32 %v283, 1.442695
    %v303 = vpow.pop %v302
    %v304 = vmul.f32 %v284, 1.442695
    %v305 = vpow.pop %v304
    %v306 = vmul.f32 %v285, 1.442695
    %v307 = vpow.pop %v306
    %v308 = vmul.f32 %v286, 1.442695
    %v309 = vpow.pop %v308
    %v310 = vmul.f32 %v287, 1.442695
    %v311 = vpow.pop %v310
    %v312 = vmul.f32 %v288, 1.442695
    %v313 = vpow.pop %v312
    %v314 = vmul.f32 %v289, 1.442695
    %v315 = vpow.pop %v314
    %v316 = vmul.f32 %v290, 1.442695
    %v317 = vpow.pop %v316
    %v318 = vmul.f32 %v291, 1.442695
    %v319 = vpow.pop %v318
    %v320 = vmul.f32 %v292, 1.442695
    %v321 = vpow.pop %v320
    %v322 = vmul.f32 %v293, 1.442695
    %v323 = vpow.pop %v322
    %v324 = vmul.f32 %v294, 1.442695
    %v325 = vpow.pop %v324
    %v326 = vmul.f32 %v295, 1.442695
    %v327 = vpow.pop %v326
    %328 = vadd.xlane.f32.xlu0 %v297
    %v329 = vpop.xlane.xlu0 %328
    %330 = vadd.xlane.f32.xlu0 %v299
    %v331 = vpop.xlane.xlu0 %330
    %332 = vadd.xlane.f32.xlu0 %v301
    %v333 = vpop.xlane.xlu0 %332
    %334 = vadd.xlane.f32.xlu0 %v303
    %v335 = vpop.xlane.xlu0 %334
    %336 = vadd.xlane.f32.xlu0 %v305
    %v337 = vpop.xlane.xlu0 %336
    %338 = vadd.xlane.f32.xlu0 %v307
    %v339 = vpop.xlane.xlu0 %338
    %340 = vadd.xlane.f32.xlu0 %v309
    %v341 = vpop.xlane.xlu0 %340
    %342 = vadd.xlane.f32.xlu0 %v311
    %v343 = vpop.xlane.xlu0 %342
    %344 = vadd.xlane.f32.xlu0 %v313
    %v345 = vpop.xlane.xlu0 %344
    %346 = vadd.xlane.f32.xlu0 %v315
    %v347 = vpop.xlane.xlu0 %346
    %348 = vadd.xlane.f32.xlu0 %v317
    %v349 = vpop.xlane.xlu0 %348
    %350 = vadd.xlane.f32.xlu0 %v319
    %v351 = vpop.xlane.xlu0 %350
    %352 = vadd.xlane.f32.xlu0 %v321
    %v353 = vpop.xlane.xlu0 %352
    %354 = vadd.xlane.f32.xlu0 %v323
    %v355 = vpop.xlane.xlu0 %354
    %356 = vadd.xlane.f32.xlu0 %v325
    %v357 = vpop.xlane.xlu0 %356
    %358 = vadd.xlane.f32.xlu0 %v327
    %v359 = vpop.xlane.xlu0 %358
    %v360 = vlog2.pop %v329
    %v361 = vmul.f32 %v360, 0.6931472
    %v362 = vlog2.pop %v331
    %v363 = vmul.f32 %v362, 0.6931472
    %v364 = vlog2.pop %v333
    %v365 = vmul.f32 %v364, 0.6931472
    %v366 = vlog2.pop %v335
    %v367 = vmul.f32 %v366, 0.6931472
    %v368 = vlog2.pop %v337
    %v369 = vmul.f32 %v368, 0.6931472
    %v370 = vlog2.pop %v339
    %v371 = vmul.f32 %v370, 0.6931472
    %v372 = vlog2.pop %v341
    %v373 = vmul.f32 %v372, 0.6931472
    %v374 = vlog2.pop %v343
    %v375 = vmul.f32 %v374, 0.6931472
    %v376 = vlog2.pop %v345
    %v377 = vmul.f32 %v376, 0.6931472
    %v378 = vlog2.pop %v347
    %v379 = vmul.f32 %v378, 0.6931472
    %v380 = vlog2.pop %v349
    %v381 = vmul.f32 %v380, 0.6931472
    %v382 = vlog2.pop %v351
    %v383 = vmul.f32 %v382, 0.6931472
    %v384 = vlog2.pop %v353
    %v385 = vmul.f32 %v384, 0.6931472
    %v386 = vlog2.pop %v355
    %v387 = vmul.f32 %v386, 0.6931472
    %v388 = vlog2.pop %v357
    %v389 = vmul.f32 %v388, 0.6931472
    %v390 = vlog2.pop %v359
    %v391 = vmul.f32 %v390, 0.6931472
    %v392 = vadd.f32 %v361, %v249
    %v393 = vadd.f32 %v363, %v251
    %v394 = vadd.f32 %v365, %v253
    %v395 = vadd.f32 %v367, %v255
    %v396 = vadd.f32 %v369, %v257
    %v397 = vadd.f32 %v371, %v259
    %v398 = vadd.f32 %v373, %v261
    %v399 = vadd.f32 %v375, %v263
    %v400 = vadd.f32 %v377, %v265
    %v401 = vadd.f32 %v379, %v267
    %v402 = vadd.f32 %v381, %v269
    %v403 = vadd.f32 %v383, %v271
    %v404 = vadd.f32 %v385, %v273
    %v405 = vadd.f32 %v387, %v275
    %v406 = vadd.f32 %v389, %v277
    %v407 = vadd.f32 %v391, %v279
    %v408 = vsub.f32 %v186, %v392
    %v409 = vsub.f32 %v189, %v393
    %v410 = vsub.f32 %v194, %v394
    %v411 = vsub.f32 %v197, %v395
    %v412 = vsub.f32 %v202, %v396
    %v413 = vsub.f32 %v205, %v397
    %v414 = vsub.f32 %v210, %v398
    %v415 = vsub.f32 %v213, %v399
    %v416 = vsub.f32 %v218, %v400
    %v417 = vsub.f32 %v221, %v401
    %v418 = vsub.f32 %v226, %v402
    %v419 = vsub.f32 %v229, %v403
    %v420 = vsub.f32 %v234, %v404
    %v421 = vsub.f32 %v237, %v405
    %v422 = vsub.f32 %v242, %v406
    %v423 = vsub.f32 %v245, %v407
    %424 = vst [vmem:[#allocation2] sm:$0xff] %v408
    %425 = vst [vmem:[#allocation2 + $0x8] sm:$0xff] %v409
    %426 = vst [vmem:[#allocation2 + $0x10] sm:$0xff] %v410
    %427 = vst [vmem:[#allocation2 + $0x18] sm:$0xff] %v411
    %428 = vst [vmem:[#allocation2 + $0x20] sm:$0xff] %v412
    %429 = vst [vmem:[#allocation2 + $0x28] sm:$0xff] %v413
    %430 = vst [vmem:[#allocation2 + $0x30] sm:$0xff] %v414
    %431 = vst [vmem:[#allocation2 + $0x38] sm:$0xff] %v415
    %432 = vst [vmem:[#allocation2 + $0x40] sm:$0xff] %v416
    %433 = vst [vmem:[#allocation2 + $0x48] sm:$0xff] %v417
    %434 = vst [vmem:[#allocation2 + $0x50] sm:$0xff] %v418
    %435 = vst [vmem:[#allocation2 + $0x58] sm:$0xff] %v419
    %436 = vst [vmem:[#allocation2 + $0x60] sm:$0xff] %v420
    %437 = vst [vmem:[#allocation2 + $0x68] sm:$0xff] %v421
    %438 = vst [vmem:[#allocation2 + $0x70] sm:$0xff] %v422
    %439 = vst [vmem:[#allocation2 + $0x78] sm:$0xff] %v423
    // Predicated region
    $region14: #{_forward_impl.7} parent=1 // pred_check
      _
    $region15: #{_forward_impl.7} parent=1 // pred_check_branch
      %441 = sbr.rel (0) target = $region17
    $region16: #{_forward_impl.7} parent=1 // pred_region
      %s443 = ssub.s32 2048, 2048
      %444 = vsyncadd [#allocation3], %s443
      %s445 = sshll.u32 [#allocation2], 4
      %s446 = int_to_ptr.vmem [resolvable:$true] %s445
      %451 = dma.vmem_to_hbm [thread:$0]  %s446, 2048, %s3, [#allocation3], 128, 128, 8
    $region17: #{_forward_impl.7} parent=1 // pred_fallthru
      _
    // Predicated region
    $region18: #{_forward_impl.7} parent=1 // pred_check
      _
    $region19: #{_forward_impl.7} parent=1 // pred_check_branch
      %453 = sbr.rel (0) target = $region21
    $region20: #{_forward_impl.7} parent=1 // pred_region
      %454 = dma.done [#allocation3], 2048
    $region21: #{_forward_impl.7} parent=1 // pred_fallthru
      _
    %455 = vsyncpa [#allocation3], 1

// kernel: _forward_impl.6
$region0: #{_forward_impl.6}
  #allocation0 [shape = 'u32[]', space=smem, size = 0x4, offset = 0x4, fixed_abs, tag = 'smem constant byte address 0x4 - core index']
  #allocation1 [shape = 'u32[144,128]{1,0:T(1,128)}', space=vmem, size = 0x12000, scoped, tag = 'internal scratch']
  #allocation2 [shape = 'f32[16,128]{1,0:T(8,128)}', space=vmem, size = 0x2000, scoped, tag = 'scratch operand']
  #allocation3 [shape = 'f32[16,128]{1,0:T(8,128)}', space=vmem, size = 0x2000, scoped, tag = 'scratch operand']
  %s0 = inlined_call_operand.vmem [shape: bf16[8,16,128], index: 0, kind: input, shape index: {}]
  %s1 = inlined_call_operand.vmem [shape: bf16[16,8,128], index: 1, kind: input, shape index: {}]
  %s2 = inlined_call_operand.vmem [shape: f32[16,128], index: 2, kind: input, shape index: {}]
  %s3 = inlined_call_operand.vmem [shape: bf16[128,128], index: 3, kind: input, shape index: {}]
  %s4 = inlined_call_operand.vmem [shape: bf16[384,512], index: 4, kind: input, shape index: {}]
  %s5 = inlined_call_operand.vmem [shape: f32[1,512], index: 5, kind: input, shape index: {}]
  %s6 = inlined_call_operand.vmem [shape: f32[8,16,128], index: 6, kind: output, shape index: {}]
  %s7 = sld [smem:[#allocation0]]
  $region34: #{_forward_impl.6} parent=0
    _
  %s9 = ssub.s32 1, %s7
  %s10 = scalar_select 0, %s9, %s7
  // Predicated region
  $region2: #{_forward_impl.6} parent=0 // pred_check
    _
  $region3: #{_forward_impl.6} parent=0 // pred_check_branch
    %12 = sbr.rel (0) target = $region5
  $region4: #{_forward_impl.6} parent=0 // pred_region
    _
  $region5: #{_forward_impl.6} parent=0 // pred_fallthru
    _
  // Predicated region
  $region6: #{_forward_impl.6} parent=0 // pred_check
    _
  $region7: #{_forward_impl.6} parent=0 // pred_check_branch
    %14 = sbr.rel (0) target = $region9
  $region8: #{_forward_impl.6} parent=0 // pred_region
    _
  $region9: #{_forward_impl.6} parent=0 // pred_fallthru
    _
  // Predicated region
  $region10: #{_forward_impl.6} parent=0 // pred_check
    _
  $region11: #{_forward_impl.6} parent=0 // pred_check_branch
    %16 = sbr.rel (0) target = $region13
  $region12: #{_forward_impl.6} parent=0 // pred_region
    _
  $region13: #{_forward_impl.6} parent=0 // pred_fallthru
    _
  // Predicated region
  $region14: #{_forward_impl.6} parent=0 // pred_check
    _
  $region15: #{_forward_impl.6} parent=0 // pred_check_branch
    %18 = sbr.rel (0) target = $region17
  $region16: #{_forward_impl.6} parent=0 // pred_region
    _
  $region17: #{_forward_impl.6} parent=0 // pred_fallthru
    _
  // Predicated region
  $region18: #{_forward_impl.6} parent=0 // pred_check
    _
  $region19: #{_forward_impl.6} parent=0 // pred_check_branch
    %20 = sbr.rel (0) target = $region21
  $region20: #{_forward_impl.6} parent=0 // pred_region
    _
  $region21: #{_forward_impl.6} parent=0 // pred_fallthru
    _
  // Predicated region
  $region22: #{_forward_impl.6} parent=0 // pred_check
    _
  $region23: #{_forward_impl.6} parent=0 // pred_check_branch
    %22 = sbr.rel (0) target = $region25
  $region24: #{_forward_impl.6} parent=0 // pred_region
    _
  $region25: #{_forward_impl.6} parent=0 // pred_fallthru
    _
  %v24 = vld [vmem:[%s1] sm:$0xf]
  %v25 = vld [vmem:[%s1 + $0x4] sm:$0xf]
  %v26 = vld [vmem:[%s1 + $0x8] sm:$0xf]
  %v27 = vld [vmem:[%s1 + $0xc] sm:$0xf]
  %v28 = vld [vmem:[%s1 + $0x10] sm:$0xf]
  %v29 = vld [vmem:[%s1 + $0x14] sm:$0xf]
  %v30 = vld [vmem:[%s1 + $0x18] sm:$0xf]
  %v31 = vld [vmem:[%s1 + $0x1c] sm:$0xf]
  %v32 = vld [vmem:[%s1 + $0x20] sm:$0xf]
  %v33 = vld [vmem:[%s1 + $0x24] sm:$0xf]
  %v34 = vld [vmem:[%s1 + $0x28] sm:$0xf]
  %v35 = vld [vmem:[%s1 + $0x2c] sm:$0xf]
  %v36 = vld [vmem:[%s1 + $0x30] sm:$0xf]
  %v37 = vld [vmem:[%s1 + $0x34] sm:$0xf]
  %v38 = vld [vmem:[%s1 + $0x38] sm:$0xf]
  %v39 = vld [vmem:[%s1 + $0x3c] sm:$0xf]
  %v40 = vunpack.c.l.bf16 %v24
  %v41 = vunpack.c.l.bf16 %v25
  %v42 = vunpack.c.l.bf16 %v26
  %v43 = vunpack.c.l.bf16 %v27
  %v44 = vunpack.c.l.bf16 %v28
  %v45 = vunpack.c.l.bf16 %v29
  %v46 = vunpack.c.l.bf16 %v30
  %v47 = vunpack.c.l.bf16 %v31
  %v48 = vunpack.c.l.bf16 %v32
  %v49 = vunpack.c.l.bf16 %v33
  %v50 = vunpack.c.l.bf16 %v34
  %v51 = vunpack.c.l.bf16 %v35
  %v52 = vunpack.c.l.bf16 %v36
  %v53 = vunpack.c.l.bf16 %v37
  %v54 = vunpack.c.l.bf16 %v38
  %v55 = vunpack.c.l.bf16 %v39
  %v56 = vld [vmem:[%s3] sm:$0xf]
  %v57 = vld [vmem:[%s3 + $0x4] sm:$0xf]
  %v58 = vld [vmem:[%s3 + $0x8] sm:$0xf]
  %v59 = vld [vmem:[%s3 + $0xc] sm:$0xf]
  %v60 = vld [vmem:[%s3 + $0x10] sm:$0xf]
  %v61 = vld [vmem:[%s3 + $0x14] sm:$0xf]
  %v62 = vld [vmem:[%s3 + $0x18] sm:$0xf]
  %v63 = vld [vmem:[%s3 + $0x1c] sm:$0xf]
  %v64 = vld [vmem:[%s3 + $0x20] sm:$0xf]
  %v65 = vld [vmem:[%s3 + $0x24] sm:$0xf]
  %v66 = vld [vmem:[%s3 + $0x28] sm:$0xf]
  %v67 = vld [vmem:[%s3 + $0x2c] sm:$0xf]
  %v68 = vld [vmem:[%s3 + $0x30] sm:$0xf]
  %v69 = vld [vmem:[%s3 + $0x34] sm:$0xf]
  %v70 = vld [vmem:[%s3 + $0x38] sm:$0xf]
  %v71 = vld [vmem:[%s3 + $0x3c] sm:$0xf]
  %v72 = vld [vmem:[%s4] sm:$0xff]
  %v73 = vld [vmem:[%s4 + $0x8] sm:$0xff]
  %v74 = vld [vmem:[%s4 + $0x10] sm:$0xff]
  %v75 = vld [vmem:[%s4 + $0x18] sm:$0xff]
  %v76 = vld [vmem:[%s4 + $0x20] sm:$0xff]
  %v77 = vld [vmem:[%s4 + $0x28] sm:$0xff]
  %v78 = vld [vmem:[%s4 + $0x30] sm:$0xff]
  %v79 = vld [vmem:[%s4 + $0x38] sm:$0xff]
  %v80 = vld [vmem:[%s4 + $0x40] sm:$0xff]
  %v81 = vld [vmem:[%s4 + $0x48] sm:$0xff]
  %v82 = vld [vmem:[%s4 + $0x50] sm:$0xff]
  %v83 = vld [vmem:[%s4 + $0x58] sm:$0xff]
  %v84 = vld [vmem:[%s4 + $0x60] sm:$0xff]
  %v85 = vld [vmem:[%s4 + $0x68] sm:$0xff]
  %v86 = vld [vmem:[%s4 + $0x70] sm:$0xff]
  %v87 = vld [vmem:[%s4 + $0x78] sm:$0xff]
  %v88 = vld [vmem:[%s4 + $0x80] sm:$0xff]
  %v89 = vld [vmem:[%s4 + $0x88] sm:$0xff]
  %v90 = vld [vmem:[%s4 + $0x90] sm:$0xff]
  %v91 = vld [vmem:[%s4 + $0x98] sm:$0xff]
  %v92 = vld [vmem:[%s4 + $0xa0] sm:$0xff]
  %v93 = vld [vmem:[%s4 + $0xa8] sm:$0xff]
  %v94 = vld [vmem:[%s4 + $0xb0] sm:$0xff]
  %v95 = vld [vmem:[%s4 + $0xb8] sm:$0xff]
  %v96 = vld [vmem:[%s4 + $0xc0] sm:$0xff]
  %v97 = vld [vmem:[%s4 + $0xc8] sm:$0xff]
  %v98 = vld [vmem:[%s4 + $0xd0] sm:$0xff]
  %v99 = vld [vmem:[%s4 + $0xd8] sm:$0xff]
  %v100 = vld [vmem:[%s4 + $0xe0] sm:$0xff]
  %v101 = vld [vmem:[%s4 + $0xe8] sm:$0xff]
  %v102 = vld [vmem:[%s4 + $0xf0] sm:$0xff]
  %v103 = vld [vmem:[%s4 + $0xf8] sm:$0xff]
  %v104 = vld [vmem:[%s4 + $0x100] sm:$0xff]
  %v105 = vld [vmem:[%s4 + $0x108] sm:$0xff]
  %v106 = vld [vmem:[%s4 + $0x110] sm:$0xff]
  %v107 = vld [vmem:[%s4 + $0x118] sm:$0xff]
  %v108 = vld [vmem:[%s4 + $0x120] sm:$0xff]
  %v109 = vld [vmem:[%s4 + $0x128] sm:$0xff]
  %v110 = vld [vmem:[%s4 + $0x130] sm:$0xff]
  %v111 = vld [vmem:[%s4 + $0x138] sm:$0xff]
  %v112 = vld [vmem:[%s4 + $0x140] sm:$0xff]
  %v113 = vld [vmem:[%s4 + $0x148] sm:$0xff]
  %v114 = vld [vmem:[%s4 + $0x150] sm:$0xff]
  %v115 = vld [vmem:[%s4 + $0x158] sm:$0xff]
  %v116 = vld [vmem:[%s4 + $0x160] sm:$0xff]
  %v117 = vld [vmem:[%s4 + $0x168] sm:$0xff]
  %v118 = vld [vmem:[%s4 + $0x170] sm:$0xff]
  %v119 = vld [vmem:[%s4 + $0x178] sm:$0xff]
  %v120 = vld [vmem:[%s4 + $0x180] sm:$0xff]
  %v121 = vld [vmem:[%s4 + $0x188] sm:$0xff]
  %v122 = vld [vmem:[%s4 + $0x190] sm:$0xff]
  %v123 = vld [vmem:[%s4 + $0x198] sm:$0xff]
  %v124 = vld [vmem:[%s4 + $0x1a0] sm:$0xff]
  %v125 = vld [vmem:[%s4 + $0x1a8] sm:$0xff]
  %v126 = vld [vmem:[%s4 + $0x1b0] sm:$0xff]
  %v127 = vld [vmem:[%s4 + $0x1b8] sm:$0xff]
  %v128 = vld [vmem:[%s4 + $0x1c0] sm:$0xff]
  %v129 = vld [vmem:[%s4 + $0x1c8] sm:$0xff]
  %v130 = vld [vmem:[%s4 + $0x1d0] sm:$0xff]
  %v131 = vld [vmem:[%s4 + $0x1d8] sm:$0xff]
  %v132 = vld [vmem:[%s4 + $0x1e0] sm:$0xff]
  %v133 = vld [vmem:[%s4 + $0x1e8] sm:$0xff]
  %v134 = vld [vmem:[%s4 + $0x1f0] sm:$0xff]
  %v135 = vld [vmem:[%s4 + $0x1f8] sm:$0xff]
  %v136 = vld [vmem:[%s4 + $0x200] sm:$0xff]
  %v137 = vld [vmem:[%s4 + $0x208] sm:$0xff]
  %v138 = vld [vmem:[%s4 + $0x210] sm:$0xff]
  %v139 = vld [vmem:[%s4 + $0x218] sm:$0xff]
  %v140 = vld [vmem:[%s4 + $0x220] sm:$0xff]
  %v141 = vld [vmem:[%s4 + $0x228] sm:$0xff]
  %v142 = vld [vmem:[%s4 + $0x230] sm:$0xff]
  %v143 = vld [vmem:[%s4 + $0x238] sm:$0xff]
  %v144 = vld [vmem:[%s4 + $0x240] sm:$0xff]
  %v145 = vld [vmem:[%s4 + $0x248] sm:$0xff]
  %v146 = vld [vmem:[%s4 + $0x250] sm:$0xff]
  %v147 = vld [vmem:[%s4 + $0x258] sm:$0xff]
  %v148 = vld [vmem:[%s4 + $0x260] sm:$0xff]
  %v149 = vld [vmem:[%s4 + $0x268] sm:$0xff]
  %v150 = vld [vmem:[%s4 + $0x270] sm:$0xff]
  %v151 = vld [vmem:[%s4 + $0x278] sm:$0xff]
  %v152 = vld [vmem:[%s4 + $0x280] sm:$0xff]
  %v153 = vld [vmem:[%s4 + $0x288] sm:$0xff]
  %v154 = vld [vmem:[%s4 + $0x290] sm:$0xff]
  %v155 = vld [vmem:[%s4 + $0x298] sm:$0xff]
  %v156 = vld [vmem:[%s4 + $0x2a0] sm:$0xff]
  %v157 = vld [vmem:[%s4 + $0x2a8] sm:$0xff]
  %v158 = vld [vmem:[%s4 + $0x2b0] sm:$0xff]
  %v159 = vld [vmem:[%s4 + $0x2b8] sm:$0xff]
  %v160 = vld [vmem:[%s4 + $0x2c0] sm:$0xff]
  %v161 = vld [vmem:[%s4 + $0x2c8] sm:$0xff]
  %v162 = vld [vmem:[%s4 + $0x2d0] sm:$0xff]
  %v163 = vld [vmem:[%s4 + $0x2d8] sm:$0xff]
  %v164 = vld [vmem:[%s4 + $0x2e0] sm:$0xff]
  %v165 = vld [vmem:[%s4 + $0x2e8] sm:$0xff]
  %v166 = vld [vmem:[%s4 + $0x2f0] sm:$0xff]
  %v167 = vld [vmem:[%s4 + $0x2f8] sm:$0xff]
  %v168 = vld [vmem:[%s5] sm:$0xf]
  %v169 = vld [vmem:[%s2] sm:$0xff]
  %v170 = vld [vmem:[%s2 + $0x8] sm:$0xff]
  %171 = vst [vmem:[#allocation2] sm:$0xff] %v169
  %172 = vst [vmem:[#allocation2 + $0x8] sm:$0xff] %v170
  %v173 = vld [vmem:[%s2] sm:$0xff]
  %v174 = vld [vmem:[%s2 + $0x8] sm:$0xff]
  %175 = vst [vmem:[#allocation3] sm:$0xff] %v173
  %176 = vst [vmem:[#allocation3 + $0x8] sm:$0xff] %v174
  %v177 = vld [vmem:[%s0] sm:$0xf]
  %v178 = vld [vmem:[%s0 + $0x4] sm:$0xf]
  %v179 = vld [vmem:[#allocation2] sm:$0xff]
  %v180 = vld [vmem:[#allocation2 + $0x8] sm:$0xff]
  %v181 = vld [vmem:[#allocation3] sm:$0xff]
  %v182 = vld [vmem:[#allocation3 + $0x8] sm:$0xff]
  %v183 = vpack.c.bf16 %v180, %v179
  %v200 = vunpack.c.l.b16 %v56
  %v201 = vunpack.c.l.b16 %v57
  %v202 = vunpack.c.l.b16 %v58
  %v203 = vunpack.c.l.b16 %v59
  %v204 = vunpack.c.l.b16 %v60
  %v205 = vunpack.c.l.b16 %v61
  %v206 = vunpack.c.l.b16 %v62
  %v207 = vunpack.c.l.b16 %v63
  %v208 = vunpack.c.l.b16 %v64
  %v209 = vunpack.c.l.b16 %v65
  %v210 = vunpack.c.l.b16 %v66
  %v211 = vunpack.c.l.b16 %v67
  %v212 = vunpack.c.l.b16 %v68
  %v213 = vunpack.c.l.b16 %v69
  %v214 = vunpack.c.l.b16 %v70
  %v215 = vunpack.c.l.b16 %v71
  %v216 = vpack.c.b16 %v201, %v200
  %v217 = vpack.c.b16 %v203, %v202
  %v218 = vpack.c.b16 %v205, %v204
  %v219 = vpack.c.b16 %v207, %v206
  %v220 = vpack.c.b16 %v209, %v208
  %v221 = vpack.c.b16 %v211, %v210
  %v222 = vpack.c.b16 %v213, %v212
  %v223 = vpack.c.b16 %v215, %v214
  %232 = vmatprep.subr.bf16.mxu0 0
  %233 = vmatpush1.bf16.msra.mxu0 %v223
  %234 = vmatprep.subr.bf16.mxu0 0
  %235 = vmatpush1.bf16.msra.mxu0 %v222
  %236 = vmatprep.subr.bf16.mxu0 0
  %237 = vmatpush1.bf16.msra.mxu0 %v221
  %238 = vmatprep.subr.bf16.mxu0 0
  %239 = vmatpush1.bf16.msra.mxu0 %v220
  %240 = vmatprep.subr.bf16.mxu0 0
  %241 = vmatpush1.bf16.msra.mxu0 %v219
  %242 = vmatprep.subr.bf16.mxu0 0
  %243 = vmatpush1.bf16.msra.mxu0 %v218
  %244 = vmatprep.subr.bf16.mxu0 0
  %245 = vmatpush1.bf16.msra.mxu0 %v217
  %246 = vmatprep.subr.bf16.mxu0 0
  %247 = vmatpush1.bf16.msra.mxu0 %v216
  %248 = vmatprep.subr.bf16.mxu0 0
  %249 = vmatpush2.bf16.msra.mxu0 0
  %250 = vmatprep.subr.bf16.mxu0 0
  %251 = vmatpush2.bf16.msra.mxu0 0
  %252 = vmatprep.subr.bf16.mxu0 0
  %253 = vmatpush2.bf16.msra.mxu0 0
  %254 = vmatprep.subr.bf16.mxu0 0
  %255 = vmatpush2.bf16.msra.mxu0 0
  %256 = vmatprep.subr.bf16.mxu0 0
  %257 = vmatpush2.bf16.msra.mxu0 0
  %258 = vmatprep.subr.bf16.mxu0 0
  %259 = vmatpush2.bf16.msra.mxu0 0
  %260 = vmatprep.subr.bf16.mxu0 0
  %261 = vmatpush2.bf16.msra.mxu0 0
  %262 = vmatprep.subr.bf16.mxu0 0
  %263 = vmatpush2.bf16.msra.mxu0 0
  %264 = vmatprep.mubr.bf16.mxu0 0
  %265 = vmatmul.mubr.bf16.gmra.mxu0 %v183
  %v266 = vpop.f32.mrf.mxu0
  %v267 = vadd.f32 0.0, %v266
  %v268 = vpop.f32.mrf.mxu0
  %v269 = vpop.f32.mrf.mxu0
  %v270 = vadd.f32 0.0, %v269
  %v271 = vpop.f32.mrf.mxu0
  %272 = vdwg.mxu0
  %v275 = vcombine.high %v267, %v267
  %v277 = vunpack.c.l.s4 1966171168
  %v278 = vunpack.c.0.s8 %v277
  %v279 = vlaneseq
  %v280 = vshrl.u32 %v279, 7
  %v281 = vsub.s32 %v278, %v280
  %v282 = vrot.slane %v267, %v281
  %v284 = vunpack.c.l.s4 1966171168
  %v285 = vunpack.c.0.s8 %v284
  %v286 = vlaneseq
  %v287 = vshrl.u32 %v286, 7
  %v288 = vsub.s32 %v285, %v287
  %v289 = vrot.slane %v275, %v288
  %v290 = vcombine.high %v282, %v282
  %v291 = vcombine.high %v289, %v289
  %v293 = vunpack.c.l.s4 1966171168
  %v294 = vunpack.c.0.s8 %v293
  %v295 = vlaneseq
  %v296 = vshrl.u32 %v295, 7
  %v297 = vsub.s32 %v294, %v296
  %v298 = vrot.slane %v282, %v297
  %v300 = vunpack.c.l.s4 1966171168
  %v301 = vunpack.c.0.s8 %v300
  %v302 = vlaneseq
  %v303 = vshrl.u32 %v302, 7
  %v304 = vsub.s32 %v301, %v303
  %v305 = vrot.slane %v289, %v304
  %v307 = vunpack.c.l.s4 1966171168
  %v308 = vunpack.c.0.s8 %v307
  %v309 = vlaneseq
  %v310 = vshrl.u32 %v309, 7
  %v311 = vsub.s32 %v308, %v310
  %v312 = vrot.slane %v290, %v311
  %v314 = vunpack.c.l.s4 1966171168
  %v315 = vunpack.c.0.s8 %v314
  %v316 = vlaneseq
  %v317 = vshrl.u32 %v316, 7
  %v318 = vsub.s32 %v315, %v317
  %v319 = vrot.slane %v291, %v318
  %v320 = vcombine.high %v298, %v298
  %v321 = vcombine.high %v305, %v305
  %v322 = vcombine.high %v312, %v312
  %v323 = vcombine.high %v319, %v319
  %v324 = vcombine.high %v270, %v270
  %v326 = vunpack.c.l.s4 1966171168
  %v327 = vunpack.c.0.s8 %v326
  %v328 = vlaneseq
  %v329 = vshrl.u32 %v328, 7
  %v330 = vsub.s32 %v327, %v329
  %v331 = vrot.slane %v270, %v330
  %v333 = vunpack.c.l.s4 1966171168
  %v334 = vunpack.c.0.s8 %v333
  %v335 = vlaneseq
  %v336 = vshrl.u32 %v335, 7
  %v337 = vsub.s32 %v334, %v336
  %v338 = vrot.slane %v324, %v337
  %v339 = vcombine.high %v331, %v331
  %v340 = vcombine.high %v338, %v338
  %v342 = vunpack.c.l.s4 1966171168
  %v343 = vunpack.c.0.s8 %v342
  %v344 = vlaneseq
  %v345 = vshrl.u32 %v344, 7
  %v346 = vsub.s32 %v343, %v345
  %v347 = vrot.slane %v331, %v346
  %v349 = vunpack.c.l.s4 1966171168
  %v350 = vunpack.c.0.s8 %v349
  %v351 = vlaneseq
  %v352 = vshrl.u32 %v351, 7
  %v353 = vsub.s32 %v350, %v352
  %v354 = vrot.slane %v338, %v353
  %v356 = vunpack.c.l.s4 1966171168
  %v357 = vunpack.c.0.s8 %v356
  %v358 = vlaneseq
  %v359 = vshrl.u32 %v358, 7
  %v360 = vsub.s32 %v357, %v359
  %v361 = vrot.slane %v339, %v360
  %v363 = vunpack.c.l.s4 1966171168
  %v364 = vunpack.c.0.s8 %v363
  %v365 = vlaneseq
  %v366 = vshrl.u32 %v365, 7
  %v367 = vsub.s32 %v364, %v366
  %v368 = vrot.slane %v340, %v367
  %v369 = vcombine.high %v347, %v347
  %v370 = vcombine.high %v354, %v354
  %v371 = vcombine.high %v361, %v361
  %v372 = vcombine.high %v368, %v368
  %v373 = vlaneseq
  %v374 = vshrl.u32 %v373, 7
  %v375 = vsub.s32 0, %v374
  %v376 = vrot.slane %v298, %v375
  %v377 = vlaneseq
  %v378 = vshrl.u32 %v377, 7
  %v379 = vsub.s32 0, %v378
  %v380 = vrot.slane %v312, %v379
  %v381 = vlaneseq
  %v382 = vshrl.u32 %v381, 7
  %v383 = vsub.s32 0, %v382
  %v384 = vrot.slane %v320, %v383
  %v385 = vlaneseq
  %v386 = vshrl.u32 %v385, 7
  %v387 = vsub.s32 0, %v386
  %v388 = vrot.slane %v322, %v387
  %v389 = vlaneseq
  %v390 = vshrl.u32 %v389, 7
  %v391 = vsub.s32 0, %v390
  %v392 = vrot.slane %v305, %v391
  %v393 = vlaneseq
  %v394 = vshrl.u32 %v393, 7
  %v395 = vsub.s32 0, %v394
  %v396 = vrot.slane %v319, %v395
  %v397 = vlaneseq
  %v398 = vshrl.u32 %v397, 7
  %v399 = vsub.s32 0, %v398
  %v400 = vrot.slane %v321, %v399
  %v401 = vlaneseq
  %v402 = vshrl.u32 %v401, 7
  %v403 = vsub.s32 0, %v402
  %v404 = vrot.slane %v323, %v403
  %v405 = vlaneseq
  %v406 = vshrl.u32 %v405, 7
  %v407 = vsub.s32 0, %v406
  %v408 = vrot.slane %v347, %v407
  %v409 = vlaneseq
  %v410 = vshrl.u32 %v409, 7
  %v411 = vsub.s32 0, %v410
  %v412 = vrot.slane %v361, %v411
  %v413 = vlaneseq
  %v414 = vshrl.u32 %v413, 7
  %v415 = vsub.s32 0, %v414
  %v416 = vrot.slane %v369, %v415
  %v417 = vlaneseq
  %v418 = vshrl.u32 %v417, 7
  %v419 = vsub.s32 0, %v418
  %v420 = vrot.slane %v371, %v419
  %v421 = vlaneseq
  %v422 = vshrl.u32 %v421, 7
  %v423 = vsub.s32 0, %v422
  %v424 = vrot.slane %v354, %v423
  %v425 = vlaneseq
  %v426 = vshrl.u32 %v425, 7
  %v427 = vsub.s32 0, %v426
  %v428 = vrot.slane %v368, %v427
  %v429 = vlaneseq
  %v430 = vshrl.u32 %v429, 7
  %v431 = vsub.s32 0, %v430
  %v432 = vrot.slane %v370, %v431
  %v433 = vlaneseq
  %v434 = vshrl.u32 %v433, 7
  %v435 = vsub.s32 0, %v434
  %v436 = vrot.slane %v372, %v435
  %v453 = vmul.f32 %v376, %v40
  %v454 = vmul.f32 %v380, %v41
  %v455 = vmul.f32 %v384, %v42
  %v456 = vmul.f32 %v388, %v43
  %v457 = vmul.f32 %v392, %v44
  %v458 = vmul.f32 %v396, %v45
  %v459 = vmul.f32 %v400, %v46
  %v460 = vmul.f32 %v404, %v47
  %v461 = vmul.f32 %v408, %v48
  %v462 = vmul.f32 %v412, %v49
  %v463 = vmul.f32 %v416, %v50
  %v464 = vmul.f32 %v420, %v51
  %v465 = vmul.f32 %v424, %v52
  %v466 = vmul.f32 %v428, %v53
  %v467 = vmul.f32 %v432, %v54
  %v468 = vmul.f32 %v436, %v55
  %469 = vadd.xlane.f32.xlu0 %v453
  %v470 = vpop.xlane.xlu0 %469
  %471 = vadd.xlane.f32.xlu0 %v454
  %v472 = vpop.xlane.xlu0 %471
  %473 = vadd.xlane.f32.xlu0 %v455
  %v474 = vpop.xlane.xlu0 %473
  %475 = vadd.xlane.f32.xlu0 %v456
  %v476 = vpop.xlane.xlu0 %475
  %477 = vadd.xlane.f32.xlu0 %v457
  %v478 = vpop.xlane.xlu0 %477
  %479 = vadd.xlane.f32.xlu0 %v458
  %v480 = vpop.xlane.xlu0 %479
  %481 = vadd.xlane.f32.xlu0 %v459
  %v482 = vpop.xlane.xlu0 %481
  %483 = vadd.xlane.f32.xlu0 %v460
  %v484 = vpop.xlane.xlu0 %483
  %485 = vadd.xlane.f32.xlu0 %v461
  %v486 = vpop.xlane.xlu0 %485
  %487 = vadd.xlane.f32.xlu0 %v462
  %v488 = vpop.xlane.xlu0 %487
  %489 = vadd.xlane.f32.xlu0 %v463
  %v490 = vpop.xlane.xlu0 %489
  %491 = vadd.xlane.f32.xlu0 %v464
  %v492 = vpop.xlane.xlu0 %491
  %493 = vadd.xlane.f32.xlu0 %v465
  %v494 = vpop.xlane.xlu0 %493
  %495 = vadd.xlane.f32.xlu0 %v466
  %v496 = vpop.xlane.xlu0 %495
  %497 = vadd.xlane.f32.xlu0 %v467
  %v498 = vpop.xlane.xlu0 %497
  %499 = vadd.xlane.f32.xlu0 %v468
  %v500 = vpop.xlane.xlu0 %499
  %v517 = vlaneseq
  %v518 = vand.u32 %v517, 127
  %v519 = vlaneseq
  %v520 = vshrl.u32 %v519, 7
  %v521 = vsub.s32 %v518, %v520
  %v522 = vrot.slane %v470, %v521
  %v523 = vlaneseq
  %v524 = vshrl.u32 %v523, 7
  %v525 = vsub.s32 %v518, %v524
  %v526 = vrot.slane %v472, %v525
  %v527 = vlaneseq
  %v528 = vshrl.u32 %v527, 7
  %v529 = vsub.s32 %v518, %v528
  %v530 = vrot.slane %v474, %v529
  %v531 = vlaneseq
  %v532 = vshrl.u32 %v531, 7
  %v533 = vsub.s32 %v518, %v532
  %v534 = vrot.slane %v476, %v533
  %v535 = vlaneseq
  %v536 = vshrl.u32 %v535, 7
  %v537 = vsub.s32 %v518, %v536
  %v538 = vrot.slane %v478, %v537
  %v539 = vlaneseq
  %v540 = vshrl.u32 %v539, 7
  %v541 = vsub.s32 %v518, %v540
  %v542 = vrot.slane %v480, %v541
  %v543 = vlaneseq
  %v544 = vshrl.u32 %v543, 7
  %v545 = vsub.s32 %v518, %v544
  %v546 = vrot.slane %v482, %v545
  %v547 = vlaneseq
  %v548 = vshrl.u32 %v547, 7
  %v549 = vsub.s32 %v518, %v548
  %v550 = vrot.slane %v484, %v549
  %v551 = vlaneseq
  %v552 = vshrl.u32 %v551, 7
  %v553 = vsub.s32 %v518, %v552
  %v554 = vrot.slane %v486, %v553
  %v555 = vlaneseq
  %v556 = vshrl.u32 %v555, 7
  %v557 = vsub.s32 %v518, %v556
  %v558 = vrot.slane %v488, %v557
  %v559 = vlaneseq
  %v560 = vshrl.u32 %v559, 7
  %v561 = vsub.s32 %v518, %v560
  %v562 = vrot.slane %v490, %v561
  %v563 = vlaneseq
  %v564 = vshrl.u32 %v563, 7
  %v565 = vsub.s32 %v518, %v564
  %v566 = vrot.slane %v492, %v565
  %v567 = vlaneseq
  %v568 = vshrl.u32 %v567, 7
  %v569 = vsub.s32 %v518, %v568
  %v570 = vrot.slane %v494, %v569
  %v571 = vlaneseq
  %v572 = vshrl.u32 %v571, 7
  %v573 = vsub.s32 %v518, %v572
  %v574 = vrot.slane %v496, %v573
  %v575 = vlaneseq
  %v576 = vshrl.u32 %v575, 7
  %v577 = vsub.s32 %v518, %v576
  %v578 = vrot.slane %v498, %v577
  %v579 = vlaneseq
  %v580 = vshrl.u32 %v579, 7
  %v581 = vsub.s32 %v518, %v580
  %v582 = vrot.slane %v500, %v581
  %vm583 = vcmask 1041409
  %v584 = vsel %vm583, %v526, %v522
  %vm585 = vcmask 1042434
  %v586 = vsel %vm585, %v530, %v584
  %vm587 = vcmask 1043459
  %v588 = vsel %vm587, %v534, %v586
  %vm589 = vcmask 1044484
  %v590 = vsel %vm589, %v538, %v588
  %vm591 = vcmask 1045509
  %v592 = vsel %vm591, %v542, %v590
  %vm593 = vcmask 1046534
  %v594 = vsel %vm593, %v546, %v592
  %vm595 = vcmask 1047559
  %v596 = vsel %vm595, %v550, %v594
  %v597 = vsel %vm583, %v558, %v554
  %v598 = vsel %vm585, %v562, %v597
  %v599 = vsel %vm587, %v566, %v598
  %v600 = vsel %vm589, %v570, %v599
  %v601 = vsel %vm591, %v574, %v600
  %v602 = vsel %vm593, %v578, %v601
  %v603 = vsel %vm595, %v582, %v602
  %vm606 = vcmask 64512
  %v607 = vsel %vm606, %v596, -inf
  %608 = vmax.xlane.f32.xlu0 %v607
  %v609 = vpop.xlane.xlu0 %608
  %v610 = vsel %vm606, %v603, -inf
  %611 = vmax.xlane.f32.xlu0 %v610
  %v612 = vpop.xlane.xlu0 %611
  %v615 = vlaneseq
  %v616 = vshrl.u32 %v615, 7
  %v617 = vsub.s32 0, %v616
  %v618 = vrot.slane %v609, %v617
  %v619 = vlaneseq
  %v620 = vshrl.u32 %v619, 7
  %v621 = vsub.s32 1, %v620
  %v622 = vrot.slane %v609, %v621
  %v623 = vlaneseq
  %v624 = vshrl.u32 %v623, 7
  %v625 = vsub.s32 2, %v624
  %v626 = vrot.slane %v609, %v625
  %v627 = vlaneseq
  %v628 = vshrl.u32 %v627, 7
  %v629 = vsub.s32 3, %v628
  %v630 = vrot.slane %v609, %v629
  %v631 = vlaneseq
  %v632 = vshrl.u32 %v631, 7
  %v633 = vsub.s32 4, %v632
  %v634 = vrot.slane %v609, %v633
  %v635 = vlaneseq
  %v636 = vshrl.u32 %v635, 7
  %v637 = vsub.s32 5, %v636
  %v638 = vrot.slane %v609, %v637
  %v639 = vlaneseq
  %v640 = vshrl.u32 %v639, 7
  %v641 = vsub.s32 6, %v640
  %v642 = vrot.slane %v609, %v641
  %v643 = vlaneseq
  %v644 = vshrl.u32 %v643, 7
  %v645 = vsub.s32 7, %v644
  %v646 = vrot.slane %v609, %v645
  %v647 = vlaneseq
  %v648 = vshrl.u32 %v647, 7
  %v649 = vsub.s32 0, %v648
  %v650 = vrot.slane %v612, %v649
  %v651 = vlaneseq
  %v652 = vshrl.u32 %v651, 7
  %v653 = vsub.s32 1, %v652
  %v654 = vrot.slane %v612, %v653
  %v655 = vlaneseq
  %v656 = vshrl.u32 %v655, 7
  %v657 = vsub.s32 2, %v656
  %v658 = vrot.slane %v612, %v657
  %v659 = vlaneseq
  %v660 = vshrl.u32 %v659, 7
  %v661 = vsub.s32 3, %v660
  %v662 = vrot.slane %v612, %v661
  %v663 = vlaneseq
  %v664 = vshrl.u32 %v663, 7
  %v665 = vsub.s32 4, %v664
  %v666 = vrot.slane %v612, %v665
  %v667 = vlaneseq
  %v668 = vshrl.u32 %v667, 7
  %v669 = vsub.s32 5, %v668
  %v670 = vrot.slane %v612, %v669
  %v671 = vlaneseq
  %v672 = vshrl.u32 %v671, 7
  %v673 = vsub.s32 6, %v672
  %v674 = vrot.slane %v612, %v673
  %v675 = vlaneseq
  %v676 = vshrl.u32 %v675, 7
  %v677 = vsub.s32 7, %v676
  %v678 = vrot.slane %v612, %v677
  %v695 = vsub.f32 %v470, %v618
  %v696 = vsub.f32 %v472, %v622
  %v697 = vsub.f32 %v474, %v626
  %v698 = vsub.f32 %v476, %v630
  %v699 = vsub.f32 %v478, %v634
  %v700 = vsub.f32 %v480, %v638
  %v701 = vsub.f32 %v482, %v642
  %v702 = vsub.f32 %v484, %v646
  %v703 = vsub.f32 %v486, %v650
  %v704 = vsub.f32 %v488, %v654
  %v705 = vsub.f32 %v490, %v658
  %v706 = vsub.f32 %v492, %v662
  %v707 = vsub.f32 %v494, %v666
  %v708 = vsub.f32 %v496, %v670
  %v709 = vsub.f32 %v498, %v674
  %v710 = vsub.f32 %v500, %v678
  %v711 = vmul.f32 %v695, 1.442695
  %v712 = vpow.pop %v711
  %v713 = vmul.f32 %v696, 1.442695
  %v714 = vpow.pop %v713
  %v715 = vmul.f32 %v697, 1.442695
  %v716 = vpow.pop %v715
  %v717 = vmul.f32 %v698, 1.442695
  %v718 = vpow.pop %v717
  %v719 = vmul.f32 %v699, 1.442695
  %v720 = vpow.pop %v719
  %v721 = vmul.f32 %v700, 1.442695
  %v722 = vpow.pop %v721
  %v723 = vmul.f32 %v701, 1.442695
  %v724 = vpow.pop %v723
  %v725 = vmul.f32 %v702, 1.442695
  %v726 = vpow.pop %v725
  %v727 = vmul.f32 %v703, 1.442695
  %v728 = vpow.pop %v727
  %v729 = vmul.f32 %v704, 1.442695
  %v730 = vpow.pop %v729
  %v731 = vmul.f32 %v705, 1.442695
  %v732 = vpow.pop %v731
  %v733 = vmul.f32 %v706, 1.442695
  %v734 = vpow.pop %v733
  %v735 = vmul.f32 %v707, 1.442695
  %v736 = vpow.pop %v735
  %v737 = vmul.f32 %v708, 1.442695
  %v738 = vpow.pop %v737
  %v739 = vmul.f32 %v709, 1.442695
  %v740 = vpow.pop %v739
  %v741 = vmul.f32 %v710, 1.442695
  %v742 = vpow.pop %v741
  %759 = vset.pattern.permute.xlu0 0
  %760 = vperm.xlu0 %759, %v712
  %v761 = vpop.permute.xlu0 %760
  %762 = vset.pattern.permute.xlu0 0
  %763 = vperm.xlu0 %762, %v714
  %v764 = vpop.permute.xlu0 %763
  %765 = vset.pattern.permute.xlu0 0
  %766 = vperm.xlu0 %765, %v716
  %v767 = vpop.permute.xlu0 %766
  %768 = vset.pattern.permute.xlu0 0
  %769 = vperm.xlu0 %768, %v718
  %v770 = vpop.permute.xlu0 %769
  %771 = vset.pattern.permute.xlu0 0
  %772 = vperm.xlu0 %771, %v720
  %v773 = vpop.permute.xlu0 %772
  %774 = vset.pattern.permute.xlu0 0
  %775 = vperm.xlu0 %774, %v722
  %v776 = vpop.permute.xlu0 %775
  %777 = vset.pattern.permute.xlu0 0
  %778 = vperm.xlu0 %777, %v724
  %v779 = vpop.permute.xlu0 %778
  %780 = vset.pattern.permute.xlu0 0
  %781 = vperm.xlu0 %780, %v726
  %v782 = vpop.permute.xlu0 %781
  %783 = vset.pattern.permute.xlu0 0
  %784 = vperm.xlu0 %783, %v728
  %v785 = vpop.permute.xlu0 %784
  %786 = vset.pattern.permute.xlu0 0
  %787 = vperm.xlu0 %786, %v730
  %v788 = vpop.permute.xlu0 %787
  %789 = vset.pattern.permute.xlu0 0
  %790 = vperm.xlu0 %789, %v732
  %v791 = vpop.permute.xlu0 %790
  %792 = vset.pattern.permute.xlu0 0
  %793 = vperm.xlu0 %792, %v734
  %v794 = vpop.permute.xlu0 %793
  %795 = vset.pattern.permute.xlu0 0
  %796 = vperm.xlu0 %795, %v736
  %v797 = vpop.permute.xlu0 %796
  %798 = vset.pattern.permute.xlu0 0
  %799 = vperm.xlu0 %798, %v738
  %v800 = vpop.permute.xlu0 %799
  %801 = vset.pattern.permute.xlu0 0
  %802 = vperm.xlu0 %801, %v740
  %v803 = vpop.permute.xlu0 %802
  %804 = vset.pattern.permute.xlu0 0
  %805 = vperm.xlu0 %804, %v742
  %v806 = vpop.permute.xlu0 %805
  %v807 = vlaneseq
  %v808 = vshrl.u32 %v807, 7
  %v809 = vsub.s32 %v518, %v808
  %v810 = vrot.slane %v761, %v809
  %v811 = vlaneseq
  %v812 = vshrl.u32 %v811, 7
  %v813 = vsub.s32 %v518, %v812
  %v814 = vrot.slane %v764, %v813
  %v815 = vlaneseq
  %v816 = vshrl.u32 %v815, 7
  %v817 = vsub.s32 %v518, %v816
  %v818 = vrot.slane %v767, %v817
  %v819 = vlaneseq
  %v820 = vshrl.u32 %v819, 7
  %v821 = vsub.s32 %v518, %v820
  %v822 = vrot.slane %v770, %v821
  %v823 = vlaneseq
  %v824 = vshrl.u32 %v823, 7
  %v825 = vsub.s32 %v518, %v824
  %v826 = vrot.slane %v773, %v825
  %v827 = vlaneseq
  %v828 = vshrl.u32 %v827, 7
  %v829 = vsub.s32 %v518, %v828
  %v830 = vrot.slane %v776, %v829
  %v831 = vlaneseq
  %v832 = vshrl.u32 %v831, 7
  %v833 = vsub.s32 %v518, %v832
  %v834 = vrot.slane %v779, %v833
  %v835 = vlaneseq
  %v836 = vshrl.u32 %v835, 7
  %v837 = vsub.s32 %v518, %v836
  %v838 = vrot.slane %v782, %v837
  %v839 = vlaneseq
  %v840 = vshrl.u32 %v839, 7
  %v841 = vsub.s32 %v518, %v840
  %v842 = vrot.slane %v785, %v841
  %v843 = vlaneseq
  %v844 = vshrl.u32 %v843, 7
  %v845 = vsub.s32 %v518, %v844
  %v846 = vrot.slane %v788, %v845
  %v847 = vlaneseq
  %v848 = vshrl.u32 %v847, 7
  %v849 = vsub.s32 %v518, %v848
  %v850 = vrot.slane %v791, %v849
  %v851 = vlaneseq
  %v852 = vshrl.u32 %v851, 7
  %v853 = vsub.s32 %v518, %v852
  %v854 = vrot.slane %v794, %v853
  %v855 = vlaneseq
  %v856 = vshrl.u32 %v855, 7
  %v857 = vsub.s32 %v518, %v856
  %v858 = vrot.slane %v797, %v857
  %v859 = vlaneseq
  %v860 = vshrl.u32 %v859, 7
  %v861 = vsub.s32 %v518, %v860
  %v862 = vrot.slane %v800, %v861
  %v863 = vlaneseq
  %v864 = vshrl.u32 %v863, 7
  %v865 = vsub.s32 %v518, %v864
  %v866 = vrot.slane %v803, %v865
  %v867 = vlaneseq
  %v868 = vshrl.u32 %v867, 7
  %v869 = vsub.s32 %v518, %v868
  %v870 = vrot.slane %v806, %v869
  %v871 = vsel %vm583, %v814, %v810
  %v872 = vsel %vm585, %v818, %v871
  %v873 = vsel %vm587, %v822, %v872
  %v874 = vsel %vm589, %v826, %v873
  %v875 = vsel %vm591, %v830, %v874
  %v876 = vsel %vm593, %v834, %v875
  %v877 = vsel %vm595, %v838, %v876
  %v878 = vsel %vm583, %v846, %v842
  %v879 = vsel %vm585, %v850, %v878
  %v880 = vsel %vm587, %v854, %v879
  %v881 = vsel %vm589, %v858, %v880
  %v882 = vsel %vm591, %v862, %v881
  %v883 = vsel %vm593, %v866, %v882
  %v884 = vsel %vm595, %v870, %v883
  %v887 = vsel %vm606, %v877, 0.0
  %888 = vadd.xlane.f32.xlu0 %v887
  %v889 = vpop.xlane.xlu0 %888
  %v890 = vsel %vm606, %v884, 0.0
  %891 = vadd.xlane.f32.xlu0 %v890
  %v892 = vpop.xlane.xlu0 %891
  %v893 = vrcp.pop %v889
  %v894 = vrcp.pop %v892
  %v897 = vlaneseq
  %v898 = vshrl.u32 %v897, 7
  %v899 = vsub.s32 0, %v898
  %v900 = vrot.slane %v893, %v899
  %v901 = vlaneseq
  %v902 = vshrl.u32 %v901, 7
  %v903 = vsub.s32 1, %v902
  %v904 = vrot.slane %v893, %v903
  %v905 = vlaneseq
  %v906 = vshrl.u32 %v905, 7
  %v907 = vsub.s32 2, %v906
  %v908 = vrot.slane %v893, %v907
  %v909 = vlaneseq
  %v910 = vshrl.u32 %v909, 7
  %v911 = vsub.s32 3, %v910
  %v912 = vrot.slane %v893, %v911
  %v913 = vlaneseq
  %v914 = vshrl.u32 %v913, 7
  %v915 = vsub.s32 4, %v914
  %v916 = vrot.slane %v893, %v915
  %v917 = vlaneseq
  %v918 = vshrl.u32 %v917, 7
  %v919 = vsub.s32 5, %v918
  %v920 = vrot.slane %v893, %v919
  %v921 = vlaneseq
  %v922 = vshrl.u32 %v921, 7
  %v923 = vsub.s32 6, %v922
  %v924 = vrot.slane %v893, %v923
  %v925 = vlaneseq
  %v926 = vshrl.u32 %v925, 7
  %v927 = vsub.s32 7, %v926
  %v928 = vrot.slane %v893, %v927
  %v929 = vlaneseq
  %v930 = vshrl.u32 %v929, 7
  %v931 = vsub.s32 0, %v930
  %v932 = vrot.slane %v894, %v931
  %v933 = vlaneseq
  %v934 = vshrl.u32 %v933, 7
  %v935 = vsub.s32 1, %v934
  %v936 = vrot.slane %v894, %v935
  %v937 = vlaneseq
  %v938 = vshrl.u32 %v937, 7
  %v939 = vsub.s32 2, %v938
  %v940 = vrot.slane %v894, %v939
  %v941 = vlaneseq
  %v942 = vshrl.u32 %v941, 7
  %v943 = vsub.s32 3, %v942
  %v944 = vrot.slane %v894, %v943
  %v945 = vlaneseq
  %v946 = vshrl.u32 %v945, 7
  %v947 = vsub.s32 4, %v946
  %v948 = vrot.slane %v894, %v947
  %v949 = vlaneseq
  %v950 = vshrl.u32 %v949, 7
  %v951 = vsub.s32 5, %v950
  %v952 = vrot.slane %v894, %v951
  %v953 = vlaneseq
  %v954 = vshrl.u32 %v953, 7
  %v955 = vsub.s32 6, %v954
  %v956 = vrot.slane %v894, %v955
  %v957 = vlaneseq
  %v958 = vshrl.u32 %v957, 7
  %v959 = vsub.s32 7, %v958
  %v960 = vrot.slane %v894, %v959
  %v977 = vmul.f32 %v712, %v900
  %v978 = vmul.f32 %v714, %v904
  %v979 = vmul.f32 %v716, %v908
  %v980 = vmul.f32 %v718, %v912
  %v981 = vmul.f32 %v720, %v916
  %v982 = vmul.f32 %v722, %v920
  %v983 = vmul.f32 %v724, %v924
  %v984 = vmul.f32 %v726, %v928
  %v985 = vmul.f32 %v728, %v932
  %v986 = vmul.f32 %v730, %v936
  %v987 = vmul.f32 %v732, %v940
  %v988 = vmul.f32 %v734, %v944
  %v989 = vmul.f32 %v736, %v948
  %v990 = vmul.f32 %v738, %v952
  %v991 = vmul.f32 %v740, %v956
  %v992 = vmul.f32 %v742, %v960
  %994 = vset.pattern.permute.xlu0 0
  %995 = vperm.xlu0 %994, %v977
  %v996 = vpop.permute.xlu0 %995
  %999 = vset.pattern.permute.xlu0 0
  %1000 = vperm.xlu0 %999, %v978
  %v1001 = vpop.permute.xlu0 %1000
  %1004 = vset.pattern.permute.xlu0 0
  %1005 = vperm.xlu0 %1004, %v979
  %v1006 = vpop.permute.xlu0 %1005
  %1009 = vset.pattern.permute.xlu0 0
  %1010 = vperm.xlu0 %1009, %v980
  %v1011 = vpop.permute.xlu0 %1010
  %1014 = vset.pattern.permute.xlu0 0
  %1015 = vperm.xlu0 %1014, %v981
  %v1016 = vpop.permute.xlu0 %1015
  %1019 = vset.pattern.permute.xlu0 0
  %1020 = vperm.xlu0 %1019, %v982
  %v1021 = vpop.permute.xlu0 %1020
  %1024 = vset.pattern.permute.xlu0 0
  %1025 = vperm.xlu0 %1024, %v983
  %v1026 = vpop.permute.xlu0 %1025
  %1029 = vset.pattern.permute.xlu0 0
  %1030 = vperm.xlu0 %1029, %v984
  %v1031 = vpop.permute.xlu0 %1030
  %1034 = vset.pattern.permute.xlu0 0
  %1035 = vperm.xlu0 %1034, %v985
  %v1036 = vpop.permute.xlu0 %1035
  %1039 = vset.pattern.permute.xlu0 0
  %1040 = vperm.xlu0 %1039, %v986
  %v1041 = vpop.permute.xlu0 %1040
  %1044 = vset.pattern.permute.xlu0 0
  %1045 = vperm.xlu0 %1044, %v987
  %v1046 = vpop.permute.xlu0 %1045
  %1049 = vset.pattern.permute.xlu0 0
  %1050 = vperm.xlu0 %1049, %v988
  %v1051 = vpop.permute.xlu0 %1050
  %1054 = vset.pattern.permute.xlu0 0
  %1055 = vperm.xlu0 %1054, %v989
  %v1056 = vpop.permute.xlu0 %1055
  %1059 = vset.pattern.permute.xlu0 0
  %1060 = vperm.xlu0 %1059, %v990
  %v1061 = vpop.permute.xlu0 %1060
  %1064 = vset.pattern.permute.xlu0 0
  %1065 = vperm.xlu0 %1064, %v991
  %v1066 = vpop.permute.xlu0 %1065
  %1069 = vset.pattern.permute.xlu0 0
  %1070 = vperm.xlu0 %1069, %v992
  %v1071 = vpop.permute.xlu0 %1070
  %v1073 = vmul.f32 %v996, %v40
  %v1074 = vmul.f32 %v1001, %v41
  %v1075 = vmul.f32 %v1006, %v42
  %v1076 = vmul.f32 %v1011, %v43
  %v1077 = vmul.f32 %v1016, %v44
  %v1078 = vmul.f32 %v1021, %v45
  %v1079 = vmul.f32 %v1026, %v46
  %v1080 = vmul.f32 %v1031, %v47
  %v1081 = vmul.f32 %v1036, %v48
  %v1082 = vmul.f32 %v1041, %v49
  %v1083 = vmul.f32 %v1046, %v50
  %v1084 = vmul.f32 %v1051, %v51
  %v1085 = vmul.f32 %v1056, %v52
  %v1086 = vmul.f32 %v1061, %v53
  %v1087 = vmul.f32 %v1066, %v54
  %v1088 = vmul.f32 %v1071, %v55
  %v1089 = vrot.slane %v1073, 4
  %v1090 = vadd.f32 %v1073, %v1089
  %v1091 = vrot.slane %v1090, 2
  %v1092 = vadd.f32 %v1090, %v1091
  %v1093 = vrot.slane %v1092, 1
  %v1094 = vadd.f32 %v1092, %v1093
  %v1095 = vrot.slane %v1074, 4
  %v1096 = vadd.f32 %v1074, %v1095
  %v1097 = vrot.slane %v1096, 2
  %v1098 = vadd.f32 %v1096, %v1097
  %v1099 = vrot.slane %v1098, 1
  %v1100 = vadd.f32 %v1098, %v1099
  %v1101 = vrot.slane %v1075, 4
  %v1102 = vadd.f32 %v1075, %v1101
  %v1103 = vrot.slane %v1102, 2
  %v1104 = vadd.f32 %v1102, %v1103
  %v1105 = vrot.slane %v1104, 1
  %v1106 = vadd.f32 %v1104, %v1105
  %v1107 = vrot.slane %v1076, 4
  %v1108 = vadd.f32 %v1076, %v1107
  %v1109 = vrot.slane %v1108, 2
  %v1110 = vadd.f32 %v1108, %v1109
  %v1111 = vrot.slane %v1110, 1
  %v1112 = vadd.f32 %v1110, %v1111
  %v1113 = vrot.slane %v1077, 4
  %v1114 = vadd.f32 %v1077, %v1113
  %v1115 = vrot.slane %v1114, 2
  %v1116 = vadd.f32 %v1114, %v1115
  %v1117 = vrot.slane %v1116, 1
  %v1118 = vadd.f32 %v1116, %v1117
  %v1119 = vrot.slane %v1078, 4
  %v1120 = vadd.f32 %v1078, %v1119
  %v1121 = vrot.slane %v1120, 2
  %v1122 = vadd.f32 %v1120, %v1121
  %v1123 = vrot.slane %v1122, 1
  %v1124 = vadd.f32 %v1122, %v1123
  %v1125 = vrot.slane %v1079, 4
  %v1126 = vadd.f32 %v1079, %v1125
  %v1127 = vrot.slane %v1126, 2
  %v1128 = vadd.f32 %v1126, %v1127
  %v1129 = vrot.slane %v1128, 1
  %v1130 = vadd.f32 %v1128, %v1129
  %v1131 = vrot.slane %v1080, 4
  %v1132 = vadd.f32 %v1080, %v1131
  %v1133 = vrot.slane %v1132, 2
  %v1134 = vadd.f32 %v1132, %v1133
  %v1135 = vrot.slane %v1134, 1
  %v1136 = vadd.f32 %v1134, %v1135
  %v1137 = vrot.slane %v1081, 4
  %v1138 = vadd.f32 %v1081, %v1137
  %v1139 = vrot.slane %v1138, 2
  %v1140 = vadd.f32 %v1138, %v1139
  %v1141 = vrot.slane %v1140, 1
  %v1142 = vadd.f32 %v1140, %v1141
  %v1143 = vrot.slane %v1082, 4
  %v1144 = vadd.f32 %v1082, %v1143
  %v1145 = vrot.slane %v1144, 2
  %v1146 = vadd.f32 %v1144, %v1145
  %v1147 = vrot.slane %v1146, 1
  %v1148 = vadd.f32 %v1146, %v1147
  %v1149 = vrot.slane %v1083, 4
  %v1150 = vadd.f32 %v1083, %v1149
  %v1151 = vrot.slane %v1150, 2
  %v1152 = vadd.f32 %v1150, %v1151
  %v1153 = vrot.slane %v1152, 1
  %v1154 = vadd.f32 %v1152, %v1153
  %v1155 = vrot.slane %v1084, 4
  %v1156 = vadd.f32 %v1084, %v1155
  %v1157 = vrot.slane %v1156, 2
  %v1158 = vadd.f32 %v1156, %v1157
  %v1159 = vrot.slane %v1158, 1
  %v1160 = vadd.f32 %v1158, %v1159
  %v1161 = vrot.slane %v1085, 4
  %v1162 = vadd.f32 %v1085, %v1161
  %v1163 = vrot.slane %v1162, 2
  %v1164 = vadd.f32 %v1162, %v1163
  %v1165 = vrot.slane %v1164, 1
  %v1166 = vadd.f32 %v1164, %v1165
  %v1167 = vrot.slane %v1086, 4
  %v1168 = vadd.f32 %v1086, %v1167
  %v1169 = vrot.slane %v1168, 2
  %v1170 = vadd.f32 %v1168, %v1169
  %v1171 = vrot.slane %v1170, 1
  %v1172 = vadd.f32 %v1170, %v1171
  %v1173 = vrot.slane %v1087, 4
  %v1174 = vadd.f32 %v1087, %v1173
  %v1175 = vrot.slane %v1174, 2
  %v1176 = vadd.f32 %v1174, %v1175
  %v1177 = vrot.slane %v1176, 1
  %v1178 = vadd.f32 %v1176, %v1177
  %v1179 = vrot.slane %v1088, 4
  %v1180 = vadd.f32 %v1088, %v1179
  %v1181 = vrot.slane %v1180, 2
  %v1182 = vadd.f32 %v1180, %v1181
  %v1183 = vrot.slane %v1182, 1
  %v1184 = vadd.f32 %v1182, %v1183
  %v1185 = vpack.c.bf16 %v1094, %v1094
  %v1186 = vpack.c.bf16 %v1100, %v1100
  %v1187 = vpack.c.bf16 %v1106, %v1106
  %v1188 = vpack.c.bf16 %v1112, %v1112
  %v1189 = vpack.c.bf16 %v1118, %v1118
  %v1190 = vpack.c.bf16 %v1124, %v1124
  %v1191 = vpack.c.bf16 %v1130, %v1130
  %v1192 = vpack.c.bf16 %v1136, %v1136
  %v1193 = vpack.c.bf16 %v1142, %v1142
  %v1194 = vpack.c.bf16 %v1148, %v1148
  %v1195 = vpack.c.bf16 %v1154, %v1154
  %v1196 = vpack.c.bf16 %v1160, %v1160
  %v1197 = vpack.c.bf16 %v1166, %v1166
  %v1198 = vpack.c.bf16 %v1172, %v1172
  %v1199 = vpack.c.bf16 %v1178, %v1178
  %v1200 = vpack.c.bf16 %v1184, %v1184
  %v1203 = vunpack.c.l.b16 %v177
  %v1204 = vunpack.c.l.b16 %v178
  %v1205 = vpack.c.b16 %v1204, %v1203
  %v1223 = vunpack.c.l.b16 %v1185
  %v1224 = vunpack.c.l.b16 %v1186
  %v1225 = vunpack.c.l.b16 %v1187
  %v1226 = vunpack.c.l.b16 %v1188
  %v1227 = vunpack.c.l.b16 %v1189
  %v1228 = vunpack.c.l.b16 %v1190
  %v1229 = vunpack.c.l.b16 %v1191
  %v1230 = vunpack.c.l.b16 %v1192
  %v1231 = vunpack.c.l.b16 %v1193
  %v1232 = vunpack.c.l.b16 %v1194
  %v1233 = vunpack.c.l.b16 %v1195
  %v1234 = vunpack.c.l.b16 %v1196
  %v1235 = vunpack.c.l.b16 %v1197
  %v1236 = vunpack.c.l.b16 %v1198
  %v1237 = vunpack.c.l.b16 %v1199
  %v1238 = vunpack.c.l.b16 %v1200
  %v1239 = vsel %vm583, %v1224, %v1223
  %v1240 = vsel %vm585, %v1225, %v1239
  %v1241 = vsel %vm587, %v1226, %v1240
  %v1242 = vsel %vm589, %v1227, %v1241
  %v1243 = vsel %vm591, %v1228, %v1242
  %v1244 = vsel %vm593, %v1229, %v1243
  %v1245 = vsel %vm595, %v1230, %v1244
  %v1246 = vsel %vm583, %v1232, %v1231
  %v1247 = vsel %vm585, %v1233, %v1246
  %v1248 = vsel %vm587, %v1234, %v1247
  %v1249 = vsel %vm589, %v1235, %v1248
  %v1250 = vsel %vm591, %v1236, %v1249
  %v1251 = vsel %vm593, %v1237, %v1250
  %v1252 = vsel %vm595, %v1238, %v1251
  %v1253 = vpack.c.b16 %v1252, %v1245
  %v1256 = vlaneseq
  %v1257 = vshrl.u32 %v1256, 7
  %v1258 = vsub.s32 0, %v1257
  %v1259 = vrot.slane %v168, %v1258
  %v1260 = vlaneseq
  %v1261 = vshrl.u32 %v1260, 7
  %v1262 = vsub.s32 1, %v1261
  %v1263 = vrot.slane %v168, %v1262
  %v1264 = vlaneseq
  %v1265 = vshrl.u32 %v1264, 7
  %v1266 = vsub.s32 2, %v1265
  %v1267 = vrot.slane %v168, %v1266
  %v1268 = vlaneseq
  %v1269 = vshrl.u32 %v1268, 7
  %v1270 = vsub.s32 3, %v1269
  %v1271 = vrot.slane %v168, %v1270
  %v1372 = vunpack.c.l.b16 %v72
  %v1373 = vunpack.c.h.b16 %v72
  %v1374 = vunpack.c.l.b16 %v73
  %v1375 = vunpack.c.h.b16 %v73
  %v1376 = vunpack.c.l.b16 %v74
  %v1377 = vunpack.c.h.b16 %v74
  %v1378 = vunpack.c.l.b16 %v75
  %v1379 = vunpack.c.h.b16 %v75
  %v1380 = vunpack.c.l.b16 %v76
  %v1381 = vunpack.c.h.b16 %v76
  %v1382 = vunpack.c.l.b16 %v77
  %v1383 = vunpack.c.h.b16 %v77
  %v1384 = vunpack.c.l.b16 %v78
  %v1385 = vunpack.c.h.b16 %v78
  %v1386 = vunpack.c.l.b16 %v79
  %v1387 = vunpack.c.h.b16 %v79
  %v1388 = vunpack.c.l.b16 %v80
  %v1389 = vunpack.c.h.b16 %v80
  %v1390 = vunpack.c.l.b16 %v81
  %v1391 = vunpack.c.h.b16 %v81
  %v1392 = vunpack.c.l.b16 %v82
  %v1393 = vunpack.c.h.b16 %v82
  %v1394 = vunpack.c.l.b16 %v83
  %v1395 = vunpack.c.h.b16 %v83
  %v1396 = vunpack.c.l.b16 %v84
  %v1397 = vunpack.c.h.b16 %v84
  %v1398 = vunpack.c.l.b16 %v85
  %v1399 = vunpack.c.h.b16 %v85
  %v1400 = vunpack.c.l.b16 %v86
  %v1401 = vunpack.c.h.b16 %v86
  %v1402 = vunpack.c.l.b16 %v87
  %v1403 = vunpack.c.h.b16 %v87
  %v1404 = vunpack.c.l.b16 %v88
  %v1405 = vunpack.c.h.b16 %v88
  %v1406 = vunpack.c.l.b16 %v89
  %v1407 = vunpack.c.h.b16 %v89
  %v1408 = vunpack.c.l.b16 %v90
  %v1409 = vunpack.c.h.b16 %v90
  %v1410 = vunpack.c.l.b16 %v91
  %v1411 = vunpack.c.h.b16 %v91
  %v1412 = vunpack.c.l.b16 %v92
  %v1413 = vunpack.c.h.b16 %v92
  %v1414 = vunpack.c.l.b16 %v93
  %v1415 = vunpack.c.h.b16 %v93
  %v1416 = vunpack.c.l.b16 %v94
  %v1417 = vunpack.c.h.b16 %v94
  %v1418 = vunpack.c.l.b16 %v95
  %v1419 = vunpack.c.h.b16 %v95
  %v1420 = vunpack.c.l.b16 %v96
  %v1421 = vunpack.c.h.b16 %v96
  %v1422 = vunpack.c.l.b16 %v97
  %v1423 = vunpack.c.h.b16 %v97
  %v1424 = vunpack.c.l.b16 %v98
  %v1425 = vunpack.c.h.b16 %v98
  %v1426 = vunpack.c.l.b16 %v99
  %v1427 = vunpack.c.h.b16 %v99
  %v1428 = vunpack.c.l.b16 %v100
  %v1429 = vunpack.c.h.b16 %v100
  %v1430 = vunpack.c.l.b16 %v101
  %v1431 = vunpack.c.h.b16 %v101
  %v1432 = vunpack.c.l.b16 %v102
  %v1433 = vunpack.c.h.b16 %v102
  %v1434 = vunpack.c.l.b16 %v103
  %v1435 = vunpack.c.h.b16 %v103
  %v1436 = vunpack.c.l.b16 %v104
  %v1437 = vunpack.c.h.b16 %v104
  %v1438 = vunpack.c.l.b16 %v105
  %v1439 = vunpack.c.h.b16 %v105
  %v1440 = vunpack.c.l.b16 %v106
  %v1441 = vunpack.c.h.b16 %v106
  %v1442 = vunpack.c.l.b16 %v107
  %v1443 = vunpack.c.h.b16 %v107
  %v1444 = vunpack.c.l.b16 %v108
  %v1445 = vunpack.c.h.b16 %v108
  %v1446 = vunpack.c.l.b16 %v109
  %v1447 = vunpack.c.h.b16 %v109
  %v1448 = vunpack.c.l.b16 %v110
  %v1449 = vunpack.c.h.b16 %v110
  %v1450 = vunpack.c.l.b16 %v111
  %v1451 = vunpack.c.h.b16 %v111
  %v1452 = vunpack.c.l.b16 %v112
  %v1453 = vunpack.c.h.b16 %v112
  %v1454 = vunpack.c.l.b16 %v113
  %v1455 = vunpack.c.h.b16 %v113
  %v1456 = vunpack.c.l.b16 %v114
  %v1457 = vunpack.c.h.b16 %v114
  %v1458 = vunpack.c.l.b16 %v115
  %v1459 = vunpack.c.h.b16 %v115
  %v1460 = vunpack.c.l.b16 %v116
  %v1461 = vunpack.c.h.b16 %v116
  %v1462 = vunpack.c.l.b16 %v117
  %v1463 = vunpack.c.h.b16 %v117
  %v1464 = vunpack.c.l.b16 %v118
  %v1465 = vunpack.c.h.b16 %v118
  %v1466 = vunpack.c.l.b16 %v119
  %v1467 = vunpack.c.h.b16 %v119
  %v1468 = vunpack.c.l.b16 %v120
  %v1469 = vunpack.c.h.b16 %v120
  %v1470 = vunpack.c.l.b16 %v121
  %v1471 = vunpack.c.h.b16 %v121
  %v1472 = vunpack.c.l.b16 %v122
  %v1473 = vunpack.c.h.b16 %v122
  %v1474 = vunpack.c.l.b16 %v123
  %v1475 = vunpack.c.h.b16 %v123
  %v1476 = vunpack.c.l.b16 %v124
  %v1477 = vunpack.c.h.b16 %v124
  %v1478 = vunpack.c.l.b16 %v125
  %v1479 = vunpack.c.h.b16 %v125
  %v1480 = vunpack.c.l.b16 %v126
  %v1481 = vunpack.c.h.b16 %v126
  %v1482 = vunpack.c.l.b16 %v127
  %v1483 = vunpack.c.h.b16 %v127
  %v1484 = vunpack.c.l.b16 %v128
  %v1485 = vunpack.c.h.b16 %v128
  %v1486 = vunpack.c.l.b16 %v129
  %v1487 = vunpack.c.h.b16 %v129
  %v1488 = vunpack.c.l.b16 %v130
  %v1489 = vunpack.c.h.b16 %v130
  %v1490 = vunpack.c.l.b16 %v131
  %v1491 = vunpack.c.h.b16 %v131
  %v1492 = vunpack.c.l.b16 %v132
  %v1493 = vunpack.c.h.b16 %v132
  %v1494 = vunpack.c.l.b16 %v133
  %v1495 = vunpack.c.h.b16 %v133
  %v1496 = vunpack.c.l.b16 %v134
  %v1497 = vunpack.c.h.b16 %v134
  %v1498 = vunpack.c.l.b16 %v135
  %v1499 = vunpack.c.h.b16 %v135
  %v1500 = vunpack.c.l.b16 %v136
  %v1501 = vunpack.c.h.b16 %v136
  %v1502 = vunpack.c.l.b16 %v137
  %v1503 = vunpack.c.h.b16 %v137
  %v1504 = vunpack.c.l.b16 %v138
  %v1505 = vunpack.c.h.b16 %v138
  %v1506 = vunpack.c.l.b16 %v139
  %v1507 = vunpack.c.h.b16 %v139
  %v1508 = vunpack.c.l.b16 %v140
  %v1509 = vunpack.c.h.b16 %v140
  %v1510 = vunpack.c.l.b16 %v141
  %v1511 = vunpack.c.h.b16 %v141
  %v1512 = vunpack.c.l.b16 %v142
  %v1513 = vunpack.c.h.b16 %v142
  %v1514 = vunpack.c.l.b16 %v143
  %v1515 = vunpack.c.h.b16 %v143
  %v1516 = vunpack.c.l.b16 %v144
  %v1517 = vunpack.c.h.b16 %v144
  %v1518 = vunpack.c.l.b16 %v145
  %v1519 = vunpack.c.h.b16 %v145
  %v1520 = vunpack.c.l.b16 %v146
  %v1521 = vunpack.c.h.b16 %v146
  %v1522 = vunpack.c.l.b16 %v147
  %v1523 = vunpack.c.h.b16 %v147
  %v1524 = vunpack.c.l.b16 %v148
  %v1525 = vunpack.c.h.b16 %v148
  %v1526 = vunpack.c.l.b16 %v149
  %v1527 = vunpack.c.h.b16 %v149
  %v1528 = vunpack.c.l.b16 %v150
  %v1529 = vunpack.c.h.b16 %v150
  %v1530 = vunpack.c.l.b16 %v151
  %v1531 = vunpack.c.h.b16 %v151
  %v1532 = vunpack.c.l.b16 %v152
  %v1533 = vunpack.c.h.b16 %v152
  %v1534 = vunpack.c.l.b16 %v153
  %v1535 = vunpack.c.h.b16 %v153
  %v1536 = vunpack.c.l.b16 %v154
  %v1537 = vunpack.c.h.b16 %v154
  %v1538 = vunpack.c.l.b16 %v155
  %v1539 = vunpack.c.h.b16 %v155
  %v1540 = vunpack.c.l.b16 %v156
  %v1541 = vunpack.c.h.b16 %v156
  %v1542 = vunpack.c.l.b16 %v157
  %v1543 = vunpack.c.h.b16 %v157
  %v1544 = vunpack.c.l.b16 %v158
  %v1545 = vunpack.c.h.b16 %v158
  %v1546 = vunpack.c.l.b16 %v159
  %v1547 = vunpack.c.h.b16 %v159
  %v1548 = vunpack.c.l.b16 %v160
  %v1549 = vunpack.c.h.b16 %v160
  %v1550 = vunpack.c.l.b16 %v161
  %v1551 = vunpack.c.h.b16 %v161
  %v1552 = vunpack.c.l.b16 %v162
  %v1553 = vunpack.c.h.b16 %v162
  %v1554 = vunpack.c.l.b16 %v163
  %v1555 = vunpack.c.h.b16 %v163
  %v1556 = vunpack.c.l.b16 %v164
  %v1557 = vunpack.c.h.b16 %v164
  %v1558 = vunpack.c.l.b16 %v165
  %v1559 = vunpack.c.h.b16 %v165
  %v1560 = vunpack.c.l.b16 %v166
  %v1561 = vunpack.c.h.b16 %v166
  %v1562 = vunpack.c.l.b16 %v167
  %v1563 = vunpack.c.h.b16 %v167
  %v1564 = vpack.c.b16 %v1376, %v1372
  %v1565 = vpack.c.b16 %v1377, %v1373
  %v1566 = vpack.c.b16 %v1378, %v1374
  %v1567 = vpack.c.b16 %v1379, %v1375
  %v1568 = vpack.c.b16 %v1384, %v1380
  %v1569 = vpack.c.b16 %v1385, %v1381
  %v1570 = vpack.c.b16 %v1386, %v1382
  %v1571 = vpack.c.b16 %v1387, %v1383
  %v1572 = vpack.c.b16 %v1392, %v1388
  %v1573 = vpack.c.b16 %v1393, %v1389
  %v1574 = vpack.c.b16 %v1394, %v1390
  %v1575 = vpack.c.b16 %v1395, %v1391
  %v1576 = vpack.c.b16 %v1400, %v1396
  %v1577 = vpack.c.b16 %v1401, %v1397
  %v1578 = vpack.c.b16 %v1402, %v1398
  %v1579 = vpack.c.b16 %v1403, %v1399
  %v1580 = vpack.c.b16 %v1408, %v1404
  %v1581 = vpack.c.b16 %v1409, %v1405
  %v1582 = vpack.c.b16 %v1410, %v1406
  %v1583 = vpack.c.b16 %v1411, %v1407
  %v1584 = vpack.c.b16 %v1416, %v1412
  %v1585 = vpack.c.b16 %v1417, %v1413
  %v1586 = vpack.c.b16 %v1418, %v1414
  %v1587 = vpack.c.b16 %v1419, %v1415
  %v1588 = vpack.c.b16 %v1424, %v1420
  %v1589 = vpack.c.b16 %v1425, %v1421
  %v1590 = vpack.c.b16 %v1426, %v1422
  %v1591 = vpack.c.b16 %v1427, %v1423
  %v1592 = vpack.c.b16 %v1432, %v1428
  %v1593 = vpack.c.b16 %v1433, %v1429
  %v1594 = vpack.c.b16 %v1434, %v1430
  %v1595 = vpack.c.b16 %v1435, %v1431
  %v1596 = vpack.c.b16 %v1440, %v1436
  %v1597 = vpack.c.b16 %v1441, %v1437
  %v1598 = vpack.c.b16 %v1442, %v1438
  %v1599 = vpack.c.b16 %v1443, %v1439
  %v1600 = vpack.c.b16 %v1448, %v1444
  %v1601 = vpack.c.b16 %v1449, %v1445
  %v1602 = vpack.c.b16 %v1450, %v1446
  %v1603 = vpack.c.b16 %v1451, %v1447
  %v1604 = vpack.c.b16 %v1456, %v1452
  %v1605 = vpack.c.b16 %v1457, %v1453
  %v1606 = vpack.c.b16 %v1458, %v1454
  %v1607 = vpack.c.b16 %v1459, %v1455
  %v1608 = vpack.c.b16 %v1464, %v1460
  %v1609 = vpack.c.b16 %v1465, %v1461
  %v1610 = vpack.c.b16 %v1466, %v1462
  %v1611 = vpack.c.b16 %v1467, %v1463
  %v1612 = vpack.c.b16 %v1472, %v1468
  %v1613 = vpack.c.b16 %v1473, %v1469
  %v1614 = vpack.c.b16 %v1474, %v1470
  %v1615 = vpack.c.b16 %v1475, %v1471
  %v1616 = vpack.c.b16 %v1480, %v1476
  %v1617 = vpack.c.b16 %v1481, %v1477
  %v1618 = vpack.c.b16 %v1482, %v1478
  %v1619 = vpack.c.b16 %v1483, %v1479
  %v1620 = vpack.c.b16 %v1488, %v1484
  %v1621 = vpack.c.b16 %v1489, %v1485
  %v1622 = vpack.c.b16 %v1490, %v1486
  %v1623 = vpack.c.b16 %v1491, %v1487
  %v1624 = vpack.c.b16 %v1496, %v1492
  %v1625 = vpack.c.b16 %v1497, %v1493
  %v1626 = vpack.c.b16 %v1498, %v1494
  %v1627 = vpack.c.b16 %v1499, %v1495
  %v1628 = vpack.c.b16 %v1504, %v1500
  %v1629 = vpack.c.b16 %v1505, %v1501
  %v1630 = vpack.c.b16 %v1506, %v1502
  %v1631 = vpack.c.b16 %v1507, %v1503
  %v1632 = vpack.c.b16 %v1512, %v1508
  %v1633 = vpack.c.b16 %v1513, %v1509
  %v1634 = vpack.c.b16 %v1514, %v1510
  %v1635 = vpack.c.b16 %v1515, %v1511
  %v1636 = vpack.c.b16 %v1520, %v1516
  %v1637 = vpack.c.b16 %v1521, %v1517
  %v1638 = vpack.c.b16 %v1522, %v1518
  %v1639 = vpack.c.b16 %v1523, %v1519
  %v1640 = vpack.c.b16 %v1528, %v1524
  %v1641 = vpack.c.b16 %v1529, %v1525
  %v1642 = vpack.c.b16 %v1530, %v1526
  %v1643 = vpack.c.b16 %v1531, %v1527
  %v1644 = vpack.c.b16 %v1536, %v1532
  %v1645 = vpack.c.b16 %v1537, %v1533
  %v1646 = vpack.c.b16 %v1538, %v1534
  %v1647 = vpack.c.b16 %v1539, %v1535
  %v1648 = vpack.c.b16 %v1544, %v1540
  %v1649 = vpack.c.b16 %v1545, %v1541
  %v1650 = vpack.c.b16 %v1546, %v1542
  %v1651 = vpack.c.b16 %v1547, %v1543
  %v1652 = vpack.c.b16 %v1552, %v1548
  %v1653 = vpack.c.b16 %v1553, %v1549
  %v1654 = vpack.c.b16 %v1554, %v1550
  %v1655 = vpack.c.b16 %v1555, %v1551
  %v1656 = vpack.c.b16 %v1560, %v1556
  %v1657 = vpack.c.b16 %v1561, %v1557
  %v1658 = vpack.c.b16 %v1562, %v1558
  %v1659 = vpack.c.b16 %v1563, %v1559
  %1756 = vmatprep.subr.bf16.mxu0 %v1593
  %1757 = vmatpush1.bf16.msra.mxu0 %v1592
  %1758 = vmatprep.subr.bf16.mxu0 %v1589
  %1759 = vmatpush1.bf16.msra.mxu0 %v1588
  %1760 = vmatprep.subr.bf16.mxu0 %v1585
  %1761 = vmatpush1.bf16.msra.mxu0 %v1584
  %1762 = vmatprep.subr.bf16.mxu0 %v1581
  %1763 = vmatpush1.bf16.msra.mxu0 %v1580
  %1764 = vmatprep.subr.bf16.mxu0 %v1577
  %1765 = vmatpush1.bf16.msra.mxu0 %v1576
  %1766 = vmatprep.subr.bf16.mxu0 %v1573
  %1767 = vmatpush1.bf16.msra.mxu0 %v1572
  %1768 = vmatprep.subr.bf16.mxu0 %v1569
  %1769 = vmatpush1.bf16.msra.mxu0 %v1568
  %1770 = vmatprep.subr.bf16.mxu0 %v1565
  %1771 = vmatpush1.bf16.msra.mxu0 %v1564
  %1772 = vmatprep.subr.bf16.mxu0 %v1625
  %1773 = vmatpush2.bf16.msra.mxu0 %v1624
  %1774 = vmatprep.subr.bf16.mxu0 %v1621
  %1775 = vmatpush2.bf16.msra.mxu0 %v1620
  %1776 = vmatprep.subr.bf16.mxu0 %v1617
  %1777 = vmatpush2.bf16.msra.mxu0 %v1616
  %1778 = vmatprep.subr.bf16.mxu0 %v1613
  %1779 = vmatpush2.bf16.msra.mxu0 %v1612
  %1780 = vmatprep.subr.bf16.mxu0 %v1609
  %1781 = vmatpush2.bf16.msra.mxu0 %v1608
  %1782 = vmatprep.subr.bf16.mxu0 %v1605
  %1783 = vmatpush2.bf16.msra.mxu0 %v1604
  %1784 = vmatprep.subr.bf16.mxu0 %v1601
  %1785 = vmatpush2.bf16.msra.mxu0 %v1600
  %1786 = vmatprep.subr.bf16.mxu0 %v1597
  %1787 = vmatpush2.bf16.msra.mxu0 %v1596
  %1788 = vmatprep.mubr.bf16.mxu0 %v1253
  %1789 = vmatmul.mubr.bf16.gmra.mxu0 %v1205
  %v1790 = vpop.f32.mrf.mxu0
  %v1791 = vadd.f32 %v1259, %v1790
  %v1792 = vpop.f32.mrf.mxu0
  %v1793 = vadd.f32 %v1263, %v1792
  %v1794 = vpop.f32.mrf.mxu0
  %v1795 = vadd.f32 %v1259, %v1794
  %v1796 = vpop.f32.mrf.mxu0
  %v1797 = vadd.f32 %v1263, %v1796
  %1798 = vdwg.mxu0
  %1799 = vmatprep.subr.bf16.mxu0 %v1657
  %1800 = vmatpush1.bf16.msra.mxu0 %v1656
  %1801 = vmatprep.subr.bf16.mxu0 %v1653
  %1802 = vmatpush1.bf16.msra.mxu0 %v1652
  %1803 = vmatprep.subr.bf16.mxu0 %v1649
  %1804 = vmatpush1.bf16.msra.mxu0 %v1648
  %1805 = vmatprep.subr.bf16.mxu0 %v1645
  %1806 = vmatpush1.bf16.msra.mxu0 %v1644
  %1807 = vmatprep.subr.bf16.mxu0 %v1641
  %1808 = vmatpush1.bf16.msra.mxu0 %v1640
  %1809 = vmatprep.subr.bf16.mxu0 %v1637
  %1810 = vmatpush1.bf16.msra.mxu0 %v1636
  %1811 = vmatprep.subr.bf16.mxu0 %v1633
  %1812 = vmatpush1.bf16.msra.mxu0 %v1632
  %1813 = vmatprep.subr.bf16.mxu0 %v1629
  %1814 = vmatpush1.bf16.msra.mxu0 %v1628
  %1815 = vmatprep.subr.bf16.mxu0 0
  %1816 = vmatpush2.bf16.msra.mxu0 0
  %1817 = vmatprep.subr.bf16.mxu0 0
  %1818 = vmatpush2.bf16.msra.mxu0 0
  %1819 = vmatprep.subr.bf16.mxu0 0
  %1820 = vmatpush2.bf16.msra.mxu0 0
  %1821 = vmatprep.subr.bf16.mxu0 0
  %1822 = vmatpush2.bf16.msra.mxu0 0
  %1823 = vmatprep.subr.bf16.mxu0 0
  %1824 = vmatpush2.bf16.msra.mxu0 0
  %1825 = vmatprep.subr.bf16.mxu0 0
  %1826 = vmatpush2.bf16.msra.mxu0 0
  %1827 = vmatprep.subr.bf16.mxu0 0
  %1828 = vmatpush2.bf16.msra.mxu0 0
  %1829 = vmatprep.subr.bf16.mxu0 0
  %1830 = vmatpush2.bf16.msra.mxu0 0
  %1831 = vmatprep.mubr.bf16.mxu0 0
  %1832 = vmatmul.mubr.bf16.gmra.mxu0 %v183
  %v1833 = vpop.f32.mrf.mxu0
  %v1834 = vadd.f32 %v1791, %v1833
  %v1835 = vpop.f32.mrf.mxu0
  %v1836 = vadd.f32 %v1793, %v1835
  %v1837 = vpop.f32.mrf.mxu0
  %v1838 = vadd.f32 %v1795, %v1837
  %v1839 = vpop.f32.mrf.mxu0
  %v1840 = vadd.f32 %v1797, %v1839
  %1841 = vdwg.mxu0
  %1842 = vmatprep.subr.bf16.mxu0 %v1595
  %1843 = vmatpush1.bf16.msra.mxu0 %v1594
  %1844 = vmatprep.subr.bf16.mxu0 %v1591
  %1845 = vmatpush1.bf16.msra.mxu0 %v1590
  %1846 = vmatprep.subr.bf16.mxu0 %v1587
  %1847 = vmatpush1.bf16.msra.mxu0 %v1586
  %1848 = vmatprep.subr.bf16.mxu0 %v1583
  %1849 = vmatpush1.bf16.msra.mxu0 %v1582
  %1850 = vmatprep.subr.bf16.mxu0 %v1579
  %1851 = vmatpush1.bf16.msra.mxu0 %v1578
  %1852 = vmatprep.subr.bf16.mxu0 %v1575
  %1853 = vmatpush1.bf16.msra.mxu0 %v1574
  %1854 = vmatprep.subr.bf16.mxu0 %v1571
  %1855 = vmatpush1.bf16.msra.mxu0 %v1570
  %1856 = vmatprep.subr.bf16.mxu0 %v1567
  %1857 = vmatpush1.bf16.msra.mxu0 %v1566
  %1858 = vmatprep.subr.bf16.mxu0 %v1627
  %1859 = vmatpush2.bf16.msra.mxu0 %v1626
  %1860 = vmatprep.subr.bf16.mxu0 %v1623
  %1861 = vmatpush2.bf16.msra.mxu0 %v1622
  %1862 = vmatprep.subr.bf16.mxu0 %v1619
  %1863 = vmatpush2.bf16.msra.mxu0 %v1618
  %1864 = vmatprep.subr.bf16.mxu0 %v1615
  %1865 = vmatpush2.bf16.msra.mxu0 %v1614
  %1866 = vmatprep.subr.bf16.mxu0 %v1611
  %1867 = vmatpush2.bf16.msra.mxu0 %v1610
  %1868 = vmatprep.subr.bf16.mxu0 %v1607
  %1869 = vmatpush2.bf16.msra.mxu0 %v1606
  %1870 = vmatprep.subr.bf16.mxu0 %v1603
  %1871 = vmatpush2.bf16.msra.mxu0 %v1602
  %1872 = vmatprep.subr.bf16.mxu0 %v1599
  %1873 = vmatpush2.bf16.msra.mxu0 %v1598
  %1874 = vmatprep.mubr.bf16.mxu0 %v1253
  %1875 = vmatmul.mubr.bf16.gmra.mxu0 %v1205
  %v1876 = vpop.f32.mrf.mxu0
  %v1877 = vadd.f32 %v1267, %v1876
  %v1878 = vpop.f32.mrf.mxu0
  %v1879 = vadd.f32 %v1271, %v1878
  %v1880 = vpop.f32.mrf.mxu0
  %v1881 = vadd.f32 %v1267, %v1880
  %v1882 = vpop.f32.mrf.mxu0
  %v1883 = vadd.f32 %v1271, %v1882
  %1884 = vdwg.mxu0
  %1885 = vmatprep.subr.bf16.mxu0 %v1659
  %1886 = vmatpush1.bf16.msra.mxu0 %v1658
  %1887 = vmatprep.subr.bf16.mxu0 %v1655
  %1888 = vmatpush1.bf16.msra.mxu0 %v1654
  %1889 = vmatprep.subr.bf16.mxu0 %v1651
  %1890 = vmatpush1.bf16.msra.mxu0 %v1650
  %1891 = vmatprep.subr.bf16.mxu0 %v1647
  %1892 = vmatpush1.bf16.msra.mxu0 %v1646
  %1893 = vmatprep.subr.bf16.mxu0 %v1643
  %1894 = vmatpush1.bf16.msra.mxu0 %v1642
  %1895 = vmatprep.subr.bf16.mxu0 %v1639
  %1896 = vmatpush1.bf16.msra.mxu0 %v1638
  %1897 = vmatprep.subr.bf16.mxu0 %v1635
  %1898 = vmatpush1.bf16.msra.mxu0 %v1634
  %1899 = vmatprep.subr.bf16.mxu0 %v1631
  %1900 = vmatpush1.bf16.msra.mxu0 %v1630
  %1901 = vmatprep.subr.bf16.mxu0 0
  %1902 = vmatpush2.bf16.msra.mxu0 0
  %1903 = vmatprep.subr.bf16.mxu0 0
  %1904 = vmatpush2.bf16.msra.mxu0 0
  %1905 = vmatprep.subr.bf16.mxu0 0
  %1906 = vmatpush2.bf16.msra.mxu0 0
  %1907 = vmatprep.subr.bf16.mxu0 0
  %1908 = vmatpush2.bf16.msra.mxu0 0
  %1909 = vmatprep.subr.bf16.mxu0 0
  %1910 = vmatpush2.bf16.msra.mxu0 0
  %1911 = vmatprep.subr.bf16.mxu0 0
  %1912 = vmatpush2.bf16.msra.mxu0 0
  %1913 = vmatprep.subr.bf16.mxu0 0
  %1914 = vmatpush2.bf16.msra.mxu0 0
  %1915 = vmatprep.subr.bf16.mxu0 0
  %1916 = vmatpush2.bf16.msra.mxu0 0
  %1917 = vmatprep.mubr.bf16.mxu0 0
  %1918 = vmatmul.mubr.bf16.gmra.mxu0 %v183
  %v1919 = vpop.f32.mrf.mxu0
  %v1920 = vadd.f32 %v1877, %v1919
  %v1921 = vpop.f32.mrf.mxu0
  %v1922 = vadd.f32 %v1879, %v1921
  %v1923 = vpop.f32.mrf.mxu0
  %v1924 = vadd.f32 %v1881, %v1923
  %v1925 = vpop.f32.mrf.mxu0
  %v1926 = vadd.f32 %v1883, %v1925
  %1927 = vdwg.mxu0
  %v1928 = vmul.f32 %v1834, 0.5
  %v1929 = vmul.f32 %v1836, 0.5
  %v1930 = vmul.f32 %v1920, 0.5
  %v1931 = vmul.f32 %v1838, 0.5
  %v1932 = vmul.f32 %v1840, 0.5
  %v1933 = vmul.f32 %v1924, 0.5
  %v1934 = vtanh.pop %v1928
  %v1935 = vtanh.pop %v1929
  %v1936 = vtanh.pop %v1930
  %v1937 = vtanh.pop %v1931
  %v1938 = vtanh.pop %v1932
  %v1939 = vtanh.pop %v1933
  %v1940 = vadd.f32 %v1934, 1.0
  %v1941 = vadd.f32 %v1935, 1.0
  %v1942 = vadd.f32 %v1936, 1.0
  %v1943 = vadd.f32 %v1937, 1.0
  %v1944 = vadd.f32 %v1938, 1.0
  %v1945 = vadd.f32 %v1939, 1.0
  %v1946 = vmul.f32 %v1940, 0.5
  %v1947 = vmul.f32 %v1941, 0.5
  %v1948 = vmul.f32 %v1942, 0.5
  %v1949 = vmul.f32 %v1943, 0.5
  %v1950 = vmul.f32 %v1944, 0.5
  %v1951 = vmul.f32 %v1945, 0.5
  %v1952 = vtanh.pop %v1922
  %v1953 = vtanh.pop %v1926
  %v1954 = vmul.f32 %v1947, %v181
  %v1955 = vmul.f32 %v1950, %v182
  %v1956 = vmul.f32 %v1946, %v1952
  %v1957 = vmul.f32 %v1949, %v1953
  %v1958 = vadd.f32 %v1954, %v1956
  %v1959 = vadd.f32 %v1955, %v1957
  %v1960 = vtanh.pop %v1958
  %v1961 = vtanh.pop %v1959
  %v1962 = vmul.f32 %v1948, %v1960
  %v1963 = vmul.f32 %v1951, %v1961
  %1964 = vst [vmem:[%s6] sm:$0xff] %v1962
  %1965 = vst [vmem:[%s6 + $0x8] sm:$0xff] %v1963
  %1966 = vst [vmem:[#allocation2] sm:$0xff] %v1962
  %1967 = vst [vmem:[#allocation2 + $0x8] sm:$0xff] %v1963
  %1968 = vst [vmem:[#allocation3] sm:$0xff] %v1958
  %1969 = vst [vmem:[#allocation3 + $0x8] sm:$0xff] %v1959
  %s1970 = scalar_lea.vmem %s0, 8
  %v1971 = vld [vmem:[%s1970] sm:$0xf]
  %v1972 = vld [vmem:[%s1970 + $0x4] sm:$0xf]
  %v1973 = vld [vmem:[#allocation2] sm:$0xff]
  %v1974 = vld [vmem:[#allocation2 + $0x8] sm:$0xff]
  %v1975 = vld [vmem:[#allocation3] sm:$0xff]
  %v1976 = vld [vmem:[#allocation3 + $0x8] sm:$0xff]
  %v1977 = vpack.c.bf16 %v1974, %v1973
  %1978 = vmatprep.subr.bf16.mxu0 0
  %1979 = vmatpush1.bf16.msra.mxu0 %v223
  %1980 = vmatprep.subr.bf16.mxu0 0
  %1981 = vmatpush1.bf16.msra.mxu0 %v222
  %1982 = vmatprep.subr.bf16.mxu0 0
  %1983 = vmatpush1.bf16.msra.mxu0 %v221
  %1984 = vmatprep.subr.bf16.mxu0 0
  %1985 = vmatpush1.bf16.msra.mxu0 %v220
  %1986 = vmatprep.subr.bf16.mxu0 0
  %1987 = vmatpush1.bf16.msra.mxu0 %v219
  %1988 = vmatprep.subr.bf16.mxu0 0
  %1989 = vmatpush1.bf16.msra.mxu0 %v218
  %1990 = vmatprep.subr.bf16.mxu0 0
  %1991 = vmatpush1.bf16.msra.mxu0 %v217
  %1992 = vmatprep.subr.bf16.mxu0 0
  %1993 = vmatpush1.bf16.msra.mxu0 %v216
  %1994 = vmatprep.subr.bf16.mxu0 0
  %1995 = vmatpush2.bf16.msra.mxu0 0
  %1996 = vmatprep.subr.bf16.mxu0 0
  %1997 = vmatpush2.bf16.msra.mxu0 0
  %1998 = vmatprep.subr.bf16.mxu0 0
  %1999 = vmatpush2.bf16.msra.mxu0 0
  %2000 = vmatprep.subr.bf16.mxu0 0
  %2001 = vmatpush2.bf16.msra.mxu0 0
  %2002 = vmatprep.subr.bf16.mxu0 0
  %2003 = vmatpush2.bf16.msra.mxu0 0
  %2004 = vmatprep.subr.bf16.mxu0 0
  %2005 = vmatpush2.bf16.msra.mxu0 0
  %2006 = vmatprep.subr.bf16.mxu0 0
  %2007 = vmatpush2.bf16.msra.mxu0 0
  %2008 = vmatprep.subr.bf16.mxu0 0
  %2009 = vmatpush2.bf16.msra.mxu0 0
  %2010 = vmatprep.mubr.bf16.mxu0 0
  %2011 = vmatmul.mubr.bf16.gmra.mxu0 %v1977
  %v2012 = vpop.f32.mrf.mxu0
  %v2013 = vadd.f32 0.0, %v2012
  %v2014 = vpop.f32.mrf.mxu0
  %v2015 = vpop.f32.mrf.mxu0
  %v2016 = vadd.f32 0.0, %v2015
  %v2017 = vpop.f32.mrf.mxu0
  %2018 = vdwg.mxu0
  %v2021 = vcombine.high %v2013, %v2013
  %v2023 = vunpack.c.l.s4 1966171168
  %v2024 = vunpack.c.0.s8 %v2023
  %v2025 = vlaneseq
  %v2026 = vshrl.u32 %v2025, 7
  %v2027 = vsub.s32 %v2024, %v2026
  %v2028 = vrot.slane %v2013, %v2027
  %v2030 = vunpack.c.l.s4 1966171168
  %v2031 = vunpack.c.0.s8 %v2030
  %v2032 = vlaneseq
  %v2033 = vshrl.u32 %v2032, 7
  %v2034 = vsub.s32 %v2031, %v2033
  %v2035 = vrot.slane %v2021, %v2034
  %v2036 = vcombine.high %v2028, %v2028
  %v2037 = vcombine.high %v2035, %v2035
  %v2039 = vunpack.c.l.s4 1966171168
  %v2040 = vunpack.c.0.s8 %v2039
  %v2041 = vlaneseq
  %v2042 = vshrl.u32 %v2041, 7
  %v2043 = vsub.s32 %v2040, %v2042
  %v2044 = vrot.slane %v2028, %v2043
  %v2046 = vunpack.c.l.s4 1966171168
  %v2047 = vunpack.c.0.s8 %v2046
  %v2048 = vlaneseq
  %v2049 = vshrl.u32 %v2048, 7
  %v2050 = vsub.s32 %v2047, %v2049
  %v2051 = vrot.slane %v2035, %v2050
  %v2053 = vunpack.c.l.s4 1966171168
  %v2054 = vunpack.c.0.s8 %v2053
  %v2055 = vlaneseq
  %v2056 = vshrl.u32 %v2055, 7
  %v2057 = vsub.s32 %v2054, %v2056
  %v2058 = vrot.slane %v2036, %v2057
  %v2060 = vunpack.c.l.s4 1966171168
  %v2061 = vunpack.c.0.s8 %v2060
  %v2062 = vlaneseq
  %v2063 = vshrl.u32 %v2062, 7
  %v2064 = vsub.s32 %v2061, %v2063
  %v2065 = vrot.slane %v2037, %v2064
  %v2066 = vcombine.high %v2044, %v2044
  %v2067 = vcombine.high %v2051, %v2051
  %v2068 = vcombine.high %v2058, %v2058
  %v2069 = vcombine.high %v2065, %v2065
  %v2070 = vcombine.high %v2016, %v2016
  %v2072 = vunpack.c.l.s4 1966171168
  %v2073 = vunpack.c.0.s8 %v2072
  %v2074 = vlaneseq
  %v2075 = vshrl.u32 %v2074, 7
  %v2076 = vsub.s32 %v2073, %v2075
  %v2077 = vrot.slane %v2016, %v2076
  %v2079 = vunpack.c.l.s4 1966171168
  %v2080 = vunpack.c.0.s8 %v2079
  %v2081 = vlaneseq
  %v2082 = vshrl.u32 %v2081, 7
  %v2083 = vsub.s32 %v2080, %v2082
  %v2084 = vrot.slane %v2070, %v2083
  %v2085 = vcombine.high %v2077, %v2077
  %v2086 = vcombine.high %v2084, %v2084
  %v2088 = vunpack.c.l.s4 1966171168
  %v2089 = vunpack.c.0.s8 %v2088
  %v2090 = vlaneseq
  %v2091 = vshrl.u32 %v2090, 7
  %v2092 = vsub.s32 %v2089, %v2091
  %v2093 = vrot.slane %v2077, %v2092
  %v2095 = vunpack.c.l.s4 1966171168
  %v2096 = vunpack.c.0.s8 %v2095
  %v2097 = vlaneseq
  %v2098 = vshrl.u32 %v2097, 7
  %v2099 = vsub.s32 %v2096, %v2098
  %v2100 = vrot.slane %v2084, %v2099
  %v2102 = vunpack.c.l.s4 1966171168
  %v2103 = vunpack.c.0.s8 %v2102
  %v2104 = vlaneseq
  %v2105 = vshrl.u32 %v2104, 7
  %v2106 = vsub.s32 %v2103, %v2105
  %v2107 = vrot.slane %v2085, %v2106
  %v2109 = vunpack.c.l.s4 1966171168
  %v2110 = vunpack.c.0.s8 %v2109
  %v2111 = vlaneseq
  %v2112 = vshrl.u32 %v2111, 7
  %v2113 = vsub.s32 %v2110, %v2112
  %v2114 = vrot.slane %v2086, %v2113
  %v2115 = vcombine.high %v2093, %v2093
  %v2116 = vcombine.high %v2100, %v2100
  %v2117 = vcombine.high %v2107, %v2107
  %v2118 = vcombine.high %v2114, %v2114
  %v2119 = vlaneseq
  %v2120 = vshrl.u32 %v2119, 7
  %v2121 = vsub.s32 0, %v2120
  %v2122 = vrot.slane %v2044, %v2121
  %v2123 = vlaneseq
  %v2124 = vshrl.u32 %v2123, 7
  %v2125 = vsub.s32 0, %v2124
  %v2126 = vrot.slane %v2058, %v2125
  %v2127 = vlaneseq
  %v2128 = vshrl.u32 %v2127, 7
  %v2129 = vsub.s32 0, %v2128
  %v2130 = vrot.slane %v2066, %v2129
  %v2131 = vlaneseq
  %v2132 = vshrl.u32 %v2131, 7
  %v2133 = vsub.s32 0, %v2132
  %v2134 = vrot.slane %v2068, %v2133
  %v2135 = vlaneseq
  %v2136 = vshrl.u32 %v2135, 7
  %v2137 = vsub.s32 0, %v2136
  %v2138 = vrot.slane %v2051, %v2137
  %v2139 = vlaneseq
  %v2140 = vshrl.u32 %v2139, 7
  %v2141 = vsub.s32 0, %v2140
  %v2142 = vrot.slane %v2065, %v2141
  %v2143 = vlaneseq
  %v2144 = vshrl.u32 %v2143, 7
  %v2145 = vsub.s32 0, %v2144
  %v2146 = vrot.slane %v2067, %v2145
  %v2147 = vlaneseq
  %v2148 = vshrl.u32 %v2147, 7
  %v2149 = vsub.s32 0, %v2148
  %v2150 = vrot.slane %v2069, %v2149
  %v2151 = vlaneseq
  %v2152 = vshrl.u32 %v2151, 7
  %v2153 = vsub.s32 0, %v2152
  %v2154 = vrot.slane %v2093, %v2153
  %v2155 = vlaneseq
  %v2156 = vshrl.u32 %v2155, 7
  %v2157 = vsub.s32 0, %v2156
  %v2158 = vrot.slane %v2107, %v2157
  %v2159 = vlaneseq
  %v2160 = vshrl.u32 %v2159, 7
  %v2161 = vsub.s32 0, %v2160
  %v2162 = vrot.slane %v2115, %v2161
  %v2163 = vlaneseq
  %v2164 = vshrl.u32 %v2163, 7
  %v2165 = vsub.s32 0, %v2164
  %v2166 = vrot.slane %v2117, %v2165
  %v2167 = vlaneseq
  %v2168 = vshrl.u32 %v2167, 7
  %v2169 = vsub.s32 0, %v2168
  %v2170 = vrot.slane %v2100, %v2169
  %v2171 = vlaneseq
  %v2172 = vshrl.u32 %v2171, 7
  %v2173 = vsub.s32 0, %v2172
  %v2174 = vrot.slane %v2114, %v2173
  %v2175 = vlaneseq
  %v2176 = vshrl.u32 %v2175, 7
  %v2177 = vsub.s32 0, %v2176
  %v2178 = vrot.slane %v2116, %v2177
  %v2179 = vlaneseq
  %v2180 = vshrl.u32 %v2179, 7
  %v2181 = vsub.s32 0, %v2180
  %v2182 = vrot.slane %v2118, %v2181
  %v2199 = vmul.f32 %v2122, %v40
  %v2200 = vmul.f32 %v2126, %v41
  %v2201 = vmul.f32 %v2130, %v42
  %v2202 = vmul.f32 %v2134, %v43
  %v2203 = vmul.f32 %v2138, %v44
  %v2204 = vmul.f32 %v2142, %v45
  %v2205 = vmul.f32 %v2146, %v46
  %v2206 = vmul.f32 %v2150, %v47
  %v2207 = vmul.f32 %v2154, %v48
  %v2208 = vmul.f32 %v2158, %v49
  %v2209 = vmul.f32 %v2162, %v50
  %v2210 = vmul.f32 %v2166, %v51
  %v2211 = vmul.f32 %v2170, %v52
  %v2212 = vmul.f32 %v2174, %v53
  %v2213 = vmul.f32 %v2178, %v54
  %v2214 = vmul.f32 %v2182, %v55
  %2215 = vadd.xlane.f32.xlu0 %v2199
  %v2216 = vpop.xlane.xlu0 %2215
  %2217 = vadd.xlane.f32.xlu0 %v2200
  %v2218 = vpop.xlane.xlu0 %2217
  %2219 = vadd.xlane.f32.xlu0 %v2201
  %v2220 = vpop.xlane.xlu0 %2219
  %2221 = vadd.xlane.f32.xlu0 %v2202
  %v2222 = vpop.xlane.xlu0 %2221
  %2223 = vadd.xlane.f32.xlu0 %v2203
  %v2224 = vpop.xlane.xlu0 %2223
  %2225 = vadd.xlane.f32.xlu0 %v2204
  %v2226 = vpop.xlane.xlu0 %2225
  %2227 = vadd.xlane.f32.xlu0 %v2205
  %v2228 = vpop.xlane.xlu0 %2227
  %2229 = vadd.xlane.f32.xlu0 %v2206
  %v2230 = vpop.xlane.xlu0 %2229
  %2231 = vadd.xlane.f32.xlu0 %v2207
  %v2232 = vpop.xlane.xlu0 %2231
  %2233 = vadd.xlane.f32.xlu0 %v2208
  %v2234 = vpop.xlane.xlu0 %2233
  %2235 = vadd.xlane.f32.xlu0 %v2209
  %v2236 = vpop.xlane.xlu0 %2235
  %2237 = vadd.xlane.f32.xlu0 %v2210
  %v2238 = vpop.xlane.xlu0 %2237
  %2239 = vadd.xlane.f32.xlu0 %v2211
  %v2240 = vpop.xlane.xlu0 %2239
  %2241 = vadd.xlane.f32.xlu0 %v2212
  %v2242 = vpop.xlane.xlu0 %2241
  %2243 = vadd.xlane.f32.xlu0 %v2213
  %v2244 = vpop.xlane.xlu0 %2243
  %2245 = vadd.xlane.f32.xlu0 %v2214
  %v2246 = vpop.xlane.xlu0 %2245
  %v2263 = vlaneseq
  %v2264 = vshrl.u32 %v2263, 7
  %v2265 = vsub.s32 %v518, %v2264
  %v2266 = vrot.slane %v2216, %v2265
  %v2267 = vlaneseq
  %v2268 = vshrl.u32 %v2267, 7
  %v2269 = vsub.s32 %v518, %v2268
  %v2270 = vrot.slane %v2218, %v2269
  %v2271 = vlaneseq
  %v2272 = vshrl.u32 %v2271, 7
  %v2273 = vsub.s32 %v518, %v2272
  %v2274 = vrot.slane %v2220, %v2273
  %v2275 = vlaneseq
  %v2276 = vshrl.u32 %v2275, 7
  %v2277 = vsub.s32 %v518, %v2276
  %v2278 = vrot.slane %v2222, %v2277
  %v2279 = vlaneseq
  %v2280 = vshrl.u32 %v2279, 7
  %v2281 = vsub.s32 %v518, %v2280
  %v2282 = vrot.slane %v2224, %v2281
  %v2283 = vlaneseq
  %v2284 = vshrl.u32 %v2283, 7
  %v2285 = vsub.s32 %v518, %v2284
  %v2286 = vrot.slane %v2226, %v2285
  %v2287 = vlaneseq
  %v2288 = vshrl.u32 %v2287, 7
  %v2289 = vsub.s32 %v518, %v2288
  %v2290 = vrot.slane %v2228, %v2289
  %v2291 = vlaneseq
  %v2292 = vshrl.u32 %v2291, 7
  %v2293 = vsub.s32 %v518, %v2292
  %v2294 = vrot.slane %v2230, %v2293
  %v2295 = vlaneseq
  %v2296 = vshrl.u32 %v2295, 7
  %v2297 = vsub.s32 %v518, %v2296
  %v2298 = vrot.slane %v2232, %v2297
  %v2299 = vlaneseq
  %v2300 = vshrl.u32 %v2299, 7
  %v2301 = vsub.s32 %v518, %v2300
  %v2302 = vrot.slane %v2234, %v2301
  %v2303 = vlaneseq
  %v2304 = vshrl.u32 %v2303, 7
  %v2305 = vsub.s32 %v518, %v2304
  %v2306 = vrot.slane %v2236, %v2305
  %v2307 = vlaneseq
  %v2308 = vshrl.u32 %v2307, 7
  %v2309 = vsub.s32 %v518, %v2308
  %v2310 = vrot.slane %v2238, %v2309
  %v2311 = vlaneseq
  %v2312 = vshrl.u32 %v2311, 7
  %v2313 = vsub.s32 %v518, %v2312
  %v2314 = vrot.slane %v2240, %v2313
  %v2315 = vlaneseq
  %v2316 = vshrl.u32 %v2315, 7
  %v2317 = vsub.s32 %v518, %v2316
  %v2318 = vrot.slane %v2242, %v2317
  %v2319 = vlaneseq
  %v2320 = vshrl.u32 %v2319, 7
  %v2321 = vsub.s32 %v518, %v2320
  %v2322 = vrot.slane %v2244, %v2321
  %v2323 = vlaneseq
  %v2324 = vshrl.u32 %v2323, 7
  %v2325 = vsub.s32 %v518, %v2324
  %v2326 = vrot.slane %v2246, %v2325
  %v2327 = vsel %vm583, %v2270, %v2266
  %v2328 = vsel %vm585, %v2274, %v2327
  %v2329 = vsel %vm587, %v2278, %v2328
  %v2330 = vsel %vm589, %v2282, %v2329
  %v2331 = vsel %vm591, %v2286, %v2330
  %v2332 = vsel %vm593, %v2290, %v2331
  %v2333 = vsel %vm595, %v2294, %v2332
  %v2334 = vsel %vm583, %v2302, %v2298
  %v2335 = vsel %vm585, %v2306, %v2334
  %v2336 = vsel %vm587, %v2310, %v2335
  %v2337 = vsel %vm589, %v2314, %v2336
  %v2338 = vsel %vm591, %v2318, %v2337
  %v2339 = vsel %vm593, %v2322, %v2338
  %v2340 = vsel %vm595, %v2326, %v2339
  %v2343 = vsel %vm606, %v2333, -inf
  %2344 = vmax.xlane.f32.xlu0 %v2343
  %v2345 = vpop.xlane.xlu0 %2344
  %v2346 = vsel %vm606, %v2340, -inf
  %2347 = vmax.xlane.f32.xlu0 %v2346
  %v2348 = vpop.xlane.xlu0 %2347
  %v2351 = vlaneseq
  %v2352 = vshrl.u32 %v2351, 7
  %v2353 = vsub.s32 0, %v2352
  %v2354 = vrot.slane %v2345, %v2353
  %v2355 = vlaneseq
  %v2356 = vshrl.u32 %v2355, 7
  %v2357 = vsub.s32 1, %v2356
  %v2358 = vrot.slane %v2345, %v2357
  %v2359 = vlaneseq
  %v2360 = vshrl.u32 %v2359, 7
  %v2361 = vsub.s32 2, %v2360
  %v2362 = vrot.slane %v2345, %v2361
  %v2363 = vlaneseq
  %v2364 = vshrl.u32 %v2363, 7
  %v2365 = vsub.s32 3, %v2364
  %v2366 = vrot.slane %v2345, %v2365
  %v2367 = vlaneseq
  %v2368 = vshrl.u32 %v2367, 7
  %v2369 = vsub.s32 4, %v2368
  %v2370 = vrot.slane %v2345, %v2369
  %v2371 = vlaneseq
  %v2372 = vshrl.u32 %v2371, 7
  %v2373 = vsub.s32 5, %v2372
  %v2374 = vrot.slane %v2345, %v2373
  %v2375 = vlaneseq
  %v2376 = vshrl.u32 %v2375, 7
  %v2377 = vsub.s32 6, %v2376
  %v2378 = vrot.slane %v2345, %v2377
  %v2379 = vlaneseq
  %v2380 = vshrl.u32 %v2379, 7
  %v2381 = vsub.s32 7, %v2380
  %v2382 = vrot.slane %v2345, %v2381
  %v2383 = vlaneseq
  %v2384 = vshrl.u32 %v2383, 7
  %v2385 = vsub.s32 0, %v2384
  %v2386 = vrot.slane %v2348, %v2385
  %v2387 = vlaneseq
  %v2388 = vshrl.u32 %v2387, 7
  %v2389 = vsub.s32 1, %v2388
  %v2390 = vrot.slane %v2348, %v2389
  %v2391 = vlaneseq
  %v2392 = vshrl.u32 %v2391, 7
  %v2393 = vsub.s32 2, %v2392
  %v2394 = vrot.slane %v2348, %v2393
  %v2395 = vlaneseq
  %v2396 = vshrl.u32 %v2395, 7
  %v2397 = vsub.s32 3, %v2396
  %v2398 = vrot.slane %v2348, %v2397
  %v2399 = vlaneseq
  %v2400 = vshrl.u32 %v2399, 7
  %v2401 = vsub.s32 4, %v2400
  %v2402 = vrot.slane %v2348, %v2401
  %v2403 = vlaneseq
  %v2404 = vshrl.u32 %v2403, 7
  %v2405 = vsub.s32 5, %v2404
  %v2406 = vrot.slane %v2348, %v2405
  %v2407 = vlaneseq
  %v2408 = vshrl.u32 %v2407, 7
  %v2409 = vsub.s32 6, %v2408
  %v2410 = vrot.slane %v2348, %v2409
  %v2411 = vlaneseq
  %v2412 = vshrl.u32 %v2411, 7
  %v2413 = vsub.s32 7, %v2412
  %v2414 = vrot.slane %v2348, %v2413
  %v2431 = vsub.f32 %v2216, %v2354
  %v2432 = vsub.f32 %v2218, %v2358
  %v2433 = vsub.f32 %v2220, %v2362
  %v2434 = vsub.f32 %v2222, %v2366
  %v2435 = vsub.f32 %v2224, %v2370
  %v2436 = vsub.f32 %v2226, %v2374
  %v2437 = vsub.f32 %v2228, %v2378
  %v2438 = vsub.f32 %v2230, %v2382
  %v2439 = vsub.f32 %v2232, %v2386
  %v2440 = vsub.f32 %v2234, %v2390
  %v2441 = vsub.f32 %v2236, %v2394
  %v2442 = vsub.f32 %v2238, %v2398
  %v2443 = vsub.f32 %v2240, %v2402
  %v2444 = vsub.f32 %v2242, %v2406
  %v2445 = vsub.f32 %v2244, %v2410
  %v2446 = vsub.f32 %v2246, %v2414
  %v2447 = vmul.f32 %v2431, 1.442695
  %v2448 = vpow.pop %v2447
  %v2449 = vmul.f32 %v2432, 1.442695
  %v2450 = vpow.pop %v2449
  %v2451 = vmul.f32 %v2433, 1.442695
  %v2452 = vpow.pop %v2451
  %v2453 = vmul.f32 %v2434, 1.442695
  %v2454 = vpow.pop %v2453
  %v2455 = vmul.f32 %v2435, 1.442695
  %v2456 = vpow.pop %v2455
  %v2457 = vmul.f32 %v2436, 1.442695
  %v2458 = vpow.pop %v2457
  %v2459 = vmul.f32 %v2437, 1.442695
  %v2460 = vpow.pop %v2459
  %v2461 = vmul.f32 %v2438, 1.442695
  %v2462 = vpow.pop %v2461
  %v2463 = vmul.f32 %v2439, 1.442695
  %v2464 = vpow.pop %v2463
  %v2465 = vmul.f32 %v2440, 1.442695
  %v2466 = vpow.pop %v2465
  %v2467 = vmul.f32 %v2441, 1.442695
  %v2468 = vpow.pop %v2467
  %v2469 = vmul.f32 %v2442, 1.442695
  %v2470 = vpow.pop %v2469
  %v2471 = vmul.f32 %v2443, 1.442695
  %v2472 = vpow.pop %v2471
  %v2473 = vmul.f32 %v2444, 1.442695
  %v2474 = vpow.pop %v2473
  %v2475 = vmul.f32 %v2445, 1.442695
  %v2476 = vpow.pop %v2475
  %v2477 = vmul.f32 %v2446, 1.442695
  %v2478 = vpow.pop %v2477
  %2495 = vset.pattern.permute.xlu0 0
  %2496 = vperm.xlu0 %2495, %v2448
  %v2497 = vpop.permute.xlu0 %2496
  %2498 = vset.pattern.permute.xlu0 0
  %2499 = vperm.xlu0 %2498, %v2450
  %v2500 = vpop.permute.xlu0 %2499
  %2501 = vset.pattern.permute.xlu0 0
  %2502 = vperm.xlu0 %2501, %v2452
  %v2503 = vpop.permute.xlu0 %2502
  %2504 = vset.pattern.permute.xlu0 0
  %2505 = vperm.xlu0 %2504, %v2454
  %v2506 = vpop.permute.xlu0 %2505
  %2507 = vset.pattern.permute.xlu0 0
  %2508 = vperm.xlu0 %2507, %v2456
  %v2509 = vpop.permute.xlu0 %2508
  %2510 = vset.pattern.permute.xlu0 0
  %2511 = vperm.xlu0 %2510, %v2458
  %v2512 = vpop.permute.xlu0 %2511
  %2513 = vset.pattern.permute.xlu0 0
  %2514 = vperm.xlu0 %2513, %v2460
  %v2515 = vpop.permute.xlu0 %2514
  %2516 = vset.pattern.permute.xlu0 0
  %2517 = vperm.xlu0 %2516, %v2462
  %v2518 = vpop.permute.xlu0 %2517
  %2519 = vset.pattern.permute.xlu0 0
  %2520 = vperm.xlu0 %2519, %v2464
  %v2521 = vpop.permute.xlu0 %2520
  %2522 = vset.pattern.permute.xlu0 0
  %2523 = vperm.xlu0 %2522, %v2466
  %v2524 = vpop.permute.xlu0 %2523
  %2525 = vset.pattern.permute.xlu0 0
  %2526 = vperm.xlu0 %2525, %v2468
  %v2527 = vpop.permute.xlu0 %2526
  %2528 = vset.pattern.permute.xlu0 0
  %2529 = vperm.xlu0 %2528, %v2470
  %v2530 = vpop.permute.xlu0 %2529
  %2531 = vset.pattern.permute.xlu0 0
  %2532 = vperm.xlu0 %2531, %v2472
  %v2533 = vpop.permute.xlu0 %2532
  %2534 = vset.pattern.permute.xlu0 0
  %2535 = vperm.xlu0 %2534, %v2474
  %v2536 = vpop.permute.xlu0 %2535
  %2537 = vset.pattern.permute.xlu0 0
  %2538 = vperm.xlu0 %2537, %v2476
  %v2539 = vpop.permute.xlu0 %2538
  %2540 = vset.pattern.permute.xlu0 0
  %2541 = vperm.xlu0 %2540, %v2478
  %v2542 = vpop.permute.xlu0 %2541
  %v2543 = vlaneseq
  %v2544 = vshrl.u32 %v2543, 7
  %v2545 = vsub.s32 %v518, %v2544
  %v2546 = vrot.slane %v2497, %v2545
  %v2547 = vlaneseq
  %v2548 = vshrl.u32 %v2547, 7
  %v2549 = vsub.s32 %v518, %v2548
  %v2550 = vrot.slane %v2500, %v2549
  %v2551 = vlaneseq
  %v2552 = vshrl.u32 %v2551, 7
  %v2553 = vsub.s32 %v518, %v2552
  %v2554 = vrot.slane %v2503, %v2553
  %v2555 = vlaneseq
  %v2556 = vshrl.u32 %v2555, 7
  %v2557 = vsub.s32 %v518, %v2556
  %v2558 = vrot.slane %v2506, %v2557
  %v2559 = vlaneseq
  %v2560 = vshrl.u32 %v2559, 7
  %v2561 = vsub.s32 %v518, %v2560
  %v2562 = vrot.slane %v2509, %v2561
  %v2563 = vlaneseq
  %v2564 = vshrl.u32 %v2563, 7
  %v2565 = vsub.s32 %v518, %v2564
  %v2566 = vrot.slane %v2512, %v2565
  %v2567 = vlaneseq
  %v2568 = vshrl.u32 %v2567, 7
  %v2569 = vsub.s32 %v518, %v2568
  %v2570 = vrot.slane %v2515, %v2569
  %v2571 = vlaneseq
  %v2572 = vshrl.u32 %v2571, 7
  %v2573 = vsub.s32 %v518, %v2572
  %v2574 = vrot.slane %v2518, %v2573
  %v2575 = vlaneseq
  %v2576 = vshrl.u32 %v2575, 7
  %v2577 = vsub.s32 %v518, %v2576
  %v2578 = vrot.slane %v2521, %v2577
  %v2579 = vlaneseq
  %v2580 = vshrl.u32 %v2579, 7
  %v2581 = vsub.s32 %v518, %v2580
  %v2582 = vrot.slane %v2524, %v2581
  %v2583 = vlaneseq
  %v2584 = vshrl.u32 %v2583, 7
  %v2585 = vsub.s32 %v518, %v2584
  %v2586 = vrot.slane %v2527, %v2585
  %v2587 = vlaneseq
  %v2588 = vshrl.u32 %v2587, 7
  %v2589 = vsub.s32 %v518, %v2588
  %v2590 = vrot.slane %v2530, %v2589
  %v2591 = vlaneseq
  %v2592 = vshrl.u32 %v2591, 7
  %v2593 = vsub.s32 %v518, %v2592
  %v2594 = vrot.slane %v2533, %v2593
  %v2595 = vlaneseq
  %v2596 = vshrl.u32 %v2595, 7
  %v2597 = vsub.s32 %v518, %v2596
  %v2598 = vrot.slane %v2536, %v2597
  %v2599 = vlaneseq
  %v2600 = vshrl.u32 %v2599, 7
  %v2601 = vsub.s32 %v518, %v2600
  %v2602 = vrot.slane %v2539, %v2601
  %v2603 = vlaneseq
  %v2604 = vshrl.u32 %v2603, 7
  %v2605 = vsub.s32 %v518, %v2604
  %v2606 = vrot.slane %v2542, %v2605
  %v2607 = vsel %vm583, %v2550, %v2546
  %v2608 = vsel %vm585, %v2554, %v2607
  %v2609 = vsel %vm587, %v2558, %v2608
  %v2610 = vsel %vm589, %v2562, %v2609
  %v2611 = vsel %vm591, %v2566, %v2610
  %v2612 = vsel %vm593, %v2570, %v2611
  %v2613 = vsel %vm595, %v2574, %v2612
  %v2614 = vsel %vm583, %v2582, %v2578
  %v2615 = vsel %vm585, %v2586, %v2614
  %v2616 = vsel %vm587, %v2590, %v2615
  %v2617 = vsel %vm589, %v2594, %v2616
  %v2618 = vsel %vm591, %v2598, %v2617
  %v2619 = vsel %vm593, %v2602, %v2618
  %v2620 = vsel %vm595, %v2606, %v2619
  %v2623 = vsel %vm606, %v2613, 0.0
  %2624 = vadd.xlane.f32.xlu0 %v2623
  %v2625 = vpop.xlane.xlu0 %2624
  %v2626 = vsel %vm606, %v2620, 0.0
  %2627 = vadd.xlane.f32.xlu0 %v2626
  %v2628 = vpop.xlane.xlu0 %2627
  %v2629 = vrcp.pop %v2625
  %v2630 = vrcp.pop %v2628
  %v2633 = vlaneseq
  %v2634 = vshrl.u32 %v2633, 7
  %v2635 = vsub.s32 0, %v2634
  %v2636 = vrot.slane %v2629, %v2635
  %v2637 = vlaneseq
  %v2638 = vshrl.u32 %v2637, 7
  %v2639 = vsub.s32 1, %v2638
  %v2640 = vrot.slane %v2629, %v2639
  %v2641 = vlaneseq
  %v2642 = vshrl.u32 %v2641, 7
  %v2643 = vsub.s32 2, %v2642
  %v2644 = vrot.slane %v2629, %v2643
  %v2645 = vlaneseq
  %v2646 = vshrl.u32 %v2645, 7
  %v2647 = vsub.s32 3, %v2646
  %v2648 = vrot.slane %v2629, %v2647
  %v2649 = vlaneseq
  %v2650 = vshrl.u32 %v2649, 7
  %v2651 = vsub.s32 4, %v2650
  %v2652 = vrot.slane %v2629, %v2651
  %v2653 = vlaneseq
  %v2654 = vshrl.u32 %v2653, 7
  %v2655 = vsub.s32 5, %v2654
  %v2656 = vrot.slane %v2629, %v2655
  %v2657 = vlaneseq
  %v2658 = vshrl.u32 %v2657, 7
  %v2659 = vsub.s32 6, %v2658
  %v2660 = vrot.slane %v2629, %v2659
  %v2661 = vlaneseq
  %v2662 = vshrl.u32 %v2661, 7
  %v2663 = vsub.s32 7, %v2662
  %v2664 = vrot.slane %v2629, %v2663
  %v2665 = vlaneseq
  %v2666 = vshrl.u32 %v2665, 7
  %v2667 = vsub.s32 0, %v2666
  %v2668 = vrot.slane %v2630, %v2667
  %v2669 = vlaneseq
  %v2670 = vshrl.u32 %v2669, 7
  %v2671 = vsub.s32 1, %v2670
  %v2672 = vrot.slane %v2630, %v2671
  %v2673 = vlaneseq
  %v2674 = vshrl.u32 %v2673, 7
  %v2675 = vsub.s32 2, %v2674
  %v2676 = vrot.slane %v2630, %v2675
  %v2677 = vlaneseq
  %v2678 = vshrl.u32 %v2677, 7
  %v2679 = vsub.s32 3, %v2678
  %v2680 = vrot.slane %v2630, %v2679
  %v2681 = vlaneseq
  %v2682 = vshrl.u32 %v2681, 7
  %v2683 = vsub.s32 4, %v2682
  %v2684 = vrot.slane %v2630, %v2683
  %v2685 = vlaneseq
  %v2686 = vshrl.u32 %v2685, 7
  %v2687 = vsub.s32 5, %v2686
  %v2688 = vrot.slane %v2630, %v2687
  %v2689 = vlaneseq
  %v2690 = vshrl.u32 %v2689, 7
  %v2691 = vsub.s32 6, %v2690
  %v2692 = vrot.slane %v2630, %v2691
  %v2693 = vlaneseq
  %v2694 = vshrl.u32 %v2693, 7
  %v2695 = vsub.s32 7, %v2694
  %v2696 = vrot.slane %v2630, %v2695
  %v2713 = vmul.f32 %v2448, %v2636
  %v2714 = vmul.f32 %v2450, %v2640
  %v2715 = vmul.f32 %v2452, %v2644
  %v2716 = vmul.f32 %v2454, %v2648
  %v2717 = vmul.f32 %v2456, %v2652
  %v2718 = vmul.f32 %v2458, %v2656
  %v2719 = vmul.f32 %v2460, %v2660
  %v2720 = vmul.f32 %v2462, %v2664
  %v2721 = vmul.f32 %v2464, %v2668
  %v2722 = vmul.f32 %v2466, %v2672
  %v2723 = vmul.f32 %v2468, %v2676
  %v2724 = vmul.f32 %v2470, %v2680
  %v2725 = vmul.f32 %v2472, %v2684
  %v2726 = vmul.f32 %v2474, %v2688
  %v2727 = vmul.f32 %v2476, %v2692
  %v2728 = vmul.f32 %v2478, %v2696
  %2730 = vset.pattern.permute.xlu0 0
  %2731 = vperm.xlu0 %2730, %v2713
  %v2732 = vpop.permute.xlu0 %2731
  %2735 = vset.pattern.permute.xlu0 0
  %2736 = vperm.xlu0 %2735, %v2714
  %v2737 = vpop.permute.xlu0 %2736
  %2740 = vset.pattern.permute.xlu0 0
  %2741 = vperm.xlu0 %2740, %v2715
  %v2742 = vpop.permute.xlu0 %2741
  %2745 = vset.pattern.permute.xlu0 0
  %2746 = vperm.xlu0 %2745, %v2716
  %v2747 = vpop.permute.xlu0 %2746
  %2750 = vset.pattern.permute.xlu0 0
  %2751 = vperm.xlu0 %2750, %v2717
  %v2752 = vpop.permute.xlu0 %2751
  %2755 = vset.pattern.permute.xlu0 0
  %2756 = vperm.xlu0 %2755, %v2718
  %v2757 = vpop.permute.xlu0 %2756
  %2760 = vset.pattern.permute.xlu0 0
  %2761 = vperm.xlu0 %2760, %v2719
  %v2762 = vpop.permute.xlu0 %2761
  %2765 = vset.pattern.permute.xlu0 0
  %2766 = vperm.xlu0 %2765, %v2720
  %v2767 = vpop.permute.xlu0 %2766
  %2770 = vset.pattern.permute.xlu0 0
  %2771 = vperm.xlu0 %2770, %v2721
  %v2772 = vpop.permute.xlu0 %2771
  %2775 = vset.pattern.permute.xlu0 0
  %2776 = vperm.xlu0 %2775, %v2722
  %v2777 = vpop.permute.xlu0 %2776
  %2780 = vset.pattern.permute.xlu0 0
  %2781 = vperm.xlu0 %2780, %v2723
  %v2782 = vpop.permute.xlu0 %2781
  %2785 = vset.pattern.permute.xlu0 0
  %2786 = vperm.xlu0 %2785, %v2724
  %v2787 = vpop.permute.xlu0 %2786
  %2790 = vset.pattern.permute.xlu0 0
  %2791 = vperm.xlu0 %2790, %v2725
  %v2792 = vpop.permute.xlu0 %2791
  %2795 = vset.pattern.permute.xlu0 0
  %2796 = vperm.xlu0 %2795, %v2726
  %v2797 = vpop.permute.xlu0 %2796
  %2800 = vset.pattern.permute.xlu0 0
  %2801 = vperm.xlu0 %2800, %v2727
  %v2802 = vpop.permute.xlu0 %2801
  %2805 = vset.pattern.permute.xlu0 0
  %2806 = vperm.xlu0 %2805, %v2728
  %v2807 = vpop.permute.xlu0 %2806
  %v2809 = vmul.f32 %v2732, %v40
  %v2810 = vmul.f32 %v2737, %v41
  %v2811 = vmul.f32 %v2742, %v42
  %v2812 = vmul.f32 %v2747, %v43
  %v2813 = vmul.f32 %v2752, %v44
  %v2814 = vmul.f32 %v2757, %v45
  %v2815 = vmul.f32 %v2762, %v46
  %v2816 = vmul.f32 %v2767, %v47
  %v2817 = vmul.f32 %v2772, %v48
  %v2818 = vmul.f32 %v2777, %v49
  %v2819 = vmul.f32 %v2782, %v50
  %v2820 = vmul.f32 %v2787, %v51
  %v2821 = vmul.f32 %v2792, %v52
  %v2822 = vmul.f32 %v2797, %v53
  %v2823 = vmul.f32 %v2802, %v54
  %v2824 = vmul.f32 %v2807, %v55
  %v2825 = vrot.slane %v2809, 4
  %v2826 = vadd.f32 %v2809, %v2825
  %v2827 = vrot.slane %v2826, 2
  %v2828 = vadd.f32 %v2826, %v2827
  %v2829 = vrot.slane %v2828, 1
  %v2830 = vadd.f32 %v2828, %v2829
  %v2831 = vrot.slane %v2810, 4
  %v2832 = vadd.f32 %v2810, %v2831
  %v2833 = vrot.slane %v2832, 2
  %v2834 = vadd.f32 %v2832, %v2833
  %v2835 = vrot.slane %v2834, 1
  %v2836 = vadd.f32 %v2834, %v2835
  %v2837 = vrot.slane %v2811, 4
  %v2838 = vadd.f32 %v2811, %v2837
  %v2839 = vrot.slane %v2838, 2
  %v2840 = vadd.f32 %v2838, %v2839
  %v2841 = vrot.slane %v2840, 1
  %v2842 = vadd.f32 %v2840, %v2841
  %v2843 = vrot.slane %v2812, 4
  %v2844 = vadd.f32 %v2812, %v2843
  %v2845 = vrot.slane %v2844, 2
  %v2846 = vadd.f32 %v2844, %v2845
  %v2847 = vrot.slane %v2846, 1
  %v2848 = vadd.f32 %v2846, %v2847
  %v2849 = vrot.slane %v2813, 4
  %v2850 = vadd.f32 %v2813, %v2849
  %v2851 = vrot.slane %v2850, 2
  %v2852 = vadd.f32 %v2850, %v2851
  %v2853 = vrot.slane %v2852, 1
  %v2854 = vadd.f32 %v2852, %v2853
  %v2855 = vrot.slane %v2814, 4
  %v2856 = vadd.f32 %v2814, %v2855
  %v2857 = vrot.slane %v2856, 2
  %v2858 = vadd.f32 %v2856, %v2857
  %v2859 = vrot.slane %v2858, 1
  %v2860 = vadd.f32 %v2858, %v2859
  %v2861 = vrot.slane %v2815, 4
  %v2862 = vadd.f32 %v2815, %v2861
  %v2863 = vrot.slane %v2862, 2
  %v2864 = vadd.f32 %v2862, %v2863
  %v2865 = vrot.slane %v2864, 1
  %v2866 = vadd.f32 %v2864, %v2865
  %v2867 = vrot.slane %v2816, 4
  %v2868 = vadd.f32 %v2816, %v2867
  %v2869 = vrot.slane %v2868, 2
  %v2870 = vadd.f32 %v2868, %v2869
  %v2871 = vrot.slane %v2870, 1
  %v2872 = vadd.f32 %v2870, %v2871
  %v2873 = vrot.slane %v2817, 4
  %v2874 = vadd.f32 %v2817, %v2873
  %v2875 = vrot.slane %v2874, 2
  %v2876 = vadd.f32 %v2874, %v2875
  %v2877 = vrot.slane %v2876, 1
  %v2878 = vadd.f32 %v2876, %v2877
  %v2879 = vrot.slane %v2818, 4
  %v2880 = vadd.f32 %v2818, %v2879
  %v2881 = vrot.slane %v2880, 2
  %v2882 = vadd.f32 %v2880, %v2881
  %v2883 = vrot.slane %v2882, 1
  %v2884 = vadd.f32 %v2882, %v2883
  %v2885 = vrot.slane %v2819, 4
  %v2886 = vadd.f32 %v2819, %v2885
  %v2887 = vrot.slane %v2886, 2
  %v2888 = vadd.f32 %v2886, %v2887
  %v2889 = vrot.slane %v2888, 1
  %v2890 = vadd.f32 %v2888, %v2889
  %v2891 = vrot.slane %v2820, 4
  %v2892 = vadd.f32 %v2820, %v2891
  %v2893 = vrot.slane %v2892, 2
  %v2894 = vadd.f32 %v2892, %v2893
  %v2895 = vrot.slane %v2894, 1
  %v2896 = vadd.f32 %v2894, %v2895
  %v2897 = vrot.slane %v2821, 4
  %v2898 = vadd.f32 %v2821, %v2897
  %v2899 = vrot.slane %v2898, 2
  %v2900 = vadd.f32 %v2898, %v2899
  %v2901 = vrot.slane %v2900, 1
  %v2902 = vadd.f32 %v2900, %v2901
  %v2903 = vrot.slane %v2822, 4
  %v2904 = vadd.f32 %v2822, %v2903
  %v2905 = vrot.slane %v2904, 2
  %v2906 = vadd.f32 %v2904, %v2905
  %v2907 = vrot.slane %v2906, 1
  %v2908 = vadd.f32 %v2906, %v2907
  %v2909 = vrot.slane %v2823, 4
  %v2910 = vadd.f32 %v2823, %v2909
  %v2911 = vrot.slane %v2910, 2
  %v2912 = vadd.f32 %v2910, %v2911
  %v2913 = vrot.slane %v2912, 1
  %v2914 = vadd.f32 %v2912, %v2913
  %v2915 = vrot.slane %v2824, 4
  %v2916 = vadd.f32 %v2824, %v2915
  %v2917 = vrot.slane %v2916, 2
  %v2918 = vadd.f32 %v2916, %v2917
  %v2919 = vrot.slane %v2918, 1
  %v2920 = vadd.f32 %v2918, %v2919
  %v2921 = vpack.c.bf16 %v2830, %v2830
  %v2922 = vpack.c.bf16 %v2836, %v2836
  %v2923 = vpack.c.bf16 %v2842, %v2842
  %v2924 = vpack.c.bf16 %v2848, %v2848
  %v2925 = vpack.c.bf16 %v2854, %v2854
  %v2926 = vpack.c.bf16 %v2860, %v2860
  %v2927 = vpack.c.bf16 %v2866, %v2866
  %v2928 = vpack.c.bf16 %v2872, %v2872
  %v2929 = vpack.c.bf16 %v2878, %v2878
  %v2930 = vpack.c.bf16 %v2884, %v2884
  %v2931 = vpack.c.bf16 %v2890, %v2890
  %v2932 = vpack.c.bf16 %v2896, %v2896
  %v2933 = vpack.c.bf16 %v2902, %v2902
  %v2934 = vpack.c.bf16 %v2908, %v2908
  %v2935 = vpack.c.bf16 %v2914, %v2914
  %v2936 = vpack.c.bf16 %v2920, %v2920
  %v2939 = vunpack.c.l.b16 %v1971
  %v2940 = vunpack.c.l.b16 %v1972
  %v2941 = vpack.c.b16 %v2940, %v2939
  %v2959 = vunpack.c.l.b16 %v2921
  %v2960 = vunpack.c.l.b16 %v2922
  %v2961 = vunpack.c.l.b16 %v2923
  %v2962 = vunpack.c.l.b16 %v2924
  %v2963 = vunpack.c.l.b16 %v2925
  %v2964 = vunpack.c.l.b16 %v2926
  %v2965 = vunpack.c.l.b16 %v2927
  %v2966 = vunpack.c.l.b16 %v2928
  %v2967 = vunpack.c.l.b16 %v2929
  %v2968 = vunpack.c.l.b16 %v2930
  %v2969 = vunpack.c.l.b16 %v2931
  %v2970 = vunpack.c.l.b16 %v2932
  %v2971 = vunpack.c.l.b16 %v2933
  %v2972 = vunpack.c.l.b16 %v2934
  %v2973 = vunpack.c.l.b16 %v2935
  %v2974 = vunpack.c.l.b16 %v2936
  %v2975 = vsel %vm583, %v2960, %v2959
  %v2976 = vsel %vm585, %v2961, %v2975
  %v2977 = vsel %vm587, %v2962, %v2976
  %v2978 = vsel %vm589, %v2963, %v2977
  %v2979 = vsel %vm591, %v2964, %v2978
  %v2980 = vsel %vm593, %v2965, %v2979
  %v2981 = vsel %vm595, %v2966, %v2980
  %v2982 = vsel %vm583, %v2968, %v2967
  %v2983 = vsel %vm585, %v2969, %v2982
  %v2984 = vsel %vm587, %v2970, %v2983
  %v2985 = vsel %vm589, %v2971, %v2984
  %v2986 = vsel %vm591, %v2972, %v2985
  %v2987 = vsel %vm593, %v2973, %v2986
  %v2988 = vsel %vm595, %v2974, %v2987
  %v2989 = vpack.c.b16 %v2988, %v2981
  %2991 = vmatprep.subr.bf16.mxu0 %v1593
  %2992 = vmatpush1.bf16.msra.mxu0 %v1592
  %2993 = vmatprep.subr.bf16.mxu0 %v1589
  %2994 = vmatpush1.bf16.msra.mxu0 %v1588
  %2995 = vmatprep.subr.bf16.mxu0 %v1585
  %2996 = vmatpush1.bf16.msra.mxu0 %v1584
  %2997 = vmatprep.subr.bf16.mxu0 %v1581
  %2998 = vmatpush1.bf16.msra.mxu0 %v1580
  %2999 = vmatprep.subr.bf16.mxu0 %v1577
  %3000 = vmatpush1.bf16.msra.mxu0 %v1576
  %3001 = vmatprep.subr.bf16.mxu0 %v1573
  %3002 = vmatpush1.bf16.msra.mxu0 %v1572
  %3003 = vmatprep.subr.bf16.mxu0 %v1569
  %3004 = vmatpush1.bf16.msra.mxu0 %v1568
  %3005 = vmatprep.subr.bf16.mxu0 %v1565
  %3006 = vmatpush1.bf16.msra.mxu0 %v1564
  %3007 = vmatprep.subr.bf16.mxu0 %v1625
  %3008 = vmatpush2.bf16.msra.mxu0 %v1624
  %3009 = vmatprep.subr.bf16.mxu0 %v1621
  %3010 = vmatpush2.bf16.msra.mxu0 %v1620
  %3011 = vmatprep.subr.bf16.mxu0 %v1617
  %3012 = vmatpush2.bf16.msra.mxu0 %v1616
  %3013 = vmatprep.subr.bf16.mxu0 %v1613
  %3014 = vmatpush2.bf16.msra.mxu0 %v1612
  %3015 = vmatprep.subr.bf16.mxu0 %v1609
  %3016 = vmatpush2.bf16.msra.mxu0 %v1608
  %3017 = vmatprep.subr.bf16.mxu0 %v1605
  %3018 = vmatpush2.bf16.msra.mxu0 %v1604
  %3019 = vmatprep.subr.bf16.mxu0 %v1601
  %3020 = vmatpush2.bf16.msra.mxu0 %v1600
  %3021 = vmatprep.subr.bf16.mxu0 %v1597
  %3022 = vmatpush2.bf16.msra.mxu0 %v1596
  %3023 = vmatprep.mubr.bf16.mxu0 %v2989
  %3024 = vmatmul.mubr.bf16.gmra.mxu0 %v2941
  %v3025 = vpop.f32.mrf.mxu0
  %v3026 = vadd.f32 %v1259, %v3025
  %v3027 = vpop.f32.mrf.mxu0
  %v3028 = vadd.f32 %v1263, %v3027
  %v3029 = vpop.f32.mrf.mxu0
  %v3030 = vadd.f32 %v1259, %v3029
  %v3031 = vpop.f32.mrf.mxu0
  %v3032 = vadd.f32 %v1263, %v3031
  %3033 = vdwg.mxu0
  %3034 = vmatprep.subr.bf16.mxu0 %v1657
  %3035 = vmatpush1.bf16.msra.mxu0 %v1656
  %3036 = vmatprep.subr.bf16.mxu0 %v1653
  %3037 = vmatpush1.bf16.msra.mxu0 %v1652
  %3038 = vmatprep.subr.bf16.mxu0 %v1649
  %3039 = vmatpush1.bf16.msra.mxu0 %v1648
  %3040 = vmatprep.subr.bf16.mxu0 %v1645
  %3041 = vmatpush1.bf16.msra.mxu0 %v1644
  %3042 = vmatprep.subr.bf16.mxu0 %v1641
  %3043 = vmatpush1.bf16.msra.mxu0 %v1640
  %3044 = vmatprep.subr.bf16.mxu0 %v1637
  %3045 = vmatpush1.bf16.msra.mxu0 %v1636
  %3046 = vmatprep.subr.bf16.mxu0 %v1633
  %3047 = vmatpush1.bf16.msra.mxu0 %v1632
  %3048 = vmatprep.subr.bf16.mxu0 %v1629
  %3049 = vmatpush1.bf16.msra.mxu0 %v1628
  %3050 = vmatprep.subr.bf16.mxu0 0
  %3051 = vmatpush2.bf16.msra.mxu0 0
  %3052 = vmatprep.subr.bf16.mxu0 0
  %3053 = vmatpush2.bf16.msra.mxu0 0
  %3054 = vmatprep.subr.bf16.mxu0 0
  %3055 = vmatpush2.bf16.msra.mxu0 0
  %3056 = vmatprep.subr.bf16.mxu0 0
  %3057 = vmatpush2.bf16.msra.mxu0 0
  %3058 = vmatprep.subr.bf16.mxu0 0
  %3059 = vmatpush2.bf16.msra.mxu0 0
  %3060 = vmatprep.subr.bf16.mxu0 0
  %3061 = vmatpush2.bf16.msra.mxu0 0
  %3062 = vmatprep.subr.bf16.mxu0 0
  %3063 = vmatpush2.bf16.msra.mxu0 0
  %3064 = vmatprep.subr.bf16.mxu0 0
  %3065 = vmatpush2.bf16.msra.mxu0 0
  %3066 = vmatprep.mubr.bf16.mxu0 0
  %3067 = vmatmul.mubr.bf16.gmra.mxu0 %v1977
  %v3068 = vpop.f32.mrf.mxu0
  %v3069 = vadd.f32 %v3026, %v3068
  %v3070 = vpop.f32.mrf.mxu0
  %v3071 = vadd.f32 %v3028, %v3070
  %v3072 = vpop.f32.mrf.mxu0
  %v3073 = vadd.f32 %v3030, %v3072
  %v3074 = vpop.f32.mrf.mxu0
  %v3075 = vadd.f32 %v3032, %v3074
  %3076 = vdwg.mxu0
  %3077 = vmatprep.subr.bf16.mxu0 %v1595
  %3078 = vmatpush1.bf16.msra.mxu0 %v1594
  %3079 = vmatprep.subr.bf16.mxu0 %v1591
  %3080 = vmatpush1.bf16.msra.mxu0 %v1590
  %3081 = vmatprep.subr.bf16.mxu0 %v1587
  %3082 = vmatpush1.bf16.msra.mxu0 %v1586
  %3083 = vmatprep.subr.bf16.mxu0 %v1583
  %3084 = vmatpush1.bf16.msra.mxu0 %v1582
  %3085 = vmatprep.subr.bf16.mxu0 %v1579
  %3086 = vmatpush1.bf16.msra.mxu0 %v1578
  %3087 = vmatprep.subr.bf16.mxu0 %v1575
  %3088 = vmatpush1.bf16.msra.mxu0 %v1574
  %3089 = vmatprep.subr.bf16.mxu0 %v1571
  %3090 = vmatpush1.bf16.msra.mxu0 %v1570
  %3091 = vmatprep.subr.bf16.mxu0 %v1567
  %3092 = vmatpush1.bf16.msra.mxu0 %v1566
  %3093 = vmatprep.subr.bf16.mxu0 %v1627
  %3094 = vmatpush2.bf16.msra.mxu0 %v1626
  %3095 = vmatprep.subr.bf16.mxu0 %v1623
  %3096 = vmatpush2.bf16.msra.mxu0 %v1622
  %3097 = vmatprep.subr.bf16.mxu0 %v1619
  %3098 = vmatpush2.bf16.msra.mxu0 %v1618
  %3099 = vmatprep.subr.bf16.mxu0 %v1615
  %3100 = vmatpush2.bf16.msra.mxu0 %v1614
  %3101 = vmatprep.subr.bf16.mxu0 %v1611
  %3102 = vmatpush2.bf16.msra.mxu0 %v1610
  %3103 = vmatprep.subr.bf16.mxu0 %v1607
  %3104 = vmatpush2.bf16.msra.mxu0 %v1606
  %3105 = vmatprep.subr.bf16.mxu0 %v1603
  %3106 = vmatpush2.bf16.msra.mxu0 %v1602
  %3107 = vmatprep.subr.bf16.mxu0 %v1599
  %3108 = vmatpush2.bf16.msra.mxu0 %v1598
  %3109 = vmatprep.mubr.bf16.mxu0 %v2989
  %3110 = vmatmul.mubr.bf16.gmra.mxu0 %v2941
  %v3111 = vpop.f32.mrf.mxu0
  %v3112 = vadd.f32 %v1267, %v3111
  %v3113 = vpop.f32.mrf.mxu0
  %v3114 = vadd.f32 %v1271, %v3113
  %v3115 = vpop.f32.mrf.mxu0
  %v3116 = vadd.f32 %v1267, %v3115
  %v3117 = vpop.f32.mrf.mxu0
  %v3118 = vadd.f32 %v1271, %v3117
  %3119 = vdwg.mxu0
  %3120 = vmatprep.subr.bf16.mxu0 %v1659
  %3121 = vmatpush1.bf16.msra.mxu0 %v1658
  %3122 = vmatprep.subr.bf16.mxu0 %v1655
  %3123 = vmatpush1.bf16.msra.mxu0 %v1654
  %3124 = vmatprep.subr.bf16.mxu0 %v1651
  %3125 = vmatpush1.bf16.msra.mxu0 %v1650
  %3126 = vmatprep.subr.bf16.mxu0 %v1647
  %3127 = vmatpush1.bf16.msra.mxu0 %v1646
  %3128 = vmatprep.subr.bf16.mxu0 %v1643
  %3129 = vmatpush1.bf16.msra.mxu0 %v1642
  %3130 = vmatprep.subr.bf16.mxu0 %v1639
  %3131 = vmatpush1.bf16.msra.mxu0 %v1638
  %3132 = vmatprep.subr.bf16.mxu0 %v1635
  %3133 = vmatpush1.bf16.msra.mxu0 %v1634
  %3134 = vmatprep.subr.bf16.mxu0 %v1631
  %3135 = vmatpush1.bf16.msra.mxu0 %v1630
  %3136 = vmatprep.subr.bf16.mxu0 0
  %3137 = vmatpush2.bf16.msra.mxu0 0
  %3138 = vmatprep.subr.bf16.mxu0 0
  %3139 = vmatpush2.bf16.msra.mxu0 0
  %3140 = vmatprep.subr.bf16.mxu0 0
  %3141 = vmatpush2.bf16.msra.mxu0 0
  %3142 = vmatprep.subr.bf16.mxu0 0
  %3143 = vmatpush2.bf16.msra.mxu0 0
  %3144 = vmatprep.subr.bf16.mxu0 0
  %3145 = vmatpush2.bf16.msra.mxu0 0
  %3146 = vmatprep.subr.bf16.mxu0 0
  %3147 = vmatpush2.bf16.msra.mxu0 0
  %3148 = vmatprep.subr.bf16.mxu0 0
  %3149 = vmatpush2.bf16.msra.mxu0 0
  %3150 = vmatprep.subr.bf16.mxu0 0
  %3151 = vmatpush2.bf16.msra.mxu0 0
  %3152 = vmatprep.mubr.bf16.mxu0 0
  %3153 = vmatmul.mubr.bf16.gmra.mxu0 %v1977
  %v3154 = vpop.f32.mrf.mxu0
  %v3155 = vadd.f32 %v3112, %v3154
  %v3156 = vpop.f32.mrf.mxu0
  %v3157 = vadd.f32 %v3114, %v3156
  %v3158 = vpop.f32.mrf.mxu0
  %v3159 = vadd.f32 %v3116, %v3158
  %v3160 = vpop.f32.mrf.mxu0
  %v3161 = vadd.f32 %v3118, %v3160
  %3162 = vdwg.mxu0
  %v3163 = vmul.f32 %v3069, 0.5
  %v3164 = vmul.f32 %v3071, 0.5
  %v3165 = vmul.f32 %v3155, 0.5
  %v3166 = vmul.f32 %v3073, 0.5
  %v3167 = vmul.f32 %v3075, 0.5
  %v3168 = vmul.f32 %v3159, 0.5
  %v3169 = vtanh.pop %v3163
  %v3170 = vtanh.pop %v3164
  %v3171 = vtanh.pop %v3165
  %v3172 = vtanh.pop %v3166
  %v3173 = vtanh.pop %v3167
  %v3174 = vtanh.pop %v3168
  %v3175 = vadd.f32 %v3169, 1.0
  %v3176 = vadd.f32 %v3170, 1.0
  %v3177 = vadd.f32 %v3171, 1.0
  %v3178 = vadd.f32 %v3172, 1.0
  %v3179 = vadd.f32 %v3173, 1.0
  %v3180 = vadd.f32 %v3174, 1.0
  %v3181 = vmul.f32 %v3175, 0.5
  %v3182 = vmul.f32 %v3176, 0.5
  %v3183 = vmul.f32 %v3177, 0.5
  %v3184 = vmul.f32 %v3178, 0.5
  %v3185 = vmul.f32 %v3179, 0.5
  %v3186 = vmul.f32 %v3180, 0.5
  %v3187 = vtanh.pop %v3157
  %v3188 = vtanh.pop %v3161
  %v3189 = vmul.f32 %v3182, %v1975
  %v3190 = vmul.f32 %v3185, %v1976
  %v3191 = vmul.f32 %v3181, %v3187
  %v3192 = vmul.f32 %v3184, %v3188
  %v3193 = vadd.f32 %v3189, %v3191
  %v3194 = vadd.f32 %v3190, %v3192
  %v3195 = vtanh.pop %v3193
  %v3196 = vtanh.pop %v3194
  %v3197 = vmul.f32 %v3183, %v3195
  %v3198 = vmul.f32 %v3186, %v3196
  %s3199 = scalar_lea.vmem %s6, 16
  %3200 = vst [vmem:[%s3199] sm:$0xff] %v3197
  %3201 = vst [vmem:[%s3199 + $0x8] sm:$0xff] %v3198
  %3202 = vst [vmem:[#allocation2] sm:$0xff] %v3197
  %3203 = vst [vmem:[#allocation2 + $0x8] sm:$0xff] %v3198
  %3204 = vst [vmem:[#allocation3] sm:$0xff] %v3193
  %3205 = vst [vmem:[#allocation3 + $0x8] sm:$0xff] %v3194
  %s3206 = scalar_lea.vmem %s0, 16
  %v3207 = vld [vmem:[%s3206] sm:$0xf]
  %v3208 = vld [vmem:[%s3206 + $0x4] sm:$0xf]
  %v3209 = vld [vmem:[#allocation2] sm:$0xff]
  %v3210 = vld [vmem:[#allocation2 + $0x8] sm:$0xff]
  %v3211 = vld [vmem:[#allocation3] sm:$0xff]
  %v3212 = vld [vmem:[#allocation3 + $0x8] sm:$0xff]
  %v3213 = vpack.c.bf16 %v3210, %v3209
  %3214 = vmatprep.subr.bf16.mxu0 0
  %3215 = vmatpush1.bf16.msra.mxu0 %v223
  %3216 = vmatprep.subr.bf16.mxu0 0
  %3217 = vmatpush1.bf16.msra.mxu0 %v222
  %3218 = vmatprep.subr.bf16.mxu0 0
  %3219 = vmatpush1.bf16.msra.mxu0 %v221
  %3220 = vmatprep.subr.bf16.mxu0 0
  %3221 = vmatpush1.bf16.msra.mxu0 %v220
  %3222 = vmatprep.subr.bf16.mxu0 0
  %3223 = vmatpush1.bf16.msra.mxu0 %v219
  %3224 = vmatprep.subr.bf16.mxu0 0
  %3225 = vmatpush1.bf16.msra.mxu0 %v218
  %3226 = vmatprep.subr.bf16.mxu0 0
  %3227 = vmatpush1.bf16.msra.mxu0 %v217
  %3228 = vmatprep.subr.bf16.mxu0 0
  %3229 = vmatpush1.bf16.msra.mxu0 %v216
  %3230 = vmatprep.subr.bf16.mxu0 0
  %3231 = vmatpush2.bf16.msra.mxu0 0
  %3232 = vmatprep.subr.bf16.mxu0 0
  %3233 = vmatpush2.bf16.msra.mxu0 0
  %3234 = vmatprep.subr.bf16.mxu0 0
  %3235 = vmatpush2.bf16.msra.mxu0 0
  %3236 = vmatprep.subr.bf16.mxu0 0
  %3237 = vmatpush2.bf16.msra.mxu0 0
  %3238 = vmatprep.subr.bf16.mxu0 0
  %3239 = vmatpush2.bf16.msra.mxu0 0
  %3240 = vmatprep.subr.bf16.mxu0 0
  %3241 = vmatpush2.bf16.msra.mxu0 0
  %3242 = vmatprep.subr.bf16.mxu0 0
  %3243 = vmatpush2.bf16.msra.mxu0 0
  %3244 = vmatprep.subr.bf16.mxu0 0
  %3245 = vmatpush2.bf16.msra.mxu0 0
  %3246 = vmatprep.mubr.bf16.mxu0 0
  %3247 = vmatmul.mubr.bf16.gmra.mxu0 %v3213
  %v3248 = vpop.f32.mrf.mxu0
  %v3249 = vadd.f32 0.0, %v3248
  %v3250 = vpop.f32.mrf.mxu0
  %v3251 = vpop.f32.mrf.mxu0
  %v3252 = vadd.f32 0.0, %v3251
  %v3253 = vpop.f32.mrf.mxu0
  %3254 = vdwg.mxu0
  %v3257 = vcombine.high %v3249, %v3249
  %v3259 = vunpack.c.l.s4 1966171168
  %v3260 = vunpack.c.0.s8 %v3259
  %v3261 = vlaneseq
  %v3262 = vshrl.u32 %v3261, 7
  %v3263 = vsub.s32 %v3260, %v3262
  %v3264 = vrot.slane %v3249, %v3263
  %v3266 = vunpack.c.l.s4 1966171168
  %v3267 = vunpack.c.0.s8 %v3266
  %v3268 = vlaneseq
  %v3269 = vshrl.u32 %v3268, 7
  %v3270 = vsub.s32 %v3267, %v3269
  %v3271 = vrot.slane %v3257, %v3270
  %v3272 = vcombine.high %v3264, %v3264
  %v3273 = vcombine.high %v3271, %v3271
  %v3275 = vunpack.c.l.s4 1966171168
  %v3276 = vunpack.c.0.s8 %v3275
  %v3277 = vlaneseq
  %v3278 = vshrl.u32 %v3277, 7
  %v3279 = vsub.s32 %v3276, %v3278
  %v3280 = vrot.slane %v3264, %v3279
  %v3282 = vunpack.c.l.s4 1966171168
  %v3283 = vunpack.c.0.s8 %v3282
  %v3284 = vlaneseq
  %v3285 = vshrl.u32 %v3284, 7
  %v3286 = vsub.s32 %v3283, %v3285
  %v3287 = vrot.slane %v3271, %v3286
  %v3289 = vunpack.c.l.s4 1966171168
  %v3290 = vunpack.c.0.s8 %v3289
  %v3291 = vlaneseq
  %v3292 = vshrl.u32 %v3291, 7
  %v3293 = vsub.s32 %v3290, %v3292
  %v3294 = vrot.slane %v3272, %v3293
  %v3296 = vunpack.c.l.s4 1966171168
  %v3297 = vunpack.c.0.s8 %v3296
  %v3298 = vlaneseq
  %v3299 = vshrl.u32 %v3298, 7
  %v3300 = vsub.s32 %v3297, %v3299
  %v3301 = vrot.slane %v3273, %v3300
  %v3302 = vcombine.high %v3280, %v3280
  %v3303 = vcombine.high %v3287, %v3287
  %v3304 = vcombine.high %v3294, %v3294
  %v3305 = vcombine.high %v3301, %v3301
  %v3306 = vcombine.high %v3252, %v3252
  %v3308 = vunpack.c.l.s4 1966171168
  %v3309 = vunpack.c.0.s8 %v3308
  %v3310 = vlaneseq
  %v3311 = vshrl.u32 %v3310, 7
  %v3312 = vsub.s32 %v3309, %v3311
  %v3313 = vrot.slane %v3252, %v3312
  %v3315 = vunpack.c.l.s4 1966171168
  %v3316 = vunpack.c.0.s8 %v3315
  %v3317 = vlaneseq
  %v3318 = vshrl.u32 %v3317, 7
  %v3319 = vsub.s32 %v3316, %v3318
  %v3320 = vrot.slane %v3306, %v3319
  %v3321 = vcombine.high %v3313, %v3313
  %v3322 = vcombine.high %v3320, %v3320
  %v3324 = vunpack.c.l.s4 1966171168
  %v3325 = vunpack.c.0.s8 %v3324
  %v3326 = vlaneseq
  %v3327 = vshrl.u32 %v3326, 7
  %v3328 = vsub.s32 %v3325, %v3327
  %v3329 = vrot.slane %v3313, %v3328
  %v3331 = vunpack.c.l.s4 1966171168
  %v3332 = vunpack.c.0.s8 %v3331
  %v3333 = vlaneseq
  %v3334 = vshrl.u32 %v3333, 7
  %v3335 = vsub.s32 %v3332, %v3334
  %v3336 = vrot.slane %v3320, %v3335
  %v3338 = vunpack.c.l.s4 1966171168
  %v3339 = vunpack.c.0.s8 %v3338
  %v3340 = vlaneseq
  %v3341 = vshrl.u32 %v3340, 7
  %v3342 = vsub.s32 %v3339, %v3341
  %v3343 = vrot.slane %v3321, %v3342
  %v3345 = vunpack.c.l.s4 1966171168
  %v3346 = vunpack.c.0.s8 %v3345
  %v3347 = vlaneseq
  %v3348 = vshrl.u32 %v3347, 7
  %v3349 = vsub.s32 %v3346, %v3348
  %v3350 = vrot.slane %v3322, %v3349
  %v3351 = vcombine.high %v3329, %v3329
  %v3352 = vcombine.high %v3336, %v3336
  %v3353 = vcombine.high %v3343, %v3343
  %v3354 = vcombine.high %v3350, %v3350
  %v3355 = vlaneseq
  %v3356 = vshrl.u32 %v3355, 7
  %v3357 = vsub.s32 0, %v3356
  %v3358 = vrot.slane %v3280, %v3357
  %v3359 = vlaneseq
  %v3360 = vshrl.u32 %v3359, 7
  %v3361 = vsub.s32 0, %v3360
  %v3362 = vrot.slane %v3294, %v3361
  %v3363 = vlaneseq
  %v3364 = vshrl.u32 %v3363, 7
  %v3365 = vsub.s32 0, %v3364
  %v3366 = vrot.slane %v3302, %v3365
  %v3367 = vlaneseq
  %v3368 = vshrl.u32 %v3367, 7
  %v3369 = vsub.s32 0, %v3368
  %v3370 = vrot.slane %v3304, %v3369
  %v3371 = vlaneseq
  %v3372 = vshrl.u32 %v3371, 7
  %v3373 = vsub.s32 0, %v3372
  %v3374 = vrot.slane %v3287, %v3373
  %v3375 = vlaneseq
  %v3376 = vshrl.u32 %v3375, 7
  %v3377 = vsub.s32 0, %v3376
  %v3378 = vrot.slane %v3301, %v3377
  %v3379 = vlaneseq
  %v3380 = vshrl.u32 %v3379, 7
  %v3381 = vsub.s32 0, %v3380
  %v3382 = vrot.slane %v3303, %v3381
  %v3383 = vlaneseq
  %v3384 = vshrl.u32 %v3383, 7
  %v3385 = vsub.s32 0, %v3384
  %v3386 = vrot.slane %v3305, %v3385
  %v3387 = vlaneseq
  %v3388 = vshrl.u32 %v3387, 7
  %v3389 = vsub.s32 0, %v3388
  %v3390 = vrot.slane %v3329, %v3389
  %v3391 = vlaneseq
  %v3392 = vshrl.u32 %v3391, 7
  %v3393 = vsub.s32 0, %v3392
  %v3394 = vrot.slane %v3343, %v3393
  %v3395 = vlaneseq
  %v3396 = vshrl.u32 %v3395, 7
  %v3397 = vsub.s32 0, %v3396
  %v3398 = vrot.slane %v3351, %v3397
  %v3399 = vlaneseq
  %v3400 = vshrl.u32 %v3399, 7
  %v3401 = vsub.s32 0, %v3400
  %v3402 = vrot.slane %v3353, %v3401
  %v3403 = vlaneseq
  %v3404 = vshrl.u32 %v3403, 7
  %v3405 = vsub.s32 0, %v3404
  %v3406 = vrot.slane %v3336, %v3405
  %v3407 = vlaneseq
  %v3408 = vshrl.u32 %v3407, 7
  %v3409 = vsub.s32 0, %v3408
  %v3410 = vrot.slane %v3350, %v3409
  %v3411 = vlaneseq
  %v3412 = vshrl.u32 %v3411, 7
  %v3413 = vsub.s32 0, %v3412
  %v3414 = vrot.slane %v3352, %v3413
  %v3415 = vlaneseq
  %v3416 = vshrl.u32 %v3415, 7
  %v3417 = vsub.s32 0, %v3416
  %v3418 = vrot.slane %v3354, %v3417
  %v3435 = vmul.f32 %v3358, %v40
  %v3436 = vmul.f32 %v3362, %v41
  %v3437 = vmul.f32 %v3366, %v42
  %v3438 = vmul.f32 %v3370, %v43
  %v3439 = vmul.f32 %v3374, %v44
  %v3440 = vmul.f32 %v3378, %v45
  %v3441 = vmul.f32 %v3382, %v46
  %v3442 = vmul.f32 %v3386, %v47
  %v3443 = vmul.f32 %v3390, %v48
  %v3444 = vmul.f32 %v3394, %v49
  %v3445 = vmul.f32 %v3398, %v50
  %v3446 = vmul.f32 %v3402, %v51
  %v3447 = vmul.f32 %v3406, %v52
  %v3448 = vmul.f32 %v3410, %v53
  %v3449 = vmul.f32 %v3414, %v54
  %v3450 = vmul.f32 %v3418, %v55
  %3451 = vadd.xlane.f32.xlu0 %v3435
  %v3452 = vpop.xlane.xlu0 %3451
  %3453 = vadd.xlane.f32.xlu0 %v3436
  %v3454 = vpop.xlane.xlu0 %3453
  %3455 = vadd.xlane.f32.xlu0 %v3437
  %v3456 = vpop.xlane.xlu0 %3455
  %3457 = vadd.xlane.f32.xlu0 %v3438
  %v3458 = vpop.xlane.xlu0 %3457
  %3459 = vadd.xlane.f32.xlu0 %v3439
  %v3460 = vpop.xlane.xlu0 %3459
  %3461 = vadd.xlane.f32.xlu0 %v3440
  %v3462 = vpop.xlane.xlu0 %3461
  %3463 = vadd.xlane.f32.xlu0 %v3441
  %v3464 = vpop.xlane.xlu0 %3463
  %3465 = vadd.xlane.f32.xlu0 %v3442
  %v3466 = vpop.xlane.xlu0 %3465
  %3467 = vadd.xlane.f32.xlu0 %v3443
  %v3468 = vpop.xlane.xlu0 %3467
  %3469 = vadd.xlane.f32.xlu0 %v3444
  %v3470 = vpop.xlane.xlu0 %3469
  %3471 = vadd.xlane.f32.xlu0 %v3445
  %v3472 = vpop.xlane.xlu0 %3471
  %3473 = vadd.xlane.f32.xlu0 %v3446
  %v3474 = vpop.xlane.xlu0 %3473
  %3475 = vadd.xlane.f32.xlu0 %v3447
  %v3476 = vpop.xlane.xlu0 %3475
  %3477 = vadd.xlane.f32.xlu0 %v3448
  %v3478 = vpop.xlane.xlu0 %3477
  %3479 = vadd.xlane.f32.xlu0 %v3449
  %v3480 = vpop.xlane.xlu0 %3479
  %3481 = vadd.xlane.f32.xlu0 %v3450
  %v3482 = vpop.xlane.xlu0 %3481
  %v3499 = vlaneseq
  %v3500 = vshrl.u32 %v3499, 7
  %v3501 = vsub.s32 %v518, %v3500
  %v3502 = vrot.slane %v3452, %v3501
  %v3503 = vlaneseq
  %v3504 = vshrl.u32 %v3503, 7
  %v3505 = vsub.s32 %v518, %v3504
  %v3506 = vrot.slane %v3454, %v3505
  %v3507 = vlaneseq
  %v3508 = vshrl.u32 %v3507, 7
  %v3509 = vsub.s32 %v518, %v3508
  %v3510 = vrot.slane %v3456, %v3509
  %v3511 = vlaneseq
  %v3512 = vshrl.u32 %v3511, 7
  %v3513 = vsub.s32 %v518, %v3512
  %v3514 = vrot.slane %v3458, %v3513
  %v3515 = vlaneseq
  %v3516 = vshrl.u32 %v3515, 7
  %v3517 = vsub.s32 %v518, %v3516
  %v3518 = vrot.slane %v3460, %v3517
  %v3519 = vlaneseq
  %v3520 = vshrl.u32 %v3519, 7
  %v3521 = vsub.s32 %v518, %v3520
  %v3522 = vrot.slane %v3462, %v3521
  %v3523 = vlaneseq
  %v3524 = vshrl.u32 %v3523, 7
  %v3525 = vsub.s32 %v518, %v3524
  %v3526 = vrot.slane %v3464, %v3525
  %v3527 = vlaneseq
  %v3528 = vshrl.u32 %v3527, 7
  %v3529 = vsub.s32 %v518, %v3528
  %v3530 = vrot.slane %v3466, %v3529
  %v3531 = vlaneseq
  %v3532 = vshrl.u32 %v3531, 7
  %v3533 = vsub.s32 %v518, %v3532
  %v3534 = vrot.slane %v3468, %v3533
  %v3535 = vlaneseq
  %v3536 = vshrl.u32 %v3535, 7
  %v3537 = vsub.s32 %v518, %v3536
  %v3538 = vrot.slane %v3470, %v3537
  %v3539 = vlaneseq
  %v3540 = vshrl.u32 %v3539, 7
  %v3541 = vsub.s32 %v518, %v3540
  %v3542 = vrot.slane %v3472, %v3541
  %v3543 = vlaneseq
  %v3544 = vshrl.u32 %v3543, 7
  %v3545 = vsub.s32 %v518, %v3544
  %v3546 = vrot.slane %v3474, %v3545
  %v3547 = vlaneseq
  %v3548 = vshrl.u32 %v3547, 7
  %v3549 = vsub.s32 %v518, %v3548
  %v3550 = vrot.slane %v3476, %v3549
  %v3551 = vlaneseq
  %v3552 = vshrl.u32 %v3551, 7
  %v3553 = vsub.s32 %v518, %v3552
  %v3554 = vrot.slane %v3478, %v3553
  %v3555 = vlaneseq
  %v3556 = vshrl.u32 %v3555, 7
  %v3557 = vsub.s32 %v518, %v3556
  %v3558 = vrot.slane %v3480, %v3557
  %v3559 = vlaneseq
  %v3560 = vshrl.u32 %v3559, 7
  %v3561 = vsub.s32 %v518, %v3560
  %v3562 = vrot.slane %v3482, %v3561
  %v3563 = vsel %vm583, %v3506, %v3502
  %v3564 = vsel %vm585, %v3510, %v3563
  %v3565 = vsel %vm587, %v3514, %v3564
  %v3566 = vsel %vm589, %v3518, %v3565
  %v3567 = vsel %vm591, %v3522, %v3566
  %v3568 = vsel %vm593, %v3526, %v3567
  %v3569 = vsel %vm595, %v3530, %v3568
  %v3570 = vsel %vm583, %v3538, %v3534
  %v3571 = vsel %vm585, %v3542, %v3570
  %v3572 = vsel %vm587, %v3546, %v3571
  %v3573 = vsel %vm589, %v3550, %v3572
  %v3574 = vsel %vm591, %v3554, %v3573
  %v3575 = vsel %vm593, %v3558, %v3574
  %v3576 = vsel %vm595, %v3562, %v3575
  %v3579 = vsel %vm606, %v3569, -inf
  %3580 = vmax.xlane.f32.xlu0 %v3579
  %v3581 = vpop.xlane.xlu0 %3580
  %v3582 = vsel %vm606, %v3576, -inf
  %3583 = vmax.xlane.f32.xlu0 %v3582
  %v3584 = vpop.xlane.xlu0 %3583
  %v3587 = vlaneseq
  %v3588 = vshrl.u32 %v3587, 7
  %v3589 = vsub.s32 0, %v3588
  %v3590 = vrot.slane %v3581, %v3589
  %v3591 = vlaneseq
  %v3592 = vshrl.u32 %v3591, 7
  %v3593 = vsub.s32 1, %v3592
  %v3594 = vrot.slane %v3581, %v3593
  %v3595 = vlaneseq
  %v3596 = vshrl.u32 %v3595, 7
  %v3597 = vsub.s32 2, %v3596
  %v3598 = vrot.slane %v3581, %v3597
  %v3599 = vlaneseq
  %v3600 = vshrl.u32 %v3599, 7
  %v3601 = vsub.s32 3, %v3600
  %v3602 = vrot.slane %v3581, %v3601
  %v3603 = vlaneseq
  %v3604 = vshrl.u32 %v3603, 7
  %v3605 = vsub.s32 4, %v3604
  %v3606 = vrot.slane %v3581, %v3605
  %v3607 = vlaneseq
  %v3608 = vshrl.u32 %v3607, 7
  %v3609 = vsub.s32 5, %v3608
  %v3610 = vrot.slane %v3581, %v3609
  %v3611 = vlaneseq
  %v3612 = vshrl.u32 %v3611, 7
  %v3613 = vsub.s32 6, %v3612
  %v3614 = vrot.slane %v3581, %v3613
  %v3615 = vlaneseq
  %v3616 = vshrl.u32 %v3615, 7
  %v3617 = vsub.s32 7, %v3616
  %v3618 = vrot.slane %v3581, %v3617
  %v3619 = vlaneseq
  %v3620 = vshrl.u32 %v3619, 7
  %v3621 = vsub.s32 0, %v3620
  %v3622 = vrot.slane %v3584, %v3621
  %v3623 = vlaneseq
  %v3624 = vshrl.u32 %v3623, 7
  %v3625 = vsub.s32 1, %v3624
  %v3626 = vrot.slane %v3584, %v3625
  %v3627 = vlaneseq
  %v3628 = vshrl.u32 %v3627, 7
  %v3629 = vsub.s32 2, %v3628
  %v3630 = vrot.slane %v3584, %v3629
  %v3631 = vlaneseq
  %v3632 = vshrl.u32 %v3631, 7
  %v3633 = vsub.s32 3, %v3632
  %v3634 = vrot.slane %v3584, %v3633
  %v3635 = vlaneseq
  %v3636 = vshrl.u32 %v3635, 7
  %v3637 = vsub.s32 4, %v3636
  %v3638 = vrot.slane %v3584, %v3637
  %v3639 = vlaneseq
  %v3640 = vshrl.u32 %v3639, 7
  %v3641 = vsub.s32 5, %v3640
  %v3642 = vrot.slane %v3584, %v3641
  %v3643 = vlaneseq
  %v3644 = vshrl.u32 %v3643, 7
  %v3645 = vsub.s32 6, %v3644
  %v3646 = vrot.slane %v3584, %v3645
  %v3647 = vlaneseq
  %v3648 = vshrl.u32 %v3647, 7
  %v3649 = vsub.s32 7, %v3648
  %v3650 = vrot.slane %v3584, %v3649
  %v3667 = vsub.f32 %v3452, %v3590
  %v3668 = vsub.f32 %v3454, %v3594
  %v3669 = vsub.f32 %v3456, %v3598
  %v3670 = vsub.f32 %v3458, %v3602
  %v3671 = vsub.f32 %v3460, %v3606
  %v3672 = vsub.f32 %v3462, %v3610
  %v3673 = vsub.f32 %v3464, %v3614
  %v3674 = vsub.f32 %v3466, %v3618
  %v3675 = vsub.f32 %v3468, %v3622
  %v3676 = vsub.f32 %v3470, %v3626
  %v3677 = vsub.f32 %v3472, %v3630
  %v3678 = vsub.f32 %v3474, %v3634
  %v3679 = vsub.f32 %v3476, %v3638
  %v3680 = vsub.f32 %v3478, %v3642
  %v3681 = vsub.f32 %v3480, %v3646
  %v3682 = vsub.f32 %v3482, %v3650
  %v3683 = vmul.f32 %v3667, 1.442695
  %v3684 = vpow.pop %v3683
  %v3685 = vmul.f32 %v3668, 1.442695
  %v3686 = vpow.pop %v3685
  %v3687 = vmul.f32 %v3669, 1.442695
  %v3688 = vpow.pop %v3687
  %v3689 = vmul.f32 %v3670, 1.442695
  %v3690 = vpow.pop %v3689
  %v3691 = vmul.f32 %v3671, 1.442695
  %v3692 = vpow.pop %v3691
  %v3693 = vmul.f32 %v3672, 1.442695
  %v3694 = vpow.pop %v3693
  %v3695 = vmul.f32 %v3673, 1.442695
  %v3696 = vpow.pop %v3695
  %v3697 = vmul.f32 %v3674, 1.442695
  %v3698 = vpow.pop %v3697
  %v3699 = vmul.f32 %v3675, 1.442695
  %v3700 = vpow.pop %v3699
  %v3701 = vmul.f32 %v3676, 1.442695
  %v3702 = vpow.pop %v3701
  %v3703 = vmul.f32 %v3677, 1.442695
  %v3704 = vpow.pop %v3703
  %v3705 = vmul.f32 %v3678, 1.442695
  %v3706 = vpow.pop %v3705
  %v3707 = vmul.f32 %v3679, 1.442695
  %v3708 = vpow.pop %v3707
  %v3709 = vmul.f32 %v3680, 1.442695
  %v3710 = vpow.pop %v3709
  %v3711 = vmul.f32 %v3681, 1.442695
  %v3712 = vpow.pop %v3711
  %v3713 = vmul.f32 %v3682, 1.442695
  %v3714 = vpow.pop %v3713
  %3731 = vset.pattern.permute.xlu0 0
  %3732 = vperm.xlu0 %3731, %v3684
  %v3733 = vpop.permute.xlu0 %3732
  %3734 = vset.pattern.permute.xlu0 0
  %3735 = vperm.xlu0 %3734, %v3686
  %v3736 = vpop.permute.xlu0 %3735
  %3737 = vset.pattern.permute.xlu0 0
  %3738 = vperm.xlu0 %3737, %v3688
  %v3739 = vpop.permute.xlu0 %3738
  %3740 = vset.pattern.permute.xlu0 0
  %3741 = vperm.xlu0 %3740, %v3690
  %v3742 = vpop.permute.xlu0 %3741
  %3743 = vset.pattern.permute.xlu0 0
  %3744 = vperm.xlu0 %3743, %v3692
  %v3745 = vpop.permute.xlu0 %3744
  %3746 = vset.pattern.permute.xlu0 0
  %3747 = vperm.xlu0 %3746, %v3694
  %v3748 = vpop.permute.xlu0 %3747
  %3749 = vset.pattern.permute.xlu0 0
  %3750 = vperm.xlu0 %3749, %v3696
  %v3751 = vpop.permute.xlu0 %3750
  %3752 = vset.pattern.permute.xlu0 0
  %3753 = vperm.xlu0 %3752, %v3698
  %v3754 = vpop.permute.xlu0 %3753
  %3755 = vset.pattern.permute.xlu0 0
  %3756 = vperm.xlu0 %3755, %v3700
  %v3757 = vpop.permute.xlu0 %3756
  %3758 = vset.pattern.permute.xlu0 0
  %3759 = vperm.xlu0 %3758, %v3702
  %v3760 = vpop.permute.xlu0 %3759
  %3761 = vset.pattern.permute.xlu0 0
  %3762 = vperm.xlu0 %3761, %v3704
  %v3763 = vpop.permute.xlu0 %3762
  %3764 = vset.pattern.permute.xlu0 0
  %3765 = vperm.xlu0 %3764, %v3706
  %v3766 = vpop.permute.xlu0 %3765
  %3767 = vset.pattern.permute.xlu0 0
  %3768 = vperm.xlu0 %3767, %v3708
  %v3769 = vpop.permute.xlu0 %3768
  %3770 = vset.pattern.permute.xlu0 0
  %3771 = vperm.xlu0 %3770, %v3710
  %v3772 = vpop.permute.xlu0 %3771
  %3773 = vset.pattern.permute.xlu0 0
  %3774 = vperm.xlu0 %3773, %v3712
  %v3775 = vpop.permute.xlu0 %3774
  %3776 = vset.pattern.permute.xlu0 0
  %3777 = vperm.xlu0 %3776, %v3714
  %v3778 = vpop.permute.xlu0 %3777
  %v3779 = vlaneseq
  %v3780 = vshrl.u32 %v3779, 7
  %v3781 = vsub.s32 %v518, %v3780
  %v3782 = vrot.slane %v3733, %v3781
  %v3783 = vlaneseq
  %v3784 = vshrl.u32 %v3783, 7
  %v3785 = vsub.s32 %v518, %v3784
  %v3786 = vrot.slane %v3736, %v3785
  %v3787 = vlaneseq
  %v3788 = vshrl.u32 %v3787, 7
  %v3789 = vsub.s32 %v518, %v3788
  %v3790 = vrot.slane %v3739, %v3789
  %v3791 = vlaneseq
  %v3792 = vshrl.u32 %v3791, 7
  %v3793 = vsub.s32 %v518, %v3792
  %v3794 = vrot.slane %v3742, %v3793
  %v3795 = vlaneseq
  %v3796 = vshrl.u32 %v3795, 7
  %v3797 = vsub.s32 %v518, %v3796
  %v3798 = vrot.slane %v3745, %v3797
  %v3799 = vlaneseq
  %v3800 = vshrl.u32 %v3799, 7
  %v3801 = vsub.s32 %v518, %v3800
  %v3802 = vrot.slane %v3748, %v3801
  %v3803 = vlaneseq
  %v3804 = vshrl.u32 %v3803, 7
  %v3805 = vsub.s32 %v518, %v3804
  %v3806 = vrot.slane %v3751, %v3805
  %v3807 = vlaneseq
  %v3808 = vshrl.u32 %v3807, 7
  %v3809 = vsub.s32 %v518, %v3808
  %v3810 = vrot.slane %v3754, %v3809
  %v3811 = vlaneseq
  %v3812 = vshrl.u32 %v3811, 7
  %v3813 = vsub.s32 %v518, %v3812
  %v3814 = vrot.slane %v3757, %v3813
  %v3815 = vlaneseq
  %v3816 = vshrl.u32 %v3815, 7
  %v3817 = vsub.s32 %v518, %v3816
  %v3818 = vrot.slane %v3760, %v3817
  %v3819 = vlaneseq
  %v3820 = vshrl.u32 %v3819, 7
  %v3821 = vsub.s32 %v518, %v3820
  %v3822 = vrot.slane %v3763, %v3821
  %v3823 = vlaneseq
  %v3824 = vshrl.u32 %v3823, 7
  %v3825 = vsub.s32 %v518, %v3824
  %v3826 = vrot.slane %v3766, %v3825
  %v3827 = vlaneseq
  %v3828 = vshrl.u32 %v3827, 7
  %v3829 = vsub.s32 %v518, %v3828
  %v3830 = vrot.slane %v3769, %v3829
  %v3831 = vlaneseq
  %v3832 = vshrl.u32 %v3831, 7
  %v3833 = vsub.s32 %v518, %v3832
  %v3834 = vrot.slane %v3772, %v3833
  %v3835 = vlaneseq
  %v3836 = vshrl.u32 %v3835, 7
  %v3837 = vsub.s32 %v518, %v3836
  %v3838 = vrot.slane %v3775, %v3837
  %v3839 = vlaneseq
  %v3840 = vshrl.u32 %v3839, 7
  %v3841 = vsub.s32 %v518, %v3840
  %v3842 = vrot.slane %v3778, %v3841
  %v3843 = vsel %vm583, %v3786, %v3782
  %v3844 = vsel %vm585, %v3790, %v3843
  %v3845 = vsel %vm587, %v3794, %v3844
  %v3846 = vsel %vm589, %v3798, %v3845
  %v3847 = vsel %vm591, %v3802, %v3846
  %v3848 = vsel %vm593, %v3806, %v3847
  %v3849 = vsel %vm595, %v3810, %v3848
  %v3850 = vsel %vm583, %v3818, %v3814
  %v3851 = vsel %vm585, %v3822, %v3850
  %v3852 = vsel %vm587, %v3826, %v3851
  %v3853 = vsel %vm589, %v3830, %v3852
  %v3854 = vsel %vm591, %v3834, %v3853
  %v3855 = vsel %vm593, %v3838, %v3854
  %v3856 = vsel %vm595, %v3842, %v3855
  %v3859 = vsel %vm606, %v3849, 0.0
  %3860 = vadd.xlane.f32.xlu0 %v3859
  %v3861 = vpop.xlane.xlu0 %3860
  %v3862 = vsel %vm606, %v3856, 0.0
  %3863 = vadd.xlane.f32.xlu0 %v3862
  %v3864 = vpop.xlane.xlu0 %3863
  %v3865 = vrcp.pop %v3861
  %v3866 = vrcp.pop %v3864
  %v3869 = vlaneseq
  %v3870 = vshrl.u32 %v3869, 7
  %v3871 = vsub.s32 0, %v3870
  %v3872 = vrot.slane %v3865, %v3871
  %v3873 = vlaneseq
  %v3874 = vshrl.u32 %v3873, 7
  %v3875 = vsub.s32 1, %v3874
  %v3876 = vrot.slane %v3865, %v3875
  %v3877 = vlaneseq
  %v3878 = vshrl.u32 %v3877, 7
  %v3879 = vsub.s32 2, %v3878
  %v3880 = vrot.slane %v3865, %v3879
  %v3881 = vlaneseq
  %v3882 = vshrl.u32 %v3881, 7
  %v3883 = vsub.s32 3, %v3882
  %v3884 = vrot.slane %v3865, %v3883
  %v3885 = vlaneseq
  %v3886 = vshrl.u32 %v3885, 7
  %v3887 = vsub.s32 4, %v3886
  %v3888 = vrot.slane %v3865, %v3887
  %v3889 = vlaneseq
  %v3890 = vshrl.u32 %v3889, 7
  %v3891 = vsub.s32 5, %v3890
  %v3892 = vrot.slane %v3865, %v3891
  %v3893 = vlaneseq
  %v3894 = vshrl.u32 %v3893, 7
  %v3895 = vsub.s32 6, %v3894
  %v3896 = vrot.slane %v3865, %v3895
  %v3897 = vlaneseq
  %v3898 = vshrl.u32 %v3897, 7
  %v3899 = vsub.s32 7, %v3898
  %v3900 = vrot.slane %v3865, %v3899
  %v3901 = vlaneseq
  %v3902 = vshrl.u32 %v3901, 7
  %v3903 = vsub.s32 0, %v3902
  %v3904 = vrot.slane %v3866, %v3903
  %v3905 = vlaneseq
  %v3906 = vshrl.u32 %v3905, 7
  %v3907 = vsub.s32 1, %v3906
  %v3908 = vrot.slane %v3866, %v3907
  %v3909 = vlaneseq
  %v3910 = vshrl.u32 %v3909, 7
  %v3911 = vsub.s32 2, %v3910
  %v3912 = vrot.slane %v3866, %v3911
  %v3913 = vlaneseq
  %v3914 = vshrl.u32 %v3913, 7
  %v3915 = vsub.s32 3, %v3914
  %v3916 = vrot.slane %v3866, %v3915
  %v3917 = vlaneseq
  %v3918 = vshrl.u32 %v3917, 7
  %v3919 = vsub.s32 4, %v3918
  %v3920 = vrot.slane %v3866, %v3919
  %v3921 = vlaneseq
  %v3922 = vshrl.u32 %v3921, 7
  %v3923 = vsub.s32 5, %v3922
  %v3924 = vrot.slane %v3866, %v3923
  %v3925 = vlaneseq
  %v3926 = vshrl.u32 %v3925, 7
  %v3927 = vsub.s32 6, %v3926
  %v3928 = vrot.slane %v3866, %v3927
  %v3929 = vlaneseq
  %v3930 = vshrl.u32 %v3929, 7
  %v3931 = vsub.s32 7, %v3930
  %v3932 = vrot.slane %v3866, %v3931
  %v3949 = vmul.f32 %v3684, %v3872
  %v3950 = vmul.f32 %v3686, %v3876
  %v3951 = vmul.f32 %v3688, %v3880
  %v3952 = vmul.f32 %v3690, %v3884
  %v3953 = vmul.f32 %v3692, %v3888
  %v3954 = vmul.f32 %v3694, %v3892
  %v3955 = vmul.f32 %v3696, %v3896
  %v3956 = vmul.f32 %v3698, %v3900
  %v3957 = vmul.f32 %v3700, %v3904
  %v3958 = vmul.f32 %v3702, %v3908
  %v3959 = vmul.f32 %v3704, %v3912
  %v3960 = vmul.f32 %v3706, %v3916
  %v3961 = vmul.f32 %v3708, %v3920
  %v3962 = vmul.f32 %v3710, %v3924
  %v3963 = vmul.f32 %v3712, %v3928
  %v3964 = vmul.f32 %v3714, %v3932
  %3966 = vset.pattern.permute.xlu0 0
  %3967 = vperm.xlu0 %3966, %v3949
  %v3968 = vpop.permute.xlu0 %3967
  %3971 = vset.pattern.permute.xlu0 0
  %3972 = vperm.xlu0 %3971, %v3950
  %v3973 = vpop.permute.xlu0 %3972
  %3976 = vset.pattern.permute.xlu0 0
  %3977 = vperm.xlu0 %3976, %v3951
  %v3978 = vpop.permute.xlu0 %3977
  %3981 = vset.pattern.permute.xlu0 0
  %3982 = vperm.xlu0 %3981, %v3952
  %v3983 = vpop.permute.xlu0 %3982
  %3986 = vset.pattern.permute.xlu0 0
  %3987 = vperm.xlu0 %3986, %v3953
  %v3988 = vpop.permute.xlu0 %3987
  %3991 = vset.pattern.permute.xlu0 0
  %3992 = vperm.xlu0 %3991, %v3954
  %v3993 = vpop.permute.xlu0 %3992
  %3996 = vset.pattern.permute.xlu0 0
  %3997 = vperm.xlu0 %3996, %v3955
  %v3998 = vpop.permute.xlu0 %3997
  %4001 = vset.pattern.permute.xlu0 0
  %4002 = vperm.xlu0 %4001, %v3956
  %v4003 = vpop.permute.xlu0 %4002
  %4006 = vset.pattern.permute.xlu0 0
  %4007 = vperm.xlu0 %4006, %v3957
  %v4008 = vpop.permute.xlu0 %4007
  %4011 = vset.pattern.permute.xlu0 0
  %4012 = vperm.xlu0 %4011, %v3958
  %v4013 = vpop.permute.xlu0 %4012
  %4016 = vset.pattern.permute.xlu0 0
  %4017 = vperm.xlu0 %4016, %v3959
  %v4018 = vpop.permute.xlu0 %4017
  %4021 = vset.pattern.permute.xlu0 0
  %4022 = vperm.xlu0 %4021, %v3960
  %v4023 = vpop.permute.xlu0 %4022
  %4026 = vset.pattern.permute.xlu0 0
  %4027 = vperm.xlu0 %4026, %v3961
  %v4028 = vpop.permute.xlu0 %4027
  %4031 = vset.pattern.permute.xlu0 0
  %4032 = vperm.xlu0 %4031, %v3962
  %v4033 = vpop.permute.xlu0 %4032
  %4036 = vset.pattern.permute.xlu0 0
  %4037 = vperm.xlu0 %4036, %v3963
  %v4038 = vpop.permute.xlu0 %4037
  %4041 = vset.pattern.permute.xlu0 0
  %4042 = vperm.xlu0 %4041, %v3964
  %v4043 = vpop.permute.xlu0 %4042
  %v4045 = vmul.f32 %v3968, %v40
  %v4046 = vmul.f32 %v3973, %v41
  %v4047 = vmul.f32 %v3978, %v42
  %v4048 = vmul.f32 %v3983, %v43
  %v4049 = vmul.f32 %v3988, %v44
  %v4050 = vmul.f32 %v3993, %v45
  %v4051 = vmul.f32 %v3998, %v46
  %v4052 = vmul.f32 %v4003, %v47
  %v4053 = vmul.f32 %v4008, %v48
  %v4054 = vmul.f32 %v4013, %v49
  %v4055 = vmul.f32 %v4018, %v50
  %v4056 = vmul.f32 %v4023, %v51
  %v4057 = vmul.f32 %v4028, %v52
  %v4058 = vmul.f32 %v4033, %v53
  %v4059 = vmul.f32 %v4038, %v54
  %v4060 = vmul.f32 %v4043, %v55
  %v4061 = vrot.slane %v4045, 4
  %v4062 = vadd.f32 %v4045, %v4061
  %v4063 = vrot.slane %v4062, 2
  %v4064 = vadd.f32 %v4062, %v4063
  %v4065 = vrot.slane %v4064, 1
  %v4066 = vadd.f32 %v4064, %v4065
  %v4067 = vrot.slane %v4046, 4
  %v4068 = vadd.f32 %v4046, %v4067
  %v4069 = vrot.slane %v4068, 2
  %v4070 = vadd.f32 %v4068, %v4069
  %v4071 = vrot.slane %v4070, 1
  %v4072 = vadd.f32 %v4070, %v4071
  %v4073 = vrot.slane %v4047, 4
  %v4074 = vadd.f32 %v4047, %v4073
  %v4075 = vrot.slane %v4074, 2
  %v4076 = vadd.f32 %v4074, %v4075
  %v4077 = vrot.slane %v4076, 1
  %v4078 = vadd.f32 %v4076, %v4077
  %v4079 = vrot.slane %v4048, 4
  %v4080 = vadd.f32 %v4048, %v4079
  %v4081 = vrot.slane %v4080, 2
  %v4082 = vadd.f32 %v4080, %v4081
  %v4083 = vrot.slane %v4082, 1
  %v4084 = vadd.f32 %v4082, %v4083
  %v4085 = vrot.slane %v4049, 4
  %v4086 = vadd.f32 %v4049, %v4085
  %v4087 = vrot.slane %v4086, 2
  %v4088 = vadd.f32 %v4086, %v4087
  %v4089 = vrot.slane %v4088, 1
  %v4090 = vadd.f32 %v4088, %v4089
  %v4091 = vrot.slane %v4050, 4
  %v4092 = vadd.f32 %v4050, %v4091
  %v4093 = vrot.slane %v4092, 2
  %v4094 = vadd.f32 %v4092, %v4093
  %v4095 = vrot.slane %v4094, 1
  %v4096 = vadd.f32 %v4094, %v4095
  %v4097 = vrot.slane %v4051, 4
  %v4098 = vadd.f32 %v4051, %v4097
  %v4099 = vrot.slane %v4098, 2
  %v4100 = vadd.f32 %v4098, %v4099
  %v4101 = vrot.slane %v4100, 1
  %v4102 = vadd.f32 %v4100, %v4101
  %v4103 = vrot.slane %v4052, 4
  %v4104 = vadd.f32 %v4052, %v4103
  %v4105 = vrot.slane %v4104, 2
  %v4106 = vadd.f32 %v4104, %v4105
  %v4107 = vrot.slane %v4106, 1
  %v4108 = vadd.f32 %v4106, %v4107
  %v4109 = vrot.slane %v4053, 4
  %v4110 = vadd.f32 %v4053, %v4109
  %v4111 = vrot.slane %v4110, 2
  %v4112 = vadd.f32 %v4110, %v4111
  %v4113 = vrot.slane %v4112, 1
  %v4114 = vadd.f32 %v4112, %v4113
  %v4115 = vrot.slane %v4054, 4
  %v4116 = vadd.f32 %v4054, %v4115
  %v4117 = vrot.slane %v4116, 2
  %v4118 = vadd.f32 %v4116, %v4117
  %v4119 = vrot.slane %v4118, 1
  %v4120 = vadd.f32 %v4118, %v4119
  %v4121 = vrot.slane %v4055, 4
  %v4122 = vadd.f32 %v4055, %v4121
  %v4123 = vrot.slane %v4122, 2
  %v4124 = vadd.f32 %v4122, %v4123
  %v4125 = vrot.slane %v4124, 1
  %v4126 = vadd.f32 %v4124, %v4125
  %v4127 = vrot.slane %v4056, 4
  %v4128 = vadd.f32 %v4056, %v4127
  %v4129 = vrot.slane %v4128, 2
  %v4130 = vadd.f32 %v4128, %v4129
  %v4131 = vrot.slane %v4130, 1
  %v4132 = vadd.f32 %v4130, %v4131
  %v4133 = vrot.slane %v4057, 4
  %v4134 = vadd.f32 %v4057, %v4133
  %v4135 = vrot.slane %v4134, 2
  %v4136 = vadd.f32 %v4134, %v4135
  %v4137 = vrot.slane %v4136, 1
  %v4138 = vadd.f32 %v4136, %v4137
  %v4139 = vrot.slane %v4058, 4
  %v4140 = vadd.f32 %v4058, %v4139
  %v4141 = vrot.slane %v4140, 2
  %v4142 = vadd.f32 %v4140, %v4141
  %v4143 = vrot.slane %v4142, 1
  %v4144 = vadd.f32 %v4142, %v4143
  %v4145 = vrot.slane %v4059, 4
  %v4146 = vadd.f32 %v4059, %v4145
  %v4147 = vrot.slane %v4146, 2
  %v4148 = vadd.f32 %v4146, %v4147
  %v4149 = vrot.slane %v4148, 1
  %v4150 = vadd.f32 %v4148, %v4149
  %v4151 = vrot.slane %v4060, 4
  %v4152 = vadd.f32 %v4060, %v4151
  %v4153 = vrot.slane %v4152, 2
  %v4154 = vadd.f32 %v4152, %v4153
  %v4155 = vrot.slane %v4154, 1
  %v4156 = vadd.f32 %v4154, %v4155
  %v4157 = vpack.c.bf16 %v4066, %v4066
  %v4158 = vpack.c.bf16 %v4072, %v4072
  %v4159 = vpack.c.bf16 %v4078, %v4078
  %v4160 = vpack.c.bf16 %v4084, %v4084
  %v4161 = vpack.c.bf16 %v4090, %v4090
  %v4162 = vpack.c.bf16 %v4096, %v4096
  %v4163 = vpack.c.bf16 %v4102, %v4102
  %v4164 = vpack.c.bf16 %v4108, %v4108
  %v4165 = vpack.c.bf16 %v4114, %v4114
  %v4166 = vpack.c.bf16 %v4120, %v4120
  %v4167 = vpack.c.bf16 %v4126, %v4126
  %v4168 = vpack.c.bf16 %v4132, %v4132
  %v4169 = vpack.c.bf16 %v4138, %v4138
  %v4170 = vpack.c.bf16 %v4144, %v4144
  %v4171 = vpack.c.bf16 %v4150, %v4150
  %v4172 = vpack.c.bf16 %v4156, %v4156
  %v4175 = vunpack.c.l.b16 %v3207
  %v4176 = vunpack.c.l.b16 %v3208
  %v4177 = vpack.c.b16 %v4176, %v4175
  %v4195 = vunpack.c.l.b16 %v4157
  %v4196 = vunpack.c.l.b16 %v4158
  %v4197 = vunpack.c.l.b16 %v4159
  %v4198 = vunpack.c.l.b16 %v4160
  %v4199 = vunpack.c.l.b16 %v4161
  %v4200 = vunpack.c.l.b16 %v4162
  %v4201 = vunpack.c.l.b16 %v4163
  %v4202 = vunpack.c.l.b16 %v4164
  %v4203 = vunpack.c.l.b16 %v4165
  %v4204 = vunpack.c.l.b16 %v4166
  %v4205 = vunpack.c.l.b16 %v4167
  %v4206 = vunpack.c.l.b16 %v4168
  %v4207 = vunpack.c.l.b16 %v4169
  %v4208 = vunpack.c.l.b16 %v4170
  %v4209 = vunpack.c.l.b16 %v4171
  %v4210 = vunpack.c.l.b16 %v4172
  %v4211 = vsel %vm583, %v4196, %v4195
  %v4212 = vsel %vm585, %v4197, %v4211
  %v4213 = vsel %vm587, %v4198, %v4212
  %v4214 = vsel %vm589, %v4199, %v4213
  %v4215 = vsel %vm591, %v4200, %v4214
  %v4216 = vsel %vm593, %v4201, %v4215
  %v4217 = vsel %vm595, %v4202, %v4216
  %v4218 = vsel %vm583, %v4204, %v4203
  %v4219 = vsel %vm585, %v4205, %v4218
  %v4220 = vsel %vm587, %v4206, %v4219
  %v4221 = vsel %vm589, %v4207, %v4220
  %v4222 = vsel %vm591, %v4208, %v4221
  %v4223 = vsel %vm593, %v4209, %v4222
  %v4224 = vsel %vm595, %v4210, %v4223
  %v4225 = vpack.c.b16 %v4224, %v4217
  %4227 = vmatprep.subr.bf16.mxu0 %v1593
  %4228 = vmatpush1.bf16.msra.mxu0 %v1592
  %4229 = vmatprep.subr.bf16.mxu0 %v1589
  %4230 = vmatpush1.bf16.msra.mxu0 %v1588
  %4231 = vmatprep.subr.bf16.mxu0 %v1585
  %4232 = vmatpush1.bf16.msra.mxu0 %v1584
  %4233 = vmatprep.subr.bf16.mxu0 %v1581
  %4234 = vmatpush1.bf16.msra.mxu0 %v1580
  %4235 = vmatprep.subr.bf16.mxu0 %v1577
  %4236 = vmatpush1.bf16.msra.mxu0 %v1576
  %4237 = vmatprep.subr.bf16.mxu0 %v1573
  %4238 = vmatpush1.bf16.msra.mxu0 %v1572
  %4239 = vmatprep.subr.bf16.mxu0 %v1569
  %4240 = vmatpush1.bf16.msra.mxu0 %v1568
  %4241 = vmatprep.subr.bf16.mxu0 %v1565
  %4242 = vmatpush1.bf16.msra.mxu0 %v1564
  %4243 = vmatprep.subr.bf16.mxu0 %v1625
  %4244 = vmatpush2.bf16.msra.mxu0 %v1624
  %4245 = vmatprep.subr.bf16.mxu0 %v1621
  %4246 = vmatpush2.bf16.msra.mxu0 %v1620
  %4247 = vmatprep.subr.bf16.mxu0 %v1617
  %4248 = vmatpush2.bf16.msra.mxu0 %v1616
  %4249 = vmatprep.subr.bf16.mxu0 %v1613
  %4250 = vmatpush2.bf16.msra.mxu0 %v1612
  %4251 = vmatprep.subr.bf16.mxu0 %v1609
  %4252 = vmatpush2.bf16.msra.mxu0 %v1608
  %4253 = vmatprep.subr.bf16.mxu0 %v1605
  %4254 = vmatpush2.bf16.msra.mxu0 %v1604
  %4255 = vmatprep.subr.bf16.mxu0 %v1601
  %4256 = vmatpush2.bf16.msra.mxu0 %v1600
  %4257 = vmatprep.subr.bf16.mxu0 %v1597
  %4258 = vmatpush2.bf16.msra.mxu0 %v1596
  %4259 = vmatprep.mubr.bf16.mxu0 %v4225
  %4260 = vmatmul.mubr.bf16.gmra.mxu0 %v4177
  %v4261 = vpop.f32.mrf.mxu0
  %v4262 = vadd.f32 %v1259, %v4261
  %v4263 = vpop.f32.mrf.mxu0
  %v4264 = vadd.f32 %v1263, %v4263
  %v4265 = vpop.f32.mrf.mxu0
  %v4266 = vadd.f32 %v1259, %v4265
  %v4267 = vpop.f32.mrf.mxu0
  %v4268 = vadd.f32 %v1263, %v4267
  %4269 = vdwg.mxu0
  %4270 = vmatprep.subr.bf16.mxu0 %v1657
  %4271 = vmatpush1.bf16.msra.mxu0 %v1656
  %4272 = vmatprep.subr.bf16.mxu0 %v1653
  %4273 = vmatpush1.bf16.msra.mxu0 %v1652
  %4274 = vmatprep.subr.bf16.mxu0 %v1649
  %4275 = vmatpush1.bf16.msra.mxu0 %v1648
  %4276 = vmatprep.subr.bf16.mxu0 %v1645
  %4277 = vmatpush1.bf16.msra.mxu0 %v1644
  %4278 = vmatprep.subr.bf16.mxu0 %v1641
  %4279 = vmatpush1.bf16.msra.mxu0 %v1640
  %4280 = vmatprep.subr.bf16.mxu0 %v1637
  %4281 = vmatpush1.bf16.msra.mxu0 %v1636
  %4282 = vmatprep.subr.bf16.mxu0 %v1633
  %4283 = vmatpush1.bf16.msra.mxu0 %v1632
  %4284 = vmatprep.subr.bf16.mxu0 %v1629
  %4285 = vmatpush1.bf16.msra.mxu0 %v1628
  %4286 = vmatprep.subr.bf16.mxu0 0
  %4287 = vmatpush2.bf16.msra.mxu0 0
  %4288 = vmatprep.subr.bf16.mxu0 0
  %4289 = vmatpush2.bf16.msra.mxu0 0
  %4290 = vmatprep.subr.bf16.mxu0 0
  %4291 = vmatpush2.bf16.msra.mxu0 0
  %4292 = vmatprep.subr.bf16.mxu0 0
  %4293 = vmatpush2.bf16.msra.mxu0 0
  %4294 = vmatprep.subr.bf16.mxu0 0
  %4295 = vmatpush2.bf16.msra.mxu0 0
  %4296 = vmatprep.subr.bf16.mxu0 0
  %4297 = vmatpush2.bf16.msra.mxu0 0
  %4298 = vmatprep.subr.bf16.mxu0 0
  %4299 = vmatpush2.bf16.msra.mxu0 0
  %4300 = vmatprep.subr.bf16.mxu0 0
  %4301 = vmatpush2.bf16.msra.mxu0 0
  %4302 = vmatprep.mubr.bf16.mxu0 0
  %4303 = vmatmul.mubr.bf16.gmra.mxu0 %v3213
  %v4304 = vpop.f32.mrf.mxu0
  %v4305 = vadd.f32 %v4262, %v4304
  %v4306 = vpop.f32.mrf.mxu0
  %v4307 = vadd.f32 %v4264, %v4306
  %v4308 = vpop.f32.mrf.mxu0
  %v4309 = vadd.f32 %v4266, %v4308
  %v4310 = vpop.f32.mrf.mxu0
  %v4311 = vadd.f32 %v4268, %v4310
  %4312 = vdwg.mxu0
  %4313 = vmatprep.subr.bf16.mxu0 %v1595
  %4314 = vmatpush1.bf16.msra.mxu0 %v1594
  %4315 = vmatprep.subr.bf16.mxu0 %v1591
  %4316 = vmatpush1.bf16.msra.mxu0 %v1590
  %4317 = vmatprep.subr.bf16.mxu0 %v1587
  %4318 = vmatpush1.bf16.msra.mxu0 %v1586
  %4319 = vmatprep.subr.bf16.mxu0 %v1583
  %4320 = vmatpush1.bf16.msra.mxu0 %v1582
  %4321 = vmatprep.subr.bf16.mxu0 %v1579
  %4322 = vmatpush1.bf16.msra.mxu0 %v1578
  %4323 = vmatprep.subr.bf16.mxu0 %v1575
  %4324 = vmatpush1.bf16.msra.mxu0 %v1574
  %4325 = vmatprep.subr.bf16.mxu0 %v1571
  %4326 = vmatpush1.bf16.msra.mxu0 %v1570
  %4327 = vmatprep.subr.bf16.mxu0 %v1567
  %4328 = vmatpush1.bf16.msra.mxu0 %v1566
  %4329 = vmatprep.subr.bf16.mxu0 %v1627
  %4330 = vmatpush2.bf16.msra.mxu0 %v1626
  %4331 = vmatprep.subr.bf16.mxu0 %v1623
  %4332 = vmatpush2.bf16.msra.mxu0 %v1622
  %4333 = vmatprep.subr.bf16.mxu0 %v1619
  %4334 = vmatpush2.bf16.msra.mxu0 %v1618
  %4335 = vmatprep.subr.bf16.mxu0 %v1615
  %4336 = vmatpush2.bf16.msra.mxu0 %v1614
  %4337 = vmatprep.subr.bf16.mxu0 %v1611
  %4338 = vmatpush2.bf16.msra.mxu0 %v1610
  %4339 = vmatprep.subr.bf16.mxu0 %v1607
  %4340 = vmatpush2.bf16.msra.mxu0 %v1606
  %4341 = vmatprep.subr.bf16.mxu0 %v1603
  %4342 = vmatpush2.bf16.msra.mxu0 %v1602
  %4343 = vmatprep.subr.bf16.mxu0 %v1599
  %4344 = vmatpush2.bf16.msra.mxu0 %v1598
  %4345 = vmatprep.mubr.bf16.mxu0 %v4225
  %4346 = vmatmul.mubr.bf16.gmra.mxu0 %v4177
  %v4347 = vpop.f32.mrf.mxu0
  %v4348 = vadd.f32 %v1267, %v4347
  %v4349 = vpop.f32.mrf.mxu0
  %v4350 = vadd.f32 %v1271, %v4349
  %v4351 = vpop.f32.mrf.mxu0
  %v4352 = vadd.f32 %v1267, %v4351
  %v4353 = vpop.f32.mrf.mxu0
  %v4354 = vadd.f32 %v1271, %v4353
  %4355 = vdwg.mxu0
  %4356 = vmatprep.subr.bf16.mxu0 %v1659
  %4357 = vmatpush1.bf16.msra.mxu0 %v1658
  %4358 = vmatprep.subr.bf16.mxu0 %v1655
  %4359 = vmatpush1.bf16.msra.mxu0 %v1654
  %4360 = vmatprep.subr.bf16.mxu0 %v1651
  %4361 = vmatpush1.bf16.msra.mxu0 %v1650
  %4362 = vmatprep.subr.bf16.mxu0 %v1647
  %4363 = vmatpush1.bf16.msra.mxu0 %v1646
  %4364 = vmatprep.subr.bf16.mxu0 %v1643
  %4365 = vmatpush1.bf16.msra.mxu0 %v1642
  %4366 = vmatprep.subr.bf16.mxu0 %v1639
  %4367 = vmatpush1.bf16.msra.mxu0 %v1638
  %4368 = vmatprep.subr.bf16.mxu0 %v1635
  %4369 = vmatpush1.bf16.msra.mxu0 %v1634
  %4370 = vmatprep.subr.bf16.mxu0 %v1631
  %4371 = vmatpush1.bf16.msra.mxu0 %v1630
  %4372 = vmatprep.subr.bf16.mxu0 0
  %4373 = vmatpush2.bf16.msra.mxu0 0
  %4374 = vmatprep.subr.bf16.mxu0 0
  %4375 = vmatpush2.bf16.msra.mxu0 0
  %4376 = vmatprep.subr.bf16.mxu0 0
  %4377 = vmatpush2.bf16.msra.mxu0 0
  %4378 = vmatprep.subr.bf16.mxu0 0
  %4379 = vmatpush2.bf16.msra.mxu0 0
  %4380 = vmatprep.subr.bf16.mxu0 0
  %4381 = vmatpush2.bf16.msra.mxu0 0
  %4382 = vmatprep.subr.bf16.mxu0 0
  %4383 = vmatpush2.bf16.msra.mxu0 0
  %4384 = vmatprep.subr.bf16.mxu0 0
  %4385 = vmatpush2.bf16.msra.mxu0 0
  %4386 = vmatprep.subr.bf16.mxu0 0
  %4387 = vmatpush2.bf16.msra.mxu0 0
  %4388 = vmatprep.mubr.bf16.mxu0 0
  %4389 = vmatmul.mubr.bf16.gmra.mxu0 %v3213
  %v4390 = vpop.f32.mrf.mxu0
  %v4391 = vadd.f32 %v4348, %v4390
  %v4392 = vpop.f32.mrf.mxu0
  %v4393 = vadd.f32 %v4350, %v4392
  %v4394 = vpop.f32.mrf.mxu0
  %v4395 = vadd.f32 %v4352, %v4394
  %v4396 = vpop.f32.mrf.mxu0
  %v4397 = vadd.f32 %v4354, %v4396
  %4398 = vdwg.mxu0
  %v4399 = vmul.f32 %v4305, 0.5
  %v4400 = vmul.f32 %v4307, 0.5
  %v4401 = vmul.f32 %v4391, 0.5
  %v4402 = vmul.f32 %v4309, 0.5
  %v4403 = vmul.f32 %v4311, 0.5
  %v4404 = vmul.f32 %v4395, 0.5
  %v4405 = vtanh.pop %v4399
  %v4406 = vtanh.pop %v4400
  %v4407 = vtanh.pop %v4401
  %v4408 = vtanh.pop %v4402
  %v4409 = vtanh.pop %v4403
  %v4410 = vtanh.pop %v4404
  %v4411 = vadd.f32 %v4405, 1.0
  %v4412 = vadd.f32 %v4406, 1.0
  %v4413 = vadd.f32 %v4407, 1.0
  %v4414 = vadd.f32 %v4408, 1.0
  %v4415 = vadd.f32 %v4409, 1.0
  %v4416 = vadd.f32 %v4410, 1.0
  %v4417 = vmul.f32 %v4411, 0.5
  %v4418 = vmul.f32 %v4412, 0.5
  %v4419 = vmul.f32 %v4413, 0.5
  %v4420 = vmul.f32 %v4414, 0.5
  %v4421 = vmul.f32 %v4415, 0.5
  %v4422 = vmul.f32 %v4416, 0.5
  %v4423 = vtanh.pop %v4393
  %v4424 = vtanh.pop %v4397
  %v4425 = vmul.f32 %v4418, %v3211
  %v4426 = vmul.f32 %v4421, %v3212
  %v4427 = vmul.f32 %v4417, %v4423
  %v4428 = vmul.f32 %v4420, %v4424
  %v4429 = vadd.f32 %v4425, %v4427
  %v4430 = vadd.f32 %v4426, %v4428
  %v4431 = vtanh.pop %v4429
  %v4432 = vtanh.pop %v4430
  %v4433 = vmul.f32 %v4419, %v4431
  %v4434 = vmul.f32 %v4422, %v4432
  %s4435 = scalar_lea.vmem %s6, 32
  %4436 = vst [vmem:[%s4435] sm:$0xff] %v4433
  %4437 = vst [vmem:[%s4435 + $0x8] sm:$0xff] %v4434
  %4438 = vst [vmem:[#allocation2] sm:$0xff] %v4433
  %4439 = vst [vmem:[#allocation2 + $0x8] sm:$0xff] %v4434
  %4440 = vst [vmem:[#allocation3] sm:$0xff] %v4429
  %4441 = vst [vmem:[#allocation3 + $0x8] sm:$0xff] %v4430
  %s4442 = scalar_lea.vmem %s0, 24
  %v4443 = vld [vmem:[%s4442] sm:$0xf]
  %v4444 = vld [vmem:[%s4442 + $0x4] sm:$0xf]
  %v4445 = vld [vmem:[#allocation2] sm:$0xff]
  %v4446 = vld [vmem:[#allocation2 + $0x8] sm:$0xff]
  %v4447 = vld [vmem:[#allocation3] sm:$0xff]
  %v4448 = vld [vmem:[#allocation3 + $0x8] sm:$0xff]
  %v4449 = vpack.c.bf16 %v4446, %v4445
  %4450 = vmatprep.subr.bf16.mxu0 0
  %4451 = vmatpush1.bf16.msra.mxu0 %v223
  %4452 = vmatprep.subr.bf16.mxu0 0
  %4453 = vmatpush1.bf16.msra.mxu0 %v222
  %4454 = vmatprep.subr.bf16.mxu0 0
  %4455 = vmatpush1.bf16.msra.mxu0 %v221
  %4456 = vmatprep.subr.bf16.mxu0 0
  %4457 = vmatpush1.bf16.msra.mxu0 %v220
  %4458 = vmatprep.subr.bf16.mxu0 0
  %4459 = vmatpush1.bf16.msra.mxu0 %v219
  %4460 = vmatprep.subr.bf16.mxu0 0
  %4461 = vmatpush1.bf16.msra.mxu0 %v218
  %4462 = vmatprep.subr.bf16.mxu0 0
  %4463 = vmatpush1.bf16.msra.mxu0 %v217
  %4464 = vmatprep.subr.bf16.mxu0 0
  %4465 = vmatpush1.bf16.msra.mxu0 %v216
  %4466 = vmatprep.subr.bf16.mxu0 0
  %4467 = vmatpush2.bf16.msra.mxu0 0
  %4468 = vmatprep.subr.bf16.mxu0 0
  %4469 = vmatpush2.bf16.msra.mxu0 0
  %4470 = vmatprep.subr.bf16.mxu0 0
  %4471 = vmatpush2.bf16.msra.mxu0 0
  %4472 = vmatprep.subr.bf16.mxu0 0
  %4473 = vmatpush2.bf16.msra.mxu0 0
  %4474 = vmatprep.subr.bf16.mxu0 0
  %4475 = vmatpush2.bf16.msra.mxu0 0
  %4476 = vmatprep.subr.bf16.mxu0 0
  %4477 = vmatpush2.bf16.msra.mxu0 0
  %4478 = vmatprep.subr.bf16.mxu0 0
  %4479 = vmatpush2.bf16.msra.mxu0 0
  %4480 = vmatprep.subr.bf16.mxu0 0
  %4481 = vmatpush2.bf16.msra.mxu0 0
  %4482 = vmatprep.mubr.bf16.mxu0 0
  %4483 = vmatmul.mubr.bf16.gmra.mxu0 %v4449
  %v4484 = vpop.f32.mrf.mxu0
  %v4485 = vadd.f32 0.0, %v4484
  %v4486 = vpop.f32.mrf.mxu0
  %v4487 = vpop.f32.mrf.mxu0
  %v4488 = vadd.f32 0.0, %v4487
  %v4489 = vpop.f32.mrf.mxu0
  %4490 = vdwg.mxu0
  %v4493 = vcombine.high %v4485, %v4485
  %v4495 = vunpack.c.l.s4 1966171168
  %v4496 = vunpack.c.0.s8 %v4495
  %v4497 = vlaneseq
  %v4498 = vshrl.u32 %v4497, 7
  %v4499 = vsub.s32 %v4496, %v4498
  %v4500 = vrot.slane %v4485, %v4499
  %v4502 = vunpack.c.l.s4 1966171168
  %v4503 = vunpack.c.0.s8 %v4502
  %v4504 = vlaneseq
  %v4505 = vshrl.u32 %v4504, 7
  %v4506 = vsub.s32 %v4503, %v4505
  %v4507 = vrot.slane %v4493, %v4506
  %v4508 = vcombine.high %v4500, %v4500
  %v4509 = vcombine.high %v4507, %v4507
  %v4511 = vunpack.c.l.s4 1966171168
  %v4512 = vunpack.c.0.s8 %v4511
  %v4513 = vlaneseq
  %v4514 = vshrl.u32 %v4513, 7
  %v4515 = vsub.s32 %v4512, %v4514
  %v4516 = vrot.slane %v4500, %v4515
  %v4518 = vunpack.c.l.s4 1966171168
  %v4519 = vunpack.c.0.s8 %v4518
  %v4520 = vlaneseq
  %v4521 = vshrl.u32 %v4520, 7
  %v4522 = vsub.s32 %v4519, %v4521
  %v4523 = vrot.slane %v4507, %v4522
  %v4525 = vunpack.c.l.s4 1966171168
  %v4526 = vunpack.c.0.s8 %v4525
  %v4527 = vlaneseq
  %v4528 = vshrl.u32 %v4527, 7
  %v4529 = vsub.s32 %v4526, %v4528
  %v4530 = vrot.slane %v4508, %v4529
  %v4532 = vunpack.c.l.s4 1966171168
  %v4533 = vunpack.c.0.s8 %v4532
  %v4534 = vlaneseq
  %v4535 = vshrl.u32 %v4534, 7
  %v4536 = vsub.s32 %v4533, %v4535
  %v4537 = vrot.slane %v4509, %v4536
  %v4538 = vcombine.high %v4516, %v4516
  %v4539 = vcombine.high %v4523, %v4523
  %v4540 = vcombine.high %v4530, %v4530
  %v4541 = vcombine.high %v4537, %v4537
  %v4542 = vcombine.high %v4488, %v4488
  %v4544 = vunpack.c.l.s4 1966171168
  %v4545 = vunpack.c.0.s8 %v4544
  %v4546 = vlaneseq
  %v4547 = vshrl.u32 %v4546, 7
  %v4548 = vsub.s32 %v4545, %v4547
  %v4549 = vrot.slane %v4488, %v4548
  %v4551 = vunpack.c.l.s4 1966171168
  %v4552 = vunpack.c.0.s8 %v4551
  %v4553 = vlaneseq
  %v4554 = vshrl.u32 %v4553, 7
  %v4555 = vsub.s32 %v4552, %v4554
  %v4556 = vrot.slane %v4542, %v4555
  %v4557 = vcombine.high %v4549, %v4549
  %v4558 = vcombine.high %v4556, %v4556
  %v4560 = vunpack.c.l.s4 1966171168
  %v4561 = vunpack.c.0.s8 %v4560
  %v4562 = vlaneseq
  %v4563 = vshrl.u32 %v4562, 7
  %v4564 = vsub.s32 %v4561, %v4563
  %v4565 = vrot.slane %v4549, %v4564
  %v4567 = vunpack.c.l.s4 1966171168
  %v4568 = vunpack.c.0.s8 %v4567
  %v4569 = vlaneseq
  %v4570 = vshrl.u32 %v4569, 7
  %v4571 = vsub.s32 %v4568, %v4570
  %v4572 = vrot.slane %v4556, %v4571
  %v4574 = vunpack.c.l.s4 1966171168
  %v4575 = vunpack.c.0.s8 %v4574
  %v4576 = vlaneseq
  %v4577 = vshrl.u32 %v4576, 7
  %v4578 = vsub.s32 %v4575, %v4577
  %v4579 = vrot.slane %v4557, %v4578
  %v4581 = vunpack.c.l.s4 1966171168
  %v4582 = vunpack.c.0.s8 %v4581
  %v4583 = vlaneseq
  %v4584 = vshrl.u32 %v4583, 7
  %v4585 = vsub.s32 %v4582, %v4584
  %v4586 = vrot.slane %v4558, %v4585
  %v4587 = vcombine.high %v4565, %v4565
  %v4588 = vcombine.high %v4572, %v4572
  %v4589 = vcombine.high %v4579, %v4579
  %v4590 = vcombine.high %v4586, %v4586
  %v4591 = vlaneseq
  %v4592 = vshrl.u32 %v4591, 7
  %v4593 = vsub.s32 0, %v4592
  %v4594 = vrot.slane %v4516, %v4593
  %v4595 = vlaneseq
  %v4596 = vshrl.u32 %v4595, 7
  %v4597 = vsub.s32 0, %v4596
  %v4598 = vrot.slane %v4530, %v4597
  %v4599 = vlaneseq
  %v4600 = vshrl.u32 %v4599, 7
  %v4601 = vsub.s32 0, %v4600
  %v4602 = vrot.slane %v4538, %v4601
  %v4603 = vlaneseq
  %v4604 = vshrl.u32 %v4603, 7
  %v4605 = vsub.s32 0, %v4604
  %v4606 = vrot.slane %v4540, %v4605
  %v4607 = vlaneseq
  %v4608 = vshrl.u32 %v4607, 7
  %v4609 = vsub.s32 0, %v4608
  %v4610 = vrot.slane %v4523, %v4609
  %v4611 = vlaneseq
  %v4612 = vshrl.u32 %v4611, 7
  %v4613 = vsub.s32 0, %v4612
  %v4614 = vrot.slane %v4537, %v4613
  %v4615 = vlaneseq
  %v4616 = vshrl.u32 %v4615, 7
  %v4617 = vsub.s32 0, %v4616
  %v4618 = vrot.slane %v4539, %v4617
  %v4619 = vlaneseq
  %v4620 = vshrl.u32 %v4619, 7
  %v4621 = vsub.s32 0, %v4620
  %v4622 = vrot.slane %v4541, %v4621
  %v4623 = vlaneseq
  %v4624 = vshrl.u32 %v4623, 7
  %v4625 = vsub.s32 0, %v4624
  %v4626 = vrot.slane %v4565, %v4625
  %v4627 = vlaneseq
  %v4628 = vshrl.u32 %v4627, 7
  %v4629 = vsub.s32 0, %v4628
  %v4630 = vrot.slane %v4579, %v4629
  %v4631 = vlaneseq
  %v4632 = vshrl.u32 %v4631, 7
  %v4633 = vsub.s32 0, %v4632
  %v4634 = vrot.slane %v4587, %v4633
  %v4635 = vlaneseq
  %v4636 = vshrl.u32 %v4635, 7
  %v4637 = vsub.s32 0, %v4636
  %v4638 = vrot.slane %v4589, %v4637
  %v4639 = vlaneseq
  %v4640 = vshrl.u32 %v4639, 7
  %v4641 = vsub.s32 0, %v4640
  %v4642 = vrot.slane %v4572, %v4641
  %v4643 = vlaneseq
  %v4644 = vshrl.u32 %v4643, 7
  %v4645 = vsub.s32 0, %v4644
  %v4646 = vrot.slane %v4586, %v4645
  %v4647 = vlaneseq
  %v4648 = vshrl.u32 %v4647, 7
  %v4649 = vsub.s32 0, %v4648
  %v4650 = vrot.slane %v4588, %v4649
  %v4651 = vlaneseq
  %v4652 = vshrl.u32 %v4651, 7
  %v4653 = vsub.s32 0, %v4652
  %v4654 = vrot.slane %v4590, %v4653
  %v4671 = vmul.f32 %v4594, %v40
  %v4672 = vmul.f32 %v4598, %v41
  %v4673 = vmul.f32 %v4602, %v42
  %v4674 = vmul.f32 %v4606, %v43
  %v4675 = vmul.f32 %v4610, %v44
  %v4676 = vmul.f32 %v4614, %v45
  %v4677 = vmul.f32 %v4618, %v46
  %v4678 = vmul.f32 %v4622, %v47
  %v4679 = vmul.f32 %v4626, %v48
  %v4680 = vmul.f32 %v4630, %v49
  %v4681 = vmul.f32 %v4634, %v50
  %v4682 = vmul.f32 %v4638, %v51
  %v4683 = vmul.f32 %v4642, %v52
  %v4684 = vmul.f32 %v4646, %v53
  %v4685 = vmul.f32 %v4650, %v54
  %v4686 = vmul.f32 %v4654, %v55
  %4687 = vadd.xlane.f32.xlu0 %v4671
  %v4688 = vpop.xlane.xlu0 %4687
  %4689 = vadd.xlane.f32.xlu0 %v4672
  %v4690 = vpop.xlane.xlu0 %4689
  %4691 = vadd.xlane.f32.xlu0 %v4673
  %v4692 = vpop.xlane.xlu0 %4691
  %4693 = vadd.xlane.f32.xlu0 %v4674
  %v4694 = vpop.xlane.xlu0 %4693
  %4695 = vadd.xlane.f32.xlu0 %v4675
  %v4696 = vpop.xlane.xlu0 %4695
  %4697 = vadd.xlane.f32.xlu0 %v4676
  %v4698 = vpop.xlane.xlu0 %4697
  %4699 = vadd.xlane.f32.xlu0 %v4677
  %v4700 = vpop.xlane.xlu0 %4699
  %4701 = vadd.xlane.f32.xlu0 %v4678
  %v4702 = vpop.xlane.xlu0 %4701
  %4703 = vadd.xlane.f32.xlu0 %v4679
  %v4704 = vpop.xlane.xlu0 %4703
  %4705 = vadd.xlane.f32.xlu0 %v4680
  %v4706 = vpop.xlane.xlu0 %4705
  %4707 = vadd.xlane.f32.xlu0 %v4681
  %v4708 = vpop.xlane.xlu0 %4707
  %4709 = vadd.xlane.f32.xlu0 %v4682
  %v4710 = vpop.xlane.xlu0 %4709
  %4711 = vadd.xlane.f32.xlu0 %v4683
  %v4712 = vpop.xlane.xlu0 %4711
  %4713 = vadd.xlane.f32.xlu0 %v4684
  %v4714 = vpop.xlane.xlu0 %4713
  %4715 = vadd.xlane.f32.xlu0 %v4685
  %v4716 = vpop.xlane.xlu0 %4715
  %4717 = vadd.xlane.f32.xlu0 %v4686
  %v4718 = vpop.xlane.xlu0 %4717
  %v4735 = vlaneseq
  %v4736 = vshrl.u32 %v4735, 7
  %v4737 = vsub.s32 %v518, %v4736
  %v4738 = vrot.slane %v4688, %v4737
  %v4739 = vlaneseq
  %v4740 = vshrl.u32 %v4739, 7
  %v4741 = vsub.s32 %v518, %v4740
  %v4742 = vrot.slane %v4690, %v4741
  %v4743 = vlaneseq
  %v4744 = vshrl.u32 %v4743, 7
  %v4745 = vsub.s32 %v518, %v4744
  %v4746 = vrot.slane %v4692, %v4745
  %v4747 = vlaneseq
  %v4748 = vshrl.u32 %v4747, 7
  %v4749 = vsub.s32 %v518, %v4748
  %v4750 = vrot.slane %v4694, %v4749
  %v4751 = vlaneseq
  %v4752 = vshrl.u32 %v4751, 7
  %v4753 = vsub.s32 %v518, %v4752
  %v4754 = vrot.slane %v4696, %v4753
  %v4755 = vlaneseq
  %v4756 = vshrl.u32 %v4755, 7
  %v4757 = vsub.s32 %v518, %v4756
  %v4758 = vrot.slane %v4698, %v4757
  %v4759 = vlaneseq
  %v4760 = vshrl.u32 %v4759, 7
  %v4761 = vsub.s32 %v518, %v4760
  %v4762 = vrot.slane %v4700, %v4761
  %v4763 = vlaneseq
  %v4764 = vshrl.u32 %v4763, 7
  %v4765 = vsub.s32 %v518, %v4764
  %v4766 = vrot.slane %v4702, %v4765
  %v4767 = vlaneseq
  %v4768 = vshrl.u32 %v4767, 7
  %v4769 = vsub.s32 %v518, %v4768
  %v4770 = vrot.slane %v4704, %v4769
  %v4771 = vlaneseq
  %v4772 = vshrl.u32 %v4771, 7
  %v4773 = vsub.s32 %v518, %v4772
  %v4774 = vrot.slane %v4706, %v4773
  %v4775 = vlaneseq
  %v4776 = vshrl.u32 %v4775, 7
  %v4777 = vsub.s32 %v518, %v4776
  %v4778 = vrot.slane %v4708, %v4777
  %v4779 = vlaneseq
  %v4780 = vshrl.u32 %v4779, 7
  %v4781 = vsub.s32 %v518, %v4780
  %v4782 = vrot.slane %v4710, %v4781
  %v4783 = vlaneseq
  %v4784 = vshrl.u32 %v4783, 7
  %v4785 = vsub.s32 %v518, %v4784
  %v4786 = vrot.slane %v4712, %v4785
  %v4787 = vlaneseq
  %v4788 = vshrl.u32 %v4787, 7
  %v4789 = vsub.s32 %v518, %v4788
  %v4790 = vrot.slane %v4714, %v4789
  %v4791 = vlaneseq
  %v4792 = vshrl.u32 %v4791, 7
  %v4793 = vsub.s32 %v518, %v4792
  %v4794 = vrot.slane %v4716, %v4793
  %v4795 = vlaneseq
  %v4796 = vshrl.u32 %v4795, 7
  %v4797 = vsub.s32 %v518, %v4796
  %v4798 = vrot.slane %v4718, %v4797
  %v4799 = vsel %vm583, %v4742, %v4738
  %v4800 = vsel %vm585, %v4746, %v4799
  %v4801 = vsel %vm587, %v4750, %v4800
  %v4802 = vsel %vm589, %v4754, %v4801
  %v4803 = vsel %vm591, %v4758, %v4802
  %v4804 = vsel %vm593, %v4762, %v4803
  %v4805 = vsel %vm595, %v4766, %v4804
  %v4806 = vsel %vm583, %v4774, %v4770
  %v4807 = vsel %vm585, %v4778, %v4806
  %v4808 = vsel %vm587, %v4782, %v4807
  %v4809 = vsel %vm589, %v4786, %v4808
  %v4810 = vsel %vm591, %v4790, %v4809
  %v4811 = vsel %vm593, %v4794, %v4810
  %v4812 = vsel %vm595, %v4798, %v4811
  %v4815 = vsel %vm606, %v4805, -inf
  %4816 = vmax.xlane.f32.xlu0 %v4815
  %v4817 = vpop.xlane.xlu0 %4816
  %v4818 = vsel %vm606, %v4812, -inf
  %4819 = vmax.xlane.f32.xlu0 %v4818
  %v4820 = vpop.xlane.xlu0 %4819
  %v4823 = vlaneseq
  %v4824 = vshrl.u32 %v4823, 7
  %v4825 = vsub.s32 0, %v4824
  %v4826 = vrot.slane %v4817, %v4825
  %v4827 = vlaneseq
  %v4828 = vshrl.u32 %v4827, 7
  %v4829 = vsub.s32 1, %v4828
  %v4830 = vrot.slane %v4817, %v4829
  %v4831 = vlaneseq
  %v4832 = vshrl.u32 %v4831, 7
  %v4833 = vsub.s32 2, %v4832
  %v4834 = vrot.slane %v4817, %v4833
  %v4835 = vlaneseq
  %v4836 = vshrl.u32 %v4835, 7
  %v4837 = vsub.s32 3, %v4836
  %v4838 = vrot.slane %v4817, %v4837
  %v4839 = vlaneseq
  %v4840 = vshrl.u32 %v4839, 7
  %v4841 = vsub.s32 4, %v4840
  %v4842 = vrot.slane %v4817, %v4841
  %v4843 = vlaneseq
  %v4844 = vshrl.u32 %v4843, 7
  %v4845 = vsub.s32 5, %v4844
  %v4846 = vrot.slane %v4817, %v4845
  %v4847 = vlaneseq
  %v4848 = vshrl.u32 %v4847, 7
  %v4849 = vsub.s32 6, %v4848
  %v4850 = vrot.slane %v4817, %v4849
  %v4851 = vlaneseq
  %v4852 = vshrl.u32 %v4851, 7
  %v4853 = vsub.s32 7, %v4852
  %v4854 = vrot.slane %v4817, %v4853
  %v4855 = vlaneseq
  %v4856 = vshrl.u32 %v4855, 7
  %v4857 = vsub.s32 0, %v4856
  %v4858 = vrot.slane %v4820, %v4857
  %v4859 = vlaneseq
  %v4860 = vshrl.u32 %v4859, 7
  %v4861 = vsub.s32 1, %v4860
  %v4862 = vrot.slane %v4820, %v4861
  %v4863 = vlaneseq
  %v4864 = vshrl.u32 %v4863, 7
  %v4865 = vsub.s32 2, %v4864
  %v4866 = vrot.slane %v4820, %v4865
  %v4867 = vlaneseq
  %v4868 = vshrl.u32 %v4867, 7
  %v4869 = vsub.s32 3, %v4868
  %v4870 = vrot.slane %v4820, %v4869
  %v4871 = vlaneseq
  %v4872 = vshrl.u32 %v4871, 7
  %v4873 = vsub.s32 4, %v4872
  %v4874 = vrot.slane %v4820, %v4873
  %v4875 = vlaneseq
  %v4876 = vshrl.u32 %v4875, 7
  %v4877 = vsub.s32 5, %v4876
  %v4878 = vrot.slane %v4820, %v4877
  %v4879 = vlaneseq
  %v4880 = vshrl.u32 %v4879, 7
  %v4881 = vsub.s32 6, %v4880
  %v4882 = vrot.slane %v4820, %v4881
  %v4883 = vlaneseq
  %v4884 = vshrl.u32 %v4883, 7
  %v4885 = vsub.s32 7, %v4884
  %v4886 = vrot.slane %v4820, %v4885
  %v4903 = vsub.f32 %v4688, %v4826
  %v4904 = vsub.f32 %v4690, %v4830
  %v4905 = vsub.f32 %v4692, %v4834
  %v4906 = vsub.f32 %v4694, %v4838
  %v4907 = vsub.f32 %v4696, %v4842
  %v4908 = vsub.f32 %v4698, %v4846
  %v4909 = vsub.f32 %v4700, %v4850
  %v4910 = vsub.f32 %v4702, %v4854
  %v4911 = vsub.f32 %v4704, %v4858
  %v4912 = vsub.f32 %v4706, %v4862
  %v4913 = vsub.f32 %v4708, %v4866
  %v4914 = vsub.f32 %v4710, %v4870
  %v4915 = vsub.f32 %v4712, %v4874
  %v4916 = vsub.f32 %v4714, %v4878
  %v4917 = vsub.f32 %v4716, %v4882
  %v4918 = vsub.f32 %v4718, %v4886
  %v4919 = vmul.f32 %v4903, 1.442695
  %v4920 = vpow.pop %v4919
  %v4921 = vmul.f32 %v4904, 1.442695
  %v4922 = vpow.pop %v4921
  %v4923 = vmul.f32 %v4905, 1.442695
  %v4924 = vpow.pop %v4923
  %v4925 = vmul.f32 %v4906, 1.442695
  %v4926 = vpow.pop %v4925
  %v4927 = vmul.f32 %v4907, 1.442695
  %v4928 = vpow.pop %v4927
  %v4929 = vmul.f32 %v4908, 1.442695
  %v4930 = vpow.pop %v4929
  %v4931 = vmul.f32 %v4909, 1.442695
  %v4932 = vpow.pop %v4931
  %v4933 = vmul.f32 %v4910, 1.442695
  %v4934 = vpow.pop %v4933
  %v4935 = vmul.f32 %v4911, 1.442695
  %v4936 = vpow.pop %v4935
  %v4937 = vmul.f32 %v4912, 1.442695
  %v4938 = vpow.pop %v4937
  %v4939 = vmul.f32 %v4913, 1.442695
  %v4940 = vpow.pop %v4939
  %v4941 = vmul.f32 %v4914, 1.442695
  %v4942 = vpow.pop %v4941
  %v4943 = vmul.f32 %v4915, 1.442695
  %v4944 = vpow.pop %v4943
  %v4945 = vmul.f32 %v4916, 1.442695
  %v4946 = vpow.pop %v4945
  %v4947 = vmul.f32 %v4917, 1.442695
  %v4948 = vpow.pop %v4947
  %v4949 = vmul.f32 %v4918, 1.442695
  %v4950 = vpow.pop %v4949
  %4967 = vset.pattern.permute.xlu0 0
  %4968 = vperm.xlu0 %4967, %v4920
  %v4969 = vpop.permute.xlu0 %4968
  %4970 = vset.pattern.permute.xlu0 0
  %4971 = vperm.xlu0 %4970, %v4922
  %v4972 = vpop.permute.xlu0 %4971
  %4973 = vset.pattern.permute.xlu0 0
  %4974 = vperm.xlu0 %4973, %v4924
  %v4975 = vpop.permute.xlu0 %4974
  %4976 = vset.pattern.permute.xlu0 0
  %4977 = vperm.xlu0 %4976, %v4926
  %v4978 = vpop.permute.xlu0 %4977
  %4979 = vset.pattern.permute.xlu0 0
  %4980 = vperm.xlu0 %4979, %v4928
  %v4981 = vpop.permute.xlu0 %4980
  %4982 = vset.pattern.permute.xlu0 0
  %4983 = vperm.xlu0 %4982, %v4930
  %v4984 = vpop.permute.xlu0 %4983
  %4985 = vset.pattern.permute.xlu0 0
  %4986 = vperm.xlu0 %4985, %v4932
  %v4987 = vpop.permute.xlu0 %4986
  %4988 = vset.pattern.permute.xlu0 0
  %4989 = vperm.xlu0 %4988, %v4934
  %v4990 = vpop.permute.xlu0 %4989
  %4991 = vset.pattern.permute.xlu0 0
  %4992 = vperm.xlu0 %4991, %v4936
  %v4993 = vpop.permute.xlu0 %4992
  %4994 = vset.pattern.permute.xlu0 0
  %4995 = vperm.xlu0 %4994, %v4938
  %v4996 = vpop.permute.xlu0 %4995
  %4997 = vset.pattern.permute.xlu0 0
  %4998 = vperm.xlu0 %4997, %v4940
  %v4999 = vpop.permute.xlu0 %4998
  %5000 = vset.pattern.permute.xlu0 0
  %5001 = vperm.xlu0 %5000, %v4942
  %v5002 = vpop.permute.xlu0 %5001
  %5003 = vset.pattern.permute.xlu0 0
  %5004 = vperm.xlu0 %5003, %v4944
  %v5005 = vpop.permute.xlu0 %5004
  %5006 = vset.pattern.permute.xlu0 0
  %5007 = vperm.xlu0 %5006, %v4946
  %v5008 = vpop.permute.xlu0 %5007
  %5009 = vset.pattern.permute.xlu0 0
  %5010 = vperm.xlu0 %5009, %v4948
  %v5011 = vpop.permute.xlu0 %5010
  %5012 = vset.pattern.permute.xlu0 0
  %5013 = vperm.xlu0 %5012, %v4950
  %v5014 = vpop.permute.xlu0 %5013
  %v5015 = vlaneseq
  %v5016 = vshrl.u32 %v5015, 7
  %v5017 = vsub.s32 %v518, %v5016
  %v5018 = vrot.slane %v4969, %v5017
  %v5019 = vlaneseq
  %v5020 = vshrl.u32 %v5019, 7
  %v5021 = vsub.s32 %v518, %v5020
  %v5022 = vrot.slane %v4972, %v5021
  %v5023 = vlaneseq
  %v5024 = vshrl.u32 %v5023, 7
  %v5025 = vsub.s32 %v518, %v5024
  %v5026 = vrot.slane %v4975, %v5025
  %v5027 = vlaneseq
  %v5028 = vshrl.u32 %v5027, 7
  %v5029 = vsub.s32 %v518, %v5028
  %v5030 = vrot.slane %v4978, %v5029
  %v5031 = vlaneseq
  %v5032 = vshrl.u32 %v5031, 7
  %v5033 = vsub.s32 %v518, %v5032
  %v5034 = vrot.slane %v4981, %v5033
  %v5035 = vlaneseq
  %v5036 = vshrl.u32 %v5035, 7
  %v5037 = vsub.s32 %v518, %v5036
  %v5038 = vrot.slane %v4984, %v5037
  %v5039 = vlaneseq
  %v5040 = vshrl.u32 %v5039, 7
  %v5041 = vsub.s32 %v518, %v5040
  %v5042 = vrot.slane %v4987, %v5041
  %v5043 = vlaneseq
  %v5044 = vshrl.u32 %v5043, 7
  %v5045 = vsub.s32 %v518, %v5044
  %v5046 = vrot.slane %v4990, %v5045
  %v5047 = vlaneseq
  %v5048 = vshrl.u32 %v5047, 7
  %v5049 = vsub.s32 %v518, %v5048
  %v5050 = vrot.slane %v4993, %v5049
  %v5051 = vlaneseq
  %v5052 = vshrl.u32 %v5051, 7
  %v5053 = vsub.s32 %v518, %v5052
  %v5054 = vrot.slane %v4996, %v5053
  %v5055 = vlaneseq
  %v5056 = vshrl.u32 %v5055, 7
  %v5057 = vsub.s32 %v518, %v5056
  %v5058 = vrot.slane %v4999, %v5057
  %v5059 = vlaneseq
  %v5060 = vshrl.u32 %v5059, 7
  %v5061 = vsub.s32 %v518, %v5060
  %v5062 = vrot.slane %v5002, %v5061
  %v5063 = vlaneseq
  %v5064 = vshrl.u32 %v5063, 7
  %v5065 = vsub.s32 %v518, %v5064
  %v5066 = vrot.slane %v5005, %v5065
  %v5067 = vlaneseq
  %v5068 = vshrl.u32 %v5067, 7
  %v5069 = vsub.s32 %v518, %v5068
  %v5070 = vrot.slane %v5008, %v5069
  %v5071 = vlaneseq
  %v5072 = vshrl.u32 %v5071, 7
  %v5073 = vsub.s32 %v518, %v5072
  %v5074 = vrot.slane %v5011, %v5073
  %v5075 = vlaneseq
  %v5076 = vshrl.u32 %v5075, 7
  %v5077 = vsub.s32 %v518, %v5076
  %v5078 = vrot.slane %v5014, %v5077
  %v5079 = vsel %vm583, %v5022, %v5018
  %v5080 = vsel %vm585, %v5026, %v5079
  %v5081 = vsel %vm587, %v5030, %v5080
  %v5082 = vsel %vm589, %v5034, %v5081
  %v5083 = vsel %vm591, %v5038, %v5082
  %v5084 = vsel %vm593, %v5042, %v5083
  %v5085 = vsel %vm595, %v5046, %v5084
  %v5086 = vsel %vm583, %v5054, %v5050
  %v5087 = vsel %vm585, %v5058, %v5086
  %v5088 = vsel %vm587, %v5062, %v5087
  %v5089 = vsel %vm589, %v5066, %v5088
  %v5090 = vsel %vm591, %v5070, %v5089
  %v5091 = vsel %vm593, %v5074, %v5090
  %v5092 = vsel %vm595, %v5078, %v5091
  %v5095 = vsel %vm606, %v5085, 0.0
  %5096 = vadd.xlane.f32.xlu0 %v5095
  %v5097 = vpop.xlane.xlu0 %5096
  %v5098 = vsel %vm606, %v5092, 0.0
  %5099 = vadd.xlane.f32.xlu0 %v5098
  %v5100 = vpop.xlane.xlu0 %5099
  %v5101 = vrcp.pop %v5097
  %v5102 = vrcp.pop %v5100
  %v5105 = vlaneseq
  %v5106 = vshrl.u32 %v5105, 7
  %v5107 = vsub.s32 0, %v5106
  %v5108 = vrot.slane %v5101, %v5107
  %v5109 = vlaneseq
  %v5110 = vshrl.u32 %v5109, 7
  %v5111 = vsub.s32 1, %v5110
  %v5112 = vrot.slane %v5101, %v5111
  %v5113 = vlaneseq
  %v5114 = vshrl.u32 %v5113, 7
  %v5115 = vsub.s32 2, %v5114
  %v5116 = vrot.slane %v5101, %v5115
  %v5117 = vlaneseq
  %v5118 = vshrl.u32 %v5117, 7
  %v5119 = vsub.s32 3, %v5118
  %v5120 = vrot.slane %v5101, %v5119
  %v5121 = vlaneseq
  %v5122 = vshrl.u32 %v5121, 7
  %v5123 = vsub.s32 4, %v5122
  %v5124 = vrot.slane %v5101, %v5123
  %v5125 = vlaneseq
  %v5126 = vshrl.u32 %v5125, 7
  %v5127 = vsub.s32 5, %v5126
  %v5128 = vrot.slane %v5101, %v5127
  %v5129 = vlaneseq
  %v5130 = vshrl.u32 %v5129, 7
  %v5131 = vsub.s32 6, %v5130
  %v5132 = vrot.slane %v5101, %v5131
  %v5133 = vlaneseq
  %v5134 = vshrl.u32 %v5133, 7
  %v5135 = vsub.s32 7, %v5134
  %v5136 = vrot.slane %v5101, %v5135
  %v5137 = vlaneseq
  %v5138 = vshrl.u32 %v5137, 7
  %v5139 = vsub.s32 0, %v5138
  %v5140 = vrot.slane %v5102, %v5139
  %v5141 = vlaneseq
  %v5142 = vshrl.u32 %v5141, 7
  %v5143 = vsub.s32 1, %v5142
  %v5144 = vrot.slane %v5102, %v5143
  %v5145 = vlaneseq
  %v5146 = vshrl.u32 %v5145, 7
  %v5147 = vsub.s32 2, %v5146
  %v5148 = vrot.slane %v5102, %v5147
  %v5149 = vlaneseq
  %v5150 = vshrl.u32 %v5149, 7
  %v5151 = vsub.s32 3, %v5150
  %v5152 = vrot.slane %v5102, %v5151
  %v5153 = vlaneseq
  %v5154 = vshrl.u32 %v5153, 7
  %v5155 = vsub.s32 4, %v5154
  %v5156 = vrot.slane %v5102, %v5155
  %v5157 = vlaneseq
  %v5158 = vshrl.u32 %v5157, 7
  %v5159 = vsub.s32 5, %v5158
  %v5160 = vrot.slane %v5102, %v5159
  %v5161 = vlaneseq
  %v5162 = vshrl.u32 %v5161, 7
  %v5163 = vsub.s32 6, %v5162
  %v5164 = vrot.slane %v5102, %v5163
  %v5165 = vlaneseq
  %v5166 = vshrl.u32 %v5165, 7
  %v5167 = vsub.s32 7, %v5166
  %v5168 = vrot.slane %v5102, %v5167
  %v5185 = vmul.f32 %v4920, %v5108
  %v5186 = vmul.f32 %v4922, %v5112
  %v5187 = vmul.f32 %v4924, %v5116
  %v5188 = vmul.f32 %v4926, %v5120
  %v5189 = vmul.f32 %v4928, %v5124
  %v5190 = vmul.f32 %v4930, %v5128
  %v5191 = vmul.f32 %v4932, %v5132
  %v5192 = vmul.f32 %v4934, %v5136
  %v5193 = vmul.f32 %v4936, %v5140
  %v5194 = vmul.f32 %v4938, %v5144
  %v5195 = vmul.f32 %v4940, %v5148
  %v5196 = vmul.f32 %v4942, %v5152
  %v5197 = vmul.f32 %v4944, %v5156
  %v5198 = vmul.f32 %v4946, %v5160
  %v5199 = vmul.f32 %v4948, %v5164
  %v5200 = vmul.f32 %v4950, %v5168
  %5202 = vset.pattern.permute.xlu0 0
  %5203 = vperm.xlu0 %5202, %v5185
  %v5204 = vpop.permute.xlu0 %5203
  %5207 = vset.pattern.permute.xlu0 0
  %5208 = vperm.xlu0 %5207, %v5186
  %v5209 = vpop.permute.xlu0 %5208
  %5212 = vset.pattern.permute.xlu0 0
  %5213 = vperm.xlu0 %5212, %v5187
  %v5214 = vpop.permute.xlu0 %5213
  %5217 = vset.pattern.permute.xlu0 0
  %5218 = vperm.xlu0 %5217, %v5188
  %v5219 = vpop.permute.xlu0 %5218
  %5222 = vset.pattern.permute.xlu0 0
  %5223 = vperm.xlu0 %5222, %v5189
  %v5224 = vpop.permute.xlu0 %5223
  %5227 = vset.pattern.permute.xlu0 0
  %5228 = vperm.xlu0 %5227, %v5190
  %v5229 = vpop.permute.xlu0 %5228
  %5232 = vset.pattern.permute.xlu0 0
  %5233 = vperm.xlu0 %5232, %v5191
  %v5234 = vpop.permute.xlu0 %5233
  %5237 = vset.pattern.permute.xlu0 0
  %5238 = vperm.xlu0 %5237, %v5192
  %v5239 = vpop.permute.xlu0 %5238
  %5242 = vset.pattern.permute.xlu0 0
  %5243 = vperm.xlu0 %5242, %v5193
  %v5244 = vpop.permute.xlu0 %5243
  %5247 = vset.pattern.permute.xlu0 0
  %5248 = vperm.xlu0 %5247, %v5194
  %v5249 = vpop.permute.xlu0 %5248
  %5252 = vset.pattern.permute.xlu0 0
  %5253 = vperm.xlu0 %5252, %v5195
  %v5254 = vpop.permute.xlu0 %5253
  %5257 = vset.pattern.permute.xlu0 0
  %5258 = vperm.xlu0 %5257, %v5196
  %v5259 = vpop.permute.xlu0 %5258
  %5262 = vset.pattern.permute.xlu0 0
  %5263 = vperm.xlu0 %5262, %v5197
  %v5264 = vpop.permute.xlu0 %5263
  %5267 = vset.pattern.permute.xlu0 0
  %5268 = vperm.xlu0 %5267, %v5198
  %v5269 = vpop.permute.xlu0 %5268
  %5272 = vset.pattern.permute.xlu0 0
  %5273 = vperm.xlu0 %5272, %v5199
  %v5274 = vpop.permute.xlu0 %5273
  %5277 = vset.pattern.permute.xlu0 0
  %5278 = vperm.xlu0 %5277, %v5200
  %v5279 = vpop.permute.xlu0 %5278
  %v5281 = vmul.f32 %v5204, %v40
  %v5282 = vmul.f32 %v5209, %v41
  %v5283 = vmul.f32 %v5214, %v42
  %v5284 = vmul.f32 %v5219, %v43
  %v5285 = vmul.f32 %v5224, %v44
  %v5286 = vmul.f32 %v5229, %v45
  %v5287 = vmul.f32 %v5234, %v46
  %v5288 = vmul.f32 %v5239, %v47
  %v5289 = vmul.f32 %v5244, %v48
  %v5290 = vmul.f32 %v5249, %v49
  %v5291 = vmul.f32 %v5254, %v50
  %v5292 = vmul.f32 %v5259, %v51
  %v5293 = vmul.f32 %v5264, %v52
  %v5294 = vmul.f32 %v5269, %v53
  %v5295 = vmul.f32 %v5274, %v54
  %v5296 = vmul.f32 %v5279, %v55
  %v5297 = vrot.slane %v5281, 4
  %v5298 = vadd.f32 %v5281, %v5297
  %v5299 = vrot.slane %v5298, 2
  %v5300 = vadd.f32 %v5298, %v5299
  %v5301 = vrot.slane %v5300, 1
  %v5302 = vadd.f32 %v5300, %v5301
  %v5303 = vrot.slane %v5282, 4
  %v5304 = vadd.f32 %v5282, %v5303
  %v5305 = vrot.slane %v5304, 2
  %v5306 = vadd.f32 %v5304, %v5305
  %v5307 = vrot.slane %v5306, 1
  %v5308 = vadd.f32 %v5306, %v5307
  %v5309 = vrot.slane %v5283, 4
  %v5310 = vadd.f32 %v5283, %v5309
  %v5311 = vrot.slane %v5310, 2
  %v5312 = vadd.f32 %v5310, %v5311
  %v5313 = vrot.slane %v5312, 1
  %v5314 = vadd.f32 %v5312, %v5313
  %v5315 = vrot.slane %v5284, 4
  %v5316 = vadd.f32 %v5284, %v5315
  %v5317 = vrot.slane %v5316, 2
  %v5318 = vadd.f32 %v5316, %v5317
  %v5319 = vrot.slane %v5318, 1
  %v5320 = vadd.f32 %v5318, %v5319
  %v5321 = vrot.slane %v5285, 4
  %v5322 = vadd.f32 %v5285, %v5321
  %v5323 = vrot.slane %v5322, 2
  %v5324 = vadd.f32 %v5322, %v5323
  %v5325 = vrot.slane %v5324, 1
  %v5326 = vadd.f32 %v5324, %v5325
  %v5327 = vrot.slane %v5286, 4
  %v5328 = vadd.f32 %v5286, %v5327
  %v5329 = vrot.slane %v5328, 2
  %v5330 = vadd.f32 %v5328, %v5329
  %v5331 = vrot.slane %v5330, 1
  %v5332 = vadd.f32 %v5330, %v5331
  %v5333 = vrot.slane %v5287, 4
  %v5334 = vadd.f32 %v5287, %v5333
  %v5335 = vrot.slane %v5334, 2
  %v5336 = vadd.f32 %v5334, %v5335
  %v5337 = vrot.slane %v5336, 1
  %v5338 = vadd.f32 %v5336, %v5337
  %v5339 = vrot.slane %v5288, 4
  %v5340 = vadd.f32 %v5288, %v5339
  %v5341 = vrot.slane %v5340, 2
  %v5342 = vadd.f32 %v5340, %v5341
  %v5343 = vrot.slane %v5342, 1
  %v5344 = vadd.f32 %v5342, %v5343
  %v5345 = vrot.slane %v5289, 4
  %v5346 = vadd.f32 %v5289, %v5345
  %v5347 = vrot.slane %v5346, 2
  %v5348 = vadd.f32 %v5346, %v5347
  %v5349 = vrot.slane %v5348, 1
  %v5350 = vadd.f32 %v5348, %v5349
  %v5351 = vrot.slane %v5290, 4
  %v5352 = vadd.f32 %v5290, %v5351
  %v5353 = vrot.slane %v5352, 2
  %v5354 = vadd.f32 %v5352, %v5353
  %v5355 = vrot.slane %v5354, 1
  %v5356 = vadd.f32 %v5354, %v5355
  %v5357 = vrot.slane %v5291, 4
  %v5358 = vadd.f32 %v5291, %v5357
  %v5359 = vrot.slane %v5358, 2
  %v5360 = vadd.f32 %v5358, %v5359
  %v5361 = vrot.slane %v5360, 1
  %v5362 = vadd.f32 %v5360, %v5361
  %v5363 = vrot.slane %v5292, 4
  %v5364 = vadd.f32 %v5292, %v5363
  %v5365 = vrot.slane %v5364, 2
  %v5366 = vadd.f32 %v5364, %v5365
  %v5367 = vrot.slane %v5366, 1
  %v5368 = vadd.f32 %v5366, %v5367
  %v5369 = vrot.slane %v5293, 4
  %v5370 = vadd.f32 %v5293, %v5369
  %v5371 = vrot.slane %v5370, 2
  %v5372 = vadd.f32 %v5370, %v5371
  %v5373 = vrot.slane %v5372, 1
  %v5374 = vadd.f32 %v5372, %v5373
  %v5375 = vrot.slane %v5294, 4
  %v5376 = vadd.f32 %v5294, %v5375
  %v5377 = vrot.slane %v5376, 2
  %v5378 = vadd.f32 %v5376, %v5377
  %v5379 = vrot.slane %v5378, 1
  %v5380 = vadd.f32 %v5378, %v5379
  %v5381 = vrot.slane %v5295, 4
  %v5382 = vadd.f32 %v5295, %v5381
  %v5383 = vrot.slane %v5382, 2
  %v5384 = vadd.f32 %v5382, %v5383
  %v5385 = vrot.slane %v5384, 1
  %v5386 = vadd.f32 %v5384, %v5385
  %v5387 = vrot.slane %v5296, 4
  %v5388 = vadd.f32 %v5296, %v5387
  %v5389 = vrot.slane %v5388, 2
  %v5390 = vadd.f32 %v5388, %v5389
  %v5391 = vrot.slane %v5390, 1
  %v5392 = vadd.f32 %v5390, %v5391
  %v5393 = vpack.c.bf16 %v5302, %v5302
  %v5394 = vpack.c.bf16 %v5308, %v5308
  %v5395 = vpack.c.bf16 %v5314, %v5314
  %v5396 = vpack.c.bf16 %v5320, %v5320
  %v5397 = vpack.c.bf16 %v5326, %v5326
  %v5398 = vpack.c.bf16 %v5332, %v5332
  %v5399 = vpack.c.bf16 %v5338, %v5338
  %v5400 = vpack.c.bf16 %v5344, %v5344
  %v5401 = vpack.c.bf16 %v5350, %v5350
  %v5402 = vpack.c.bf16 %v5356, %v5356
  %v5403 = vpack.c.bf16 %v5362, %v5362
  %v5404 = vpack.c.bf16 %v5368, %v5368
  %v5405 = vpack.c.bf16 %v5374, %v5374
  %v5406 = vpack.c.bf16 %v5380, %v5380
  %v5407 = vpack.c.bf16 %v5386, %v5386
  %v5408 = vpack.c.bf16 %v5392, %v5392
  %v5411 = vunpack.c.l.b16 %v4443
  %v5412 = vunpack.c.l.b16 %v4444
  %v5413 = vpack.c.b16 %v5412, %v5411
  %v5431 = vunpack.c.l.b16 %v5393
  %v5432 = vunpack.c.l.b16 %v5394
  %v5433 = vunpack.c.l.b16 %v5395
  %v5434 = vunpack.c.l.b16 %v5396
  %v5435 = vunpack.c.l.b16 %v5397
  %v5436 = vunpack.c.l.b16 %v5398
  %v5437 = vunpack.c.l.b16 %v5399
  %v5438 = vunpack.c.l.b16 %v5400
  %v5439 = vunpack.c.l.b16 %v5401
  %v5440 = vunpack.c.l.b16 %v5402
  %v5441 = vunpack.c.l.b16 %v5403
  %v5442 = vunpack.c.l.b16 %v5404
  %v5443 = vunpack.c.l.b16 %v5405
  %v5444 = vunpack.c.l.b16 %v5406
  %v5445 = vunpack.c.l.b16 %v5407
  %v5446 = vunpack.c.l.b16 %v5408
  %v5447 = vsel %vm583, %v5432, %v5431
  %v5448 = vsel %vm585, %v5433, %v5447
  %v5449 = vsel %vm587, %v5434, %v5448
  %v5450 = vsel %vm589, %v5435, %v5449
  %v5451 = vsel %vm591, %v5436, %v5450
  %v5452 = vsel %vm593, %v5437, %v5451
  %v5453 = vsel %vm595, %v5438, %v5452
  %v5454 = vsel %vm583, %v5440, %v5439
  %v5455 = vsel %vm585, %v5441, %v5454
  %v5456 = vsel %vm587, %v5442, %v5455
  %v5457 = vsel %vm589, %v5443, %v5456
  %v5458 = vsel %vm591, %v5444, %v5457
  %v5459 = vsel %vm593, %v5445, %v5458
  %v5460 = vsel %vm595, %v5446, %v5459
  %v5461 = vpack.c.b16 %v5460, %v5453
  %5463 = vmatprep.subr.bf16.mxu0 %v1593
  %5464 = vmatpush1.bf16.msra.mxu0 %v1592
  %5465 = vmatprep.subr.bf16.mxu0 %v1589
  %5466 = vmatpush1.bf16.msra.mxu0 %v1588
  %5467 = vmatprep.subr.bf16.mxu0 %v1585
  %5468 = vmatpush1.bf16.msra.mxu0 %v1584
  %5469 = vmatprep.subr.bf16.mxu0 %v1581
  %5470 = vmatpush1.bf16.msra.mxu0 %v1580
  %5471 = vmatprep.subr.bf16.mxu0 %v1577
  %5472 = vmatpush1.bf16.msra.mxu0 %v1576
  %5473 = vmatprep.subr.bf16.mxu0 %v1573
  %5474 = vmatpush1.bf16.msra.mxu0 %v1572
  %5475 = vmatprep.subr.bf16.mxu0 %v1569
  %5476 = vmatpush1.bf16.msra.mxu0 %v1568
  %5477 = vmatprep.subr.bf16.mxu0 %v1565
  %5478 = vmatpush1.bf16.msra.mxu0 %v1564
  %5479 = vmatprep.subr.bf16.mxu0 %v1625
  %5480 = vmatpush2.bf16.msra.mxu0 %v1624
  %5481 = vmatprep.subr.bf16.mxu0 %v1621
  %5482 = vmatpush2.bf16.msra.mxu0 %v1620
  %5483 = vmatprep.subr.bf16.mxu0 %v1617
  %5484 = vmatpush2.bf16.msra.mxu0 %v1616
  %5485 = vmatprep.subr.bf16.mxu0 %v1613
  %5486 = vmatpush2.bf16.msra.mxu0 %v1612
  %5487 = vmatprep.subr.bf16.mxu0 %v1609
  %5488 = vmatpush2.bf16.msra.mxu0 %v1608
  %5489 = vmatprep.subr.bf16.mxu0 %v1605
  %5490 = vmatpush2.bf16.msra.mxu0 %v1604
  %5491 = vmatprep.subr.bf16.mxu0 %v1601
  %5492 = vmatpush2.bf16.msra.mxu0 %v1600
  %5493 = vmatprep.subr.bf16.mxu0 %v1597
  %5494 = vmatpush2.bf16.msra.mxu0 %v1596
  %5495 = vmatprep.mubr.bf16.mxu0 %v5461
  %5496 = vmatmul.mubr.bf16.gmra.mxu0 %v5413
  %v5497 = vpop.f32.mrf.mxu0
  %v5498 = vadd.f32 %v1259, %v5497
  %v5499 = vpop.f32.mrf.mxu0
  %v5500 = vadd.f32 %v1263, %v5499
  %v5501 = vpop.f32.mrf.mxu0
  %v5502 = vadd.f32 %v1259, %v5501
  %v5503 = vpop.f32.mrf.mxu0
  %v5504 = vadd.f32 %v1263, %v5503
  %5505 = vdwg.mxu0
  %5506 = vmatprep.subr.bf16.mxu0 %v1657
  %5507 = vmatpush1.bf16.msra.mxu0 %v1656
  %5508 = vmatprep.subr.bf16.mxu0 %v1653
  %5509 = vmatpush1.bf16.msra.mxu0 %v1652
  %5510 = vmatprep.subr.bf16.mxu0 %v1649
  %5511 = vmatpush1.bf16.msra.mxu0 %v1648
  %5512 = vmatprep.subr.bf16.mxu0 %v1645
  %5513 = vmatpush1.bf16.msra.mxu0 %v1644
  %5514 = vmatprep.subr.bf16.mxu0 %v1641
  %5515 = vmatpush1.bf16.msra.mxu0 %v1640
  %5516 = vmatprep.subr.bf16.mxu0 %v1637
  %5517 = vmatpush1.bf16.msra.mxu0 %v1636
  %5518 = vmatprep.subr.bf16.mxu0 %v1633
  %5519 = vmatpush1.bf16.msra.mxu0 %v1632
  %5520 = vmatprep.subr.bf16.mxu0 %v1629
  %5521 = vmatpush1.bf16.msra.mxu0 %v1628
  %5522 = vmatprep.subr.bf16.mxu0 0
  %5523 = vmatpush2.bf16.msra.mxu0 0
  %5524 = vmatprep.subr.bf16.mxu0 0
  %5525 = vmatpush2.bf16.msra.mxu0 0
  %5526 = vmatprep.subr.bf16.mxu0 0
  %5527 = vmatpush2.bf16.msra.mxu0 0
  %5528 = vmatprep.subr.bf16.mxu0 0
  %5529 = vmatpush2.bf16.msra.mxu0 0
  %5530 = vmatprep.subr.bf16.mxu0 0
  %5531 = vmatpush2.bf16.msra.mxu0 0
  %5532 = vmatprep.subr.bf16.mxu0 0
  %5533 = vmatpush2.bf16.msra.mxu0 0
  %5534 = vmatprep.subr.bf16.mxu0 0
  %5535 = vmatpush2.bf16.msra.mxu0 0
  %5536 = vmatprep.subr.bf16.mxu0 0
  %5537 = vmatpush2.bf16.msra.mxu0 0
  %5538 = vmatprep.mubr.bf16.mxu0 0
  %5539 = vmatmul.mubr.bf16.gmra.mxu0 %v4449
  %v5540 = vpop.f32.mrf.mxu0
  %v5541 = vadd.f32 %v5498, %v5540
  %v5542 = vpop.f32.mrf.mxu0
  %v5543 = vadd.f32 %v5500, %v5542
  %v5544 = vpop.f32.mrf.mxu0
  %v5545 = vadd.f32 %v5502, %v5544
  %v5546 = vpop.f32.mrf.mxu0
  %v5547 = vadd.f32 %v5504, %v5546
  %5548 = vdwg.mxu0
  %5549 = vmatprep.subr.bf16.mxu0 %v1595
  %5550 = vmatpush1.bf16.msra.mxu0 %v1594
  %5551 = vmatprep.subr.bf16.mxu0 %v1591
  %5552 = vmatpush1.bf16.msra.mxu0 %v1590
  %5553 = vmatprep.subr.bf16.mxu0 %v1587
  %5554 = vmatpush1.bf16.msra.mxu0 %v1586
  %5555 = vmatprep.subr.bf16.mxu0 %v1583
  %5556 = vmatpush1.bf16.msra.mxu0 %v1582
  %5557 = vmatprep.subr.bf16.mxu0 %v1579
  %5558 = vmatpush1.bf16.msra.mxu0 %v1578
  %5559 = vmatprep.subr.bf16.mxu0 %v1575
  %5560 = vmatpush1.bf16.msra.mxu0 %v1574
  %5561 = vmatprep.subr.bf16.mxu0 %v1571
  %5562 = vmatpush1.bf16.msra.mxu0 %v1570
  %5563 = vmatprep.subr.bf16.mxu0 %v1567
  %5564 = vmatpush1.bf16.msra.mxu0 %v1566
  %5565 = vmatprep.subr.bf16.mxu0 %v1627
  %5566 = vmatpush2.bf16.msra.mxu0 %v1626
  %5567 = vmatprep.subr.bf16.mxu0 %v1623
  %5568 = vmatpush2.bf16.msra.mxu0 %v1622
  %5569 = vmatprep.subr.bf16.mxu0 %v1619
  %5570 = vmatpush2.bf16.msra.mxu0 %v1618
  %5571 = vmatprep.subr.bf16.mxu0 %v1615
  %5572 = vmatpush2.bf16.msra.mxu0 %v1614
  %5573 = vmatprep.subr.bf16.mxu0 %v1611
  %5574 = vmatpush2.bf16.msra.mxu0 %v1610
  %5575 = vmatprep.subr.bf16.mxu0 %v1607
  %5576 = vmatpush2.bf16.msra.mxu0 %v1606
  %5577 = vmatprep.subr.bf16.mxu0 %v1603
  %5578 = vmatpush2.bf16.msra.mxu0 %v1602
  %5579 = vmatprep.subr.bf16.mxu0 %v1599
  %5580 = vmatpush2.bf16.msra.mxu0 %v1598
  %5581 = vmatprep.mubr.bf16.mxu0 %v5461
  %5582 = vmatmul.mubr.bf16.gmra.mxu0 %v5413
  %v5583 = vpop.f32.mrf.mxu0
  %v5584 = vadd.f32 %v1267, %v5583
  %v5585 = vpop.f32.mrf.mxu0
  %v5586 = vadd.f32 %v1271, %v5585
  %v5587 = vpop.f32.mrf.mxu0
  %v5588 = vadd.f32 %v1267, %v5587
  %v5589 = vpop.f32.mrf.mxu0
  %v5590 = vadd.f32 %v1271, %v5589
  %5591 = vdwg.mxu0
  %5592 = vmatprep.subr.bf16.mxu0 %v1659
  %5593 = vmatpush1.bf16.msra.mxu0 %v1658
  %5594 = vmatprep.subr.bf16.mxu0 %v1655
  %5595 = vmatpush1.bf16.msra.mxu0 %v1654
  %5596 = vmatprep.subr.bf16.mxu0 %v1651
  %5597 = vmatpush1.bf16.msra.mxu0 %v1650
  %5598 = vmatprep.subr.bf16.mxu0 %v1647
  %5599 = vmatpush1.bf16.msra.mxu0 %v1646
  %5600 = vmatprep.subr.bf16.mxu0 %v1643
  %5601 = vmatpush1.bf16.msra.mxu0 %v1642
  %5602 = vmatprep.subr.bf16.mxu0 %v1639
  %5603 = vmatpush1.bf16.msra.mxu0 %v1638
  %5604 = vmatprep.subr.bf16.mxu0 %v1635
  %5605 = vmatpush1.bf16.msra.mxu0 %v1634
  %5606 = vmatprep.subr.bf16.mxu0 %v1631
  %5607 = vmatpush1.bf16.msra.mxu0 %v1630
  %5608 = vmatprep.subr.bf16.mxu0 0
  %5609 = vmatpush2.bf16.msra.mxu0 0
  %5610 = vmatprep.subr.bf16.mxu0 0
  %5611 = vmatpush2.bf16.msra.mxu0 0
  %5612 = vmatprep.subr.bf16.mxu0 0
  %5613 = vmatpush2.bf16.msra.mxu0 0
  %5614 = vmatprep.subr.bf16.mxu0 0
  %5615 = vmatpush2.bf16.msra.mxu0 0
  %5616 = vmatprep.subr.bf16.mxu0 0
  %5617 = vmatpush2.bf16.msra.mxu0 0
  %5618 = vmatprep.subr.bf16.mxu0 0
  %5619 = vmatpush2.bf16.msra.mxu0 0
  %5620 = vmatprep.subr.bf16.mxu0 0
  %5621 = vmatpush2.bf16.msra.mxu0 0
  %5622 = vmatprep.subr.bf16.mxu0 0
  %5623 = vmatpush2.bf16.msra.mxu0 0
  %5624 = vmatprep.mubr.bf16.mxu0 0
  %5625 = vmatmul.mubr.bf16.gmra.mxu0 %v4449
  %v5626 = vpop.f32.mrf.mxu0
  %v5627 = vadd.f32 %v5584, %v5626
  %v5628 = vpop.f32.mrf.mxu0
  %v5629 = vadd.f32 %v5586, %v5628
  %v5630 = vpop.f32.mrf.mxu0
  %v5631 = vadd.f32 %v5588, %v5630
  %v5632 = vpop.f32.mrf.mxu0
  %v5633 = vadd.f32 %v5590, %v5632
  %5634 = vdwg.mxu0
  %v5635 = vmul.f32 %v5541, 0.5
  %v5636 = vmul.f32 %v5543, 0.5
  %v5637 = vmul.f32 %v5627, 0.5
  %v5638 = vmul.f32 %v5545, 0.5
  %v5639 = vmul.f32 %v5547, 0.5
  %v5640 = vmul.f32 %v5631, 0.5
  %v5641 = vtanh.pop %v5635
  %v5642 = vtanh.pop %v5636
  %v5643 = vtanh.pop %v5637
  %v5644 = vtanh.pop %v5638
  %v5645 = vtanh.pop %v5639
  %v5646 = vtanh.pop %v5640
  %v5647 = vadd.f32 %v5641, 1.0
  %v5648 = vadd.f32 %v5642, 1.0
  %v5649 = vadd.f32 %v5643, 1.0
  %v5650 = vadd.f32 %v5644, 1.0
  %v5651 = vadd.f32 %v5645, 1.0
  %v5652 = vadd.f32 %v5646, 1.0
  %v5653 = vmul.f32 %v5647, 0.5
  %v5654 = vmul.f32 %v5648, 0.5
  %v5655 = vmul.f32 %v5649, 0.5
  %v5656 = vmul.f32 %v5650, 0.5
  %v5657 = vmul.f32 %v5651, 0.5
  %v5658 = vmul.f32 %v5652, 0.5
  %v5659 = vtanh.pop %v5629
  %v5660 = vtanh.pop %v5633
  %v5661 = vmul.f32 %v5654, %v4447
  %v5662 = vmul.f32 %v5657, %v4448
  %v5663 = vmul.f32 %v5653, %v5659
  %v5664 = vmul.f32 %v5656, %v5660
  %v5665 = vadd.f32 %v5661, %v5663
  %v5666 = vadd.f32 %v5662, %v5664
  %v5667 = vtanh.pop %v5665
  %v5668 = vtanh.pop %v5666
  %v5669 = vmul.f32 %v5655, %v5667
  %v5670 = vmul.f32 %v5658, %v5668
  %s5671 = scalar_lea.vmem %s6, 48
  %5672 = vst [vmem:[%s5671] sm:$0xff] %v5669
  %5673 = vst [vmem:[%s5671 + $0x8] sm:$0xff] %v5670
  %5674 = vst [vmem:[#allocation2] sm:$0xff] %v5669
  %5675 = vst [vmem:[#allocation2 + $0x8] sm:$0xff] %v5670
  %5676 = vst [vmem:[#allocation3] sm:$0xff] %v5665
  %5677 = vst [vmem:[#allocation3 + $0x8] sm:$0xff] %v5666
  %s5678 = scalar_lea.vmem %s0, 32
  %v5679 = vld [vmem:[%s5678] sm:$0xf]
  %v5680 = vld [vmem:[%s5678 + $0x4] sm:$0xf]
  %v5681 = vld [vmem:[#allocation2] sm:$0xff]
  %v5682 = vld [vmem:[#allocation2 + $0x8] sm:$0xff]
  %v5683 = vld [vmem:[#allocation3] sm:$0xff]
  %v5684 = vld [vmem:[#allocation3 + $0x8] sm:$0xff]
  %v5685 = vpack.c.bf16 %v5682, %v5681
  %5686 = vmatprep.subr.bf16.mxu0 0
  %5687 = vmatpush1.bf16.msra.mxu0 %v223
  %5688 = vmatprep.subr.bf16.mxu0 0
  %5689 = vmatpush1.bf16.msra.mxu0 %v222
  %5690 = vmatprep.subr.bf16.mxu0 0
  %5691 = vmatpush1.bf16.msra.mxu0 %v221
  %5692 = vmatprep.subr.bf16.mxu0 0
  %5693 = vmatpush1.bf16.msra.mxu0 %v220
  %5694 = vmatprep.subr.bf16.mxu0 0
  %5695 = vmatpush1.bf16.msra.mxu0 %v219
  %5696 = vmatprep.subr.bf16.mxu0 0
  %5697 = vmatpush1.bf16.msra.mxu0 %v218
  %5698 = vmatprep.subr.bf16.mxu0 0
  %5699 = vmatpush1.bf16.msra.mxu0 %v217
  %5700 = vmatprep.subr.bf16.mxu0 0
  %5701 = vmatpush1.bf16.msra.mxu0 %v216
  %5702 = vmatprep.subr.bf16.mxu0 0
  %5703 = vmatpush2.bf16.msra.mxu0 0
  %5704 = vmatprep.subr.bf16.mxu0 0
  %5705 = vmatpush2.bf16.msra.mxu0 0
  %5706 = vmatprep.subr.bf16.mxu0 0
  %5707 = vmatpush2.bf16.msra.mxu0 0
  %5708 = vmatprep.subr.bf16.mxu0 0
  %5709 = vmatpush2.bf16.msra.mxu0 0
  %5710 = vmatprep.subr.bf16.mxu0 0
  %5711 = vmatpush2.bf16.msra.mxu0 0
  %5712 = vmatprep.subr.bf16.mxu0 0
  %5713 = vmatpush2.bf16.msra.mxu0 0
  %5714 = vmatprep.subr.bf16.mxu0 0
  %5715 = vmatpush2.bf16.msra.mxu0 0
  %5716 = vmatprep.subr.bf16.mxu0 0
  %5717 = vmatpush2.bf16.msra.mxu0 0
  %5718 = vmatprep.mubr.bf16.mxu0 0
  %5719 = vmatmul.mubr.bf16.gmra.mxu0 %v5685
  %v5720 = vpop.f32.mrf.mxu0
  %v5721 = vadd.f32 0.0, %v5720
  %v5722 = vpop.f32.mrf.mxu0
  %v5723 = vpop.f32.mrf.mxu0
  %v5724 = vadd.f32 0.0, %v5723
  %v5725 = vpop.f32.mrf.mxu0
  %5726 = vdwg.mxu0
  %v5729 = vcombine.high %v5721, %v5721
  %v5731 = vunpack.c.l.s4 1966171168
  %v5732 = vunpack.c.0.s8 %v5731
  %v5733 = vlaneseq
  %v5734 = vshrl.u32 %v5733, 7
  %v5735 = vsub.s32 %v5732, %v5734
  %v5736 = vrot.slane %v5721, %v5735
  %v5738 = vunpack.c.l.s4 1966171168
  %v5739 = vunpack.c.0.s8 %v5738
  %v5740 = vlaneseq
  %v5741 = vshrl.u32 %v5740, 7
  %v5742 = vsub.s32 %v5739, %v5741
  %v5743 = vrot.slane %v5729, %v5742
  %v5744 = vcombine.high %v5736, %v5736
  %v5745 = vcombine.high %v5743, %v5743
  %v5747 = vunpack.c.l.s4 1966171168
  %v5748 = vunpack.c.0.s8 %v5747
  %v5749 = vlaneseq
  %v5750 = vshrl.u32 %v5749, 7
  %v5751 = vsub.s32 %v5748, %v5750
  %v5752 = vrot.slane %v5736, %v5751
  %v5754 = vunpack.c.l.s4 1966171168
  %v5755 = vunpack.c.0.s8 %v5754
  %v5756 = vlaneseq
  %v5757 = vshrl.u32 %v5756, 7
  %v5758 = vsub.s32 %v5755, %v5757
  %v5759 = vrot.slane %v5743, %v5758
  %v5761 = vunpack.c.l.s4 1966171168
  %v5762 = vunpack.c.0.s8 %v5761
  %v5763 = vlaneseq
  %v5764 = vshrl.u32 %v5763, 7
  %v5765 = vsub.s32 %v5762, %v5764
  %v5766 = vrot.slane %v5744, %v5765
  %v5768 = vunpack.c.l.s4 1966171168
  %v5769 = vunpack.c.0.s8 %v5768
  %v5770 = vlaneseq
  %v5771 = vshrl.u32 %v5770, 7
  %v5772 = vsub.s32 %v5769, %v5771
  %v5773 = vrot.slane %v5745, %v5772
  %v5774 = vcombine.high %v5752, %v5752
  %v5775 = vcombine.high %v5759, %v5759
  %v5776 = vcombine.high %v5766, %v5766
  %v5777 = vcombine.high %v5773, %v5773
  %v5778 = vcombine.high %v5724, %v5724
  %v5780 = vunpack.c.l.s4 1966171168
  %v5781 = vunpack.c.0.s8 %v5780
  %v5782 = vlaneseq
  %v5783 = vshrl.u32 %v5782, 7
  %v5784 = vsub.s32 %v5781, %v5783
  %v5785 = vrot.slane %v5724, %v5784
  %v5787 = vunpack.c.l.s4 1966171168
  %v5788 = vunpack.c.0.s8 %v5787
  %v5789 = vlaneseq
  %v5790 = vshrl.u32 %v5789, 7
  %v5791 = vsub.s32 %v5788, %v5790
  %v5792 = vrot.slane %v5778, %v5791
  %v5793 = vcombine.high %v5785, %v5785
  %v5794 = vcombine.high %v5792, %v5792
  %v5796 = vunpack.c.l.s4 1966171168
  %v5797 = vunpack.c.0.s8 %v5796
  %v5798 = vlaneseq
  %v5799 = vshrl.u32 %v5798, 7
  %v5800 = vsub.s32 %v5797, %v5799
  %v5801 = vrot.slane %v5785, %v5800
  %v5803 = vunpack.c.l.s4 1966171168
  %v5804 = vunpack.c.0.s8 %v5803
  %v5805 = vlaneseq
  %v5806 = vshrl.u32 %v5805, 7
  %v5807 = vsub.s32 %v5804, %v5806
  %v5808 = vrot.slane %v5792, %v5807
  %v5810 = vunpack.c.l.s4 1966171168
  %v5811 = vunpack.c.0.s8 %v5810
  %v5812 = vlaneseq
  %v5813 = vshrl.u32 %v5812, 7
  %v5814 = vsub.s32 %v5811, %v5813
  %v5815 = vrot.slane %v5793, %v5814
  %v5817 = vunpack.c.l.s4 1966171168
  %v5818 = vunpack.c.0.s8 %v5817
  %v5819 = vlaneseq
  %v5820 = vshrl.u32 %v5819, 7
  %v5821 = vsub.s32 %v5818, %v5820
  %v5822 = vrot.slane %v5794, %v5821
  %v5823 = vcombine.high %v5801, %v5801
  %v5824 = vcombine.high %v5808, %v5808
  %v5825 = vcombine.high %v5815, %v5815
  %v5826 = vcombine.high %v5822, %v5822
  %v5827 = vlaneseq
  %v5828 = vshrl.u32 %v5827, 7
  %v5829 = vsub.s32 0, %v5828
  %v5830 = vrot.slane %v5752, %v5829
  %v5831 = vlaneseq
  %v5832 = vshrl.u32 %v5831, 7
  %v5833 = vsub.s32 0, %v5832
  %v5834 = vrot.slane %v5766, %v5833
  %v5835 = vlaneseq
  %v5836 = vshrl.u32 %v5835, 7
  %v5837 = vsub.s32 0, %v5836
  %v5838 = vrot.slane %v5774, %v5837
  %v5839 = vlaneseq
  %v5840 = vshrl.u32 %v5839, 7
  %v5841 = vsub.s32 0, %v5840
  %v5842 = vrot.slane %v5776, %v5841
  %v5843 = vlaneseq
  %v5844 = vshrl.u32 %v5843, 7
  %v5845 = vsub.s32 0, %v5844
  %v5846 = vrot.slane %v5759, %v5845
  %v5847 = vlaneseq
  %v5848 = vshrl.u32 %v5847, 7
  %v5849 = vsub.s32 0, %v5848
  %v5850 = vrot.slane %v5773, %v5849
  %v5851 = vlaneseq
  %v5852 = vshrl.u32 %v5851, 7
  %v5853 = vsub.s32 0, %v5852
  %v5854 = vrot.slane %v5775, %v5853
  %v5855 = vlaneseq
  %v5856 = vshrl.u32 %v5855, 7
  %v5857 = vsub.s32 0, %v5856
  %v5858 = vrot.slane %v5777, %v5857
  %v5859 = vlaneseq
  %v5860 = vshrl.u32 %v5859, 7
  %v5861 = vsub.s32 0, %v5860
  %v5862 = vrot.slane %v5801, %v5861
  %v5863 = vlaneseq
  %v5864 = vshrl.u32 %v5863, 7
  %v5865 = vsub.s32 0, %v5864
  %v5866 = vrot.slane %v5815, %v5865
  %v5867 = vlaneseq
  %v5868 = vshrl.u32 %v5867, 7
  %v5869 = vsub.s32 0, %v5868
  %v5870 = vrot.slane %v5823, %v5869
  %v5871 = vlaneseq
  %v5872 = vshrl.u32 %v5871, 7
  %v5873 = vsub.s32 0, %v5872
  %v5874 = vrot.slane %v5825, %v5873
  %v5875 = vlaneseq
  %v5876 = vshrl.u32 %v5875, 7
  %v5877 = vsub.s32 0, %v5876
  %v5878 = vrot.slane %v5808, %v5877
  %v5879 = vlaneseq
  %v5880 = vshrl.u32 %v5879, 7
  %v5881 = vsub.s32 0, %v5880
  %v5882 = vrot.slane %v5822, %v5881
  %v5883 = vlaneseq
  %v5884 = vshrl.u32 %v5883, 7
  %v5885 = vsub.s32 0, %v5884
  %v5886 = vrot.slane %v5824, %v5885
  %v5887 = vlaneseq
  %v5888 = vshrl.u32 %v5887, 7
  %v5889 = vsub.s32 0, %v5888
  %v5890 = vrot.slane %v5826, %v5889
  %v5907 = vmul.f32 %v5830, %v40
  %v5908 = vmul.f32 %v5834, %v41
  %v5909 = vmul.f32 %v5838, %v42
  %v5910 = vmul.f32 %v5842, %v43
  %v5911 = vmul.f32 %v5846, %v44
  %v5912 = vmul.f32 %v5850, %v45
  %v5913 = vmul.f32 %v5854, %v46
  %v5914 = vmul.f32 %v5858, %v47
  %v5915 = vmul.f32 %v5862, %v48
  %v5916 = vmul.f32 %v5866, %v49
  %v5917 = vmul.f32 %v5870, %v50
  %v5918 = vmul.f32 %v5874, %v51
  %v5919 = vmul.f32 %v5878, %v52
  %v5920 = vmul.f32 %v5882, %v53
  %v5921 = vmul.f32 %v5886, %v54
  %v5922 = vmul.f32 %v5890, %v55
  %5923 = vadd.xlane.f32.xlu0 %v5907
  %v5924 = vpop.xlane.xlu0 %5923
  %5925 = vadd.xlane.f32.xlu0 %v5908
  %v5926 = vpop.xlane.xlu0 %5925
  %5927 = vadd.xlane.f32.xlu0 %v5909
  %v5928 = vpop.xlane.xlu0 %5927
  %5929 = vadd.xlane.f32.xlu0 %v5910
  %v5930 = vpop.xlane.xlu0 %5929
  %5931 = vadd.xlane.f32.xlu0 %v5911
  %v5932 = vpop.xlane.xlu0 %5931
  %5933 = vadd.xlane.f32.xlu0 %v5912
  %v5934 = vpop.xlane.xlu0 %5933
  %5935 = vadd.xlane.f32.xlu0 %v5913
  %v5936 = vpop.xlane.xlu0 %5935
  %5937 = vadd.xlane.f32.xlu0 %v5914
  %v5938 = vpop.xlane.xlu0 %5937
  %5939 = vadd.xlane.f32.xlu0 %v5915
  %v5940 = vpop.xlane.xlu0 %5939
  %5941 = vadd.xlane.f32.xlu0 %v5916
  %v5942 = vpop.xlane.xlu0 %5941
  %5943 = vadd.xlane.f32.xlu0 %v5917
  %v5944 = vpop.xlane.xlu0 %5943
  %5945 = vadd.xlane.f32.xlu0 %v5918
  %v5946 = vpop.xlane.xlu0 %5945
  %5947 = vadd.xlane.f32.xlu0 %v5919
  %v5948 = vpop.xlane.xlu0 %5947
  %5949 = vadd.xlane.f32.xlu0 %v5920
  %v5950 = vpop.xlane.xlu0 %5949
  %5951 = vadd.xlane.f32.xlu0 %v5921
  %v5952 = vpop.xlane.xlu0 %5951
  %5953 = vadd.xlane.f32.xlu0 %v5922
  %v5954 = vpop.xlane.xlu0 %5953
  %v5971 = vlaneseq
  %v5972 = vshrl.u32 %v5971, 7
  %v5973 = vsub.s32 %v518, %v5972
  %v5974 = vrot.slane %v5924, %v5973
  %v5975 = vlaneseq
  %v5976 = vshrl.u32 %v5975, 7
  %v5977 = vsub.s32 %v518, %v5976
  %v5978 = vrot.slane %v5926, %v5977
  %v5979 = vlaneseq
  %v5980 = vshrl.u32 %v5979, 7
  %v5981 = vsub.s32 %v518, %v5980
  %v5982 = vrot.slane %v5928, %v5981
  %v5983 = vlaneseq
  %v5984 = vshrl.u32 %v5983, 7
  %v5985 = vsub.s32 %v518, %v5984
  %v5986 = vrot.slane %v5930, %v5985
  %v5987 = vlaneseq
  %v5988 = vshrl.u32 %v5987, 7
  %v5989 = vsub.s32 %v518, %v5988
  %v5990 = vrot.slane %v5932, %v5989
  %v5991 = vlaneseq
  %v5992 = vshrl.u32 %v5991, 7
  %v5993 = vsub.s32 %v518, %v5992
  %v5994 = vrot.slane %v5934, %v5993
  %v5995 = vlaneseq
  %v5996 = vshrl.u32 %v5995, 7
  %v5997 = vsub.s32 %v518, %v5996
  %v5998 = vrot.slane %v5936, %v5997
  %v5999 = vlaneseq
  %v6000 = vshrl.u32 %v5999, 7
  %v6001 = vsub.s32 %v518, %v6000
  %v6002 = vrot.slane %v5938, %v6001
  %v6003 = vlaneseq
  %v6004 = vshrl.u32 %v6003, 7
  %v6005 = vsub.s32 %v518, %v6004
  %v6006 = vrot.slane %v5940, %v6005
  %v6007 = vlaneseq
  %v6008 = vshrl.u32 %v6007, 7
  %v6009 = vsub.s32 %v518, %v6008
  %v6010 = vrot.slane %v5942, %v6009
  %v6011 = vlaneseq
  %v6012 = vshrl.u32 %v6011, 7
  %v6013 = vsub.s32 %v518, %v6012
  %v6014 = vrot.slane %v5944, %v6013
  %v6015 = vlaneseq
  %v6016 = vshrl.u32 %v6015, 7
  %v6017 = vsub.s32 %v518, %v6016
  %v6018 = vrot.slane %v5946, %v6017
  %v6019 = vlaneseq
  %v6020 = vshrl.u32 %v6019, 7
  %v6021 = vsub.s32 %v518, %v6020
  %v6022 = vrot.slane %v5948, %v6021
  %v6023 = vlaneseq
  %v6024 = vshrl.u32 %v6023, 7
  %v6025 = vsub.s32 %v518, %v6024
  %v6026 = vrot.slane %v5950, %v6025
  %v6027 = vlaneseq
  %v6028 = vshrl.u32 %v6027, 7
  %v6029 = vsub.s32 %v518, %v6028
  %v6030 = vrot.slane %v5952, %v6029
  %v6031 = vlaneseq
  %v6032 = vshrl.u32 %v6031, 7
  %v6033 = vsub.s32 %v518, %v6032
  %v6034 = vrot.slane %v5954, %v6033
  %v6035 = vsel %vm583, %v5978, %v5974
  %v6036 = vsel %vm585, %v5982, %v6035
  %v6037 = vsel %vm587, %v5986, %v6036
  %v6038 = vsel %vm589, %v5990, %v6037
  %v6039 = vsel %vm591, %v5994, %v6038
  %v6040 = vsel %vm593, %v5998, %v6039
  %v6041 = vsel %vm595, %v6002, %v6040
  %v6042 = vsel %vm583, %v6010, %v6006
  %v6043 = vsel %vm585, %v6014, %v6042
  %v6044 = vsel %vm587, %v6018, %v6043
  %v6045 = vsel %vm589, %v6022, %v6044
  %v6046 = vsel %vm591, %v6026, %v6045
  %v6047 = vsel %vm593, %v6030, %v6046
  %v6048 = vsel %vm595, %v6034, %v6047
  %v6051 = vsel %vm606, %v6041, -inf
  %6052 = vmax.xlane.f32.xlu0 %v6051
  %v6053 = vpop.xlane.xlu0 %6052
  %v6054 = vsel %vm606, %v6048, -inf
  %6055 = vmax.xlane.f32.xlu0 %v6054
  %v6056 = vpop.xlane.xlu0 %6055
  %v6059 = vlaneseq
  %v6060 = vshrl.u32 %v6059, 7
  %v6061 = vsub.s32 0, %v6060
  %v6062 = vrot.slane %v6053, %v6061
  %v6063 = vlaneseq
  %v6064 = vshrl.u32 %v6063, 7
  %v6065 = vsub.s32 1, %v6064
  %v6066 = vrot.slane %v6053, %v6065
  %v6067 = vlaneseq
  %v6068 = vshrl.u32 %v6067, 7
  %v6069 = vsub.s32 2, %v6068
  %v6070 = vrot.slane %v6053, %v6069
  %v6071 = vlaneseq
  %v6072 = vshrl.u32 %v6071, 7
  %v6073 = vsub.s32 3, %v6072
  %v6074 = vrot.slane %v6053, %v6073
  %v6075 = vlaneseq
  %v6076 = vshrl.u32 %v6075, 7
  %v6077 = vsub.s32 4, %v6076
  %v6078 = vrot.slane %v6053, %v6077
  %v6079 = vlaneseq
  %v6080 = vshrl.u32 %v6079, 7
  %v6081 = vsub.s32 5, %v6080
  %v6082 = vrot.slane %v6053, %v6081
  %v6083 = vlaneseq
  %v6084 = vshrl.u32 %v6083, 7
  %v6085 = vsub.s32 6, %v6084
  %v6086 = vrot.slane %v6053, %v6085
  %v6087 = vlaneseq
  %v6088 = vshrl.u32 %v6087, 7
  %v6089 = vsub.s32 7, %v6088
  %v6090 = vrot.slane %v6053, %v6089
  %v6091 = vlaneseq
  %v6092 = vshrl.u32 %v6091, 7
  %v6093 = vsub.s32 0, %v6092
  %v6094 = vrot.slane %v6056, %v6093
  %v6095 = vlaneseq
  %v6096 = vshrl.u32 %v6095, 7
  %v6097 = vsub.s32 1, %v6096
  %v6098 = vrot.slane %v6056, %v6097
  %v6099 = vlaneseq
  %v6100 = vshrl.u32 %v6099, 7
  %v6101 = vsub.s32 2, %v6100
  %v6102 = vrot.slane %v6056, %v6101
  %v6103 = vlaneseq
  %v6104 = vshrl.u32 %v6103, 7
  %v6105 = vsub.s32 3, %v6104
  %v6106 = vrot.slane %v6056, %v6105
  %v6107 = vlaneseq
  %v6108 = vshrl.u32 %v6107, 7
  %v6109 = vsub.s32 4, %v6108
  %v6110 = vrot.slane %v6056, %v6109
  %v6111 = vlaneseq
  %v6112 = vshrl.u32 %v6111, 7
  %v6113 = vsub.s32 5, %v6112
  %v6114 = vrot.slane %v6056, %v6113
  %v6115 = vlaneseq
  %v6116 = vshrl.u32 %v6115, 7
  %v6117 = vsub.s32 6, %v6116
  %v6118 = vrot.slane %v6056, %v6117
  %v6119 = vlaneseq
  %v6120 = vshrl.u32 %v6119, 7
  %v6121 = vsub.s32 7, %v6120
  %v6122 = vrot.slane %v6056, %v6121
  %v6139 = vsub.f32 %v5924, %v6062
  %v6140 = vsub.f32 %v5926, %v6066
  %v6141 = vsub.f32 %v5928, %v6070
  %v6142 = vsub.f32 %v5930, %v6074
  %v6143 = vsub.f32 %v5932, %v6078
  %v6144 = vsub.f32 %v5934, %v6082
  %v6145 = vsub.f32 %v5936, %v6086
  %v6146 = vsub.f32 %v5938, %v6090
  %v6147 = vsub.f32 %v5940, %v6094
  %v6148 = vsub.f32 %v5942, %v6098
  %v6149 = vsub.f32 %v5944, %v6102
  %v6150 = vsub.f32 %v5946, %v6106
  %v6151 = vsub.f32 %v5948, %v6110
  %v6152 = vsub.f32 %v5950, %v6114
  %v6153 = vsub.f32 %v5952, %v6118
  %v6154 = vsub.f32 %v5954, %v6122
  %v6155 = vmul.f32 %v6139, 1.442695
  %v6156 = vpow.pop %v6155
  %v6157 = vmul.f32 %v6140, 1.442695
  %v6158 = vpow.pop %v6157
  %v6159 = vmul.f32 %v6141, 1.442695
  %v6160 = vpow.pop %v6159
  %v6161 = vmul.f32 %v6142, 1.442695
  %v6162 = vpow.pop %v6161
  %v6163 = vmul.f32 %v6143, 1.442695
  %v6164 = vpow.pop %v6163
  %v6165 = vmul.f32 %v6144, 1.442695
  %v6166 = vpow.pop %v6165
  %v6167 = vmul.f32 %v6145, 1.442695
  %v6168 = vpow.pop %v6167
  %v6169 = vmul.f32 %v6146, 1.442695
  %v6170 = vpow.pop %v6169
  %v6171 = vmul.f32 %v6147, 1.442695
  %v6172 = vpow.pop %v6171
  %v6173 = vmul.f32 %v6148, 1.442695
  %v6174 = vpow.pop %v6173
  %v6175 = vmul.f32 %v6149, 1.442695
  %v6176 = vpow.pop %v6175
  %v6177 = vmul.f32 %v6150, 1.442695
  %v6178 = vpow.pop %v6177
  %v6179 = vmul.f32 %v6151, 1.442695
  %v6180 = vpow.pop %v6179
  %v6181 = vmul.f32 %v6152, 1.442695
  %v6182 = vpow.pop %v6181
  %v6183 = vmul.f32 %v6153, 1.442695
  %v6184 = vpow.pop %v6183
  %v6185 = vmul.f32 %v6154, 1.442695
  %v6186 = vpow.pop %v6185
  %6203 = vset.pattern.permute.xlu0 0
  %6204 = vperm.xlu0 %6203, %v6156
  %v6205 = vpop.permute.xlu0 %6204
  %6206 = vset.pattern.permute.xlu0 0
  %6207 = vperm.xlu0 %6206, %v6158
  %v6208 = vpop.permute.xlu0 %6207
  %6209 = vset.pattern.permute.xlu0 0
  %6210 = vperm.xlu0 %6209, %v6160
  %v6211 = vpop.permute.xlu0 %6210
  %6212 = vset.pattern.permute.xlu0 0
  %6213 = vperm.xlu0 %6212, %v6162
  %v6214 = vpop.permute.xlu0 %6213
  %6215 = vset.pattern.permute.xlu0 0
  %6216 = vperm.xlu0 %6215, %v6164
  %v6217 = vpop.permute.xlu0 %6216
  %6218 = vset.pattern.permute.xlu0 0
  %6219 = vperm.xlu0 %6218, %v6166
  %v6220 = vpop.permute.xlu0 %6219
  %6221 = vset.pattern.permute.xlu0 0
  %6222 = vperm.xlu0 %6221, %v6168
  %v6223 = vpop.permute.xlu0 %6222
  %6224 = vset.pattern.permute.xlu0 0
  %6225 = vperm.xlu0 %6224, %v6170
  %v6226 = vpop.permute.xlu0 %6225
  %6227 = vset.pattern.permute.xlu0 0
  %6228 = vperm.xlu0 %6227, %v6172
  %v6229 = vpop.permute.xlu0 %6228
  %6230 = vset.pattern.permute.xlu0 0
  %6231 = vperm.xlu0 %6230, %v6174
  %v6232 = vpop.permute.xlu0 %6231
  %6233 = vset.pattern.permute.xlu0 0
  %6234 = vperm.xlu0 %6233, %v6176
  %v6235 = vpop.permute.xlu0 %6234
  %6236 = vset.pattern.permute.xlu0 0
  %6237 = vperm.xlu0 %6236, %v6178
  %v6238 = vpop.permute.xlu0 %6237
  %6239 = vset.pattern.permute.xlu0 0
  %6240 = vperm.xlu0 %6239, %v6180
  %v6241 = vpop.permute.xlu0 %6240
  %6242 = vset.pattern.permute.xlu0 0
  %6243 = vperm.xlu0 %6242, %v6182
  %v6244 = vpop.permute.xlu0 %6243
  %6245 = vset.pattern.permute.xlu0 0
  %6246 = vperm.xlu0 %6245, %v6184
  %v6247 = vpop.permute.xlu0 %6246
  %6248 = vset.pattern.permute.xlu0 0
  %6249 = vperm.xlu0 %6248, %v6186
  %v6250 = vpop.permute.xlu0 %6249
  %v6251 = vlaneseq
  %v6252 = vshrl.u32 %v6251, 7
  %v6253 = vsub.s32 %v518, %v6252
  %v6254 = vrot.slane %v6205, %v6253
  %v6255 = vlaneseq
  %v6256 = vshrl.u32 %v6255, 7
  %v6257 = vsub.s32 %v518, %v6256
  %v6258 = vrot.slane %v6208, %v6257
  %v6259 = vlaneseq
  %v6260 = vshrl.u32 %v6259, 7
  %v6261 = vsub.s32 %v518, %v6260
  %v6262 = vrot.slane %v6211, %v6261
  %v6263 = vlaneseq
  %v6264 = vshrl.u32 %v6263, 7
  %v6265 = vsub.s32 %v518, %v6264
  %v6266 = vrot.slane %v6214, %v6265
  %v6267 = vlaneseq
  %v6268 = vshrl.u32 %v6267, 7
  %v6269 = vsub.s32 %v518, %v6268
  %v6270 = vrot.slane %v6217, %v6269
  %v6271 = vlaneseq
  %v6272 = vshrl.u32 %v6271, 7
  %v6273 = vsub.s32 %v518, %v6272
  %v6274 = vrot.slane %v6220, %v6273
  %v6275 = vlaneseq
  %v6276 = vshrl.u32 %v6275, 7
  %v6277 = vsub.s32 %v518, %v6276
  %v6278 = vrot.slane %v6223, %v6277
  %v6279 = vlaneseq
  %v6280 = vshrl.u32 %v6279, 7
  %v6281 = vsub.s32 %v518, %v6280
  %v6282 = vrot.slane %v6226, %v6281
  %v6283 = vlaneseq
  %v6284 = vshrl.u32 %v6283, 7
  %v6285 = vsub.s32 %v518, %v6284
  %v6286 = vrot.slane %v6229, %v6285
  %v6287 = vlaneseq
  %v6288 = vshrl.u32 %v6287, 7
  %v6289 = vsub.s32 %v518, %v6288
  %v6290 = vrot.slane %v6232, %v6289
  %v6291 = vlaneseq
  %v6292 = vshrl.u32 %v6291, 7
  %v6293 = vsub.s32 %v518, %v6292
  %v6294 = vrot.slane %v6235, %v6293
  %v6295 = vlaneseq
  %v6296 = vshrl.u32 %v6295, 7
  %v6297 = vsub.s32 %v518, %v6296
  %v6298 = vrot.slane %v6238, %v6297
  %v6299 = vlaneseq
  %v6300 = vshrl.u32 %v6299, 7
  %v6301 = vsub.s32 %v518, %v6300
  %v6302 = vrot.slane %v6241, %v6301
  %v6303 = vlaneseq
  %v6304 = vshrl.u32 %v6303, 7
  %v6305 = vsub.s32 %v518, %v6304
  %v6306 = vrot.slane %v6244, %v6305
  %v6307 = vlaneseq
  %v6308 = vshrl.u32 %v6307, 7
  %v6309 = vsub.s32 %v518, %v6308
  %v6310 = vrot.slane %v6247, %v6309
  %v6311 = vlaneseq
  %v6312 = vshrl.u32 %v6311, 7
  %v6313 = vsub.s32 %v518, %v6312
  %v6314 = vrot.slane %v6250, %v6313
  %v6315 = vsel %vm583, %v6258, %v6254
  %v6316 = vsel %vm585, %v6262, %v6315
  %v6317 = vsel %vm587, %v6266, %v6316
  %v6318 = vsel %vm589, %v6270, %v6317
  %v6319 = vsel %vm591, %v6274, %v6318
  %v6320 = vsel %vm593, %v6278, %v6319
  %v6321 = vsel %vm595, %v6282, %v6320
  %v6322 = vsel %vm583, %v6290, %v6286
  %v6323 = vsel %vm585, %v6294, %v6322
  %v6324 = vsel %vm587, %v6298, %v6323
  %v6325 = vsel %vm589, %v6302, %v6324
  %v6326 = vsel %vm591, %v6306, %v6325
  %v6327 = vsel %vm593, %v6310, %v6326
  %v6328 = vsel %vm595, %v6314, %v6327
  %v6331 = vsel %vm606, %v6321, 0.0
  %6332 = vadd.xlane.f32.xlu0 %v6331
  %v6333 = vpop.xlane.xlu0 %6332
  %v6334 = vsel %vm606, %v6328, 0.0
  %6335 = vadd.xlane.f32.xlu0 %v6334
  %v6336 = vpop.xlane.xlu0 %6335
  %v6337 = vrcp.pop %v6333
  %v6338 = vrcp.pop %v6336
  %v6341 = vlaneseq
  %v6342 = vshrl.u32 %v6341, 7
  %v6343 = vsub.s32 0, %v6342
  %v6344 = vrot.slane %v6337, %v6343
  %v6345 = vlaneseq
  %v6346 = vshrl.u32 %v6345, 7
  %v6347 = vsub.s32 1, %v6346
  %v6348 = vrot.slane %v6337, %v6347
  %v6349 = vlaneseq
  %v6350 = vshrl.u32 %v6349, 7
  %v6351 = vsub.s32 2, %v6350
  %v6352 = vrot.slane %v6337, %v6351
  %v6353 = vlaneseq
  %v6354 = vshrl.u32 %v6353, 7
  %v6355 = vsub.s32 3, %v6354
  %v6356 = vrot.slane %v6337, %v6355
  %v6357 = vlaneseq
  %v6358 = vshrl.u32 %v6357, 7
  %v6359 = vsub.s32 4, %v6358
  %v6360 = vrot.slane %v6337, %v6359
  %v6361 = vlaneseq
  %v6362 = vshrl.u32 %v6361, 7
  %v6363 = vsub.s32 5, %v6362
  %v6364 = vrot.slane %v6337, %v6363
  %v6365 = vlaneseq
  %v6366 = vshrl.u32 %v6365, 7
  %v6367 = vsub.s32 6, %v6366
  %v6368 = vrot.slane %v6337, %v6367
  %v6369 = vlaneseq
  %v6370 = vshrl.u32 %v6369, 7
  %v6371 = vsub.s32 7, %v6370
  %v6372 = vrot.slane %v6337, %v6371
  %v6373 = vlaneseq
  %v6374 = vshrl.u32 %v6373, 7
  %v6375 = vsub.s32 0, %v6374
  %v6376 = vrot.slane %v6338, %v6375
  %v6377 = vlaneseq
  %v6378 = vshrl.u32 %v6377, 7
  %v6379 = vsub.s32 1, %v6378
  %v6380 = vrot.slane %v6338, %v6379
  %v6381 = vlaneseq
  %v6382 = vshrl.u32 %v6381, 7
  %v6383 = vsub.s32 2, %v6382
  %v6384 = vrot.slane %v6338, %v6383
  %v6385 = vlaneseq
  %v6386 = vshrl.u32 %v6385, 7
  %v6387 = vsub.s32 3, %v6386
  %v6388 = vrot.slane %v6338, %v6387
  %v6389 = vlaneseq
  %v6390 = vshrl.u32 %v6389, 7
  %v6391 = vsub.s32 4, %v6390
  %v6392 = vrot.slane %v6338, %v6391
  %v6393 = vlaneseq
  %v6394 = vshrl.u32 %v6393, 7
  %v6395 = vsub.s32 5, %v6394
  %v6396 = vrot.slane %v6338, %v6395
  %v6397 = vlaneseq
  %v6398 = vshrl.u32 %v6397, 7
  %v6399 = vsub.s32 6, %v6398
  %v6400 = vrot.slane %v6338, %v6399
  %v6401 = vlaneseq
  %v6402 = vshrl.u32 %v6401, 7
  %v6403 = vsub.s32 7, %v6402
  %v6404 = vrot.slane %v6338, %v6403
  %v6421 = vmul.f32 %v6156, %v6344
  %v6422 = vmul.f32 %v6158, %v6348
  %v6423 = vmul.f32 %v6160, %v6352
  %v6424 = vmul.f32 %v6162, %v6356
  %v6425 = vmul.f32 %v6164, %v6360
  %v6426 = vmul.f32 %v6166, %v6364
  %v6427 = vmul.f32 %v6168, %v6368
  %v6428 = vmul.f32 %v6170, %v6372
  %v6429 = vmul.f32 %v6172, %v6376
  %v6430 = vmul.f32 %v6174, %v6380
  %v6431 = vmul.f32 %v6176, %v6384
  %v6432 = vmul.f32 %v6178, %v6388
  %v6433 = vmul.f32 %v6180, %v6392
  %v6434 = vmul.f32 %v6182, %v6396
  %v6435 = vmul.f32 %v6184, %v6400
  %v6436 = vmul.f32 %v6186, %v6404
  %6438 = vset.pattern.permute.xlu0 0
  %6439 = vperm.xlu0 %6438, %v6421
  %v6440 = vpop.permute.xlu0 %6439
  %6443 = vset.pattern.permute.xlu0 0
  %6444 = vperm.xlu0 %6443, %v6422
  %v6445 = vpop.permute.xlu0 %6444
  %6448 = vset.pattern.permute.xlu0 0
  %6449 = vperm.xlu0 %6448, %v6423
  %v6450 = vpop.permute.xlu0 %6449
  %6453 = vset.pattern.permute.xlu0 0
  %6454 = vperm.xlu0 %6453, %v6424
  %v6455 = vpop.permute.xlu0 %6454
  %6458 = vset.pattern.permute.xlu0 0
  %6459 = vperm.xlu0 %6458, %v6425
  %v6460 = vpop.permute.xlu0 %6459
  %6463 = vset.pattern.permute.xlu0 0
  %6464 = vperm.xlu0 %6463, %v6426
  %v6465 = vpop.permute.xlu0 %6464
  %6468 = vset.pattern.permute.xlu0 0
  %6469 = vperm.xlu0 %6468, %v6427
  %v6470 = vpop.permute.xlu0 %6469
  %6473 = vset.pattern.permute.xlu0 0
  %6474 = vperm.xlu0 %6473, %v6428
  %v6475 = vpop.permute.xlu0 %6474
  %6478 = vset.pattern.permute.xlu0 0
  %6479 = vperm.xlu0 %6478, %v6429
  %v6480 = vpop.permute.xlu0 %6479
  %6483 = vset.pattern.permute.xlu0 0
  %6484 = vperm.xlu0 %6483, %v6430
  %v6485 = vpop.permute.xlu0 %6484
  %6488 = vset.pattern.permute.xlu0 0
  %6489 = vperm.xlu0 %6488, %v6431
  %v6490 = vpop.permute.xlu0 %6489
  %6493 = vset.pattern.permute.xlu0 0
  %6494 = vperm.xlu0 %6493, %v6432
  %v6495 = vpop.permute.xlu0 %6494
  %6498 = vset.pattern.permute.xlu0 0
  %6499 = vperm.xlu0 %6498, %v6433
  %v6500 = vpop.permute.xlu0 %6499
  %6503 = vset.pattern.permute.xlu0 0
  %6504 = vperm.xlu0 %6503, %v6434
  %v6505 = vpop.permute.xlu0 %6504
  %6508 = vset.pattern.permute.xlu0 0
  %6509 = vperm.xlu0 %6508, %v6435
  %v6510 = vpop.permute.xlu0 %6509
  %6513 = vset.pattern.permute.xlu0 0
  %6514 = vperm.xlu0 %6513, %v6436
  %v6515 = vpop.permute.xlu0 %6514
  %v6517 = vmul.f32 %v6440, %v40
  %v6518 = vmul.f32 %v6445, %v41
  %v6519 = vmul.f32 %v6450, %v42
  %v6520 = vmul.f32 %v6455, %v43
  %v6521 = vmul.f32 %v6460, %v44
  %v6522 = vmul.f32 %v6465, %v45
  %v6523 = vmul.f32 %v6470, %v46
  %v6524 = vmul.f32 %v6475, %v47
  %v6525 = vmul.f32 %v6480, %v48
  %v6526 = vmul.f32 %v6485, %v49
  %v6527 = vmul.f32 %v6490, %v50
  %v6528 = vmul.f32 %v6495, %v51
  %v6529 = vmul.f32 %v6500, %v52
  %v6530 = vmul.f32 %v6505, %v53
  %v6531 = vmul.f32 %v6510, %v54
  %v6532 = vmul.f32 %v6515, %v55
  %v6533 = vrot.slane %v6517, 4
  %v6534 = vadd.f32 %v6517, %v6533
  %v6535 = vrot.slane %v6534, 2
  %v6536 = vadd.f32 %v6534, %v6535
  %v6537 = vrot.slane %v6536, 1
  %v6538 = vadd.f32 %v6536, %v6537
  %v6539 = vrot.slane %v6518, 4
  %v6540 = vadd.f32 %v6518, %v6539
  %v6541 = vrot.slane %v6540, 2
  %v6542 = vadd.f32 %v6540, %v6541
  %v6543 = vrot.slane %v6542, 1
  %v6544 = vadd.f32 %v6542, %v6543
  %v6545 = vrot.slane %v6519, 4
  %v6546 = vadd.f32 %v6519, %v6545
  %v6547 = vrot.slane %v6546, 2
  %v6548 = vadd.f32 %v6546, %v6547
  %v6549 = vrot.slane %v6548, 1
  %v6550 = vadd.f32 %v6548, %v6549
  %v6551 = vrot.slane %v6520, 4
  %v6552 = vadd.f32 %v6520, %v6551
  %v6553 = vrot.slane %v6552, 2
  %v6554 = vadd.f32 %v6552, %v6553
  %v6555 = vrot.slane %v6554, 1
  %v6556 = vadd.f32 %v6554, %v6555
  %v6557 = vrot.slane %v6521, 4
  %v6558 = vadd.f32 %v6521, %v6557
  %v6559 = vrot.slane %v6558, 2
  %v6560 = vadd.f32 %v6558, %v6559
  %v6561 = vrot.slane %v6560, 1
  %v6562 = vadd.f32 %v6560, %v6561
  %v6563 = vrot.slane %v6522, 4
  %v6564 = vadd.f32 %v6522, %v6563
  %v6565 = vrot.slane %v6564, 2
  %v6566 = vadd.f32 %v6564, %v6565
  %v6567 = vrot.slane %v6566, 1
  %v6568 = vadd.f32 %v6566, %v6567
  %v6569 = vrot.slane %v6523, 4
  %v6570 = vadd.f32 %v6523, %v6569
  %v6571 = vrot.slane %v6570, 2
  %v6572 = vadd.f32 %v6570, %v6571
  %v6573 = vrot.slane %v6572, 1
  %v6574 = vadd.f32 %v6572, %v6573
  %v6575 = vrot.slane %v6524, 4
  %v6576 = vadd.f32 %v6524, %v6575
  %v6577 = vrot.slane %v6576, 2
  %v6578 = vadd.f32 %v6576, %v6577
  %v6579 = vrot.slane %v6578, 1
  %v6580 = vadd.f32 %v6578, %v6579
  %v6581 = vrot.slane %v6525, 4
  %v6582 = vadd.f32 %v6525, %v6581
  %v6583 = vrot.slane %v6582, 2
  %v6584 = vadd.f32 %v6582, %v6583
  %v6585 = vrot.slane %v6584, 1
  %v6586 = vadd.f32 %v6584, %v6585
  %v6587 = vrot.slane %v6526, 4
  %v6588 = vadd.f32 %v6526, %v6587
  %v6589 = vrot.slane %v6588, 2
  %v6590 = vadd.f32 %v6588, %v6589
  %v6591 = vrot.slane %v6590, 1
  %v6592 = vadd.f32 %v6590, %v6591
  %v6593 = vrot.slane %v6527, 4
  %v6594 = vadd.f32 %v6527, %v6593
  %v6595 = vrot.slane %v6594, 2
  %v6596 = vadd.f32 %v6594, %v6595
  %v6597 = vrot.slane %v6596, 1
  %v6598 = vadd.f32 %v6596, %v6597
  %v6599 = vrot.slane %v6528, 4
  %v6600 = vadd.f32 %v6528, %v6599
  %v6601 = vrot.slane %v6600, 2
  %v6602 = vadd.f32 %v6600, %v6601
  %v6603 = vrot.slane %v6602, 1
  %v6604 = vadd.f32 %v6602, %v6603
  %v6605 = vrot.slane %v6529, 4
  %v6606 = vadd.f32 %v6529, %v6605
  %v6607 = vrot.slane %v6606, 2
  %v6608 = vadd.f32 %v6606, %v6607
  %v6609 = vrot.slane %v6608, 1
  %v6610 = vadd.f32 %v6608, %v6609
  %v6611 = vrot.slane %v6530, 4
  %v6612 = vadd.f32 %v6530, %v6611
  %v6613 = vrot.slane %v6612, 2
  %v6614 = vadd.f32 %v6612, %v6613
  %v6615 = vrot.slane %v6614, 1
  %v6616 = vadd.f32 %v6614, %v6615
  %v6617 = vrot.slane %v6531, 4
  %v6618 = vadd.f32 %v6531, %v6617
  %v6619 = vrot.slane %v6618, 2
  %v6620 = vadd.f32 %v6618, %v6619
  %v6621 = vrot.slane %v6620, 1
  %v6622 = vadd.f32 %v6620, %v6621
  %v6623 = vrot.slane %v6532, 4
  %v6624 = vadd.f32 %v6532, %v6623
  %v6625 = vrot.slane %v6624, 2
  %v6626 = vadd.f32 %v6624, %v6625
  %v6627 = vrot.slane %v6626, 1
  %v6628 = vadd.f32 %v6626, %v6627
  %v6629 = vpack.c.bf16 %v6538, %v6538
  %v6630 = vpack.c.bf16 %v6544, %v6544
  %v6631 = vpack.c.bf16 %v6550, %v6550
  %v6632 = vpack.c.bf16 %v6556, %v6556
  %v6633 = vpack.c.bf16 %v6562, %v6562
  %v6634 = vpack.c.bf16 %v6568, %v6568
  %v6635 = vpack.c.bf16 %v6574, %v6574
  %v6636 = vpack.c.bf16 %v6580, %v6580
  %v6637 = vpack.c.bf16 %v6586, %v6586
  %v6638 = vpack.c.bf16 %v6592, %v6592
  %v6639 = vpack.c.bf16 %v6598, %v6598
  %v6640 = vpack.c.bf16 %v6604, %v6604
  %v6641 = vpack.c.bf16 %v6610, %v6610
  %v6642 = vpack.c.bf16 %v6616, %v6616
  %v6643 = vpack.c.bf16 %v6622, %v6622
  %v6644 = vpack.c.bf16 %v6628, %v6628
  %v6647 = vunpack.c.l.b16 %v5679
  %v6648 = vunpack.c.l.b16 %v5680
  %v6649 = vpack.c.b16 %v6648, %v6647
  %v6667 = vunpack.c.l.b16 %v6629
  %v6668 = vunpack.c.l.b16 %v6630
  %v6669 = vunpack.c.l.b16 %v6631
  %v6670 = vunpack.c.l.b16 %v6632
  %v6671 = vunpack.c.l.b16 %v6633
  %v6672 = vunpack.c.l.b16 %v6634
  %v6673 = vunpack.c.l.b16 %v6635
  %v6674 = vunpack.c.l.b16 %v6636
  %v6675 = vunpack.c.l.b16 %v6637
  %v6676 = vunpack.c.l.b16 %v6638
  %v6677 = vunpack.c.l.b16 %v6639
  %v6678 = vunpack.c.l.b16 %v6640
  %v6679 = vunpack.c.l.b16 %v6641
  %v6680 = vunpack.c.l.b16 %v6642
  %v6681 = vunpack.c.l.b16 %v6643
  %v6682 = vunpack.c.l.b16 %v6644
  %v6683 = vsel %vm583, %v6668, %v6667
  %v6684 = vsel %vm585, %v6669, %v6683
  %v6685 = vsel %vm587, %v6670, %v6684
  %v6686 = vsel %vm589, %v6671, %v6685
  %v6687 = vsel %vm591, %v6672, %v6686
  %v6688 = vsel %vm593, %v6673, %v6687
  %v6689 = vsel %vm595, %v6674, %v6688
  %v6690 = vsel %vm583, %v6676, %v6675
  %v6691 = vsel %vm585, %v6677, %v6690
  %v6692 = vsel %vm587, %v6678, %v6691
  %v6693 = vsel %vm589, %v6679, %v6692
  %v6694 = vsel %vm591, %v6680, %v6693
  %v6695 = vsel %vm593, %v6681, %v6694
  %v6696 = vsel %vm595, %v6682, %v6695
  %v6697 = vpack.c.b16 %v6696, %v6689
  %6699 = vmatprep.subr.bf16.mxu0 %v1593
  %6700 = vmatpush1.bf16.msra.mxu0 %v1592
  %6701 = vmatprep.subr.bf16.mxu0 %v1589
  %6702 = vmatpush1.bf16.msra.mxu0 %v1588
  %6703 = vmatprep.subr.bf16.mxu0 %v1585
  %6704 = vmatpush1.bf16.msra.mxu0 %v1584
  %6705 = vmatprep.subr.bf16.mxu0 %v1581
  %6706 = vmatpush1.bf16.msra.mxu0 %v1580
  %6707 = vmatprep.subr.bf16.mxu0 %v1577
  %6708 = vmatpush1.bf16.msra.mxu0 %v1576
  %6709 = vmatprep.subr.bf16.mxu0 %v1573
  %6710 = vmatpush1.bf16.msra.mxu0 %v1572
  %6711 = vmatprep.subr.bf16.mxu0 %v1569
  %6712 = vmatpush1.bf16.msra.mxu0 %v1568
  %6713 = vmatprep.subr.bf16.mxu0 %v1565
  %6714 = vmatpush1.bf16.msra.mxu0 %v1564
  %6715 = vmatprep.subr.bf16.mxu0 %v1625
  %6716 = vmatpush2.bf16.msra.mxu0 %v1624
  %6717 = vmatprep.subr.bf16.mxu0 %v1621
  %6718 = vmatpush2.bf16.msra.mxu0 %v1620
  %6719 = vmatprep.subr.bf16.mxu0 %v1617
  %6720 = vmatpush2.bf16.msra.mxu0 %v1616
  %6721 = vmatprep.subr.bf16.mxu0 %v1613
  %6722 = vmatpush2.bf16.msra.mxu0 %v1612
  %6723 = vmatprep.subr.bf16.mxu0 %v1609
  %6724 = vmatpush2.bf16.msra.mxu0 %v1608
  %6725 = vmatprep.subr.bf16.mxu0 %v1605
  %6726 = vmatpush2.bf16.msra.mxu0 %v1604
  %6727 = vmatprep.subr.bf16.mxu0 %v1601
  %6728 = vmatpush2.bf16.msra.mxu0 %v1600
  %6729 = vmatprep.subr.bf16.mxu0 %v1597
  %6730 = vmatpush2.bf16.msra.mxu0 %v1596
  %6731 = vmatprep.mubr.bf16.mxu0 %v6697
  %6732 = vmatmul.mubr.bf16.gmra.mxu0 %v6649
  %v6733 = vpop.f32.mrf.mxu0
  %v6734 = vadd.f32 %v1259, %v6733
  %v6735 = vpop.f32.mrf.mxu0
  %v6736 = vadd.f32 %v1263, %v6735
  %v6737 = vpop.f32.mrf.mxu0
  %v6738 = vadd.f32 %v1259, %v6737
  %v6739 = vpop.f32.mrf.mxu0
  %v6740 = vadd.f32 %v1263, %v6739
  %6741 = vdwg.mxu0
  %6742 = vmatprep.subr.bf16.mxu0 %v1657
  %6743 = vmatpush1.bf16.msra.mxu0 %v1656
  %6744 = vmatprep.subr.bf16.mxu0 %v1653
  %6745 = vmatpush1.bf16.msra.mxu0 %v1652
  %6746 = vmatprep.subr.bf16.mxu0 %v1649
  %6747 = vmatpush1.bf16.msra.mxu0 %v1648
  %6748 = vmatprep.subr.bf16.mxu0 %v1645
  %6749 = vmatpush1.bf16.msra.mxu0 %v1644
  %6750 = vmatprep.subr.bf16.mxu0 %v1641
  %6751 = vmatpush1.bf16.msra.mxu0 %v1640
  %6752 = vmatprep.subr.bf16.mxu0 %v1637
  %6753 = vmatpush1.bf16.msra.mxu0 %v1636
  %6754 = vmatprep.subr.bf16.mxu0 %v1633
  %6755 = vmatpush1.bf16.msra.mxu0 %v1632
  %6756 = vmatprep.subr.bf16.mxu0 %v1629
  %6757 = vmatpush1.bf16.msra.mxu0 %v1628
  %6758 = vmatprep.subr.bf16.mxu0 0
  %6759 = vmatpush2.bf16.msra.mxu0 0
  %6760 = vmatprep.subr.bf16.mxu0 0
  %6761 = vmatpush2.bf16.msra.mxu0 0
  %6762 = vmatprep.subr.bf16.mxu0 0
  %6763 = vmatpush2.bf16.msra.mxu0 0
  %6764 = vmatprep.subr.bf16.mxu0 0
  %6765 = vmatpush2.bf16.msra.mxu0 0
  %6766 = vmatprep.subr.bf16.mxu0 0
  %6767 = vmatpush2.bf16.msra.mxu0 0
  %6768 = vmatprep.subr.bf16.mxu0 0
  %6769 = vmatpush2.bf16.msra.mxu0 0
  %6770 = vmatprep.subr.bf16.mxu0 0
  %6771 = vmatpush2.bf16.msra.mxu0 0
  %6772 = vmatprep.subr.bf16.mxu0 0
  %6773 = vmatpush2.bf16.msra.mxu0 0
  %6774 = vmatprep.mubr.bf16.mxu0 0
  %6775 = vmatmul.mubr.bf16.gmra.mxu0 %v5685
  %v6776 = vpop.f32.mrf.mxu0
  %v6777 = vadd.f32 %v6734, %v6776
  %v6778 = vpop.f32.mrf.mxu0
  %v6779 = vadd.f32 %v6736, %v6778
  %v6780 = vpop.f32.mrf.mxu0
  %v6781 = vadd.f32 %v6738, %v6780
  %v6782 = vpop.f32.mrf.mxu0
  %v6783 = vadd.f32 %v6740, %v6782
  %6784 = vdwg.mxu0
  %6785 = vmatprep.subr.bf16.mxu0 %v1595
  %6786 = vmatpush1.bf16.msra.mxu0 %v1594
  %6787 = vmatprep.subr.bf16.mxu0 %v1591
  %6788 = vmatpush1.bf16.msra.mxu0 %v1590
  %6789 = vmatprep.subr.bf16.mxu0 %v1587
  %6790 = vmatpush1.bf16.msra.mxu0 %v1586
  %6791 = vmatprep.subr.bf16.mxu0 %v1583
  %6792 = vmatpush1.bf16.msra.mxu0 %v1582
  %6793 = vmatprep.subr.bf16.mxu0 %v1579
  %6794 = vmatpush1.bf16.msra.mxu0 %v1578
  %6795 = vmatprep.subr.bf16.mxu0 %v1575
  %6796 = vmatpush1.bf16.msra.mxu0 %v1574
  %6797 = vmatprep.subr.bf16.mxu0 %v1571
  %6798 = vmatpush1.bf16.msra.mxu0 %v1570
  %6799 = vmatprep.subr.bf16.mxu0 %v1567
  %6800 = vmatpush1.bf16.msra.mxu0 %v1566
  %6801 = vmatprep.subr.bf16.mxu0 %v1627
  %6802 = vmatpush2.bf16.msra.mxu0 %v1626
  %6803 = vmatprep.subr.bf16.mxu0 %v1623
  %6804 = vmatpush2.bf16.msra.mxu0 %v1622
  %6805 = vmatprep.subr.bf16.mxu0 %v1619
  %6806 = vmatpush2.bf16.msra.mxu0 %v1618
  %6807 = vmatprep.subr.bf16.mxu0 %v1615
  %6808 = vmatpush2.bf16.msra.mxu0 %v1614
  %6809 = vmatprep.subr.bf16.mxu0 %v1611
  %6810 = vmatpush2.bf16.msra.mxu0 %v1610
  %6811 = vmatprep.subr.bf16.mxu0 %v1607
  %6812 = vmatpush2.bf16.msra.mxu0 %v1606
  %6813 = vmatprep.subr.bf16.mxu0 %v1603
  %6814 = vmatpush2.bf16.msra.mxu0 %v1602
  %6815 = vmatprep.subr.bf16.mxu0 %v1599
  %6816 = vmatpush2.bf16.msra.mxu0 %v1598
  %6817 = vmatprep.mubr.bf16.mxu0 %v6697
  %6818 = vmatmul.mubr.bf16.gmra.mxu0 %v6649
  %v6819 = vpop.f32.mrf.mxu0
  %v6820 = vadd.f32 %v1267, %v6819
  %v6821 = vpop.f32.mrf.mxu0
  %v6822 = vadd.f32 %v1271, %v6821
  %v6823 = vpop.f32.mrf.mxu0
  %v6824 = vadd.f32 %v1267, %v6823
  %v6825 = vpop.f32.mrf.mxu0
  %v6826 = vadd.f32 %v1271, %v6825
  %6827 = vdwg.mxu0
  %6828 = vmatprep.subr.bf16.mxu0 %v1659
  %6829 = vmatpush1.bf16.msra.mxu0 %v1658
  %6830 = vmatprep.subr.bf16.mxu0 %v1655
  %6831 = vmatpush1.bf16.msra.mxu0 %v1654
  %6832 = vmatprep.subr.bf16.mxu0 %v1651
  %6833 = vmatpush1.bf16.msra.mxu0 %v1650
  %6834 = vmatprep.subr.bf16.mxu0 %v1647
  %6835 = vmatpush1.bf16.msra.mxu0 %v1646
  %6836 = vmatprep.subr.bf16.mxu0 %v1643
  %6837 = vmatpush1.bf16.msra.mxu0 %v1642
  %6838 = vmatprep.subr.bf16.mxu0 %v1639
  %6839 = vmatpush1.bf16.msra.mxu0 %v1638
  %6840 = vmatprep.subr.bf16.mxu0 %v1635
  %6841 = vmatpush1.bf16.msra.mxu0 %v1634
  %6842 = vmatprep.subr.bf16.mxu0 %v1631
  %6843 = vmatpush1.bf16.msra.mxu0 %v1630
  %6844 = vmatprep.subr.bf16.mxu0 0
  %6845 = vmatpush2.bf16.msra.mxu0 0
  %6846 = vmatprep.subr.bf16.mxu0 0
  %6847 = vmatpush2.bf16.msra.mxu0 0
  %6848 = vmatprep.subr.bf16.mxu0 0
  %6849 = vmatpush2.bf16.msra.mxu0 0
  %6850 = vmatprep.subr.bf16.mxu0 0
  %6851 = vmatpush2.bf16.msra.mxu0 0
  %6852 = vmatprep.subr.bf16.mxu0 0
  %6853 = vmatpush2.bf16.msra.mxu0 0
  %6854 = vmatprep.subr.bf16.mxu0 0
  %6855 = vmatpush2.bf16.msra.mxu0 0
  %6856 = vmatprep.subr.bf16.mxu0 0
  %6857 = vmatpush2.bf16.msra.mxu0 0
  %6858 = vmatprep.subr.bf16.mxu0 0
  %6859 = vmatpush2.bf16.msra.mxu0 0
  %6860 = vmatprep.mubr.bf16.mxu0 0
  %6861 = vmatmul.mubr.bf16.gmra.mxu0 %v5685
  %v6862 = vpop.f32.mrf.mxu0
  %v6863 = vadd.f32 %v6820, %v6862
  %v6864 = vpop.f32.mrf.mxu0
  %v6865 = vadd.f32 %v6822, %v6864
  %v6866 = vpop.f32.mrf.mxu0
  %v6867 = vadd.f32 %v6824, %v6866
  %v6868 = vpop.f32.mrf.mxu0
  %v6869 = vadd.f32 %v6826, %v6868
  %6870 = vdwg.mxu0
  %v6871 = vmul.f32 %v6777, 0.5
  %v6872 = vmul.f32 %v6779, 0.5
  %v6873 = vmul.f32 %v6863, 0.5
  %v6874 = vmul.f32 %v6781, 0.5
  %v6875 = vmul.f32 %v6783, 0.5
  %v6876 = vmul.f32 %v6867, 0.5
  %v6877 = vtanh.pop %v6871
  %v6878 = vtanh.pop %v6872
  %v6879 = vtanh.pop %v6873
  %v6880 = vtanh.pop %v6874
  %v6881 = vtanh.pop %v6875
  %v6882 = vtanh.pop %v6876
  %v6883 = vadd.f32 %v6877, 1.0
  %v6884 = vadd.f32 %v6878, 1.0
  %v6885 = vadd.f32 %v6879, 1.0
  %v6886 = vadd.f32 %v6880, 1.0
  %v6887 = vadd.f32 %v6881, 1.0
  %v6888 = vadd.f32 %v6882, 1.0
  %v6889 = vmul.f32 %v6883, 0.5
  %v6890 = vmul.f32 %v6884, 0.5
  %v6891 = vmul.f32 %v6885, 0.5
  %v6892 = vmul.f32 %v6886, 0.5
  %v6893 = vmul.f32 %v6887, 0.5
  %v6894 = vmul.f32 %v6888, 0.5
  %v6895 = vtanh.pop %v6865
  %v6896 = vtanh.pop %v6869
  %v6897 = vmul.f32 %v6890, %v5683
  %v6898 = vmul.f32 %v6893, %v5684
  %v6899 = vmul.f32 %v6889, %v6895
  %v6900 = vmul.f32 %v6892, %v6896
  %v6901 = vadd.f32 %v6897, %v6899
  %v6902 = vadd.f32 %v6898, %v6900
  %v6903 = vtanh.pop %v6901
  %v6904 = vtanh.pop %v6902
  %v6905 = vmul.f32 %v6891, %v6903
  %v6906 = vmul.f32 %v6894, %v6904
  %s6907 = scalar_lea.vmem %s6, 64
  %6908 = vst [vmem:[%s6907] sm:$0xff] %v6905
  %6909 = vst [vmem:[%s6907 + $0x8] sm:$0xff] %v6906
  %6910 = vst [vmem:[#allocation2] sm:$0xff] %v6905
  %6911 = vst [vmem:[#allocation2 + $0x8] sm:$0xff] %v6906
  %6912 = vst [vmem:[#allocation3] sm:$0xff] %v6901
  %6913 = vst [vmem:[#allocation3 + $0x8] sm:$0xff] %v6902
  %s6914 = scalar_lea.vmem %s0, 40
  %v6915 = vld [vmem:[%s6914] sm:$0xf]
  %v6916 = vld [vmem:[%s6914 + $0x4] sm:$0xf]
  %v6917 = vld [vmem:[#allocation2] sm:$0xff]
  %v6918 = vld [vmem:[#allocation2 + $0x8] sm:$0xff]
  %v6919 = vld [vmem:[#allocation3] sm:$0xff]
  %v6920 = vld [vmem:[#allocation3 + $0x8] sm:$0xff]
  %v6921 = vpack.c.bf16 %v6918, %v6917
  %6922 = vmatprep.subr.bf16.mxu0 0
  %6923 = vmatpush1.bf16.msra.mxu0 %v223
  %6924 = vmatprep.subr.bf16.mxu0 0
  %6925 = vmatpush1.bf16.msra.mxu0 %v222
  %6926 = vmatprep.subr.bf16.mxu0 0
  %6927 = vmatpush1.bf16.msra.mxu0 %v221
  %6928 = vmatprep.subr.bf16.mxu0 0
  %6929 = vmatpush1.bf16.msra.mxu0 %v220
  %6930 = vmatprep.subr.bf16.mxu0 0
  %6931 = vmatpush1.bf16.msra.mxu0 %v219
  %6932 = vmatprep.subr.bf16.mxu0 0
  %6933 = vmatpush1.bf16.msra.mxu0 %v218
  %6934 = vmatprep.subr.bf16.mxu0 0
  %6935 = vmatpush1.bf16.msra.mxu0 %v217
  %6936 = vmatprep.subr.bf16.mxu0 0
  %6937 = vmatpush1.bf16.msra.mxu0 %v216
  %6938 = vmatprep.subr.bf16.mxu0 0
  %6939 = vmatpush2.bf16.msra.mxu0 0
  %6940 = vmatprep.subr.bf16.mxu0 0
  %6941 = vmatpush2.bf16.msra.mxu0 0
  %6942 = vmatprep.subr.bf16.mxu0 0
  %6943 = vmatpush2.bf16.msra.mxu0 0
  %6944 = vmatprep.subr.bf16.mxu0 0
  %6945 = vmatpush2.bf16.msra.mxu0 0
  %6946 = vmatprep.subr.bf16.mxu0 0
  %6947 = vmatpush2.bf16.msra.mxu0 0
  %6948 = vmatprep.subr.bf16.mxu0 0
  %6949 = vmatpush2.bf16.msra.mxu0 0
  %6950 = vmatprep.subr.bf16.mxu0 0
  %6951 = vmatpush2.bf16.msra.mxu0 0
  %6952 = vmatprep.subr.bf16.mxu0 0
  %6953 = vmatpush2.bf16.msra.mxu0 0
  %6954 = vmatprep.mubr.bf16.mxu0 0
  %6955 = vmatmul.mubr.bf16.gmra.mxu0 %v6921
  %v6956 = vpop.f32.mrf.mxu0
  %v6957 = vadd.f32 0.0, %v6956
  %v6958 = vpop.f32.mrf.mxu0
  %v6959 = vpop.f32.mrf.mxu0
  %v6960 = vadd.f32 0.0, %v6959
  %v6961 = vpop.f32.mrf.mxu0
  %6962 = vdwg.mxu0
  %v6965 = vcombine.high %v6957, %v6957
  %v6967 = vunpack.c.l.s4 1966171168
  %v6968 = vunpack.c.0.s8 %v6967
  %v6969 = vlaneseq
  %v6970 = vshrl.u32 %v6969, 7
  %v6971 = vsub.s32 %v6968, %v6970
  %v6972 = vrot.slane %v6957, %v6971
  %v6974 = vunpack.c.l.s4 1966171168
  %v6975 = vunpack.c.0.s8 %v6974
  %v6976 = vlaneseq
  %v6977 = vshrl.u32 %v6976, 7
  %v6978 = vsub.s32 %v6975, %v6977
  %v6979 = vrot.slane %v6965, %v6978
  %v6980 = vcombine.high %v6972, %v6972
  %v6981 = vcombine.high %v6979, %v6979
  %v6983 = vunpack.c.l.s4 1966171168
  %v6984 = vunpack.c.0.s8 %v6983
  %v6985 = vlaneseq
  %v6986 = vshrl.u32 %v6985, 7
  %v6987 = vsub.s32 %v6984, %v6986
  %v6988 = vrot.slane %v6972, %v6987
  %v6990 = vunpack.c.l.s4 1966171168
  %v6991 = vunpack.c.0.s8 %v6990
  %v6992 = vlaneseq
  %v6993 = vshrl.u32 %v6992, 7
  %v6994 = vsub.s32 %v6991, %v6993
  %v6995 = vrot.slane %v6979, %v6994
  %v6997 = vunpack.c.l.s4 1966171168
  %v6998 = vunpack.c.0.s8 %v6997
  %v6999 = vlaneseq
  %v7000 = vshrl.u32 %v6999, 7
  %v7001 = vsub.s32 %v6998, %v7000
  %v7002 = vrot.slane %v6980, %v7001
  %v7004 = vunpack.c.l.s4 1966171168
  %v7005 = vunpack.c.0.s8 %v7004
  %v7006 = vlaneseq
  %v7007 = vshrl.u32 %v7006, 7
  %v7008 = vsub.s32 %v7005, %v7007
  %v7009 = vrot.slane %v6981, %v7008
  %v7010 = vcombine.high %v6988, %v6988
  %v7011 = vcombine.high %v6995, %v6995
  %v7012 = vcombine.high %v7002, %v7002
  %v7013 = vcombine.high %v7009, %v7009
  %v7014 = vcombine.high %v6960, %v6960
  %v7016 = vunpack.c.l.s4 1966171168
  %v7017 = vunpack.c.0.s8 %v7016
  %v7018 = vlaneseq
  %v7019 = vshrl.u32 %v7018, 7
  %v7020 = vsub.s32 %v7017, %v7019
  %v7021 = vrot.slane %v6960, %v7020
  %v7023 = vunpack.c.l.s4 1966171168
  %v7024 = vunpack.c.0.s8 %v7023
  %v7025 = vlaneseq
  %v7026 = vshrl.u32 %v7025, 7
  %v7027 = vsub.s32 %v7024, %v7026
  %v7028 = vrot.slane %v7014, %v7027
  %v7029 = vcombine.high %v7021, %v7021
  %v7030 = vcombine.high %v7028, %v7028
  %v7032 = vunpack.c.l.s4 1966171168
  %v7033 = vunpack.c.0.s8 %v7032
  %v7034 = vlaneseq
  %v7035 = vshrl.u32 %v7034, 7
  %v7036 = vsub.s32 %v7033, %v7035
  %v7037 = vrot.slane %v7021, %v7036
  %v7039 = vunpack.c.l.s4 1966171168
  %v7040 = vunpack.c.0.s8 %v7039
  %v7041 = vlaneseq
  %v7042 = vshrl.u32 %v7041, 7
  %v7043 = vsub.s32 %v7040, %v7042
  %v7044 = vrot.slane %v7028, %v7043
  %v7046 = vunpack.c.l.s4 1966171168
  %v7047 = vunpack.c.0.s8 %v7046
  %v7048 = vlaneseq
  %v7049 = vshrl.u32 %v7048, 7
  %v7050 = vsub.s32 %v7047, %v7049
  %v7051 = vrot.slane %v7029, %v7050
  %v7053 = vunpack.c.l.s4 1966171168
  %v7054 = vunpack.c.0.s8 %v7053
  %v7055 = vlaneseq
  %v7056 = vshrl.u32 %v7055, 7
  %v7057 = vsub.s32 %v7054, %v7056
  %v7058 = vrot.slane %v7030, %v7057
  %v7059 = vcombine.high %v7037, %v7037
  %v7060 = vcombine.high %v7044, %v7044
  %v7061 = vcombine.high %v7051, %v7051
  %v7062 = vcombine.high %v7058, %v7058
  %v7063 = vlaneseq
  %v7064 = vshrl.u32 %v7063, 7
  %v7065 = vsub.s32 0, %v7064
  %v7066 = vrot.slane %v6988, %v7065
  %v7067 = vlaneseq
  %v7068 = vshrl.u32 %v7067, 7
  %v7069 = vsub.s32 0, %v7068
  %v7070 = vrot.slane %v7002, %v7069
  %v7071 = vlaneseq
  %v7072 = vshrl.u32 %v7071, 7
  %v7073 = vsub.s32 0, %v7072
  %v7074 = vrot.slane %v7010, %v7073
  %v7075 = vlaneseq
  %v7076 = vshrl.u32 %v7075, 7
  %v7077 = vsub.s32 0, %v7076
  %v7078 = vrot.slane %v7012, %v7077
  %v7079 = vlaneseq
  %v7080 = vshrl.u32 %v7079, 7
  %v7081 = vsub.s32 0, %v7080
  %v7082 = vrot.slane %v6995, %v7081
  %v7083 = vlaneseq
  %v7084 = vshrl.u32 %v7083, 7
  %v7085 = vsub.s32 0, %v7084
  %v7086 = vrot.slane %v7009, %v7085
  %v7087 = vlaneseq
  %v7088 = vshrl.u32 %v7087, 7
  %v7089 = vsub.s32 0, %v7088
  %v7090 = vrot.slane %v7011, %v7089
  %v7091 = vlaneseq
  %v7092 = vshrl.u32 %v7091, 7
  %v7093 = vsub.s32 0, %v7092
  %v7094 = vrot.slane %v7013, %v7093
  %v7095 = vlaneseq
  %v7096 = vshrl.u32 %v7095, 7
  %v7097 = vsub.s32 0, %v7096
  %v7098 = vrot.slane %v7037, %v7097
  %v7099 = vlaneseq
  %v7100 = vshrl.u32 %v7099, 7
  %v7101 = vsub.s32 0, %v7100
  %v7102 = vrot.slane %v7051, %v7101
  %v7103 = vlaneseq
  %v7104 = vshrl.u32 %v7103, 7
  %v7105 = vsub.s32 0, %v7104
  %v7106 = vrot.slane %v7059, %v7105
  %v7107 = vlaneseq
  %v7108 = vshrl.u32 %v7107, 7
  %v7109 = vsub.s32 0, %v7108
  %v7110 = vrot.slane %v7061, %v7109
  %v7111 = vlaneseq
  %v7112 = vshrl.u32 %v7111, 7
  %v7113 = vsub.s32 0, %v7112
  %v7114 = vrot.slane %v7044, %v7113
  %v7115 = vlaneseq
  %v7116 = vshrl.u32 %v7115, 7
  %v7117 = vsub.s32 0, %v7116
  %v7118 = vrot.slane %v7058, %v7117
  %v7119 = vlaneseq
  %v7120 = vshrl.u32 %v7119, 7
  %v7121 = vsub.s32 0, %v7120
  %v7122 = vrot.slane %v7060, %v7121
  %v7123 = vlaneseq
  %v7124 = vshrl.u32 %v7123, 7
  %v7125 = vsub.s32 0, %v7124
  %v7126 = vrot.slane %v7062, %v7125
  %v7143 = vmul.f32 %v7066, %v40
  %v7144 = vmul.f32 %v7070, %v41
  %v7145 = vmul.f32 %v7074, %v42
  %v7146 = vmul.f32 %v7078, %v43
  %v7147 = vmul.f32 %v7082, %v44
  %v7148 = vmul.f32 %v7086, %v45
  %v7149 = vmul.f32 %v7090, %v46
  %v7150 = vmul.f32 %v7094, %v47
  %v7151 = vmul.f32 %v7098, %v48
  %v7152 = vmul.f32 %v7102, %v49
  %v7153 = vmul.f32 %v7106, %v50
  %v7154 = vmul.f32 %v7110, %v51
  %v7155 = vmul.f32 %v7114, %v52
  %v7156 = vmul.f32 %v7118, %v53
  %v7157 = vmul.f32 %v7122, %v54
  %v7158 = vmul.f32 %v7126, %v55
  %7159 = vadd.xlane.f32.xlu0 %v7143
  %v7160 = vpop.xlane.xlu0 %7159
  %7161 = vadd.xlane.f32.xlu0 %v7144
  %v7162 = vpop.xlane.xlu0 %7161
  %7163 = vadd.xlane.f32.xlu0 %v7145
  %v7164 = vpop.xlane.xlu0 %7163
  %7165 = vadd.xlane.f32.xlu0 %v7146
  %v7166 = vpop.xlane.xlu0 %7165
  %7167 = vadd.xlane.f32.xlu0 %v7147
  %v7168 = vpop.xlane.xlu0 %7167
  %7169 = vadd.xlane.f32.xlu0 %v7148
  %v7170 = vpop.xlane.xlu0 %7169
  %7171 = vadd.xlane.f32.xlu0 %v7149
  %v7172 = vpop.xlane.xlu0 %7171
  %7173 = vadd.xlane.f32.xlu0 %v7150
  %v7174 = vpop.xlane.xlu0 %7173
  %7175 = vadd.xlane.f32.xlu0 %v7151
  %v7176 = vpop.xlane.xlu0 %7175
  %7177 = vadd.xlane.f32.xlu0 %v7152
  %v7178 = vpop.xlane.xlu0 %7177
  %7179 = vadd.xlane.f32.xlu0 %v7153
  %v7180 = vpop.xlane.xlu0 %7179
  %7181 = vadd.xlane.f32.xlu0 %v7154
  %v7182 = vpop.xlane.xlu0 %7181
  %7183 = vadd.xlane.f32.xlu0 %v7155
  %v7184 = vpop.xlane.xlu0 %7183
  %7185 = vadd.xlane.f32.xlu0 %v7156
  %v7186 = vpop.xlane.xlu0 %7185
  %7187 = vadd.xlane.f32.xlu0 %v7157
  %v7188 = vpop.xlane.xlu0 %7187
  %7189 = vadd.xlane.f32.xlu0 %v7158
  %v7190 = vpop.xlane.xlu0 %7189
  %v7207 = vlaneseq
  %v7208 = vshrl.u32 %v7207, 7
  %v7209 = vsub.s32 %v518, %v7208
  %v7210 = vrot.slane %v7160, %v7209
  %v7211 = vlaneseq
  %v7212 = vshrl.u32 %v7211, 7
  %v7213 = vsub.s32 %v518, %v7212
  %v7214 = vrot.slane %v7162, %v7213
  %v7215 = vlaneseq
  %v7216 = vshrl.u32 %v7215, 7
  %v7217 = vsub.s32 %v518, %v7216
  %v7218 = vrot.slane %v7164, %v7217
  %v7219 = vlaneseq
  %v7220 = vshrl.u32 %v7219, 7
  %v7221 = vsub.s32 %v518, %v7220
  %v7222 = vrot.slane %v7166, %v7221
  %v7223 = vlaneseq
  %v7224 = vshrl.u32 %v7223, 7
  %v7225 = vsub.s32 %v518, %v7224
  %v7226 = vrot.slane %v7168, %v7225
  %v7227 = vlaneseq
  %v7228 = vshrl.u32 %v7227, 7
  %v7229 = vsub.s32 %v518, %v7228
  %v7230 = vrot.slane %v7170, %v7229
  %v7231 = vlaneseq
  %v7232 = vshrl.u32 %v7231, 7
  %v7233 = vsub.s32 %v518, %v7232
  %v7234 = vrot.slane %v7172, %v7233
  %v7235 = vlaneseq
  %v7236 = vshrl.u32 %v7235, 7
  %v7237 = vsub.s32 %v518, %v7236
  %v7238 = vrot.slane %v7174, %v7237
  %v7239 = vlaneseq
  %v7240 = vshrl.u32 %v7239, 7
  %v7241 = vsub.s32 %v518, %v7240
  %v7242 = vrot.slane %v7176, %v7241
  %v7243 = vlaneseq
  %v7244 = vshrl.u32 %v7243, 7
  %v7245 = vsub.s32 %v518, %v7244
  %v7246 = vrot.slane %v7178, %v7245
  %v7247 = vlaneseq
  %v7248 = vshrl.u32 %v7247, 7
  %v7249 = vsub.s32 %v518, %v7248
  %v7250 = vrot.slane %v7180, %v7249
  %v7251 = vlaneseq
  %v7252 = vshrl.u32 %v7251, 7
  %v7253 = vsub.s32 %v518, %v7252
  %v7254 = vrot.slane %v7182, %v7253
  %v7255 = vlaneseq
  %v7256 = vshrl.u32 %v7255, 7
  %v7257 = vsub.s32 %v518, %v7256
  %v7258 = vrot.slane %v7184, %v7257
  %v7259 = vlaneseq
  %v7260 = vshrl.u32 %v7259, 7
  %v7261 = vsub.s32 %v518, %v7260
  %v7262 = vrot.slane %v7186, %v7261
  %v7263 = vlaneseq
  %v7264 = vshrl.u32 %v7263, 7
  %v7265 = vsub.s32 %v518, %v7264
  %v7266 = vrot.slane %v7188, %v7265
  %v7267 = vlaneseq
  %v7268 = vshrl.u32 %v7267, 7
  %v7269 = vsub.s32 %v518, %v7268
  %v7270 = vrot.slane %v7190, %v7269
  %v7271 = vsel %vm583, %v7214, %v7210
  %v7272 = vsel %vm585, %v7218, %v7271
  %v7273 = vsel %vm587, %v7222, %v7272
  %v7274 = vsel %vm589, %v7226, %v7273
  %v7275 = vsel %vm591, %v7230, %v7274
  %v7276 = vsel %vm593, %v7234, %v7275
  %v7277 = vsel %vm595, %v7238, %v7276
  %v7278 = vsel %vm583, %v7246, %v7242
  %v7279 = vsel %vm585, %v7250, %v7278
  %v7280 = vsel %vm587, %v7254, %v7279
  %v7281 = vsel %vm589, %v7258, %v7280
  %v7282 = vsel %vm591, %v7262, %v7281
  %v7283 = vsel %vm593, %v7266, %v7282
  %v7284 = vsel %vm595, %v7270, %v7283
  %v7287 = vsel %vm606, %v7277, -inf
  %7288 = vmax.xlane.f32.xlu0 %v7287
  %v7289 = vpop.xlane.xlu0 %7288
  %v7290 = vsel %vm606, %v7284, -inf
  %7291 = vmax.xlane.f32.xlu0 %v7290
  %v7292 = vpop.xlane.xlu0 %7291
  %v7295 = vlaneseq
  %v7296 = vshrl.u32 %v7295, 7
  %v7297 = vsub.s32 0, %v7296
  %v7298 = vrot.slane %v7289, %v7297
  %v7299 = vlaneseq
  %v7300 = vshrl.u32 %v7299, 7
  %v7301 = vsub.s32 1, %v7300
  %v7302 = vrot.slane %v7289, %v7301
  %v7303 = vlaneseq
  %v7304 = vshrl.u32 %v7303, 7
  %v7305 = vsub.s32 2, %v7304
  %v7306 = vrot.slane %v7289, %v7305
  %v7307 = vlaneseq
  %v7308 = vshrl.u32 %v7307, 7
  %v7309 = vsub.s32 3, %v7308
  %v7310 = vrot.slane %v7289, %v7309
  %v7311 = vlaneseq
  %v7312 = vshrl.u32 %v7311, 7
  %v7313 = vsub.s32 4, %v7312
  %v7314 = vrot.slane %v7289, %v7313
  %v7315 = vlaneseq
  %v7316 = vshrl.u32 %v7315, 7
  %v7317 = vsub.s32 5, %v7316
  %v7318 = vrot.slane %v7289, %v7317
  %v7319 = vlaneseq
  %v7320 = vshrl.u32 %v7319, 7
  %v7321 = vsub.s32 6, %v7320
  %v7322 = vrot.slane %v7289, %v7321
  %v7323 = vlaneseq
  %v7324 = vshrl.u32 %v7323, 7
  %v7325 = vsub.s32 7, %v7324
  %v7326 = vrot.slane %v7289, %v7325
  %v7327 = vlaneseq
  %v7328 = vshrl.u32 %v7327, 7
  %v7329 = vsub.s32 0, %v7328
  %v7330 = vrot.slane %v7292, %v7329
  %v7331 = vlaneseq
  %v7332 = vshrl.u32 %v7331, 7
  %v7333 = vsub.s32 1, %v7332
  %v7334 = vrot.slane %v7292, %v7333
  %v7335 = vlaneseq
  %v7336 = vshrl.u32 %v7335, 7
  %v7337 = vsub.s32 2, %v7336
  %v7338 = vrot.slane %v7292, %v7337
  %v7339 = vlaneseq
  %v7340 = vshrl.u32 %v7339, 7
  %v7341 = vsub.s32 3, %v7340
  %v7342 = vrot.slane %v7292, %v7341
  %v7343 = vlaneseq
  %v7344 = vshrl.u32 %v7343, 7
  %v7345 = vsub.s32 4, %v7344
  %v7346 = vrot.slane %v7292, %v7345
  %v7347 = vlaneseq
  %v7348 = vshrl.u32 %v7347, 7
  %v7349 = vsub.s32 5, %v7348
  %v7350 = vrot.slane %v7292, %v7349
  %v7351 = vlaneseq
  %v7352 = vshrl.u32 %v7351, 7
  %v7353 = vsub.s32 6, %v7352
  %v7354 = vrot.slane %v7292, %v7353
  %v7355 = vlaneseq
  %v7356 = vshrl.u32 %v7355, 7
  %v7357 = vsub.s32 7, %v7356
  %v7358 = vrot.slane %v7292, %v7357
  %v7375 = vsub.f32 %v7160, %v7298
  %v7376 = vsub.f32 %v7162, %v7302
  %v7377 = vsub.f32 %v7164, %v7306
  %v7378 = vsub.f32 %v7166, %v7310
  %v7379 = vsub.f32 %v7168, %v7314
  %v7380 = vsub.f32 %v7170, %v7318
  %v7381 = vsub.f32 %v7172, %v7322
  %v7382 = vsub.f32 %v7174, %v7326
  %v7383 = vsub.f32 %v7176, %v7330
  %v7384 = vsub.f32 %v7178, %v7334
  %v7385 = vsub.f32 %v7180, %v7338
  %v7386 = vsub.f32 %v7182, %v7342
  %v7387 = vsub.f32 %v7184, %v7346
  %v7388 = vsub.f32 %v7186, %v7350
  %v7389 = vsub.f32 %v7188, %v7354
  %v7390 = vsub.f32 %v7190, %v7358
  %v7391 = vmul.f32 %v7375, 1.442695
  %v7392 = vpow.pop %v7391
  %v7393 = vmul.f32 %v7376, 1.442695
  %v7394 = vpow.pop %v7393
  %v7395 = vmul.f32 %v7377, 1.442695
  %v7396 = vpow.pop %v7395
  %v7397 = vmul.f32 %v7378, 1.442695
  %v7398 = vpow.pop %v7397
  %v7399 = vmul.f32 %v7379, 1.442695
  %v7400 = vpow.pop %v7399
  %v7401 = vmul.f32 %v7380, 1.442695
  %v7402 = vpow.pop %v7401
  %v7403 = vmul.f32 %v7381, 1.442695
  %v7404 = vpow.pop %v7403
  %v7405 = vmul.f32 %v7382, 1.442695
  %v7406 = vpow.pop %v7405
  %v7407 = vmul.f32 %v7383, 1.442695
  %v7408 = vpow.pop %v7407
  %v7409 = vmul.f32 %v7384, 1.442695
  %v7410 = vpow.pop %v7409
  %v7411 = vmul.f32 %v7385, 1.442695
  %v7412 = vpow.pop %v7411
  %v7413 = vmul.f32 %v7386, 1.442695
  %v7414 = vpow.pop %v7413
  %v7415 = vmul.f32 %v7387, 1.442695
  %v7416 = vpow.pop %v7415
  %v7417 = vmul.f32 %v7388, 1.442695
  %v7418 = vpow.pop %v7417
  %v7419 = vmul.f32 %v7389, 1.442695
  %v7420 = vpow.pop %v7419
  %v7421 = vmul.f32 %v7390, 1.442695
  %v7422 = vpow.pop %v7421
  %7439 = vset.pattern.permute.xlu0 0
  %7440 = vperm.xlu0 %7439, %v7392
  %v7441 = vpop.permute.xlu0 %7440
  %7442 = vset.pattern.permute.xlu0 0
  %7443 = vperm.xlu0 %7442, %v7394
  %v7444 = vpop.permute.xlu0 %7443
  %7445 = vset.pattern.permute.xlu0 0
  %7446 = vperm.xlu0 %7445, %v7396
  %v7447 = vpop.permute.xlu0 %7446
  %7448 = vset.pattern.permute.xlu0 0
  %7449 = vperm.xlu0 %7448, %v7398
  %v7450 = vpop.permute.xlu0 %7449
  %7451 = vset.pattern.permute.xlu0 0
  %7452 = vperm.xlu0 %7451, %v7400
  %v7453 = vpop.permute.xlu0 %7452
  %7454 = vset.pattern.permute.xlu0 0
  %7455 = vperm.xlu0 %7454, %v7402
  %v7456 = vpop.permute.xlu0 %7455
  %7457 = vset.pattern.permute.xlu0 0
  %7458 = vperm.xlu0 %7457, %v7404
  %v7459 = vpop.permute.xlu0 %7458
  %7460 = vset.pattern.permute.xlu0 0
  %7461 = vperm.xlu0 %7460, %v7406
  %v7462 = vpop.permute.xlu0 %7461
  %7463 = vset.pattern.permute.xlu0 0
  %7464 = vperm.xlu0 %7463, %v7408
  %v7465 = vpop.permute.xlu0 %7464
  %7466 = vset.pattern.permute.xlu0 0
  %7467 = vperm.xlu0 %7466, %v7410
  %v7468 = vpop.permute.xlu0 %7467
  %7469 = vset.pattern.permute.xlu0 0
  %7470 = vperm.xlu0 %7469, %v7412
  %v7471 = vpop.permute.xlu0 %7470
  %7472 = vset.pattern.permute.xlu0 0
  %7473 = vperm.xlu0 %7472, %v7414
  %v7474 = vpop.permute.xlu0 %7473
  %7475 = vset.pattern.permute.xlu0 0
  %7476 = vperm.xlu0 %7475, %v7416
  %v7477 = vpop.permute.xlu0 %7476
  %7478 = vset.pattern.permute.xlu0 0
  %7479 = vperm.xlu0 %7478, %v7418
  %v7480 = vpop.permute.xlu0 %7479
  %7481 = vset.pattern.permute.xlu0 0
  %7482 = vperm.xlu0 %7481, %v7420
  %v7483 = vpop.permute.xlu0 %7482
  %7484 = vset.pattern.permute.xlu0 0
  %7485 = vperm.xlu0 %7484, %v7422
  %v7486 = vpop.permute.xlu0 %7485
  %v7487 = vlaneseq
  %v7488 = vshrl.u32 %v7487, 7
  %v7489 = vsub.s32 %v518, %v7488
  %v7490 = vrot.slane %v7441, %v7489
  %v7491 = vlaneseq
  %v7492 = vshrl.u32 %v7491, 7
  %v7493 = vsub.s32 %v518, %v7492
  %v7494 = vrot.slane %v7444, %v7493
  %v7495 = vlaneseq
  %v7496 = vshrl.u32 %v7495, 7
  %v7497 = vsub.s32 %v518, %v7496
  %v7498 = vrot.slane %v7447, %v7497
  %v7499 = vlaneseq
  %v7500 = vshrl.u32 %v7499, 7
  %v7501 = vsub.s32 %v518, %v7500
  %v7502 = vrot.slane %v7450, %v7501
  %v7503 = vlaneseq
  %v7504 = vshrl.u32 %v7503, 7
  %v7505 = vsub.s32 %v518, %v7504
  %v7506 = vrot.slane %v7453, %v7505
  %v7507 = vlaneseq
  %v7508 = vshrl.u32 %v7507, 7
  %v7509 = vsub.s32 %v518, %v7508
  %v7510 = vrot.slane %v7456, %v7509
  %v7511 = vlaneseq
  %v7512 = vshrl.u32 %v7511, 7
  %v7513 = vsub.s32 %v518, %v7512
  %v7514 = vrot.slane %v7459, %v7513
  %v7515 = vlaneseq
  %v7516 = vshrl.u32 %v7515, 7
  %v7517 = vsub.s32 %v518, %v7516
  %v7518 = vrot.slane %v7462, %v7517
  %v7519 = vlaneseq
  %v7520 = vshrl.u32 %v7519, 7
  %v7521 = vsub.s32 %v518, %v7520
  %v7522 = vrot.slane %v7465, %v7521
  %v7523 = vlaneseq
  %v7524 = vshrl.u32 %v7523, 7
  %v7525 = vsub.s32 %v518, %v7524
  %v7526 = vrot.slane %v7468, %v7525
  %v7527 = vlaneseq
  %v7528 = vshrl.u32 %v7527, 7
  %v7529 = vsub.s32 %v518, %v7528
  %v7530 = vrot.slane %v7471, %v7529
  %v7531 = vlaneseq
  %v7532 = vshrl.u32 %v7531, 7
  %v7533 = vsub.s32 %v518, %v7532
  %v7534 = vrot.slane %v7474, %v7533
  %v7535 = vlaneseq
  %v7536 = vshrl.u32 %v7535, 7
  %v7537 = vsub.s32 %v518, %v7536
  %v7538 = vrot.slane %v7477, %v7537
  %v7539 = vlaneseq
  %v7540 = vshrl.u32 %v7539, 7
  %v7541 = vsub.s32 %v518, %v7540
  %v7542 = vrot.slane %v7480, %v7541
  %v7543 = vlaneseq
  %v7544 = vshrl.u32 %v7543, 7
  %v7545 = vsub.s32 %v518, %v7544
  %v7546 = vrot.slane %v7483, %v7545
  %v7547 = vlaneseq
  %v7548 = vshrl.u32 %v7547, 7
  %v7549 = vsub.s32 %v518, %v7548
  %v7550 = vrot.slane %v7486, %v7549
  %v7551 = vsel %vm583, %v7494, %v7490
  %v7552 = vsel %vm585, %v7498, %v7551
  %v7553 = vsel %vm587, %v7502, %v7552
  %v7554 = vsel %vm589, %v7506, %v7553
  %v7555 = vsel %vm591, %v7510, %v7554
  %v7556 = vsel %vm593, %v7514, %v7555
  %v7557 = vsel %vm595, %v7518, %v7556
  %v7558 = vsel %vm583, %v7526, %v7522
  %v7559 = vsel %vm585, %v7530, %v7558
  %v7560 = vsel %vm587, %v7534, %v7559
  %v7561 = vsel %vm589, %v7538, %v7560
  %v7562 = vsel %vm591, %v7542, %v7561
  %v7563 = vsel %vm593, %v7546, %v7562
  %v7564 = vsel %vm595, %v7550, %v7563
  %v7567 = vsel %vm606, %v7557, 0.0
  %7568 = vadd.xlane.f32.xlu0 %v7567
  %v7569 = vpop.xlane.xlu0 %7568
  %v7570 = vsel %vm606, %v7564, 0.0
  %7571 = vadd.xlane.f32.xlu0 %v7570
  %v7572 = vpop.xlane.xlu0 %7571
  %v7573 = vrcp.pop %v7569
  %v7574 = vrcp.pop %v7572
  %v7577 = vlaneseq
  %v7578 = vshrl.u32 %v7577, 7
  %v7579 = vsub.s32 0, %v7578
  %v7580 = vrot.slane %v7573, %v7579
  %v7581 = vlaneseq
  %v7582 = vshrl.u32 %v7581, 7
  %v7583 = vsub.s32 1, %v7582
  %v7584 = vrot.slane %v7573, %v7583
  %v7585 = vlaneseq
  %v7586 = vshrl.u32 %v7585, 7
  %v7587 = vsub.s32 2, %v7586
  %v7588 = vrot.slane %v7573, %v7587
  %v7589 = vlaneseq
  %v7590 = vshrl.u32 %v7589, 7
  %v7591 = vsub.s32 3, %v7590
  %v7592 = vrot.slane %v7573, %v7591
  %v7593 = vlaneseq
  %v7594 = vshrl.u32 %v7593, 7
  %v7595 = vsub.s32 4, %v7594
  %v7596 = vrot.slane %v7573, %v7595
  %v7597 = vlaneseq
  %v7598 = vshrl.u32 %v7597, 7
  %v7599 = vsub.s32 5, %v7598
  %v7600 = vrot.slane %v7573, %v7599
  %v7601 = vlaneseq
  %v7602 = vshrl.u32 %v7601, 7
  %v7603 = vsub.s32 6, %v7602
  %v7604 = vrot.slane %v7573, %v7603
  %v7605 = vlaneseq
  %v7606 = vshrl.u32 %v7605, 7
  %v7607 = vsub.s32 7, %v7606
  %v7608 = vrot.slane %v7573, %v7607
  %v7609 = vlaneseq
  %v7610 = vshrl.u32 %v7609, 7
  %v7611 = vsub.s32 0, %v7610
  %v7612 = vrot.slane %v7574, %v7611
  %v7613 = vlaneseq
  %v7614 = vshrl.u32 %v7613, 7
  %v7615 = vsub.s32 1, %v7614
  %v7616 = vrot.slane %v7574, %v7615
  %v7617 = vlaneseq
  %v7618 = vshrl.u32 %v7617, 7
  %v7619 = vsub.s32 2, %v7618
  %v7620 = vrot.slane %v7574, %v7619
  %v7621 = vlaneseq
  %v7622 = vshrl.u32 %v7621, 7
  %v7623 = vsub.s32 3, %v7622
  %v7624 = vrot.slane %v7574, %v7623
  %v7625 = vlaneseq
  %v7626 = vshrl.u32 %v7625, 7
  %v7627 = vsub.s32 4, %v7626
  %v7628 = vrot.slane %v7574, %v7627
  %v7629 = vlaneseq
  %v7630 = vshrl.u32 %v7629, 7
  %v7631 = vsub.s32 5, %v7630
  %v7632 = vrot.slane %v7574, %v7631
  %v7633 = vlaneseq
  %v7634 = vshrl.u32 %v7633, 7
  %v7635 = vsub.s32 6, %v7634
  %v7636 = vrot.slane %v7574, %v7635
  %v7637 = vlaneseq
  %v7638 = vshrl.u32 %v7637, 7
  %v7639 = vsub.s32 7, %v7638
  %v7640 = vrot.slane %v7574, %v7639
  %v7657 = vmul.f32 %v7392, %v7580
  %v7658 = vmul.f32 %v7394, %v7584
  %v7659 = vmul.f32 %v7396, %v7588
  %v7660 = vmul.f32 %v7398, %v7592
  %v7661 = vmul.f32 %v7400, %v7596
  %v7662 = vmul.f32 %v7402, %v7600
  %v7663 = vmul.f32 %v7404, %v7604
  %v7664 = vmul.f32 %v7406, %v7608
  %v7665 = vmul.f32 %v7408, %v7612
  %v7666 = vmul.f32 %v7410, %v7616
  %v7667 = vmul.f32 %v7412, %v7620
  %v7668 = vmul.f32 %v7414, %v7624
  %v7669 = vmul.f32 %v7416, %v7628
  %v7670 = vmul.f32 %v7418, %v7632
  %v7671 = vmul.f32 %v7420, %v7636
  %v7672 = vmul.f32 %v7422, %v7640
  %7674 = vset.pattern.permute.xlu0 0
  %7675 = vperm.xlu0 %7674, %v7657
  %v7676 = vpop.permute.xlu0 %7675
  %7679 = vset.pattern.permute.xlu0 0
  %7680 = vperm.xlu0 %7679, %v7658
  %v7681 = vpop.permute.xlu0 %7680
  %7684 = vset.pattern.permute.xlu0 0
  %7685 = vperm.xlu0 %7684, %v7659
  %v7686 = vpop.permute.xlu0 %7685
  %7689 = vset.pattern.permute.xlu0 0
  %7690 = vperm.xlu0 %7689, %v7660
  %v7691 = vpop.permute.xlu0 %7690
  %7694 = vset.pattern.permute.xlu0 0
  %7695 = vperm.xlu0 %7694, %v7661
  %v7696 = vpop.permute.xlu0 %7695
  %7699 = vset.pattern.permute.xlu0 0
  %7700 = vperm.xlu0 %7699, %v7662
  %v7701 = vpop.permute.xlu0 %7700
  %7704 = vset.pattern.permute.xlu0 0
  %7705 = vperm.xlu0 %7704, %v7663
  %v7706 = vpop.permute.xlu0 %7705
  %7709 = vset.pattern.permute.xlu0 0
  %7710 = vperm.xlu0 %7709, %v7664
  %v7711 = vpop.permute.xlu0 %7710
  %7714 = vset.pattern.permute.xlu0 0
  %7715 = vperm.xlu0 %7714, %v7665
  %v7716 = vpop.permute.xlu0 %7715
  %7719 = vset.pattern.permute.xlu0 0
  %7720 = vperm.xlu0 %7719, %v7666
  %v7721 = vpop.permute.xlu0 %7720
  %7724 = vset.pattern.permute.xlu0 0
  %7725 = vperm.xlu0 %7724, %v7667
  %v7726 = vpop.permute.xlu0 %7725
  %7729 = vset.pattern.permute.xlu0 0
  %7730 = vperm.xlu0 %7729, %v7668
  %v7731 = vpop.permute.xlu0 %7730
  %7734 = vset.pattern.permute.xlu0 0
  %7735 = vperm.xlu0 %7734, %v7669
  %v7736 = vpop.permute.xlu0 %7735
  %7739 = vset.pattern.permute.xlu0 0
  %7740 = vperm.xlu0 %7739, %v7670
  %v7741 = vpop.permute.xlu0 %7740
  %7744 = vset.pattern.permute.xlu0 0
  %7745 = vperm.xlu0 %7744, %v7671
  %v7746 = vpop.permute.xlu0 %7745
  %7749 = vset.pattern.permute.xlu0 0
  %7750 = vperm.xlu0 %7749, %v7672
  %v7751 = vpop.permute.xlu0 %7750
  %v7753 = vmul.f32 %v7676, %v40
  %v7754 = vmul.f32 %v7681, %v41
  %v7755 = vmul.f32 %v7686, %v42
  %v7756 = vmul.f32 %v7691, %v43
  %v7757 = vmul.f32 %v7696, %v44
  %v7758 = vmul.f32 %v7701, %v45
  %v7759 = vmul.f32 %v7706, %v46
  %v7760 = vmul.f32 %v7711, %v47
  %v7761 = vmul.f32 %v7716, %v48
  %v7762 = vmul.f32 %v7721, %v49
  %v7763 = vmul.f32 %v7726, %v50
  %v7764 = vmul.f32 %v7731, %v51
  %v7765 = vmul.f32 %v7736, %v52
  %v7766 = vmul.f32 %v7741, %v53
  %v7767 = vmul.f32 %v7746, %v54
  %v7768 = vmul.f32 %v7751, %v55
  %v7769 = vrot.slane %v7753, 4
  %v7770 = vadd.f32 %v7753, %v7769
  %v7771 = vrot.slane %v7770, 2
  %v7772 = vadd.f32 %v7770, %v7771
  %v7773 = vrot.slane %v7772, 1
  %v7774 = vadd.f32 %v7772, %v7773
  %v7775 = vrot.slane %v7754, 4
  %v7776 = vadd.f32 %v7754, %v7775
  %v7777 = vrot.slane %v7776, 2
  %v7778 = vadd.f32 %v7776, %v7777
  %v7779 = vrot.slane %v7778, 1
  %v7780 = vadd.f32 %v7778, %v7779
  %v7781 = vrot.slane %v7755, 4
  %v7782 = vadd.f32 %v7755, %v7781
  %v7783 = vrot.slane %v7782, 2
  %v7784 = vadd.f32 %v7782, %v7783
  %v7785 = vrot.slane %v7784, 1
  %v7786 = vadd.f32 %v7784, %v7785
  %v7787 = vrot.slane %v7756, 4
  %v7788 = vadd.f32 %v7756, %v7787
  %v7789 = vrot.slane %v7788, 2
  %v7790 = vadd.f32 %v7788, %v7789
  %v7791 = vrot.slane %v7790, 1
  %v7792 = vadd.f32 %v7790, %v7791
  %v7793 = vrot.slane %v7757, 4
  %v7794 = vadd.f32 %v7757, %v7793
  %v7795 = vrot.slane %v7794, 2
  %v7796 = vadd.f32 %v7794, %v7795
  %v7797 = vrot.slane %v7796, 1
  %v7798 = vadd.f32 %v7796, %v7797
  %v7799 = vrot.slane %v7758, 4
  %v7800 = vadd.f32 %v7758, %v7799
  %v7801 = vrot.slane %v7800, 2
  %v7802 = vadd.f32 %v7800, %v7801
  %v7803 = vrot.slane %v7802, 1
  %v7804 = vadd.f32 %v7802, %v7803
  %v7805 = vrot.slane %v7759, 4
  %v7806 = vadd.f32 %v7759, %v7805
  %v7807 = vrot.slane %v7806, 2
  %v7808 = vadd.f32 %v7806, %v7807
  %v7809 = vrot.slane %v7808, 1
  %v7810 = vadd.f32 %v7808, %v7809
  %v7811 = vrot.slane %v7760, 4
  %v7812 = vadd.f32 %v7760, %v7811
  %v7813 = vrot.slane %v7812, 2
  %v7814 = vadd.f32 %v7812, %v7813
  %v7815 = vrot.slane %v7814, 1
  %v7816 = vadd.f32 %v7814, %v7815
  %v7817 = vrot.slane %v7761, 4
  %v7818 = vadd.f32 %v7761, %v7817
  %v7819 = vrot.slane %v7818, 2
  %v7820 = vadd.f32 %v7818, %v7819
  %v7821 = vrot.slane %v7820, 1
  %v7822 = vadd.f32 %v7820, %v7821
  %v7823 = vrot.slane %v7762, 4
  %v7824 = vadd.f32 %v7762, %v7823
  %v7825 = vrot.slane %v7824, 2
  %v7826 = vadd.f32 %v7824, %v7825
  %v7827 = vrot.slane %v7826, 1
  %v7828 = vadd.f32 %v7826, %v7827
  %v7829 = vrot.slane %v7763, 4
  %v7830 = vadd.f32 %v7763, %v7829
  %v7831 = vrot.slane %v7830, 2
  %v7832 = vadd.f32 %v7830, %v7831
  %v7833 = vrot.slane %v7832, 1
  %v7834 = vadd.f32 %v7832, %v7833
  %v7835 = vrot.slane %v7764, 4
  %v7836 = vadd.f32 %v7764, %v7835
  %v7837 = vrot.slane %v7836, 2
  %v7838 = vadd.f32 %v7836, %v7837
  %v7839 = vrot.slane %v7838, 1
  %v7840 = vadd.f32 %v7838, %v7839
  %v7841 = vrot.slane %v7765, 4
  %v7842 = vadd.f32 %v7765, %v7841
  %v7843 = vrot.slane %v7842, 2
  %v7844 = vadd.f32 %v7842, %v7843
  %v7845 = vrot.slane %v7844, 1
  %v7846 = vadd.f32 %v7844, %v7845
  %v7847 = vrot.slane %v7766, 4
  %v7848 = vadd.f32 %v7766, %v7847
  %v7849 = vrot.slane %v7848, 2
  %v7850 = vadd.f32 %v7848, %v7849
  %v7851 = vrot.slane %v7850, 1
  %v7852 = vadd.f32 %v7850, %v7851
  %v7853 = vrot.slane %v7767, 4
  %v7854 = vadd.f32 %v7767, %v7853
  %v7855 = vrot.slane %v7854, 2
  %v7856 = vadd.f32 %v7854, %v7855
  %v7857 = vrot.slane %v7856, 1
  %v7858 = vadd.f32 %v7856, %v7857
  %v7859 = vrot.slane %v7768, 4
  %v7860 = vadd.f32 %v7768, %v7859
  %v7861 = vrot.slane %v7860, 2
  %v7862 = vadd.f32 %v7860, %v7861
  %v7863 = vrot.slane %v7862, 1
  %v7864 = vadd.f32 %v7862, %v7863
  %v7865 = vpack.c.bf16 %v7774, %v7774
  %v7866 = vpack.c.bf16 %v7780, %v7780
  %v7867 = vpack.c.bf16 %v7786, %v7786
  %v7868 = vpack.c.bf16 %v7792, %v7792
  %v7869 = vpack.c.bf16 %v7798, %v7798
  %v7870 = vpack.c.bf16 %v7804, %v7804
  %v7871 = vpack.c.bf16 %v7810, %v7810
  %v7872 = vpack.c.bf16 %v7816, %v7816
  %v7873 = vpack.c.bf16 %v7822, %v7822
  %v7874 = vpack.c.bf16 %v7828, %v7828
  %v7875 = vpack.c.bf16 %v7834, %v7834
  %v7876 = vpack.c.bf16 %v7840, %v7840
  %v7877 = vpack.c.bf16 %v7846, %v7846
  %v7878 = vpack.c.bf16 %v7852, %v7852
  %v7879 = vpack.c.bf16 %v7858, %v7858
  %v7880 = vpack.c.bf16 %v7864, %v7864
  %v7883 = vunpack.c.l.b16 %v6915
  %v7884 = vunpack.c.l.b16 %v6916
  %v7885 = vpack.c.b16 %v7884, %v7883
  %v7903 = vunpack.c.l.b16 %v7865
  %v7904 = vunpack.c.l.b16 %v7866
  %v7905 = vunpack.c.l.b16 %v7867
  %v7906 = vunpack.c.l.b16 %v7868
  %v7907 = vunpack.c.l.b16 %v7869
  %v7908 = vunpack.c.l.b16 %v7870
  %v7909 = vunpack.c.l.b16 %v7871
  %v7910 = vunpack.c.l.b16 %v7872
  %v7911 = vunpack.c.l.b16 %v7873
  %v7912 = vunpack.c.l.b16 %v7874
  %v7913 = vunpack.c.l.b16 %v7875
  %v7914 = vunpack.c.l.b16 %v7876
  %v7915 = vunpack.c.l.b16 %v7877
  %v7916 = vunpack.c.l.b16 %v7878
  %v7917 = vunpack.c.l.b16 %v7879
  %v7918 = vunpack.c.l.b16 %v7880
  %v7919 = vsel %vm583, %v7904, %v7903
  %v7920 = vsel %vm585, %v7905, %v7919
  %v7921 = vsel %vm587, %v7906, %v7920
  %v7922 = vsel %vm589, %v7907, %v7921
  %v7923 = vsel %vm591, %v7908, %v7922
  %v7924 = vsel %vm593, %v7909, %v7923
  %v7925 = vsel %vm595, %v7910, %v7924
  %v7926 = vsel %vm583, %v7912, %v7911
  %v7927 = vsel %vm585, %v7913, %v7926
  %v7928 = vsel %vm587, %v7914, %v7927
  %v7929 = vsel %vm589, %v7915, %v7928
  %v7930 = vsel %vm591, %v7916, %v7929
  %v7931 = vsel %vm593, %v7917, %v7930
  %v7932 = vsel %vm595, %v7918, %v7931
  %v7933 = vpack.c.b16 %v7932, %v7925
  %7935 = vmatprep.subr.bf16.mxu0 %v1593
  %7936 = vmatpush1.bf16.msra.mxu0 %v1592
  %7937 = vmatprep.subr.bf16.mxu0 %v1589
  %7938 = vmatpush1.bf16.msra.mxu0 %v1588
  %7939 = vmatprep.subr.bf16.mxu0 %v1585
  %7940 = vmatpush1.bf16.msra.mxu0 %v1584
  %7941 = vmatprep.subr.bf16.mxu0 %v1581
  %7942 = vmatpush1.bf16.msra.mxu0 %v1580
  %7943 = vmatprep.subr.bf16.mxu0 %v1577
  %7944 = vmatpush1.bf16.msra.mxu0 %v1576
  %7945 = vmatprep.subr.bf16.mxu0 %v1573
  %7946 = vmatpush1.bf16.msra.mxu0 %v1572
  %7947 = vmatprep.subr.bf16.mxu0 %v1569
  %7948 = vmatpush1.bf16.msra.mxu0 %v1568
  %7949 = vmatprep.subr.bf16.mxu0 %v1565
  %7950 = vmatpush1.bf16.msra.mxu0 %v1564
  %7951 = vmatprep.subr.bf16.mxu0 %v1625
  %7952 = vmatpush2.bf16.msra.mxu0 %v1624
  %7953 = vmatprep.subr.bf16.mxu0 %v1621
  %7954 = vmatpush2.bf16.msra.mxu0 %v1620
  %7955 = vmatprep.subr.bf16.mxu0 %v1617
  %7956 = vmatpush2.bf16.msra.mxu0 %v1616
  %7957 = vmatprep.subr.bf16.mxu0 %v1613
  %7958 = vmatpush2.bf16.msra.mxu0 %v1612
  %7959 = vmatprep.subr.bf16.mxu0 %v1609
  %7960 = vmatpush2.bf16.msra.mxu0 %v1608
  %7961 = vmatprep.subr.bf16.mxu0 %v1605
  %7962 = vmatpush2.bf16.msra.mxu0 %v1604
  %7963 = vmatprep.subr.bf16.mxu0 %v1601
  %7964 = vmatpush2.bf16.msra.mxu0 %v1600
  %7965 = vmatprep.subr.bf16.mxu0 %v1597
  %7966 = vmatpush2.bf16.msra.mxu0 %v1596
  %7967 = vmatprep.mubr.bf16.mxu0 %v7933
  %7968 = vmatmul.mubr.bf16.gmra.mxu0 %v7885
  %v7969 = vpop.f32.mrf.mxu0
  %v7970 = vadd.f32 %v1259, %v7969
  %v7971 = vpop.f32.mrf.mxu0
  %v7972 = vadd.f32 %v1263, %v7971
  %v7973 = vpop.f32.mrf.mxu0
  %v7974 = vadd.f32 %v1259, %v7973
  %v7975 = vpop.f32.mrf.mxu0
  %v7976 = vadd.f32 %v1263, %v7975
  %7977 = vdwg.mxu0
  %7978 = vmatprep.subr.bf16.mxu0 %v1657
  %7979 = vmatpush1.bf16.msra.mxu0 %v1656
  %7980 = vmatprep.subr.bf16.mxu0 %v1653
  %7981 = vmatpush1.bf16.msra.mxu0 %v1652
  %7982 = vmatprep.subr.bf16.mxu0 %v1649
  %7983 = vmatpush1.bf16.msra.mxu0 %v1648
  %7984 = vmatprep.subr.bf16.mxu0 %v1645
  %7985 = vmatpush1.bf16.msra.mxu0 %v1644
  %7986 = vmatprep.subr.bf16.mxu0 %v1641
  %7987 = vmatpush1.bf16.msra.mxu0 %v1640
  %7988 = vmatprep.subr.bf16.mxu0 %v1637
  %7989 = vmatpush1.bf16.msra.mxu0 %v1636
  %7990 = vmatprep.subr.bf16.mxu0 %v1633
  %7991 = vmatpush1.bf16.msra.mxu0 %v1632
  %7992 = vmatprep.subr.bf16.mxu0 %v1629
  %7993 = vmatpush1.bf16.msra.mxu0 %v1628
  %7994 = vmatprep.subr.bf16.mxu0 0
  %7995 = vmatpush2.bf16.msra.mxu0 0
  %7996 = vmatprep.subr.bf16.mxu0 0
  %7997 = vmatpush2.bf16.msra.mxu0 0
  %7998 = vmatprep.subr.bf16.mxu0 0
  %7999 = vmatpush2.bf16.msra.mxu0 0
  %8000 = vmatprep.subr.bf16.mxu0 0
  %8001 = vmatpush2.bf16.msra.mxu0 0
  %8002 = vmatprep.subr.bf16.mxu0 0
  %8003 = vmatpush2.bf16.msra.mxu0 0
  %8004 = vmatprep.subr.bf16.mxu0 0
  %8005 = vmatpush2.bf16.msra.mxu0 0
  %8006 = vmatprep.subr.bf16.mxu0 0
  %8007 = vmatpush2.bf16.msra.mxu0 0
  %8008 = vmatprep.subr.bf16.mxu0 0
  %8009 = vmatpush2.bf16.msra.mxu0 0
  %8010 = vmatprep.mubr.bf16.mxu0 0
  %8011 = vmatmul.mubr.bf16.gmra.mxu0 %v6921
  %v8012 = vpop.f32.mrf.mxu0
  %v8013 = vadd.f32 %v7970, %v8012
  %v8014 = vpop.f32.mrf.mxu0
  %v8015 = vadd.f32 %v7972, %v8014
  %v8016 = vpop.f32.mrf.mxu0
  %v8017 = vadd.f32 %v7974, %v8016
  %v8018 = vpop.f32.mrf.mxu0
  %v8019 = vadd.f32 %v7976, %v8018
  %8020 = vdwg.mxu0
  %8021 = vmatprep.subr.bf16.mxu0 %v1595
  %8022 = vmatpush1.bf16.msra.mxu0 %v1594
  %8023 = vmatprep.subr.bf16.mxu0 %v1591
  %8024 = vmatpush1.bf16.msra.mxu0 %v1590
  %8025 = vmatprep.subr.bf16.mxu0 %v1587
  %8026 = vmatpush1.bf16.msra.mxu0 %v1586
  %8027 = vmatprep.subr.bf16.mxu0 %v1583
  %8028 = vmatpush1.bf16.msra.mxu0 %v1582
  %8029 = vmatprep.subr.bf16.mxu0 %v1579
  %8030 = vmatpush1.bf16.msra.mxu0 %v1578
  %8031 = vmatprep.subr.bf16.mxu0 %v1575
  %8032 = vmatpush1.bf16.msra.mxu0 %v1574
  %8033 = vmatprep.subr.bf16.mxu0 %v1571
  %8034 = vmatpush1.bf16.msra.mxu0 %v1570
  %8035 = vmatprep.subr.bf16.mxu0 %v1567
  %8036 = vmatpush1.bf16.msra.mxu0 %v1566
  %8037 = vmatprep.subr.bf16.mxu0 %v1627
  %8038 = vmatpush2.bf16.msra.mxu0 %v1626
  %8039 = vmatprep.subr.bf16.mxu0 %v1623
  %8040 = vmatpush2.bf16.msra.mxu0 %v1622
  %8041 = vmatprep.subr.bf16.mxu0 %v1619
  %8042 = vmatpush2.bf16.msra.mxu0 %v1618
  %8043 = vmatprep.subr.bf16.mxu0 %v1615
  %8044 = vmatpush2.bf16.msra.mxu0 %v1614
  %8045 = vmatprep.subr.bf16.mxu0 %v1611
  %8046 = vmatpush2.bf16.msra.mxu0 %v1610
  %8047 = vmatprep.subr.bf16.mxu0 %v1607
  %8048 = vmatpush2.bf16.msra.mxu0 %v1606
  %8049 = vmatprep.subr.bf16.mxu0 %v1603
  %8050 = vmatpush2.bf16.msra.mxu0 %v1602
  %8051 = vmatprep.subr.bf16.mxu0 %v1599
  %8052 = vmatpush2.bf16.msra.mxu0 %v1598
  %8053 = vmatprep.mubr.bf16.mxu0 %v7933
  %8054 = vmatmul.mubr.bf16.gmra.mxu0 %v7885
  %v8055 = vpop.f32.mrf.mxu0
  %v8056 = vadd.f32 %v1267, %v8055
  %v8057 = vpop.f32.mrf.mxu0
  %v8058 = vadd.f32 %v1271, %v8057
  %v8059 = vpop.f32.mrf.mxu0
  %v8060 = vadd.f32 %v1267, %v8059
  %v8061 = vpop.f32.mrf.mxu0
  %v8062 = vadd.f32 %v1271, %v8061
  %8063 = vdwg.mxu0
  %8064 = vmatprep.subr.bf16.mxu0 %v1659
  %8065 = vmatpush1.bf16.msra.mxu0 %v1658
  %8066 = vmatprep.subr.bf16.mxu0 %v1655
  %8067 = vmatpush1.bf16.msra.mxu0 %v1654
  %8068 = vmatprep.subr.bf16.mxu0 %v1651
  %8069 = vmatpush1.bf16.msra.mxu0 %v1650
  %8070 = vmatprep.subr.bf16.mxu0 %v1647
  %8071 = vmatpush1.bf16.msra.mxu0 %v1646
  %8072 = vmatprep.subr.bf16.mxu0 %v1643
  %8073 = vmatpush1.bf16.msra.mxu0 %v1642
  %8074 = vmatprep.subr.bf16.mxu0 %v1639
  %8075 = vmatpush1.bf16.msra.mxu0 %v1638
  %8076 = vmatprep.subr.bf16.mxu0 %v1635
  %8077 = vmatpush1.bf16.msra.mxu0 %v1634
  %8078 = vmatprep.subr.bf16.mxu0 %v1631
  %8079 = vmatpush1.bf16.msra.mxu0 %v1630
  %8080 = vmatprep.subr.bf16.mxu0 0
  %8081 = vmatpush2.bf16.msra.mxu0 0
  %8082 = vmatprep.subr.bf16.mxu0 0
  %8083 = vmatpush2.bf16.msra.mxu0 0
  %8084 = vmatprep.subr.bf16.mxu0 0
  %8085 = vmatpush2.bf16.msra.mxu0 0
  %8086 = vmatprep.subr.bf16.mxu0 0
  %8087 = vmatpush2.bf16.msra.mxu0 0
  %8088 = vmatprep.subr.bf16.mxu0 0
  %8089 = vmatpush2.bf16.msra.mxu0 0
  %8090 = vmatprep.subr.bf16.mxu0 0
  %8091 = vmatpush2.bf16.msra.mxu0 0
  %8092 = vmatprep.subr.bf16.mxu0 0
  %8093 = vmatpush2.bf16.msra.mxu0 0
  %8094 = vmatprep.subr.bf16.mxu0 0
  %8095 = vmatpush2.bf16.msra.mxu0 0
  %8096 = vmatprep.mubr.bf16.mxu0 0
  %8097 = vmatmul.mubr.bf16.gmra.mxu0 %v6921
  %v8098 = vpop.f32.mrf.mxu0
  %v8099 = vadd.f32 %v8056, %v8098
  %v8100 = vpop.f32.mrf.mxu0
  %v8101 = vadd.f32 %v8058, %v8100
  %v8102 = vpop.f32.mrf.mxu0
  %v8103 = vadd.f32 %v8060, %v8102
  %v8104 = vpop.f32.mrf.mxu0
  %v8105 = vadd.f32 %v8062, %v8104
  %8106 = vdwg.mxu0
  %v8107 = vmul.f32 %v8013, 0.5
  %v8108 = vmul.f32 %v8015, 0.5
  %v8109 = vmul.f32 %v8099, 0.5
  %v8110 = vmul.f32 %v8017, 0.5
  %v8111 = vmul.f32 %v8019, 0.5
  %v8112 = vmul.f32 %v8103, 0.5
  %v8113 = vtanh.pop %v8107
  %v8114 = vtanh.pop %v8108
  %v8115 = vtanh.pop %v8109
  %v8116 = vtanh.pop %v8110
  %v8117 = vtanh.pop %v8111
  %v8118 = vtanh.pop %v8112
  %v8119 = vadd.f32 %v8113, 1.0
  %v8120 = vadd.f32 %v8114, 1.0
  %v8121 = vadd.f32 %v8115, 1.0
  %v8122 = vadd.f32 %v8116, 1.0
  %v8123 = vadd.f32 %v8117, 1.0
  %v8124 = vadd.f32 %v8118, 1.0
  %v8125 = vmul.f32 %v8119, 0.5
  %v8126 = vmul.f32 %v8120, 0.5
  %v8127 = vmul.f32 %v8121, 0.5
  %v8128 = vmul.f32 %v8122, 0.5
  %v8129 = vmul.f32 %v8123, 0.5
  %v8130 = vmul.f32 %v8124, 0.5
  %v8131 = vtanh.pop %v8101
  %v8132 = vtanh.pop %v8105
  %v8133 = vmul.f32 %v8126, %v6919
  %v8134 = vmul.f32 %v8129, %v6920
  %v8135 = vmul.f32 %v8125, %v8131
  %v8136 = vmul.f32 %v8128, %v8132
  %v8137 = vadd.f32 %v8133, %v8135
  %v8138 = vadd.f32 %v8134, %v8136
  %v8139 = vtanh.pop %v8137
  %v8140 = vtanh.pop %v8138
  %v8141 = vmul.f32 %v8127, %v8139
  %v8142 = vmul.f32 %v8130, %v8140
  %s8143 = scalar_lea.vmem %s6, 80
  %8144 = vst [vmem:[%s8143] sm:$0xff] %v8141
  %8145 = vst [vmem:[%s8143 + $0x8] sm:$0xff] %v8142
  %8146 = vst [vmem:[#allocation2] sm:$0xff] %v8141
  %8147 = vst [vmem:[#allocation2 + $0x8] sm:$0xff] %v8142
  %8148 = vst [vmem:[#allocation3] sm:$0xff] %v8137
  %8149 = vst [vmem:[#allocation3 + $0x8] sm:$0xff] %v8138
  %s8150 = scalar_lea.vmem %s0, 48
  %v8151 = vld [vmem:[%s8150] sm:$0xf]
  %v8152 = vld [vmem:[%s8150 + $0x4] sm:$0xf]
  %v8153 = vld [vmem:[#allocation2] sm:$0xff]
  %v8154 = vld [vmem:[#allocation2 + $0x8] sm:$0xff]
  %v8155 = vld [vmem:[#allocation3] sm:$0xff]
  %v8156 = vld [vmem:[#allocation3 + $0x8] sm:$0xff]
  %v8157 = vpack.c.bf16 %v8154, %v8153
  %8158 = vmatprep.subr.bf16.mxu0 0
  %8159 = vmatpush1.bf16.msra.mxu0 %v223
  %8160 = vmatprep.subr.bf16.mxu0 0
  %8161 = vmatpush1.bf16.msra.mxu0 %v222
  %8162 = vmatprep.subr.bf16.mxu0 0
  %8163 = vmatpush1.bf16.msra.mxu0 %v221
  %8164 = vmatprep.subr.bf16.mxu0 0
  %8165 = vmatpush1.bf16.msra.mxu0 %v220
  %8166 = vmatprep.subr.bf16.mxu0 0
  %8167 = vmatpush1.bf16.msra.mxu0 %v219
  %8168 = vmatprep.subr.bf16.mxu0 0
  %8169 = vmatpush1.bf16.msra.mxu0 %v218
  %8170 = vmatprep.subr.bf16.mxu0 0
  %8171 = vmatpush1.bf16.msra.mxu0 %v217
  %8172 = vmatprep.subr.bf16.mxu0 0
  %8173 = vmatpush1.bf16.msra.mxu0 %v216
  %8174 = vmatprep.subr.bf16.mxu0 0
  %8175 = vmatpush2.bf16.msra.mxu0 0
  %8176 = vmatprep.subr.bf16.mxu0 0
  %8177 = vmatpush2.bf16.msra.mxu0 0
  %8178 = vmatprep.subr.bf16.mxu0 0
  %8179 = vmatpush2.bf16.msra.mxu0 0
  %8180 = vmatprep.subr.bf16.mxu0 0
  %8181 = vmatpush2.bf16.msra.mxu0 0
  %8182 = vmatprep.subr.bf16.mxu0 0
  %8183 = vmatpush2.bf16.msra.mxu0 0
  %8184 = vmatprep.subr.bf16.mxu0 0
  %8185 = vmatpush2.bf16.msra.mxu0 0
  %8186 = vmatprep.subr.bf16.mxu0 0
  %8187 = vmatpush2.bf16.msra.mxu0 0
  %8188 = vmatprep.subr.bf16.mxu0 0
  %8189 = vmatpush2.bf16.msra.mxu0 0
  %8190 = vmatprep.mubr.bf16.mxu0 0
  %8191 = vmatmul.mubr.bf16.gmra.mxu0 %v8157
  %v8192 = vpop.f32.mrf.mxu0
  %v8193 = vadd.f32 0.0, %v8192
  %v8194 = vpop.f32.mrf.mxu0
  %v8195 = vpop.f32.mrf.mxu0
  %v8196 = vadd.f32 0.0, %v8195
  %v8197 = vpop.f32.mrf.mxu0
  %8198 = vdwg.mxu0
  %v8201 = vcombine.high %v8193, %v8193
  %v8203 = vunpack.c.l.s4 1966171168
  %v8204 = vunpack.c.0.s8 %v8203
  %v8205 = vlaneseq
  %v8206 = vshrl.u32 %v8205, 7
  %v8207 = vsub.s32 %v8204, %v8206
  %v8208 = vrot.slane %v8193, %v8207
  %v8210 = vunpack.c.l.s4 1966171168
  %v8211 = vunpack.c.0.s8 %v8210
  %v8212 = vlaneseq
  %v8213 = vshrl.u32 %v8212, 7
  %v8214 = vsub.s32 %v8211, %v8213
  %v8215 = vrot.slane %v8201, %v8214
  %v8216 = vcombine.high %v8208, %v8208
  %v8217 = vcombine.high %v8215, %v8215
  %v8219 = vunpack.c.l.s4 1966171168
  %v8220 = vunpack.c.0.s8 %v8219
  %v8221 = vlaneseq
  %v8222 = vshrl.u32 %v8221, 7
  %v8223 = vsub.s32 %v8220, %v8222
  %v8224 = vrot.slane %v8208, %v8223
  %v8226 = vunpack.c.l.s4 1966171168
  %v8227 = vunpack.c.0.s8 %v8226
  %v8228 = vlaneseq
  %v8229 = vshrl.u32 %v8228, 7
  %v8230 = vsub.s32 %v8227, %v8229
  %v8231 = vrot.slane %v8215, %v8230
  %v8233 = vunpack.c.l.s4 1966171168
  %v8234 = vunpack.c.0.s8 %v8233
  %v8235 = vlaneseq
  %v8236 = vshrl.u32 %v8235, 7
  %v8237 = vsub.s32 %v8234, %v8236
  %v8238 = vrot.slane %v8216, %v8237
  %v8240 = vunpack.c.l.s4 1966171168
  %v8241 = vunpack.c.0.s8 %v8240
  %v8242 = vlaneseq
  %v8243 = vshrl.u32 %v8242, 7
  %v8244 = vsub.s32 %v8241, %v8243
  %v8245 = vrot.slane %v8217, %v8244
  %v8246 = vcombine.high %v8224, %v8224
  %v8247 = vcombine.high %v8231, %v8231
  %v8248 = vcombine.high %v8238, %v8238
  %v8249 = vcombine.high %v8245, %v8245
  %v8250 = vcombine.high %v8196, %v8196
  %v8252 = vunpack.c.l.s4 1966171168
  %v8253 = vunpack.c.0.s8 %v8252
  %v8254 = vlaneseq
  %v8255 = vshrl.u32 %v8254, 7
  %v8256 = vsub.s32 %v8253, %v8255
  %v8257 = vrot.slane %v8196, %v8256
  %v8259 = vunpack.c.l.s4 1966171168
  %v8260 = vunpack.c.0.s8 %v8259
  %v8261 = vlaneseq
  %v8262 = vshrl.u32 %v8261, 7
  %v8263 = vsub.s32 %v8260, %v8262
  %v8264 = vrot.slane %v8250, %v8263
  %v8265 = vcombine.high %v8257, %v8257
  %v8266 = vcombine.high %v8264, %v8264
  %v8268 = vunpack.c.l.s4 1966171168
  %v8269 = vunpack.c.0.s8 %v8268
  %v8270 = vlaneseq
  %v8271 = vshrl.u32 %v8270, 7
  %v8272 = vsub.s32 %v8269, %v8271
  %v8273 = vrot.slane %v8257, %v8272
  %v8275 = vunpack.c.l.s4 1966171168
  %v8276 = vunpack.c.0.s8 %v8275
  %v8277 = vlaneseq
  %v8278 = vshrl.u32 %v8277, 7
  %v8279 = vsub.s32 %v8276, %v8278
  %v8280 = vrot.slane %v8264, %v8279
  %v8282 = vunpack.c.l.s4 1966171168
  %v8283 = vunpack.c.0.s8 %v8282
  %v8284 = vlaneseq
  %v8285 = vshrl.u32 %v8284, 7
  %v8286 = vsub.s32 %v8283, %v8285
  %v8287 = vrot.slane %v8265, %v8286
  %v8289 = vunpack.c.l.s4 1966171168
  %v8290 = vunpack.c.0.s8 %v8289
  %v8291 = vlaneseq
  %v8292 = vshrl.u32 %v8291, 7
  %v8293 = vsub.s32 %v8290, %v8292
  %v8294 = vrot.slane %v8266, %v8293
  %v8295 = vcombine.high %v8273, %v8273
  %v8296 = vcombine.high %v8280, %v8280
  %v8297 = vcombine.high %v8287, %v8287
  %v8298 = vcombine.high %v8294, %v8294
  %v8299 = vlaneseq
  %v8300 = vshrl.u32 %v8299, 7
  %v8301 = vsub.s32 0, %v8300
  %v8302 = vrot.slane %v8224, %v8301
  %v8303 = vlaneseq
  %v8304 = vshrl.u32 %v8303, 7
  %v8305 = vsub.s32 0, %v8304
  %v8306 = vrot.slane %v8238, %v8305
  %v8307 = vlaneseq
  %v8308 = vshrl.u32 %v8307, 7
  %v8309 = vsub.s32 0, %v8308
  %v8310 = vrot.slane %v8246, %v8309
  %v8311 = vlaneseq
  %v8312 = vshrl.u32 %v8311, 7
  %v8313 = vsub.s32 0, %v8312
  %v8314 = vrot.slane %v8248, %v8313
  %v8315 = vlaneseq
  %v8316 = vshrl.u32 %v8315, 7
  %v8317 = vsub.s32 0, %v8316
  %v8318 = vrot.slane %v8231, %v8317
  %v8319 = vlaneseq
  %v8320 = vshrl.u32 %v8319, 7
  %v8321 = vsub.s32 0, %v8320
  %v8322 = vrot.slane %v8245, %v8321
  %v8323 = vlaneseq
  %v8324 = vshrl.u32 %v8323, 7
  %v8325 = vsub.s32 0, %v8324
  %v8326 = vrot.slane %v8247, %v8325
  %v8327 = vlaneseq
  %v8328 = vshrl.u32 %v8327, 7
  %v8329 = vsub.s32 0, %v8328
  %v8330 = vrot.slane %v8249, %v8329
  %v8331 = vlaneseq
  %v8332 = vshrl.u32 %v8331, 7
  %v8333 = vsub.s32 0, %v8332
  %v8334 = vrot.slane %v8273, %v8333
  %v8335 = vlaneseq
  %v8336 = vshrl.u32 %v8335, 7
  %v8337 = vsub.s32 0, %v8336
  %v8338 = vrot.slane %v8287, %v8337
  %v8339 = vlaneseq
  %v8340 = vshrl.u32 %v8339, 7
  %v8341 = vsub.s32 0, %v8340
  %v8342 = vrot.slane %v8295, %v8341
  %v8343 = vlaneseq
  %v8344 = vshrl.u32 %v8343, 7
  %v8345 = vsub.s32 0, %v8344
  %v8346 = vrot.slane %v8297, %v8345
  %v8347 = vlaneseq
  %v8348 = vshrl.u32 %v8347, 7
  %v8349 = vsub.s32 0, %v8348
  %v8350 = vrot.slane %v8280, %v8349
  %v8351 = vlaneseq
  %v8352 = vshrl.u32 %v8351, 7
  %v8353 = vsub.s32 0, %v8352
  %v8354 = vrot.slane %v8294, %v8353
  %v8355 = vlaneseq
  %v8356 = vshrl.u32 %v8355, 7
  %v8357 = vsub.s32 0, %v8356
  %v8358 = vrot.slane %v8296, %v8357
  %v8359 = vlaneseq
  %v8360 = vshrl.u32 %v8359, 7
  %v8361 = vsub.s32 0, %v8360
  %v8362 = vrot.slane %v8298, %v8361
  %v8379 = vmul.f32 %v8302, %v40
  %v8380 = vmul.f32 %v8306, %v41
  %v8381 = vmul.f32 %v8310, %v42
  %v8382 = vmul.f32 %v8314, %v43
  %v8383 = vmul.f32 %v8318, %v44
  %v8384 = vmul.f32 %v8322, %v45
  %v8385 = vmul.f32 %v8326, %v46
  %v8386 = vmul.f32 %v8330, %v47
  %v8387 = vmul.f32 %v8334, %v48
  %v8388 = vmul.f32 %v8338, %v49
  %v8389 = vmul.f32 %v8342, %v50
  %v8390 = vmul.f32 %v8346, %v51
  %v8391 = vmul.f32 %v8350, %v52
  %v8392 = vmul.f32 %v8354, %v53
  %v8393 = vmul.f32 %v8358, %v54
  %v8394 = vmul.f32 %v8362, %v55
  %8395 = vadd.xlane.f32.xlu0 %v8379
  %v8396 = vpop.xlane.xlu0 %8395
  %8397 = vadd.xlane.f32.xlu0 %v8380
  %v8398 = vpop.xlane.xlu0 %8397
  %8399 = vadd.xlane.f32.xlu0 %v8381
  %v8400 = vpop.xlane.xlu0 %8399
  %8401 = vadd.xlane.f32.xlu0 %v8382
  %v8402 = vpop.xlane.xlu0 %8401
  %8403 = vadd.xlane.f32.xlu0 %v8383
  %v8404 = vpop.xlane.xlu0 %8403
  %8405 = vadd.xlane.f32.xlu0 %v8384
  %v8406 = vpop.xlane.xlu0 %8405
  %8407 = vadd.xlane.f32.xlu0 %v8385
  %v8408 = vpop.xlane.xlu0 %8407
  %8409 = vadd.xlane.f32.xlu0 %v8386
  %v8410 = vpop.xlane.xlu0 %8409
  %8411 = vadd.xlane.f32.xlu0 %v8387
  %v8412 = vpop.xlane.xlu0 %8411
  %8413 = vadd.xlane.f32.xlu0 %v8388
  %v8414 = vpop.xlane.xlu0 %8413
  %8415 = vadd.xlane.f32.xlu0 %v8389
  %v8416 = vpop.xlane.xlu0 %8415
  %8417 = vadd.xlane.f32.xlu0 %v8390
  %v8418 = vpop.xlane.xlu0 %8417
  %8419 = vadd.xlane.f32.xlu0 %v8391
  %v8420 = vpop.xlane.xlu0 %8419
  %8421 = vadd.xlane.f32.xlu0 %v8392
  %v8422 = vpop.xlane.xlu0 %8421
  %8423 = vadd.xlane.f32.xlu0 %v8393
  %v8424 = vpop.xlane.xlu0 %8423
  %8425 = vadd.xlane.f32.xlu0 %v8394
  %v8426 = vpop.xlane.xlu0 %8425
  %v8443 = vlaneseq
  %v8444 = vshrl.u32 %v8443, 7
  %v8445 = vsub.s32 %v518, %v8444
  %v8446 = vrot.slane %v8396, %v8445
  %v8447 = vlaneseq
  %v8448 = vshrl.u32 %v8447, 7
  %v8449 = vsub.s32 %v518, %v8448
  %v8450 = vrot.slane %v8398, %v8449
  %v8451 = vlaneseq
  %v8452 = vshrl.u32 %v8451, 7
  %v8453 = vsub.s32 %v518, %v8452
  %v8454 = vrot.slane %v8400, %v8453
  %v8455 = vlaneseq
  %v8456 = vshrl.u32 %v8455, 7
  %v8457 = vsub.s32 %v518, %v8456
  %v8458 = vrot.slane %v8402, %v8457
  %v8459 = vlaneseq
  %v8460 = vshrl.u32 %v8459, 7
  %v8461 = vsub.s32 %v518, %v8460
  %v8462 = vrot.slane %v8404, %v8461
  %v8463 = vlaneseq
  %v8464 = vshrl.u32 %v8463, 7
  %v8465 = vsub.s32 %v518, %v8464
  %v8466 = vrot.slane %v8406, %v8465
  %v8467 = vlaneseq
  %v8468 = vshrl.u32 %v8467, 7
  %v8469 = vsub.s32 %v518, %v8468
  %v8470 = vrot.slane %v8408, %v8469
  %v8471 = vlaneseq
  %v8472 = vshrl.u32 %v8471, 7
  %v8473 = vsub.s32 %v518, %v8472
  %v8474 = vrot.slane %v8410, %v8473
  %v8475 = vlaneseq
  %v8476 = vshrl.u32 %v8475, 7
  %v8477 = vsub.s32 %v518, %v8476
  %v8478 = vrot.slane %v8412, %v8477
  %v8479 = vlaneseq
  %v8480 = vshrl.u32 %v8479, 7
  %v8481 = vsub.s32 %v518, %v8480
  %v8482 = vrot.slane %v8414, %v8481
  %v8483 = vlaneseq
  %v8484 = vshrl.u32 %v8483, 7
  %v8485 = vsub.s32 %v518, %v8484
  %v8486 = vrot.slane %v8416, %v8485
  %v8487 = vlaneseq
  %v8488 = vshrl.u32 %v8487, 7
  %v8489 = vsub.s32 %v518, %v8488
  %v8490 = vrot.slane %v8418, %v8489
  %v8491 = vlaneseq
  %v8492 = vshrl.u32 %v8491, 7
  %v8493 = vsub.s32 %v518, %v8492
  %v8494 = vrot.slane %v8420, %v8493
  %v8495 = vlaneseq
  %v8496 = vshrl.u32 %v8495, 7
  %v8497 = vsub.s32 %v518, %v8496
  %v8498 = vrot.slane %v8422, %v8497
  %v8499 = vlaneseq
  %v8500 = vshrl.u32 %v8499, 7
  %v8501 = vsub.s32 %v518, %v8500
  %v8502 = vrot.slane %v8424, %v8501
  %v8503 = vlaneseq
  %v8504 = vshrl.u32 %v8503, 7
  %v8505 = vsub.s32 %v518, %v8504
  %v8506 = vrot.slane %v8426, %v8505
  %v8507 = vsel %vm583, %v8450, %v8446
  %v8508 = vsel %vm585, %v8454, %v8507
  %v8509 = vsel %vm587, %v8458, %v8508
  %v8510 = vsel %vm589, %v8462, %v8509
  %v8511 = vsel %vm591, %v8466, %v8510
  %v8512 = vsel %vm593, %v8470, %v8511
  %v8513 = vsel %vm595, %v8474, %v8512
  %v8514 = vsel %vm583, %v8482, %v8478
  %v8515 = vsel %vm585, %v8486, %v8514
  %v8516 = vsel %vm587, %v8490, %v8515
  %v8517 = vsel %vm589, %v8494, %v8516
  %v8518 = vsel %vm591, %v8498, %v8517
  %v8519 = vsel %vm593, %v8502, %v8518
  %v8520 = vsel %vm595, %v8506, %v8519
  %v8523 = vsel %vm606, %v8513, -inf
  %8524 = vmax.xlane.f32.xlu0 %v8523
  %v8525 = vpop.xlane.xlu0 %8524
  %v8526 = vsel %vm606, %v8520, -inf
  %8527 = vmax.xlane.f32.xlu0 %v8526
  %v8528 = vpop.xlane.xlu0 %8527
  %v8531 = vlaneseq
  %v8532 = vshrl.u32 %v8531, 7
  %v8533 = vsub.s32 0, %v8532
  %v8534 = vrot.slane %v8525, %v8533
  %v8535 = vlaneseq
  %v8536 = vshrl.u32 %v8535, 7
  %v8537 = vsub.s32 1, %v8536
  %v8538 = vrot.slane %v8525, %v8537
  %v8539 = vlaneseq
  %v8540 = vshrl.u32 %v8539, 7
  %v8541 = vsub.s32 2, %v8540
  %v8542 = vrot.slane %v8525, %v8541
  %v8543 = vlaneseq
  %v8544 = vshrl.u32 %v8543, 7
  %v8545 = vsub.s32 3, %v8544
  %v8546 = vrot.slane %v8525, %v8545
  %v8547 = vlaneseq
  %v8548 = vshrl.u32 %v8547, 7
  %v8549 = vsub.s32 4, %v8548
  %v8550 = vrot.slane %v8525, %v8549
  %v8551 = vlaneseq
  %v8552 = vshrl.u32 %v8551, 7
  %v8553 = vsub.s32 5, %v8552
  %v8554 = vrot.slane %v8525, %v8553
  %v8555 = vlaneseq
  %v8556 = vshrl.u32 %v8555, 7
  %v8557 = vsub.s32 6, %v8556
  %v8558 = vrot.slane %v8525, %v8557
  %v8559 = vlaneseq
  %v8560 = vshrl.u32 %v8559, 7
  %v8561 = vsub.s32 7, %v8560
  %v8562 = vrot.slane %v8525, %v8561
  %v8563 = vlaneseq
  %v8564 = vshrl.u32 %v8563, 7
  %v8565 = vsub.s32 0, %v8564
  %v8566 = vrot.slane %v8528, %v8565
  %v8567 = vlaneseq
  %v8568 = vshrl.u32 %v8567, 7
  %v8569 = vsub.s32 1, %v8568
  %v8570 = vrot.slane %v8528, %v8569
  %v8571 = vlaneseq
  %v8572 = vshrl.u32 %v8571, 7
  %v8573 = vsub.s32 2, %v8572
  %v8574 = vrot.slane %v8528, %v8573
  %v8575 = vlaneseq
  %v8576 = vshrl.u32 %v8575, 7
  %v8577 = vsub.s32 3, %v8576
  %v8578 = vrot.slane %v8528, %v8577
  %v8579 = vlaneseq
  %v8580 = vshrl.u32 %v8579, 7
  %v8581 = vsub.s32 4, %v8580
  %v8582 = vrot.slane %v8528, %v8581
  %v8583 = vlaneseq
  %v8584 = vshrl.u32 %v8583, 7
  %v8585 = vsub.s32 5, %v8584
  %v8586 = vrot.slane %v8528, %v8585
  %v8587 = vlaneseq
  %v8588 = vshrl.u32 %v8587, 7
  %v8589 = vsub.s32 6, %v8588
  %v8590 = vrot.slane %v8528, %v8589
  %v8591 = vlaneseq
  %v8592 = vshrl.u32 %v8591, 7
  %v8593 = vsub.s32 7, %v8592
  %v8594 = vrot.slane %v8528, %v8593
  %v8611 = vsub.f32 %v8396, %v8534
  %v8612 = vsub.f32 %v8398, %v8538
  %v8613 = vsub.f32 %v8400, %v8542
  %v8614 = vsub.f32 %v8402, %v8546
  %v8615 = vsub.f32 %v8404, %v8550
  %v8616 = vsub.f32 %v8406, %v8554
  %v8617 = vsub.f32 %v8408, %v8558
  %v8618 = vsub.f32 %v8410, %v8562
  %v8619 = vsub.f32 %v8412, %v8566
  %v8620 = vsub.f32 %v8414, %v8570
  %v8621 = vsub.f32 %v8416, %v8574
  %v8622 = vsub.f32 %v8418, %v8578
  %v8623 = vsub.f32 %v8420, %v8582
  %v8624 = vsub.f32 %v8422, %v8586
  %v8625 = vsub.f32 %v8424, %v8590
  %v8626 = vsub.f32 %v8426, %v8594
  %v8627 = vmul.f32 %v8611, 1.442695
  %v8628 = vpow.pop %v8627
  %v8629 = vmul.f32 %v8612, 1.442695
  %v8630 = vpow.pop %v8629
  %v8631 = vmul.f32 %v8613, 1.442695
  %v8632 = vpow.pop %v8631
  %v8633 = vmul.f32 %v8614, 1.442695
  %v8634 = vpow.pop %v8633
  %v8635 = vmul.f32 %v8615, 1.442695
  %v8636 = vpow.pop %v8635
  %v8637 = vmul.f32 %v8616, 1.442695
  %v8638 = vpow.pop %v8637
  %v8639 = vmul.f32 %v8617, 1.442695
  %v8640 = vpow.pop %v8639
  %v8641 = vmul.f32 %v8618, 1.442695
  %v8642 = vpow.pop %v8641
  %v8643 = vmul.f32 %v8619, 1.442695
  %v8644 = vpow.pop %v8643
  %v8645 = vmul.f32 %v8620, 1.442695
  %v8646 = vpow.pop %v8645
  %v8647 = vmul.f32 %v8621, 1.442695
  %v8648 = vpow.pop %v8647
  %v8649 = vmul.f32 %v8622, 1.442695
  %v8650 = vpow.pop %v8649
  %v8651 = vmul.f32 %v8623, 1.442695
  %v8652 = vpow.pop %v8651
  %v8653 = vmul.f32 %v8624, 1.442695
  %v8654 = vpow.pop %v8653
  %v8655 = vmul.f32 %v8625, 1.442695
  %v8656 = vpow.pop %v8655
  %v8657 = vmul.f32 %v8626, 1.442695
  %v8658 = vpow.pop %v8657
  %8675 = vset.pattern.permute.xlu0 0
  %8676 = vperm.xlu0 %8675, %v8628
  %v8677 = vpop.permute.xlu0 %8676
  %8678 = vset.pattern.permute.xlu0 0
  %8679 = vperm.xlu0 %8678, %v8630
  %v8680 = vpop.permute.xlu0 %8679
  %8681 = vset.pattern.permute.xlu0 0
  %8682 = vperm.xlu0 %8681, %v8632
  %v8683 = vpop.permute.xlu0 %8682
  %8684 = vset.pattern.permute.xlu0 0
  %8685 = vperm.xlu0 %8684, %v8634
  %v8686 = vpop.permute.xlu0 %8685
  %8687 = vset.pattern.permute.xlu0 0
  %8688 = vperm.xlu0 %8687, %v8636
  %v8689 = vpop.permute.xlu0 %8688
  %8690 = vset.pattern.permute.xlu0 0
  %8691 = vperm.xlu0 %8690, %v8638
  %v8692 = vpop.permute.xlu0 %8691
  %8693 = vset.pattern.permute.xlu0 0
  %8694 = vperm.xlu0 %8693, %v8640
  %v8695 = vpop.permute.xlu0 %8694
  %8696 = vset.pattern.permute.xlu0 0
  %8697 = vperm.xlu0 %8696, %v8642
  %v8698 = vpop.permute.xlu0 %8697
  %8699 = vset.pattern.permute.xlu0 0
  %8700 = vperm.xlu0 %8699, %v8644
  %v8701 = vpop.permute.xlu0 %8700
  %8702 = vset.pattern.permute.xlu0 0
  %8703 = vperm.xlu0 %8702, %v8646
  %v8704 = vpop.permute.xlu0 %8703
  %8705 = vset.pattern.permute.xlu0 0
  %8706 = vperm.xlu0 %8705, %v8648
  %v8707 = vpop.permute.xlu0 %8706
  %8708 = vset.pattern.permute.xlu0 0
  %8709 = vperm.xlu0 %8708, %v8650
  %v8710 = vpop.permute.xlu0 %8709
  %8711 = vset.pattern.permute.xlu0 0
  %8712 = vperm.xlu0 %8711, %v8652
  %v8713 = vpop.permute.xlu0 %8712
  %8714 = vset.pattern.permute.xlu0 0
  %8715 = vperm.xlu0 %8714, %v8654
  %v8716 = vpop.permute.xlu0 %8715
  %8717 = vset.pattern.permute.xlu0 0
  %8718 = vperm.xlu0 %8717, %v8656
  %v8719 = vpop.permute.xlu0 %8718
  %8720 = vset.pattern.permute.xlu0 0
  %8721 = vperm.xlu0 %8720, %v8658
  %v8722 = vpop.permute.xlu0 %8721
  %v8723 = vlaneseq
  %v8724 = vshrl.u32 %v8723, 7
  %v8725 = vsub.s32 %v518, %v8724
  %v8726 = vrot.slane %v8677, %v8725
  %v8727 = vlaneseq
  %v8728 = vshrl.u32 %v8727, 7
  %v8729 = vsub.s32 %v518, %v8728
  %v8730 = vrot.slane %v8680, %v8729
  %v8731 = vlaneseq
  %v8732 = vshrl.u32 %v8731, 7
  %v8733 = vsub.s32 %v518, %v8732
  %v8734 = vrot.slane %v8683, %v8733
  %v8735 = vlaneseq
  %v8736 = vshrl.u32 %v8735, 7
  %v8737 = vsub.s32 %v518, %v8736
  %v8738 = vrot.slane %v8686, %v8737
  %v8739 = vlaneseq
  %v8740 = vshrl.u32 %v8739, 7
  %v8741 = vsub.s32 %v518, %v8740
  %v8742 = vrot.slane %v8689, %v8741
  %v8743 = vlaneseq
  %v8744 = vshrl.u32 %v8743, 7
  %v8745 = vsub.s32 %v518, %v8744
  %v8746 = vrot.slane %v8692, %v8745
  %v8747 = vlaneseq
  %v8748 = vshrl.u32 %v8747, 7
  %v8749 = vsub.s32 %v518, %v8748
  %v8750 = vrot.slane %v8695, %v8749
  %v8751 = vlaneseq
  %v8752 = vshrl.u32 %v8751, 7
  %v8753 = vsub.s32 %v518, %v8752
  %v8754 = vrot.slane %v8698, %v8753
  %v8755 = vlaneseq
  %v8756 = vshrl.u32 %v8755, 7
  %v8757 = vsub.s32 %v518, %v8756
  %v8758 = vrot.slane %v8701, %v8757
  %v8759 = vlaneseq
  %v8760 = vshrl.u32 %v8759, 7
  %v8761 = vsub.s32 %v518, %v8760
  %v8762 = vrot.slane %v8704, %v8761
  %v8763 = vlaneseq
  %v8764 = vshrl.u32 %v8763, 7
  %v8765 = vsub.s32 %v518, %v8764
  %v8766 = vrot.slane %v8707, %v8765
  %v8767 = vlaneseq
  %v8768 = vshrl.u32 %v8767, 7
  %v8769 = vsub.s32 %v518, %v8768
  %v8770 = vrot.slane %v8710, %v8769
  %v8771 = vlaneseq
  %v8772 = vshrl.u32 %v8771, 7
  %v8773 = vsub.s32 %v518, %v8772
  %v8774 = vrot.slane %v8713, %v8773
  %v8775 = vlaneseq
  %v8776 = vshrl.u32 %v8775, 7
  %v8777 = vsub.s32 %v518, %v8776
  %v8778 = vrot.slane %v8716, %v8777
  %v8779 = vlaneseq
  %v8780 = vshrl.u32 %v8779, 7
  %v8781 = vsub.s32 %v518, %v8780
  %v8782 = vrot.slane %v8719, %v8781
  %v8783 = vlaneseq
  %v8784 = vshrl.u32 %v8783, 7
  %v8785 = vsub.s32 %v518, %v8784
  %v8786 = vrot.slane %v8722, %v8785
  %v8787 = vsel %vm583, %v8730, %v8726
  %v8788 = vsel %vm585, %v8734, %v8787
  %v8789 = vsel %vm587, %v8738, %v8788
  %v8790 = vsel %vm589, %v8742, %v8789
  %v8791 = vsel %vm591, %v8746, %v8790
  %v8792 = vsel %vm593, %v8750, %v8791
  %v8793 = vsel %vm595, %v8754, %v8792
  %v8794 = vsel %vm583, %v8762, %v8758
  %v8795 = vsel %vm585, %v8766, %v8794
  %v8796 = vsel %vm587, %v8770, %v8795
  %v8797 = vsel %vm589, %v8774, %v8796
  %v8798 = vsel %vm591, %v8778, %v8797
  %v8799 = vsel %vm593, %v8782, %v8798
  %v8800 = vsel %vm595, %v8786, %v8799
  %v8803 = vsel %vm606, %v8793, 0.0
  %8804 = vadd.xlane.f32.xlu0 %v8803
  %v8805 = vpop.xlane.xlu0 %8804
  %v8806 = vsel %vm606, %v8800, 0.0
  %8807 = vadd.xlane.f32.xlu0 %v8806
  %v8808 = vpop.xlane.xlu0 %8807
  %v8809 = vrcp.pop %v8805
  %v8810 = vrcp.pop %v8808
  %v8813 = vlaneseq
  %v8814 = vshrl.u32 %v8813, 7
  %v8815 = vsub.s32 0, %v8814
  %v8816 = vrot.slane %v8809, %v8815
  %v8817 = vlaneseq
  %v8818 = vshrl.u32 %v8817, 7
  %v8819 = vsub.s32 1, %v8818
  %v8820 = vrot.slane %v8809, %v8819
  %v8821 = vlaneseq
  %v8822 = vshrl.u32 %v8821, 7
  %v8823 = vsub.s32 2, %v8822
  %v8824 = vrot.slane %v8809, %v8823
  %v8825 = vlaneseq
  %v8826 = vshrl.u32 %v8825, 7
  %v8827 = vsub.s32 3, %v8826
  %v8828 = vrot.slane %v8809, %v8827
  %v8829 = vlaneseq
  %v8830 = vshrl.u32 %v8829, 7
  %v8831 = vsub.s32 4, %v8830
  %v8832 = vrot.slane %v8809, %v8831
  %v8833 = vlaneseq
  %v8834 = vshrl.u32 %v8833, 7
  %v8835 = vsub.s32 5, %v8834
  %v8836 = vrot.slane %v8809, %v8835
  %v8837 = vlaneseq
  %v8838 = vshrl.u32 %v8837, 7
  %v8839 = vsub.s32 6, %v8838
  %v8840 = vrot.slane %v8809, %v8839
  %v8841 = vlaneseq
  %v8842 = vshrl.u32 %v8841, 7
  %v8843 = vsub.s32 7, %v8842
  %v8844 = vrot.slane %v8809, %v8843
  %v8845 = vlaneseq
  %v8846 = vshrl.u32 %v8845, 7
  %v8847 = vsub.s32 0, %v8846
  %v8848 = vrot.slane %v8810, %v8847
  %v8849 = vlaneseq
  %v8850 = vshrl.u32 %v8849, 7
  %v8851 = vsub.s32 1, %v8850
  %v8852 = vrot.slane %v8810, %v8851
  %v8853 = vlaneseq
  %v8854 = vshrl.u32 %v8853, 7
  %v8855 = vsub.s32 2, %v8854
  %v8856 = vrot.slane %v8810, %v8855
  %v8857 = vlaneseq
  %v8858 = vshrl.u32 %v8857, 7
  %v8859 = vsub.s32 3, %v8858
  %v8860 = vrot.slane %v8810, %v8859
  %v8861 = vlaneseq
  %v8862 = vshrl.u32 %v8861, 7
  %v8863 = vsub.s32 4, %v8862
  %v8864 = vrot.slane %v8810, %v8863
  %v8865 = vlaneseq
  %v8866 = vshrl.u32 %v8865, 7
  %v8867 = vsub.s32 5, %v8866
  %v8868 = vrot.slane %v8810, %v8867
  %v8869 = vlaneseq
  %v8870 = vshrl.u32 %v8869, 7
  %v8871 = vsub.s32 6, %v8870
  %v8872 = vrot.slane %v8810, %v8871
  %v8873 = vlaneseq
  %v8874 = vshrl.u32 %v8873, 7
  %v8875 = vsub.s32 7, %v8874
  %v8876 = vrot.slane %v8810, %v8875
  %v8893 = vmul.f32 %v8628, %v8816
  %v8894 = vmul.f32 %v8630, %v8820
  %v8895 = vmul.f32 %v8632, %v8824
  %v8896 = vmul.f32 %v8634, %v8828
  %v8897 = vmul.f32 %v8636, %v8832
  %v8898 = vmul.f32 %v8638, %v8836
  %v8899 = vmul.f32 %v8640, %v8840
  %v8900 = vmul.f32 %v8642, %v8844
  %v8901 = vmul.f32 %v8644, %v8848
  %v8902 = vmul.f32 %v8646, %v8852
  %v8903 = vmul.f32 %v8648, %v8856
  %v8904 = vmul.f32 %v8650, %v8860
  %v8905 = vmul.f32 %v8652, %v8864
  %v8906 = vmul.f32 %v8654, %v8868
  %v8907 = vmul.f32 %v8656, %v8872
  %v8908 = vmul.f32 %v8658, %v8876
  %8910 = vset.pattern.permute.xlu0 0
  %8911 = vperm.xlu0 %8910, %v8893
  %v8912 = vpop.permute.xlu0 %8911
  %8915 = vset.pattern.permute.xlu0 0
  %8916 = vperm.xlu0 %8915, %v8894
  %v8917 = vpop.permute.xlu0 %8916
  %8920 = vset.pattern.permute.xlu0 0
  %8921 = vperm.xlu0 %8920, %v8895
  %v8922 = vpop.permute.xlu0 %8921
  %8925 = vset.pattern.permute.xlu0 0
  %8926 = vperm.xlu0 %8925, %v8896
  %v8927 = vpop.permute.xlu0 %8926
  %8930 = vset.pattern.permute.xlu0 0
  %8931 = vperm.xlu0 %8930, %v8897
  %v8932 = vpop.permute.xlu0 %8931
  %8935 = vset.pattern.permute.xlu0 0
  %8936 = vperm.xlu0 %8935, %v8898
  %v8937 = vpop.permute.xlu0 %8936
  %8940 = vset.pattern.permute.xlu0 0
  %8941 = vperm.xlu0 %8940, %v8899
  %v8942 = vpop.permute.xlu0 %8941
  %8945 = vset.pattern.permute.xlu0 0
  %8946 = vperm.xlu0 %8945, %v8900
  %v8947 = vpop.permute.xlu0 %8946
  %8950 = vset.pattern.permute.xlu0 0
  %8951 = vperm.xlu0 %8950, %v8901
  %v8952 = vpop.permute.xlu0 %8951
  %8955 = vset.pattern.permute.xlu0 0
  %8956 = vperm.xlu0 %8955, %v8902
  %v8957 = vpop.permute.xlu0 %8956
  %8960 = vset.pattern.permute.xlu0 0
  %8961 = vperm.xlu0 %8960, %v8903
  %v8962 = vpop.permute.xlu0 %8961
  %8965 = vset.pattern.permute.xlu0 0
  %8966 = vperm.xlu0 %8965, %v8904
  %v8967 = vpop.permute.xlu0 %8966
  %8970 = vset.pattern.permute.xlu0 0
  %8971 = vperm.xlu0 %8970, %v8905
  %v8972 = vpop.permute.xlu0 %8971
  %8975 = vset.pattern.permute.xlu0 0
  %8976 = vperm.xlu0 %8975, %v8906
  %v8977 = vpop.permute.xlu0 %8976
  %8980 = vset.pattern.permute.xlu0 0
  %8981 = vperm.xlu0 %8980, %v8907
  %v8982 = vpop.permute.xlu0 %8981
  %8985 = vset.pattern.permute.xlu0 0
  %8986 = vperm.xlu0 %8985, %v8908
  %v8987 = vpop.permute.xlu0 %8986
  %v8989 = vmul.f32 %v8912, %v40
  %v8990 = vmul.f32 %v8917, %v41
  %v8991 = vmul.f32 %v8922, %v42
  %v8992 = vmul.f32 %v8927, %v43
  %v8993 = vmul.f32 %v8932, %v44
  %v8994 = vmul.f32 %v8937, %v45
  %v8995 = vmul.f32 %v8942, %v46
  %v8996 = vmul.f32 %v8947, %v47
  %v8997 = vmul.f32 %v8952, %v48
  %v8998 = vmul.f32 %v8957, %v49
  %v8999 = vmul.f32 %v8962, %v50
  %v9000 = vmul.f32 %v8967, %v51
  %v9001 = vmul.f32 %v8972, %v52
  %v9002 = vmul.f32 %v8977, %v53
  %v9003 = vmul.f32 %v8982, %v54
  %v9004 = vmul.f32 %v8987, %v55
  %v9005 = vrot.slane %v8989, 4
  %v9006 = vadd.f32 %v8989, %v9005
  %v9007 = vrot.slane %v9006, 2
  %v9008 = vadd.f32 %v9006, %v9007
  %v9009 = vrot.slane %v9008, 1
  %v9010 = vadd.f32 %v9008, %v9009
  %v9011 = vrot.slane %v8990, 4
  %v9012 = vadd.f32 %v8990, %v9011
  %v9013 = vrot.slane %v9012, 2
  %v9014 = vadd.f32 %v9012, %v9013
  %v9015 = vrot.slane %v9014, 1
  %v9016 = vadd.f32 %v9014, %v9015
  %v9017 = vrot.slane %v8991, 4
  %v9018 = vadd.f32 %v8991, %v9017
  %v9019 = vrot.slane %v9018, 2
  %v9020 = vadd.f32 %v9018, %v9019
  %v9021 = vrot.slane %v9020, 1
  %v9022 = vadd.f32 %v9020, %v9021
  %v9023 = vrot.slane %v8992, 4
  %v9024 = vadd.f32 %v8992, %v9023
  %v9025 = vrot.slane %v9024, 2
  %v9026 = vadd.f32 %v9024, %v9025
  %v9027 = vrot.slane %v9026, 1
  %v9028 = vadd.f32 %v9026, %v9027
  %v9029 = vrot.slane %v8993, 4
  %v9030 = vadd.f32 %v8993, %v9029
  %v9031 = vrot.slane %v9030, 2
  %v9032 = vadd.f32 %v9030, %v9031
  %v9033 = vrot.slane %v9032, 1
  %v9034 = vadd.f32 %v9032, %v9033
  %v9035 = vrot.slane %v8994, 4
  %v9036 = vadd.f32 %v8994, %v9035
  %v9037 = vrot.slane %v9036, 2
  %v9038 = vadd.f32 %v9036, %v9037
  %v9039 = vrot.slane %v9038, 1
  %v9040 = vadd.f32 %v9038, %v9039
  %v9041 = vrot.slane %v8995, 4
  %v9042 = vadd.f32 %v8995, %v9041
  %v9043 = vrot.slane %v9042, 2
  %v9044 = vadd.f32 %v9042, %v9043
  %v9045 = vrot.slane %v9044, 1
  %v9046 = vadd.f32 %v9044, %v9045
  %v9047 = vrot.slane %v8996, 4
  %v9048 = vadd.f32 %v8996, %v9047
  %v9049 = vrot.slane %v9048, 2
  %v9050 = vadd.f32 %v9048, %v9049
  %v9051 = vrot.slane %v9050, 1
  %v9052 = vadd.f32 %v9050, %v9051
  %v9053 = vrot.slane %v8997, 4
  %v9054 = vadd.f32 %v8997, %v9053
  %v9055 = vrot.slane %v9054, 2
  %v9056 = vadd.f32 %v9054, %v9055
  %v9057 = vrot.slane %v9056, 1
  %v9058 = vadd.f32 %v9056, %v9057
  %v9059 = vrot.slane %v8998, 4
  %v9060 = vadd.f32 %v8998, %v9059
  %v9061 = vrot.slane %v9060, 2
  %v9062 = vadd.f32 %v9060, %v9061
  %v9063 = vrot.slane %v9062, 1
  %v9064 = vadd.f32 %v9062, %v9063
  %v9065 = vrot.slane %v8999, 4
  %v9066 = vadd.f32 %v8999, %v9065
  %v9067 = vrot.slane %v9066, 2
  %v9068 = vadd.f32 %v9066, %v9067
  %v9069 = vrot.slane %v9068, 1
  %v9070 = vadd.f32 %v9068, %v9069
  %v9071 = vrot.slane %v9000, 4
  %v9072 = vadd.f32 %v9000, %v9071
  %v9073 = vrot.slane %v9072, 2
  %v9074 = vadd.f32 %v9072, %v9073
  %v9075 = vrot.slane %v9074, 1
  %v9076 = vadd.f32 %v9074, %v9075
  %v9077 = vrot.slane %v9001, 4
  %v9078 = vadd.f32 %v9001, %v9077
  %v9079 = vrot.slane %v9078, 2
  %v9080 = vadd.f32 %v9078, %v9079
  %v9081 = vrot.slane %v9080, 1
  %v9082 = vadd.f32 %v9080, %v9081
  %v9083 = vrot.slane %v9002, 4
  %v9084 = vadd.f32 %v9002, %v9083
  %v9085 = vrot.slane %v9084, 2
  %v9086 = vadd.f32 %v9084, %v9085
  %v9087 = vrot.slane %v9086, 1
  %v9088 = vadd.f32 %v9086, %v9087
  %v9089 = vrot.slane %v9003, 4
  %v9090 = vadd.f32 %v9003, %v9089
  %v9091 = vrot.slane %v9090, 2
  %v9092 = vadd.f32 %v9090, %v9091
  %v9093 = vrot.slane %v9092, 1
  %v9094 = vadd.f32 %v9092, %v9093
  %v9095 = vrot.slane %v9004, 4
  %v9096 = vadd.f32 %v9004, %v9095
  %v9097 = vrot.slane %v9096, 2
  %v9098 = vadd.f32 %v9096, %v9097
  %v9099 = vrot.slane %v9098, 1
  %v9100 = vadd.f32 %v9098, %v9099
  %v9101 = vpack.c.bf16 %v9010, %v9010
  %v9102 = vpack.c.bf16 %v9016, %v9016
  %v9103 = vpack.c.bf16 %v9022, %v9022
  %v9104 = vpack.c.bf16 %v9028, %v9028
  %v9105 = vpack.c.bf16 %v9034, %v9034
  %v9106 = vpack.c.bf16 %v9040, %v9040
  %v9107 = vpack.c.bf16 %v9046, %v9046
  %v9108 = vpack.c.bf16 %v9052, %v9052
  %v9109 = vpack.c.bf16 %v9058, %v9058
  %v9110 = vpack.c.bf16 %v9064, %v9064
  %v9111 = vpack.c.bf16 %v9070, %v9070
  %v9112 = vpack.c.bf16 %v9076, %v9076
  %v9113 = vpack.c.bf16 %v9082, %v9082
  %v9114 = vpack.c.bf16 %v9088, %v9088
  %v9115 = vpack.c.bf16 %v9094, %v9094
  %v9116 = vpack.c.bf16 %v9100, %v9100
  %v9119 = vunpack.c.l.b16 %v8151
  %v9120 = vunpack.c.l.b16 %v8152
  %v9121 = vpack.c.b16 %v9120, %v9119
  %v9139 = vunpack.c.l.b16 %v9101
  %v9140 = vunpack.c.l.b16 %v9102
  %v9141 = vunpack.c.l.b16 %v9103
  %v9142 = vunpack.c.l.b16 %v9104
  %v9143 = vunpack.c.l.b16 %v9105
  %v9144 = vunpack.c.l.b16 %v9106
  %v9145 = vunpack.c.l.b16 %v9107
  %v9146 = vunpack.c.l.b16 %v9108
  %v9147 = vunpack.c.l.b16 %v9109
  %v9148 = vunpack.c.l.b16 %v9110
  %v9149 = vunpack.c.l.b16 %v9111
  %v9150 = vunpack.c.l.b16 %v9112
  %v9151 = vunpack.c.l.b16 %v9113
  %v9152 = vunpack.c.l.b16 %v9114
  %v9153 = vunpack.c.l.b16 %v9115
  %v9154 = vunpack.c.l.b16 %v9116
  %v9155 = vsel %vm583, %v9140, %v9139
  %v9156 = vsel %vm585, %v9141, %v9155
  %v9157 = vsel %vm587, %v9142, %v9156
  %v9158 = vsel %vm589, %v9143, %v9157
  %v9159 = vsel %vm591, %v9144, %v9158
  %v9160 = vsel %vm593, %v9145, %v9159
  %v9161 = vsel %vm595, %v9146, %v9160
  %v9162 = vsel %vm583, %v9148, %v9147
  %v9163 = vsel %vm585, %v9149, %v9162
  %v9164 = vsel %vm587, %v9150, %v9163
  %v9165 = vsel %vm589, %v9151, %v9164
  %v9166 = vsel %vm591, %v9152, %v9165
  %v9167 = vsel %vm593, %v9153, %v9166
  %v9168 = vsel %vm595, %v9154, %v9167
  %v9169 = vpack.c.b16 %v9168, %v9161
  %9171 = vmatprep.subr.bf16.mxu0 %v1593
  %9172 = vmatpush1.bf16.msra.mxu0 %v1592
  %9173 = vmatprep.subr.bf16.mxu0 %v1589
  %9174 = vmatpush1.bf16.msra.mxu0 %v1588
  %9175 = vmatprep.subr.bf16.mxu0 %v1585
  %9176 = vmatpush1.bf16.msra.mxu0 %v1584
  %9177 = vmatprep.subr.bf16.mxu0 %v1581
  %9178 = vmatpush1.bf16.msra.mxu0 %v1580
  %9179 = vmatprep.subr.bf16.mxu0 %v1577
  %9180 = vmatpush1.bf16.msra.mxu0 %v1576
  %9181 = vmatprep.subr.bf16.mxu0 %v1573
  %9182 = vmatpush1.bf16.msra.mxu0 %v1572
  %9183 = vmatprep.subr.bf16.mxu0 %v1569
  %9184 = vmatpush1.bf16.msra.mxu0 %v1568
  %9185 = vmatprep.subr.bf16.mxu0 %v1565
  %9186 = vmatpush1.bf16.msra.mxu0 %v1564
  %9187 = vmatprep.subr.bf16.mxu0 %v1625
  %9188 = vmatpush2.bf16.msra.mxu0 %v1624
  %9189 = vmatprep.subr.bf16.mxu0 %v1621
  %9190 = vmatpush2.bf16.msra.mxu0 %v1620
  %9191 = vmatprep.subr.bf16.mxu0 %v1617
  %9192 = vmatpush2.bf16.msra.mxu0 %v1616
  %9193 = vmatprep.subr.bf16.mxu0 %v1613
  %9194 = vmatpush2.bf16.msra.mxu0 %v1612
  %9195 = vmatprep.subr.bf16.mxu0 %v1609
  %9196 = vmatpush2.bf16.msra.mxu0 %v1608
  %9197 = vmatprep.subr.bf16.mxu0 %v1605
  %9198 = vmatpush2.bf16.msra.mxu0 %v1604
  %9199 = vmatprep.subr.bf16.mxu0 %v1601
  %9200 = vmatpush2.bf16.msra.mxu0 %v1600
  %9201 = vmatprep.subr.bf16.mxu0 %v1597
  %9202 = vmatpush2.bf16.msra.mxu0 %v1596
  %9203 = vmatprep.mubr.bf16.mxu0 %v9169
  %9204 = vmatmul.mubr.bf16.gmra.mxu0 %v9121
  %v9205 = vpop.f32.mrf.mxu0
  %v9206 = vadd.f32 %v1259, %v9205
  %v9207 = vpop.f32.mrf.mxu0
  %v9208 = vadd.f32 %v1263, %v9207
  %v9209 = vpop.f32.mrf.mxu0
  %v9210 = vadd.f32 %v1259, %v9209
  %v9211 = vpop.f32.mrf.mxu0
  %v9212 = vadd.f32 %v1263, %v9211
  %9213 = vdwg.mxu0
  %9214 = vmatprep.subr.bf16.mxu0 %v1657
  %9215 = vmatpush1.bf16.msra.mxu0 %v1656
  %9216 = vmatprep.subr.bf16.mxu0 %v1653
  %9217 = vmatpush1.bf16.msra.mxu0 %v1652
  %9218 = vmatprep.subr.bf16.mxu0 %v1649
  %9219 = vmatpush1.bf16.msra.mxu0 %v1648
  %9220 = vmatprep.subr.bf16.mxu0 %v1645
  %9221 = vmatpush1.bf16.msra.mxu0 %v1644
  %9222 = vmatprep.subr.bf16.mxu0 %v1641
  %9223 = vmatpush1.bf16.msra.mxu0 %v1640
  %9224 = vmatprep.subr.bf16.mxu0 %v1637
  %9225 = vmatpush1.bf16.msra.mxu0 %v1636
  %9226 = vmatprep.subr.bf16.mxu0 %v1633
  %9227 = vmatpush1.bf16.msra.mxu0 %v1632
  %9228 = vmatprep.subr.bf16.mxu0 %v1629
  %9229 = vmatpush1.bf16.msra.mxu0 %v1628
  %9230 = vmatprep.subr.bf16.mxu0 0
  %9231 = vmatpush2.bf16.msra.mxu0 0
  %9232 = vmatprep.subr.bf16.mxu0 0
  %9233 = vmatpush2.bf16.msra.mxu0 0
  %9234 = vmatprep.subr.bf16.mxu0 0
  %9235 = vmatpush2.bf16.msra.mxu0 0
  %9236 = vmatprep.subr.bf16.mxu0 0
  %9237 = vmatpush2.bf16.msra.mxu0 0
  %9238 = vmatprep.subr.bf16.mxu0 0
  %9239 = vmatpush2.bf16.msra.mxu0 0
  %9240 = vmatprep.subr.bf16.mxu0 0
  %9241 = vmatpush2.bf16.msra.mxu0 0
  %9242 = vmatprep.subr.bf16.mxu0 0
  %9243 = vmatpush2.bf16.msra.mxu0 0
  %9244 = vmatprep.subr.bf16.mxu0 0
  %9245 = vmatpush2.bf16.msra.mxu0 0
  %9246 = vmatprep.mubr.bf16.mxu0 0
  %9247 = vmatmul.mubr.bf16.gmra.mxu0 %v8157
  %v9248 = vpop.f32.mrf.mxu0
  %v9249 = vadd.f32 %v9206, %v9248
  %v9250 = vpop.f32.mrf.mxu0
  %v9251 = vadd.f32 %v9208, %v9250
  %v9252 = vpop.f32.mrf.mxu0
  %v9253 = vadd.f32 %v9210, %v9252
  %v9254 = vpop.f32.mrf.mxu0
  %v9255 = vadd.f32 %v9212, %v9254
  %9256 = vdwg.mxu0
  %9257 = vmatprep.subr.bf16.mxu0 %v1595
  %9258 = vmatpush1.bf16.msra.mxu0 %v1594
  %9259 = vmatprep.subr.bf16.mxu0 %v1591
  %9260 = vmatpush1.bf16.msra.mxu0 %v1590
  %9261 = vmatprep.subr.bf16.mxu0 %v1587
  %9262 = vmatpush1.bf16.msra.mxu0 %v1586
  %9263 = vmatprep.subr.bf16.mxu0 %v1583
  %9264 = vmatpush1.bf16.msra.mxu0 %v1582
  %9265 = vmatprep.subr.bf16.mxu0 %v1579
  %9266 = vmatpush1.bf16.msra.mxu0 %v1578
  %9267 = vmatprep.subr.bf16.mxu0 %v1575
  %9268 = vmatpush1.bf16.msra.mxu0 %v1574
  %9269 = vmatprep.subr.bf16.mxu0 %v1571
  %9270 = vmatpush1.bf16.msra.mxu0 %v1570
  %9271 = vmatprep.subr.bf16.mxu0 %v1567
  %9272 = vmatpush1.bf16.msra.mxu0 %v1566
  %9273 = vmatprep.subr.bf16.mxu0 %v1627
  %9274 = vmatpush2.bf16.msra.mxu0 %v1626
  %9275 = vmatprep.subr.bf16.mxu0 %v1623
  %9276 = vmatpush2.bf16.msra.mxu0 %v1622
  %9277 = vmatprep.subr.bf16.mxu0 %v1619
  %9278 = vmatpush2.bf16.msra.mxu0 %v1618
  %9279 = vmatprep.subr.bf16.mxu0 %v1615
  %9280 = vmatpush2.bf16.msra.mxu0 %v1614
  %9281 = vmatprep.subr.bf16.mxu0 %v1611
  %9282 = vmatpush2.bf16.msra.mxu0 %v1610
  %9283 = vmatprep.subr.bf16.mxu0 %v1607
  %9284 = vmatpush2.bf16.msra.mxu0 %v1606
  %9285 = vmatprep.subr.bf16.mxu0 %v1603
  %9286 = vmatpush2.bf16.msra.mxu0 %v1602
  %9287 = vmatprep.subr.bf16.mxu0 %v1599
  %9288 = vmatpush2.bf16.msra.mxu0 %v1598
  %9289 = vmatprep.mubr.bf16.mxu0 %v9169
  %9290 = vmatmul.mubr.bf16.gmra.mxu0 %v9121
  %v9291 = vpop.f32.mrf.mxu0
  %v9292 = vadd.f32 %v1267, %v9291
  %v9293 = vpop.f32.mrf.mxu0
  %v9294 = vadd.f32 %v1271, %v9293
  %v9295 = vpop.f32.mrf.mxu0
  %v9296 = vadd.f32 %v1267, %v9295
  %v9297 = vpop.f32.mrf.mxu0
  %v9298 = vadd.f32 %v1271, %v9297
  %9299 = vdwg.mxu0
  %9300 = vmatprep.subr.bf16.mxu0 %v1659
  %9301 = vmatpush1.bf16.msra.mxu0 %v1658
  %9302 = vmatprep.subr.bf16.mxu0 %v1655
  %9303 = vmatpush1.bf16.msra.mxu0 %v1654
  %9304 = vmatprep.subr.bf16.mxu0 %v1651
  %9305 = vmatpush1.bf16.msra.mxu0 %v1650
  %9306 = vmatprep.subr.bf16.mxu0 %v1647
  %9307 = vmatpush1.bf16.msra.mxu0 %v1646
  %9308 = vmatprep.subr.bf16.mxu0 %v1643
  %9309 = vmatpush1.bf16.msra.mxu0 %v1642
  %9310 = vmatprep.subr.bf16.mxu0 %v1639
  %9311 = vmatpush1.bf16.msra.mxu0 %v1638
  %9312 = vmatprep.subr.bf16.mxu0 %v1635
  %9313 = vmatpush1.bf16.msra.mxu0 %v1634
  %9314 = vmatprep.subr.bf16.mxu0 %v1631
  %9315 = vmatpush1.bf16.msra.mxu0 %v1630
  %9316 = vmatprep.subr.bf16.mxu0 0
  %9317 = vmatpush2.bf16.msra.mxu0 0
  %9318 = vmatprep.subr.bf16.mxu0 0
  %9319 = vmatpush2.bf16.msra.mxu0 0
  %9320 = vmatprep.subr.bf16.mxu0 0
  %9321 = vmatpush2.bf16.msra.mxu0 0
  %9322 = vmatprep.subr.bf16.mxu0 0
  %9323 = vmatpush2.bf16.msra.mxu0 0
  %9324 = vmatprep.subr.bf16.mxu0 0
  %9325 = vmatpush2.bf16.msra.mxu0 0
  %9326 = vmatprep.subr.bf16.mxu0 0
  %9327 = vmatpush2.bf16.msra.mxu0 0
  %9328 = vmatprep.subr.bf16.mxu0 0
  %9329 = vmatpush2.bf16.msra.mxu0 0
  %9330 = vmatprep.subr.bf16.mxu0 0
  %9331 = vmatpush2.bf16.msra.mxu0 0
  %9332 = vmatprep.mubr.bf16.mxu0 0
  %9333 = vmatmul.mubr.bf16.gmra.mxu0 %v8157
  %v9334 = vpop.f32.mrf.mxu0
  %v9335 = vadd.f32 %v9292, %v9334
  %v9336 = vpop.f32.mrf.mxu0
  %v9337 = vadd.f32 %v9294, %v9336
  %v9338 = vpop.f32.mrf.mxu0
  %v9339 = vadd.f32 %v9296, %v9338
  %v9340 = vpop.f32.mrf.mxu0
  %v9341 = vadd.f32 %v9298, %v9340
  %9342 = vdwg.mxu0
  %v9343 = vmul.f32 %v9249, 0.5
  %v9344 = vmul.f32 %v9251, 0.5
  %v9345 = vmul.f32 %v9335, 0.5
  %v9346 = vmul.f32 %v9253, 0.5
  %v9347 = vmul.f32 %v9255, 0.5
  %v9348 = vmul.f32 %v9339, 0.5
  %v9349 = vtanh.pop %v9343
  %v9350 = vtanh.pop %v9344
  %v9351 = vtanh.pop %v9345
  %v9352 = vtanh.pop %v9346
  %v9353 = vtanh.pop %v9347
  %v9354 = vtanh.pop %v9348
  %v9355 = vadd.f32 %v9349, 1.0
  %v9356 = vadd.f32 %v9350, 1.0
  %v9357 = vadd.f32 %v9351, 1.0
  %v9358 = vadd.f32 %v9352, 1.0
  %v9359 = vadd.f32 %v9353, 1.0
  %v9360 = vadd.f32 %v9354, 1.0
  %v9361 = vmul.f32 %v9355, 0.5
  %v9362 = vmul.f32 %v9356, 0.5
  %v9363 = vmul.f32 %v9357, 0.5
  %v9364 = vmul.f32 %v9358, 0.5
  %v9365 = vmul.f32 %v9359, 0.5
  %v9366 = vmul.f32 %v9360, 0.5
  %v9367 = vtanh.pop %v9337
  %v9368 = vtanh.pop %v9341
  %v9369 = vmul.f32 %v9362, %v8155
  %v9370 = vmul.f32 %v9365, %v8156
  %v9371 = vmul.f32 %v9361, %v9367
  %v9372 = vmul.f32 %v9364, %v9368
  %v9373 = vadd.f32 %v9369, %v9371
  %v9374 = vadd.f32 %v9370, %v9372
  %v9375 = vtanh.pop %v9373
  %v9376 = vtanh.pop %v9374
  %v9377 = vmul.f32 %v9363, %v9375
  %v9378 = vmul.f32 %v9366, %v9376
  %s9379 = scalar_lea.vmem %s6, 96
  %9380 = vst [vmem:[%s9379] sm:$0xff] %v9377
  %9381 = vst [vmem:[%s9379 + $0x8] sm:$0xff] %v9378
  %9382 = vst [vmem:[#allocation2] sm:$0xff] %v9377
  %9383 = vst [vmem:[#allocation2 + $0x8] sm:$0xff] %v9378
  %9384 = vst [vmem:[#allocation3] sm:$0xff] %v9373
  %9385 = vst [vmem:[#allocation3 + $0x8] sm:$0xff] %v9374
  %s9386 = scalar_lea.vmem %s0, 56
  %v9387 = vld [vmem:[%s9386] sm:$0xf]
  %v9388 = vld [vmem:[%s9386 + $0x4] sm:$0xf]
  %v9389 = vld [vmem:[#allocation2] sm:$0xff]
  %v9390 = vld [vmem:[#allocation2 + $0x8] sm:$0xff]
  %v9391 = vld [vmem:[#allocation3] sm:$0xff]
  %v9392 = vld [vmem:[#allocation3 + $0x8] sm:$0xff]
  %v9393 = vpack.c.bf16 %v9390, %v9389
  %9394 = vmatprep.subr.bf16.mxu0 0
  %9395 = vmatpush1.bf16.msra.mxu0 %v223
  %9396 = vmatprep.subr.bf16.mxu0 0
  %9397 = vmatpush1.bf16.msra.mxu0 %v222
  %9398 = vmatprep.subr.bf16.mxu0 0
  %9399 = vmatpush1.bf16.msra.mxu0 %v221
  %9400 = vmatprep.subr.bf16.mxu0 0
  %9401 = vmatpush1.bf16.msra.mxu0 %v220
  %9402 = vmatprep.subr.bf16.mxu0 0
  %9403 = vmatpush1.bf16.msra.mxu0 %v219
  %9404 = vmatprep.subr.bf16.mxu0 0
  %9405 = vmatpush1.bf16.msra.mxu0 %v218
  %9406 = vmatprep.subr.bf16.mxu0 0
  %9407 = vmatpush1.bf16.msra.mxu0 %v217
  %9408 = vmatprep.subr.bf16.mxu0 0
  %9409 = vmatpush1.bf16.msra.mxu0 %v216
  %9410 = vmatprep.subr.bf16.mxu0 0
  %9411 = vmatpush2.bf16.msra.mxu0 0
  %9412 = vmatprep.subr.bf16.mxu0 0
  %9413 = vmatpush2.bf16.msra.mxu0 0
  %9414 = vmatprep.subr.bf16.mxu0 0
  %9415 = vmatpush2.bf16.msra.mxu0 0
  %9416 = vmatprep.subr.bf16.mxu0 0
  %9417 = vmatpush2.bf16.msra.mxu0 0
  %9418 = vmatprep.subr.bf16.mxu0 0
  %9419 = vmatpush2.bf16.msra.mxu0 0
  %9420 = vmatprep.subr.bf16.mxu0 0
  %9421 = vmatpush2.bf16.msra.mxu0 0
  %9422 = vmatprep.subr.bf16.mxu0 0
  %9423 = vmatpush2.bf16.msra.mxu0 0
  %9424 = vmatprep.subr.bf16.mxu0 0
  %9425 = vmatpush2.bf16.msra.mxu0 0
  %9426 = vmatprep.mubr.bf16.mxu0 0
  %9427 = vmatmul.mubr.bf16.gmra.mxu0 %v9393
  %v9428 = vpop.f32.mrf.mxu0
  %v9429 = vadd.f32 0.0, %v9428
  %v9430 = vpop.f32.mrf.mxu0
  %v9431 = vpop.f32.mrf.mxu0
  %v9432 = vadd.f32 0.0, %v9431
  %v9433 = vpop.f32.mrf.mxu0
  %9434 = vdwg.mxu0
  %v9437 = vcombine.high %v9429, %v9429
  %v9439 = vunpack.c.l.s4 1966171168
  %v9440 = vunpack.c.0.s8 %v9439
  %v9441 = vlaneseq
  %v9442 = vshrl.u32 %v9441, 7
  %v9443 = vsub.s32 %v9440, %v9442
  %v9444 = vrot.slane %v9429, %v9443
  %v9446 = vunpack.c.l.s4 1966171168
  %v9447 = vunpack.c.0.s8 %v9446
  %v9448 = vlaneseq
  %v9449 = vshrl.u32 %v9448, 7
  %v9450 = vsub.s32 %v9447, %v9449
  %v9451 = vrot.slane %v9437, %v9450
  %v9452 = vcombine.high %v9444, %v9444
  %v9453 = vcombine.high %v9451, %v9451
  %v9455 = vunpack.c.l.s4 1966171168
  %v9456 = vunpack.c.0.s8 %v9455
  %v9457 = vlaneseq
  %v9458 = vshrl.u32 %v9457, 7
  %v9459 = vsub.s32 %v9456, %v9458
  %v9460 = vrot.slane %v9444, %v9459
  %v9462 = vunpack.c.l.s4 1966171168
  %v9463 = vunpack.c.0.s8 %v9462
  %v9464 = vlaneseq
  %v9465 = vshrl.u32 %v9464, 7
  %v9466 = vsub.s32 %v9463, %v9465
  %v9467 = vrot.slane %v9451, %v9466
  %v9469 = vunpack.c.l.s4 1966171168
  %v9470 = vunpack.c.0.s8 %v9469
  %v9471 = vlaneseq
  %v9472 = vshrl.u32 %v9471, 7
  %v9473 = vsub.s32 %v9470, %v9472
  %v9474 = vrot.slane %v9452, %v9473
  %v9476 = vunpack.c.l.s4 1966171168
  %v9477 = vunpack.c.0.s8 %v9476
  %v9478 = vlaneseq
  %v9479 = vshrl.u32 %v9478, 7
  %v9480 = vsub.s32 %v9477, %v9479
  %v9481 = vrot.slane %v9453, %v9480
  %v9482 = vcombine.high %v9460, %v9460
  %v9483 = vcombine.high %v9467, %v9467
  %v9484 = vcombine.high %v9474, %v9474
  %v9485 = vcombine.high %v9481, %v9481
  %v9486 = vcombine.high %v9432, %v9432
  %v9488 = vunpack.c.l.s4 1966171168
  %v9489 = vunpack.c.0.s8 %v9488
  %v9490 = vlaneseq
  %v9491 = vshrl.u32 %v9490, 7
  %v9492 = vsub.s32 %v9489, %v9491
  %v9493 = vrot.slane %v9432, %v9492
  %v9495 = vunpack.c.l.s4 1966171168
  %v9496 = vunpack.c.0.s8 %v9495
  %v9497 = vlaneseq
  %v9498 = vshrl.u32 %v9497, 7
  %v9499 = vsub.s32 %v9496, %v9498
  %v9500 = vrot.slane %v9486, %v9499
  %v9501 = vcombine.high %v9493, %v9493
  %v9502 = vcombine.high %v9500, %v9500
  %v9504 = vunpack.c.l.s4 1966171168
  %v9505 = vunpack.c.0.s8 %v9504
  %v9506 = vlaneseq
  %v9507 = vshrl.u32 %v9506, 7
  %v9508 = vsub.s32 %v9505, %v9507
  %v9509 = vrot.slane %v9493, %v9508
  %v9511 = vunpack.c.l.s4 1966171168
  %v9512 = vunpack.c.0.s8 %v9511
  %v9513 = vlaneseq
  %v9514 = vshrl.u32 %v9513, 7
  %v9515 = vsub.s32 %v9512, %v9514
  %v9516 = vrot.slane %v9500, %v9515
  %v9518 = vunpack.c.l.s4 1966171168
  %v9519 = vunpack.c.0.s8 %v9518
  %v9520 = vlaneseq
  %v9521 = vshrl.u32 %v9520, 7
  %v9522 = vsub.s32 %v9519, %v9521
  %v9523 = vrot.slane %v9501, %v9522
  %v9525 = vunpack.c.l.s4 1966171168
  %v9526 = vunpack.c.0.s8 %v9525
  %v9527 = vlaneseq
  %v9528 = vshrl.u32 %v9527, 7
  %v9529 = vsub.s32 %v9526, %v9528
  %v9530 = vrot.slane %v9502, %v9529
  %v9531 = vcombine.high %v9509, %v9509
  %v9532 = vcombine.high %v9516, %v9516
  %v9533 = vcombine.high %v9523, %v9523
  %v9534 = vcombine.high %v9530, %v9530
  %v9535 = vlaneseq
  %v9536 = vshrl.u32 %v9535, 7
  %v9537 = vsub.s32 0, %v9536
  %v9538 = vrot.slane %v9460, %v9537
  %v9539 = vlaneseq
  %v9540 = vshrl.u32 %v9539, 7
  %v9541 = vsub.s32 0, %v9540
  %v9542 = vrot.slane %v9474, %v9541
  %v9543 = vlaneseq
  %v9544 = vshrl.u32 %v9543, 7
  %v9545 = vsub.s32 0, %v9544
  %v9546 = vrot.slane %v9482, %v9545
  %v9547 = vlaneseq
  %v9548 = vshrl.u32 %v9547, 7
  %v9549 = vsub.s32 0, %v9548
  %v9550 = vrot.slane %v9484, %v9549
  %v9551 = vlaneseq
  %v9552 = vshrl.u32 %v9551, 7
  %v9553 = vsub.s32 0, %v9552
  %v9554 = vrot.slane %v9467, %v9553
  %v9555 = vlaneseq
  %v9556 = vshrl.u32 %v9555, 7
  %v9557 = vsub.s32 0, %v9556
  %v9558 = vrot.slane %v9481, %v9557
  %v9559 = vlaneseq
  %v9560 = vshrl.u32 %v9559, 7
  %v9561 = vsub.s32 0, %v9560
  %v9562 = vrot.slane %v9483, %v9561
  %v9563 = vlaneseq
  %v9564 = vshrl.u32 %v9563, 7
  %v9565 = vsub.s32 0, %v9564
  %v9566 = vrot.slane %v9485, %v9565
  %v9567 = vlaneseq
  %v9568 = vshrl.u32 %v9567, 7
  %v9569 = vsub.s32 0, %v9568
  %v9570 = vrot.slane %v9509, %v9569
  %v9571 = vlaneseq
  %v9572 = vshrl.u32 %v9571, 7
  %v9573 = vsub.s32 0, %v9572
  %v9574 = vrot.slane %v9523, %v9573
  %v9575 = vlaneseq
  %v9576 = vshrl.u32 %v9575, 7
  %v9577 = vsub.s32 0, %v9576
  %v9578 = vrot.slane %v9531, %v9577
  %v9579 = vlaneseq
  %v9580 = vshrl.u32 %v9579, 7
  %v9581 = vsub.s32 0, %v9580
  %v9582 = vrot.slane %v9533, %v9581
  %v9583 = vlaneseq
  %v9584 = vshrl.u32 %v9583, 7
  %v9585 = vsub.s32 0, %v9584
  %v9586 = vrot.slane %v9516, %v9585
  %v9587 = vlaneseq
  %v9588 = vshrl.u32 %v9587, 7
  %v9589 = vsub.s32 0, %v9588
  %v9590 = vrot.slane %v9530, %v9589
  %v9591 = vlaneseq
  %v9592 = vshrl.u32 %v9591, 7
  %v9593 = vsub.s32 0, %v9592
  %v9594 = vrot.slane %v9532, %v9593
  %v9595 = vlaneseq
  %v9596 = vshrl.u32 %v9595, 7
  %v9597 = vsub.s32 0, %v9596
  %v9598 = vrot.slane %v9534, %v9597
  %v9615 = vmul.f32 %v9538, %v40
  %v9616 = vmul.f32 %v9542, %v41
  %v9617 = vmul.f32 %v9546, %v42
  %v9618 = vmul.f32 %v9550, %v43
  %v9619 = vmul.f32 %v9554, %v44
  %v9620 = vmul.f32 %v9558, %v45
  %v9621 = vmul.f32 %v9562, %v46
  %v9622 = vmul.f32 %v9566, %v47
  %v9623 = vmul.f32 %v9570, %v48
  %v9624 = vmul.f32 %v9574, %v49
  %v9625 = vmul.f32 %v9578, %v50
  %v9626 = vmul.f32 %v9582, %v51
  %v9627 = vmul.f32 %v9586, %v52
  %v9628 = vmul.f32 %v9590, %v53
  %v9629 = vmul.f32 %v9594, %v54
  %v9630 = vmul.f32 %v9598, %v55
  %9631 = vadd.xlane.f32.xlu0 %v9615
  %v9632 = vpop.xlane.xlu0 %9631
  %9633 = vadd.xlane.f32.xlu0 %v9616
  %v9634 = vpop.xlane.xlu0 %9633
  %9635 = vadd.xlane.f32.xlu0 %v9617
  %v9636 = vpop.xlane.xlu0 %9635
  %9637 = vadd.xlane.f32.xlu0 %v9618
  %v9638 = vpop.xlane.xlu0 %9637
  %9639 = vadd.xlane.f32.xlu0 %v9619
  %v9640 = vpop.xlane.xlu0 %9639
  %9641 = vadd.xlane.f32.xlu0 %v9620
  %v9642 = vpop.xlane.xlu0 %9641
  %9643 = vadd.xlane.f32.xlu0 %v9621
  %v9644 = vpop.xlane.xlu0 %9643
  %9645 = vadd.xlane.f32.xlu0 %v9622
  %v9646 = vpop.xlane.xlu0 %9645
  %9647 = vadd.xlane.f32.xlu0 %v9623
  %v9648 = vpop.xlane.xlu0 %9647
  %9649 = vadd.xlane.f32.xlu0 %v9624
  %v9650 = vpop.xlane.xlu0 %9649
  %9651 = vadd.xlane.f32.xlu0 %v9625
  %v9652 = vpop.xlane.xlu0 %9651
  %9653 = vadd.xlane.f32.xlu0 %v9626
  %v9654 = vpop.xlane.xlu0 %9653
  %9655 = vadd.xlane.f32.xlu0 %v9627
  %v9656 = vpop.xlane.xlu0 %9655
  %9657 = vadd.xlane.f32.xlu0 %v9628
  %v9658 = vpop.xlane.xlu0 %9657
  %9659 = vadd.xlane.f32.xlu0 %v9629
  %v9660 = vpop.xlane.xlu0 %9659
  %9661 = vadd.xlane.f32.xlu0 %v9630
  %v9662 = vpop.xlane.xlu0 %9661
  %v9679 = vlaneseq
  %v9680 = vshrl.u32 %v9679, 7
  %v9681 = vsub.s32 %v518, %v9680
  %v9682 = vrot.slane %v9632, %v9681
  %v9683 = vlaneseq
  %v9684 = vshrl.u32 %v9683, 7
  %v9685 = vsub.s32 %v518, %v9684
  %v9686 = vrot.slane %v9634, %v9685
  %v9687 = vlaneseq
  %v9688 = vshrl.u32 %v9687, 7
  %v9689 = vsub.s32 %v518, %v9688
  %v9690 = vrot.slane %v9636, %v9689
  %v9691 = vlaneseq
  %v9692 = vshrl.u32 %v9691, 7
  %v9693 = vsub.s32 %v518, %v9692
  %v9694 = vrot.slane %v9638, %v9693
  %v9695 = vlaneseq
  %v9696 = vshrl.u32 %v9695, 7
  %v9697 = vsub.s32 %v518, %v9696
  %v9698 = vrot.slane %v9640, %v9697
  %v9699 = vlaneseq
  %v9700 = vshrl.u32 %v9699, 7
  %v9701 = vsub.s32 %v518, %v9700
  %v9702 = vrot.slane %v9642, %v9701
  %v9703 = vlaneseq
  %v9704 = vshrl.u32 %v9703, 7
  %v9705 = vsub.s32 %v518, %v9704
  %v9706 = vrot.slane %v9644, %v9705
  %v9707 = vlaneseq
  %v9708 = vshrl.u32 %v9707, 7
  %v9709 = vsub.s32 %v518, %v9708
  %v9710 = vrot.slane %v9646, %v9709
  %v9711 = vlaneseq
  %v9712 = vshrl.u32 %v9711, 7
  %v9713 = vsub.s32 %v518, %v9712
  %v9714 = vrot.slane %v9648, %v9713
  %v9715 = vlaneseq
  %v9716 = vshrl.u32 %v9715, 7
  %v9717 = vsub.s32 %v518, %v9716
  %v9718 = vrot.slane %v9650, %v9717
  %v9719 = vlaneseq
  %v9720 = vshrl.u32 %v9719, 7
  %v9721 = vsub.s32 %v518, %v9720
  %v9722 = vrot.slane %v9652, %v9721
  %v9723 = vlaneseq
  %v9724 = vshrl.u32 %v9723, 7
  %v9725 = vsub.s32 %v518, %v9724
  %v9726 = vrot.slane %v9654, %v9725
  %v9727 = vlaneseq
  %v9728 = vshrl.u32 %v9727, 7
  %v9729 = vsub.s32 %v518, %v9728
  %v9730 = vrot.slane %v9656, %v9729
  %v9731 = vlaneseq
  %v9732 = vshrl.u32 %v9731, 7
  %v9733 = vsub.s32 %v518, %v9732
  %v9734 = vrot.slane %v9658, %v9733
  %v9735 = vlaneseq
  %v9736 = vshrl.u32 %v9735, 7
  %v9737 = vsub.s32 %v518, %v9736
  %v9738 = vrot.slane %v9660, %v9737
  %v9739 = vlaneseq
  %v9740 = vshrl.u32 %v9739, 7
  %v9741 = vsub.s32 %v518, %v9740
  %v9742 = vrot.slane %v9662, %v9741
  %v9743 = vsel %vm583, %v9686, %v9682
  %v9744 = vsel %vm585, %v9690, %v9743
  %v9745 = vsel %vm587, %v9694, %v9744
  %v9746 = vsel %vm589, %v9698, %v9745
  %v9747 = vsel %vm591, %v9702, %v9746
  %v9748 = vsel %vm593, %v9706, %v9747
  %v9749 = vsel %vm595, %v9710, %v9748
  %v9750 = vsel %vm583, %v9718, %v9714
  %v9751 = vsel %vm585, %v9722, %v9750
  %v9752 = vsel %vm587, %v9726, %v9751
  %v9753 = vsel %vm589, %v9730, %v9752
  %v9754 = vsel %vm591, %v9734, %v9753
  %v9755 = vsel %vm593, %v9738, %v9754
  %v9756 = vsel %vm595, %v9742, %v9755
  %v9759 = vsel %vm606, %v9749, -inf
  %9760 = vmax.xlane.f32.xlu0 %v9759
  %v9761 = vpop.xlane.xlu0 %9760
  %v9762 = vsel %vm606, %v9756, -inf
  %9763 = vmax.xlane.f32.xlu0 %v9762
  %v9764 = vpop.xlane.xlu0 %9763
  %v9767 = vlaneseq
  %v9768 = vshrl.u32 %v9767, 7
  %v9769 = vsub.s32 0, %v9768
  %v9770 = vrot.slane %v9761, %v9769
  %v9771 = vlaneseq
  %v9772 = vshrl.u32 %v9771, 7
  %v9773 = vsub.s32 1, %v9772
  %v9774 = vrot.slane %v9761, %v9773
  %v9775 = vlaneseq
  %v9776 = vshrl.u32 %v9775, 7
  %v9777 = vsub.s32 2, %v9776
  %v9778 = vrot.slane %v9761, %v9777
  %v9779 = vlaneseq
  %v9780 = vshrl.u32 %v9779, 7
  %v9781 = vsub.s32 3, %v9780
  %v9782 = vrot.slane %v9761, %v9781
  %v9783 = vlaneseq
  %v9784 = vshrl.u32 %v9783, 7
  %v9785 = vsub.s32 4, %v9784
  %v9786 = vrot.slane %v9761, %v9785
  %v9787 = vlaneseq
  %v9788 = vshrl.u32 %v9787, 7
  %v9789 = vsub.s32 5, %v9788
  %v9790 = vrot.slane %v9761, %v9789
  %v9791 = vlaneseq
  %v9792 = vshrl.u32 %v9791, 7
  %v9793 = vsub.s32 6, %v9792
  %v9794 = vrot.slane %v9761, %v9793
  %v9795 = vlaneseq
  %v9796 = vshrl.u32 %v9795, 7
  %v9797 = vsub.s32 7, %v9796
  %v9798 = vrot.slane %v9761, %v9797
  %v9799 = vlaneseq
  %v9800 = vshrl.u32 %v9799, 7
  %v9801 = vsub.s32 0, %v9800
  %v9802 = vrot.slane %v9764, %v9801
  %v9803 = vlaneseq
  %v9804 = vshrl.u32 %v9803, 7
  %v9805 = vsub.s32 1, %v9804
  %v9806 = vrot.slane %v9764, %v9805
  %v9807 = vlaneseq
  %v9808 = vshrl.u32 %v9807, 7
  %v9809 = vsub.s32 2, %v9808
  %v9810 = vrot.slane %v9764, %v9809
  %v9811 = vlaneseq
  %v9812 = vshrl.u32 %v9811, 7
  %v9813 = vsub.s32 3, %v9812
  %v9814 = vrot.slane %v9764, %v9813
  %v9815 = vlaneseq
  %v9816 = vshrl.u32 %v9815, 7
  %v9817 = vsub.s32 4, %v9816
  %v9818 = vrot.slane %v9764, %v9817
  %v9819 = vlaneseq
  %v9820 = vshrl.u32 %v9819, 7
  %v9821 = vsub.s32 5, %v9820
  %v9822 = vrot.slane %v9764, %v9821
  %v9823 = vlaneseq
  %v9824 = vshrl.u32 %v9823, 7
  %v9825 = vsub.s32 6, %v9824
  %v9826 = vrot.slane %v9764, %v9825
  %v9827 = vlaneseq
  %v9828 = vshrl.u32 %v9827, 7
  %v9829 = vsub.s32 7, %v9828
  %v9830 = vrot.slane %v9764, %v9829
  %v9847 = vsub.f32 %v9632, %v9770
  %v9848 = vsub.f32 %v9634, %v9774
  %v9849 = vsub.f32 %v9636, %v9778
  %v9850 = vsub.f32 %v9638, %v9782
  %v9851 = vsub.f32 %v9640, %v9786
  %v9852 = vsub.f32 %v9642, %v9790
  %v9853 = vsub.f32 %v9644, %v9794
  %v9854 = vsub.f32 %v9646, %v9798
  %v9855 = vsub.f32 %v9648, %v9802
  %v9856 = vsub.f32 %v9650, %v9806
  %v9857 = vsub.f32 %v9652, %v9810
  %v9858 = vsub.f32 %v9654, %v9814
  %v9859 = vsub.f32 %v9656, %v9818
  %v9860 = vsub.f32 %v9658, %v9822
  %v9861 = vsub.f32 %v9660, %v9826
  %v9862 = vsub.f32 %v9662, %v9830
  %v9863 = vmul.f32 %v9847, 1.442695
  %v9864 = vpow.pop %v9863
  %v9865 = vmul.f32 %v9848, 1.442695
  %v9866 = vpow.pop %v9865
  %v9867 = vmul.f32 %v9849, 1.442695
  %v9868 = vpow.pop %v9867
  %v9869 = vmul.f32 %v9850, 1.442695
  %v9870 = vpow.pop %v9869
  %v9871 = vmul.f32 %v9851, 1.442695
  %v9872 = vpow.pop %v9871
  %v9873 = vmul.f32 %v9852, 1.442695
  %v9874 = vpow.pop %v9873
  %v9875 = vmul.f32 %v9853, 1.442695
  %v9876 = vpow.pop %v9875
  %v9877 = vmul.f32 %v9854, 1.442695
  %v9878 = vpow.pop %v9877
  %v9879 = vmul.f32 %v9855, 1.442695
  %v9880 = vpow.pop %v9879
  %v9881 = vmul.f32 %v9856, 1.442695
  %v9882 = vpow.pop %v9881
  %v9883 = vmul.f32 %v9857, 1.442695
  %v9884 = vpow.pop %v9883
  %v9885 = vmul.f32 %v9858, 1.442695
  %v9886 = vpow.pop %v9885
  %v9887 = vmul.f32 %v9859, 1.442695
  %v9888 = vpow.pop %v9887
  %v9889 = vmul.f32 %v9860, 1.442695
  %v9890 = vpow.pop %v9889
  %v9891 = vmul.f32 %v9861, 1.442695
  %v9892 = vpow.pop %v9891
  %v9893 = vmul.f32 %v9862, 1.442695
  %v9894 = vpow.pop %v9893
  %9911 = vset.pattern.permute.xlu0 0
  %9912 = vperm.xlu0 %9911, %v9864
  %v9913 = vpop.permute.xlu0 %9912
  %9914 = vset.pattern.permute.xlu0 0
  %9915 = vperm.xlu0 %9914, %v9866
  %v9916 = vpop.permute.xlu0 %9915
  %9917 = vset.pattern.permute.xlu0 0
  %9918 = vperm.xlu0 %9917, %v9868
  %v9919 = vpop.permute.xlu0 %9918
  %9920 = vset.pattern.permute.xlu0 0
  %9921 = vperm.xlu0 %9920, %v9870
  %v9922 = vpop.permute.xlu0 %9921
  %9923 = vset.pattern.permute.xlu0 0
  %9924 = vperm.xlu0 %9923, %v9872
  %v9925 = vpop.permute.xlu0 %9924
  %9926 = vset.pattern.permute.xlu0 0
  %9927 = vperm.xlu0 %9926, %v9874
  %v9928 = vpop.permute.xlu0 %9927
  %9929 = vset.pattern.permute.xlu0 0
  %9930 = vperm.xlu0 %9929, %v9876
  %v9931 = vpop.permute.xlu0 %9930
  %9932 = vset.pattern.permute.xlu0 0
  %9933 = vperm.xlu0 %9932, %v9878
  %v9934 = vpop.permute.xlu0 %9933
  %9935 = vset.pattern.permute.xlu0 0
  %9936 = vperm.xlu0 %9935, %v9880
  %v9937 = vpop.permute.xlu0 %9936
  %9938 = vset.pattern.permute.xlu0 0
  %9939 = vperm.xlu0 %9938, %v9882
  %v9940 = vpop.permute.xlu0 %9939
  %9941 = vset.pattern.permute.xlu0 0
  %9942 = vperm.xlu0 %9941, %v9884
  %v9943 = vpop.permute.xlu0 %9942
  %9944 = vset.pattern.permute.xlu0 0
  %9945 = vperm.xlu0 %9944, %v9886
  %v9946 = vpop.permute.xlu0 %9945
  %9947 = vset.pattern.permute.xlu0 0
  %9948 = vperm.xlu0 %9947, %v9888
  %v9949 = vpop.permute.xlu0 %9948
  %9950 = vset.pattern.permute.xlu0 0
  %9951 = vperm.xlu0 %9950, %v9890
  %v9952 = vpop.permute.xlu0 %9951
  %9953 = vset.pattern.permute.xlu0 0
  %9954 = vperm.xlu0 %9953, %v9892
  %v9955 = vpop.permute.xlu0 %9954
  %9956 = vset.pattern.permute.xlu0 0
  %9957 = vperm.xlu0 %9956, %v9894
  %v9958 = vpop.permute.xlu0 %9957
  %v9959 = vlaneseq
  %v9960 = vshrl.u32 %v9959, 7
  %v9961 = vsub.s32 %v518, %v9960
  %v9962 = vrot.slane %v9913, %v9961
  %v9963 = vlaneseq
  %v9964 = vshrl.u32 %v9963, 7
  %v9965 = vsub.s32 %v518, %v9964
  %v9966 = vrot.slane %v9916, %v9965
  %v9967 = vlaneseq
  %v9968 = vshrl.u32 %v9967, 7
  %v9969 = vsub.s32 %v518, %v9968
  %v9970 = vrot.slane %v9919, %v9969
  %v9971 = vlaneseq
  %v9972 = vshrl.u32 %v9971, 7
  %v9973 = vsub.s32 %v518, %v9972
  %v9974 = vrot.slane %v9922, %v9973
  %v9975 = vlaneseq
  %v9976 = vshrl.u32 %v9975, 7
  %v9977 = vsub.s32 %v518, %v9976
  %v9978 = vrot.slane %v9925, %v9977
  %v9979 = vlaneseq
  %v9980 = vshrl.u32 %v9979, 7
  %v9981 = vsub.s32 %v518, %v9980
  %v9982 = vrot.slane %v9928, %v9981
  %v9983 = vlaneseq
  %v9984 = vshrl.u32 %v9983, 7
  %v9985 = vsub.s32 %v518, %v9984
  %v9986 = vrot.slane %v9931, %v9985
  %v9987 = vlaneseq
  %v9988 = vshrl.u32 %v9987, 7
  %v9989 = vsub.s32 %v518, %v9988
  %v9990 = vrot.slane %v9934, %v9989
  %v9991 = vlaneseq
  %v9992 = vshrl.u32 %v9991, 7
  %v9993 = vsub.s32 %v518, %v9992
  %v9994 = vrot.slane %v9937, %v9993
  %v9995 = vlaneseq
  %v9996 = vshrl.u32 %v9995, 7
  %v9997 = vsub.s32 %v518, %v9996
  %v9998 = vrot.slane %v9940, %v9997
  %v9999 = vlaneseq
  %v10000 = vshrl.u32 %v9999, 7
  %v10001 = vsub.s32 %v518, %v10000
  %v10002 = vrot.slane %v9943, %v10001
  %v10003 = vlaneseq
  %v10004 = vshrl.u32 %v10003, 7
  %v10005 = vsub.s32 %v518, %v10004
  %v10006 = vrot.slane %v9946, %v10005
  %v10007 = vlaneseq
  %v10008 = vshrl.u32 %v10007, 7
  %v10009 = vsub.s32 %v518, %v10008
  %v10010 = vrot.slane %v9949, %v10009
  %v10011 = vlaneseq
  %v10012 = vshrl.u32 %v10011, 7
  %v10013 = vsub.s32 %v518, %v10012
  %v10014 = vrot.slane %v9952, %v10013
  %v10015 = vlaneseq
  %v10016 = vshrl.u32 %v10015, 7
  %v10017 = vsub.s32 %v518, %v10016
  %v10018 = vrot.slane %v9955, %v10017
  %v10019 = vlaneseq
  %v10020 = vshrl.u32 %v10019, 7
  %v10021 = vsub.s32 %v518, %v10020
  %v10022 = vrot.slane %v9958, %v10021
  %v10023 = vsel %vm583, %v9966, %v9962
  %v10024 = vsel %vm585, %v9970, %v10023
  %v10025 = vsel %vm587, %v9974, %v10024
  %v10026 = vsel %vm589, %v9978, %v10025
  %v10027 = vsel %vm591, %v9982, %v10026
  %v10028 = vsel %vm593, %v9986, %v10027
  %v10029 = vsel %vm595, %v9990, %v10028
  %v10030 = vsel %vm583, %v9998, %v9994
  %v10031 = vsel %vm585, %v10002, %v10030
  %v10032 = vsel %vm587, %v10006, %v10031
  %v10033 = vsel %vm589, %v10010, %v10032
  %v10034 = vsel %vm591, %v10014, %v10033
  %v10035 = vsel %vm593, %v10018, %v10034
  %v10036 = vsel %vm595, %v10022, %v10035
  %v10039 = vsel %vm606, %v10029, 0.0
  %10040 = vadd.xlane.f32.xlu0 %v10039
  %v10041 = vpop.xlane.xlu0 %10040
  %v10042 = vsel %vm606, %v10036, 0.0
  %10043 = vadd.xlane.f32.xlu0 %v10042
  %v10044 = vpop.xlane.xlu0 %10043
  %v10045 = vrcp.pop %v10041
  %v10046 = vrcp.pop %v10044
  %v10049 = vlaneseq
  %v10050 = vshrl.u32 %v10049, 7
  %v10051 = vsub.s32 0, %v10050
  %v10052 = vrot.slane %v10045, %v10051
  %v10053 = vlaneseq
  %v10054 = vshrl.u32 %v10053, 7
  %v10055 = vsub.s32 1, %v10054
  %v10056 = vrot.slane %v10045, %v10055
  %v10057 = vlaneseq
  %v10058 = vshrl.u32 %v10057, 7
  %v10059 = vsub.s32 2, %v10058
  %v10060 = vrot.slane %v10045, %v10059
  %v10061 = vlaneseq
  %v10062 = vshrl.u32 %v10061, 7
  %v10063 = vsub.s32 3, %v10062
  %v10064 = vrot.slane %v10045, %v10063
  %v10065 = vlaneseq
  %v10066 = vshrl.u32 %v10065, 7
  %v10067 = vsub.s32 4, %v10066
  %v10068 = vrot.slane %v10045, %v10067
  %v10069 = vlaneseq
  %v10070 = vshrl.u32 %v10069, 7
  %v10071 = vsub.s32 5, %v10070
  %v10072 = vrot.slane %v10045, %v10071
  %v10073 = vlaneseq
  %v10074 = vshrl.u32 %v10073, 7
  %v10075 = vsub.s32 6, %v10074
  %v10076 = vrot.slane %v10045, %v10075
  %v10077 = vlaneseq
  %v10078 = vshrl.u32 %v10077, 7
  %v10079 = vsub.s32 7, %v10078
  %v10080 = vrot.slane %v10045, %v10079
  %v10081 = vlaneseq
  %v10082 = vshrl.u32 %v10081, 7
  %v10083 = vsub.s32 0, %v10082
  %v10084 = vrot.slane %v10046, %v10083
  %v10085 = vlaneseq
  %v10086 = vshrl.u32 %v10085, 7
  %v10087 = vsub.s32 1, %v10086
  %v10088 = vrot.slane %v10046, %v10087
  %v10089 = vlaneseq
  %v10090 = vshrl.u32 %v10089, 7
  %v10091 = vsub.s32 2, %v10090
  %v10092 = vrot.slane %v10046, %v10091
  %v10093 = vlaneseq
  %v10094 = vshrl.u32 %v10093, 7
  %v10095 = vsub.s32 3, %v10094
  %v10096 = vrot.slane %v10046, %v10095
  %v10097 = vlaneseq
  %v10098 = vshrl.u32 %v10097, 7
  %v10099 = vsub.s32 4, %v10098
  %v10100 = vrot.slane %v10046, %v10099
  %v10101 = vlaneseq
  %v10102 = vshrl.u32 %v10101, 7
  %v10103 = vsub.s32 5, %v10102
  %v10104 = vrot.slane %v10046, %v10103
  %v10105 = vlaneseq
  %v10106 = vshrl.u32 %v10105, 7
  %v10107 = vsub.s32 6, %v10106
  %v10108 = vrot.slane %v10046, %v10107
  %v10109 = vlaneseq
  %v10110 = vshrl.u32 %v10109, 7
  %v10111 = vsub.s32 7, %v10110
  %v10112 = vrot.slane %v10046, %v10111
  %v10129 = vmul.f32 %v9864, %v10052
  %v10130 = vmul.f32 %v9866, %v10056
  %v10131 = vmul.f32 %v9868, %v10060
  %v10132 = vmul.f32 %v9870, %v10064
  %v10133 = vmul.f32 %v9872, %v10068
  %v10134 = vmul.f32 %v9874, %v10072
  %v10135 = vmul.f32 %v9876, %v10076
  %v10136 = vmul.f32 %v9878, %v10080
  %v10137 = vmul.f32 %v9880, %v10084
  %v10138 = vmul.f32 %v9882, %v10088
  %v10139 = vmul.f32 %v9884, %v10092
  %v10140 = vmul.f32 %v9886, %v10096
  %v10141 = vmul.f32 %v9888, %v10100
  %v10142 = vmul.f32 %v9890, %v10104
  %v10143 = vmul.f32 %v9892, %v10108
  %v10144 = vmul.f32 %v9894, %v10112
  %10146 = vset.pattern.permute.xlu0 0
  %10147 = vperm.xlu0 %10146, %v10129
  %v10148 = vpop.permute.xlu0 %10147
  %10151 = vset.pattern.permute.xlu0 0
  %10152 = vperm.xlu0 %10151, %v10130
  %v10153 = vpop.permute.xlu0 %10152
  %10156 = vset.pattern.permute.xlu0 0
  %10157 = vperm.xlu0 %10156, %v10131
  %v10158 = vpop.permute.xlu0 %10157
  %10161 = vset.pattern.permute.xlu0 0
  %10162 = vperm.xlu0 %10161, %v10132
  %v10163 = vpop.permute.xlu0 %10162
  %10166 = vset.pattern.permute.xlu0 0
  %10167 = vperm.xlu0 %10166, %v10133
  %v10168 = vpop.permute.xlu0 %10167
  %10171 = vset.pattern.permute.xlu0 0
  %10172 = vperm.xlu0 %10171, %v10134
  %v10173 = vpop.permute.xlu0 %10172
  %10176 = vset.pattern.permute.xlu0 0
  %10177 = vperm.xlu0 %10176, %v10135
  %v10178 = vpop.permute.xlu0 %10177
  %10181 = vset.pattern.permute.xlu0 0
  %10182 = vperm.xlu0 %10181, %v10136
  %v10183 = vpop.permute.xlu0 %10182
  %10186 = vset.pattern.permute.xlu0 0
  %10187 = vperm.xlu0 %10186, %v10137
  %v10188 = vpop.permute.xlu0 %10187
  %10191 = vset.pattern.permute.xlu0 0
  %10192 = vperm.xlu0 %10191, %v10138
  %v10193 = vpop.permute.xlu0 %10192
  %10196 = vset.pattern.permute.xlu0 0
  %10197 = vperm.xlu0 %10196, %v10139
  %v10198 = vpop.permute.xlu0 %10197
  %10201 = vset.pattern.permute.xlu0 0
  %10202 = vperm.xlu0 %10201, %v10140
  %v10203 = vpop.permute.xlu0 %10202
  %10206 = vset.pattern.permute.xlu0 0
  %10207 = vperm.xlu0 %10206, %v10141
  %v10208 = vpop.permute.xlu0 %10207
  %10211 = vset.pattern.permute.xlu0 0
  %10212 = vperm.xlu0 %10211, %v10142
  %v10213 = vpop.permute.xlu0 %10212
  %10216 = vset.pattern.permute.xlu0 0
  %10217 = vperm.xlu0 %10216, %v10143
  %v10218 = vpop.permute.xlu0 %10217
  %10221 = vset.pattern.permute.xlu0 0
  %10222 = vperm.xlu0 %10221, %v10144
  %v10223 = vpop.permute.xlu0 %10222
  %v10225 = vmul.f32 %v10148, %v40
  %v10226 = vmul.f32 %v10153, %v41
  %v10227 = vmul.f32 %v10158, %v42
  %v10228 = vmul.f32 %v10163, %v43
  %v10229 = vmul.f32 %v10168, %v44
  %v10230 = vmul.f32 %v10173, %v45
  %v10231 = vmul.f32 %v10178, %v46
  %v10232 = vmul.f32 %v10183, %v47
  %v10233 = vmul.f32 %v10188, %v48
  %v10234 = vmul.f32 %v10193, %v49
  %v10235 = vmul.f32 %v10198, %v50
  %v10236 = vmul.f32 %v10203, %v51
  %v10237 = vmul.f32 %v10208, %v52
  %v10238 = vmul.f32 %v10213, %v53
  %v10239 = vmul.f32 %v10218, %v54
  %v10240 = vmul.f32 %v10223, %v55
  %v10241 = vrot.slane %v10225, 4
  %v10242 = vadd.f32 %v10225, %v10241
  %v10243 = vrot.slane %v10242, 2
  %v10244 = vadd.f32 %v10242, %v10243
  %v10245 = vrot.slane %v10244, 1
  %v10246 = vadd.f32 %v10244, %v10245
  %v10247 = vrot.slane %v10226, 4
  %v10248 = vadd.f32 %v10226, %v10247
  %v10249 = vrot.slane %v10248, 2
  %v10250 = vadd.f32 %v10248, %v10249
  %v10251 = vrot.slane %v10250, 1
  %v10252 = vadd.f32 %v10250, %v10251
  %v10253 = vrot.slane %v10227, 4
  %v10254 = vadd.f32 %v10227, %v10253
  %v10255 = vrot.slane %v10254, 2
  %v10256 = vadd.f32 %v10254, %v10255
  %v10257 = vrot.slane %v10256, 1
  %v10258 = vadd.f32 %v10256, %v10257
  %v10259 = vrot.slane %v10228, 4
  %v10260 = vadd.f32 %v10228, %v10259
  %v10261 = vrot.slane %v10260, 2
  %v10262 = vadd.f32 %v10260, %v10261
  %v10263 = vrot.slane %v10262, 1
  %v10264 = vadd.f32 %v10262, %v10263
  %v10265 = vrot.slane %v10229, 4
  %v10266 = vadd.f32 %v10229, %v10265
  %v10267 = vrot.slane %v10266, 2
  %v10268 = vadd.f32 %v10266, %v10267
  %v10269 = vrot.slane %v10268, 1
  %v10270 = vadd.f32 %v10268, %v10269
  %v10271 = vrot.slane %v10230, 4
  %v10272 = vadd.f32 %v10230, %v10271
  %v10273 = vrot.slane %v10272, 2
  %v10274 = vadd.f32 %v10272, %v10273
  %v10275 = vrot.slane %v10274, 1
  %v10276 = vadd.f32 %v10274, %v10275
  %v10277 = vrot.slane %v10231, 4
  %v10278 = vadd.f32 %v10231, %v10277
  %v10279 = vrot.slane %v10278, 2
  %v10280 = vadd.f32 %v10278, %v10279
  %v10281 = vrot.slane %v10280, 1
  %v10282 = vadd.f32 %v10280, %v10281
  %v10283 = vrot.slane %v10232, 4
  %v10284 = vadd.f32 %v10232, %v10283
  %v10285 = vrot.slane %v10284, 2
  %v10286 = vadd.f32 %v10284, %v10285
  %v10287 = vrot.slane %v10286, 1
  %v10288 = vadd.f32 %v10286, %v10287
  %v10289 = vrot.slane %v10233, 4
  %v10290 = vadd.f32 %v10233, %v10289
  %v10291 = vrot.slane %v10290, 2
  %v10292 = vadd.f32 %v10290, %v10291
  %v10293 = vrot.slane %v10292, 1
  %v10294 = vadd.f32 %v10292, %v10293
  %v10295 = vrot.slane %v10234, 4
  %v10296 = vadd.f32 %v10234, %v10295
  %v10297 = vrot.slane %v10296, 2
  %v10298 = vadd.f32 %v10296, %v10297
  %v10299 = vrot.slane %v10298, 1
  %v10300 = vadd.f32 %v10298, %v10299
  %v10301 = vrot.slane %v10235, 4
  %v10302 = vadd.f32 %v10235, %v10301
  %v10303 = vrot.slane %v10302, 2
  %v10304 = vadd.f32 %v10302, %v10303
  %v10305 = vrot.slane %v10304, 1
  %v10306 = vadd.f32 %v10304, %v10305
  %v10307 = vrot.slane %v10236, 4
  %v10308 = vadd.f32 %v10236, %v10307
  %v10309 = vrot.slane %v10308, 2
  %v10310 = vadd.f32 %v10308, %v10309
  %v10311 = vrot.slane %v10310, 1
  %v10312 = vadd.f32 %v10310, %v10311
  %v10313 = vrot.slane %v10237, 4
  %v10314 = vadd.f32 %v10237, %v10313
  %v10315 = vrot.slane %v10314, 2
  %v10316 = vadd.f32 %v10314, %v10315
  %v10317 = vrot.slane %v10316, 1
  %v10318 = vadd.f32 %v10316, %v10317
  %v10319 = vrot.slane %v10238, 4
  %v10320 = vadd.f32 %v10238, %v10319
  %v10321 = vrot.slane %v10320, 2
  %v10322 = vadd.f32 %v10320, %v10321
  %v10323 = vrot.slane %v10322, 1
  %v10324 = vadd.f32 %v10322, %v10323
  %v10325 = vrot.slane %v10239, 4
  %v10326 = vadd.f32 %v10239, %v10325
  %v10327 = vrot.slane %v10326, 2
  %v10328 = vadd.f32 %v10326, %v10327
  %v10329 = vrot.slane %v10328, 1
  %v10330 = vadd.f32 %v10328, %v10329
  %v10331 = vrot.slane %v10240, 4
  %v10332 = vadd.f32 %v10240, %v10331
  %v10333 = vrot.slane %v10332, 2
  %v10334 = vadd.f32 %v10332, %v10333
  %v10335 = vrot.slane %v10334, 1
  %v10336 = vadd.f32 %v10334, %v10335
  %v10337 = vpack.c.bf16 %v10246, %v10246
  %v10338 = vpack.c.bf16 %v10252, %v10252
  %v10339 = vpack.c.bf16 %v10258, %v10258
  %v10340 = vpack.c.bf16 %v10264, %v10264
  %v10341 = vpack.c.bf16 %v10270, %v10270
  %v10342 = vpack.c.bf16 %v10276, %v10276
  %v10343 = vpack.c.bf16 %v10282, %v10282
  %v10344 = vpack.c.bf16 %v10288, %v10288
  %v10345 = vpack.c.bf16 %v10294, %v10294
  %v10346 = vpack.c.bf16 %v10300, %v10300
  %v10347 = vpack.c.bf16 %v10306, %v10306
  %v10348 = vpack.c.bf16 %v10312, %v10312
  %v10349 = vpack.c.bf16 %v10318, %v10318
  %v10350 = vpack.c.bf16 %v10324, %v10324
  %v10351 = vpack.c.bf16 %v10330, %v10330
  %v10352 = vpack.c.bf16 %v10336, %v10336
  %v10355 = vunpack.c.l.b16 %v9387
  %v10356 = vunpack.c.l.b16 %v9388
  %v10357 = vpack.c.b16 %v10356, %v10355
  %v10375 = vunpack.c.l.b16 %v10337
  %v10376 = vunpack.c.l.b16 %v10338
  %v10377 = vunpack.c.l.b16 %v10339
  %v10378 = vunpack.c.l.b16 %v10340
  %v10379 = vunpack.c.l.b16 %v10341
  %v10380 = vunpack.c.l.b16 %v10342
  %v10381 = vunpack.c.l.b16 %v10343
  %v10382 = vunpack.c.l.b16 %v10344
  %v10383 = vunpack.c.l.b16 %v10345
  %v10384 = vunpack.c.l.b16 %v10346
  %v10385 = vunpack.c.l.b16 %v10347
  %v10386 = vunpack.c.l.b16 %v10348
  %v10387 = vunpack.c.l.b16 %v10349
  %v10388 = vunpack.c.l.b16 %v10350
  %v10389 = vunpack.c.l.b16 %v10351
  %v10390 = vunpack.c.l.b16 %v10352
  %v10391 = vsel %vm583, %v10376, %v10375
  %v10392 = vsel %vm585, %v10377, %v10391
  %v10393 = vsel %vm587, %v10378, %v10392
  %v10394 = vsel %vm589, %v10379, %v10393
  %v10395 = vsel %vm591, %v10380, %v10394
  %v10396 = vsel %vm593, %v10381, %v10395
  %v10397 = vsel %vm595, %v10382, %v10396
  %v10398 = vsel %vm583, %v10384, %v10383
  %v10399 = vsel %vm585, %v10385, %v10398
  %v10400 = vsel %vm587, %v10386, %v10399
  %v10401 = vsel %vm589, %v10387, %v10400
  %v10402 = vsel %vm591, %v10388, %v10401
  %v10403 = vsel %vm593, %v10389, %v10402
  %v10404 = vsel %vm595, %v10390, %v10403
  %v10405 = vpack.c.b16 %v10404, %v10397
  %10407 = vmatprep.subr.bf16.mxu0 %v1593
  %10408 = vmatpush1.bf16.msra.mxu0 %v1592
  %10409 = vmatprep.subr.bf16.mxu0 %v1589
  %10410 = vmatpush1.bf16.msra.mxu0 %v1588
  %10411 = vmatprep.subr.bf16.mxu0 %v1585
  %10412 = vmatpush1.bf16.msra.mxu0 %v1584
  %10413 = vmatprep.subr.bf16.mxu0 %v1581
  %10414 = vmatpush1.bf16.msra.mxu0 %v1580
  %10415 = vmatprep.subr.bf16.mxu0 %v1577
  %10416 = vmatpush1.bf16.msra.mxu0 %v1576
  %10417 = vmatprep.subr.bf16.mxu0 %v1573
  %10418 = vmatpush1.bf16.msra.mxu0 %v1572
  %10419 = vmatprep.subr.bf16.mxu0 %v1569
  %10420 = vmatpush1.bf16.msra.mxu0 %v1568
  %10421 = vmatprep.subr.bf16.mxu0 %v1565
  %10422 = vmatpush1.bf16.msra.mxu0 %v1564
  %10423 = vmatprep.subr.bf16.mxu0 %v1625
  %10424 = vmatpush2.bf16.msra.mxu0 %v1624
  %10425 = vmatprep.subr.bf16.mxu0 %v1621
  %10426 = vmatpush2.bf16.msra.mxu0 %v1620
  %10427 = vmatprep.subr.bf16.mxu0 %v1617
  %10428 = vmatpush2.bf16.msra.mxu0 %v1616
  %10429 = vmatprep.subr.bf16.mxu0 %v1613
  %10430 = vmatpush2.bf16.msra.mxu0 %v1612
  %10431 = vmatprep.subr.bf16.mxu0 %v1609
  %10432 = vmatpush2.bf16.msra.mxu0 %v1608
  %10433 = vmatprep.subr.bf16.mxu0 %v1605
  %10434 = vmatpush2.bf16.msra.mxu0 %v1604
  %10435 = vmatprep.subr.bf16.mxu0 %v1601
  %10436 = vmatpush2.bf16.msra.mxu0 %v1600
  %10437 = vmatprep.subr.bf16.mxu0 %v1597
  %10438 = vmatpush2.bf16.msra.mxu0 %v1596
  %10439 = vmatprep.mubr.bf16.mxu0 %v10405
  %10440 = vmatmul.mubr.bf16.gmra.mxu0 %v10357
  %v10441 = vpop.f32.mrf.mxu0
  %v10442 = vadd.f32 %v1259, %v10441
  %v10443 = vpop.f32.mrf.mxu0
  %v10444 = vadd.f32 %v1263, %v10443
  %v10445 = vpop.f32.mrf.mxu0
  %v10446 = vadd.f32 %v1259, %v10445
  %v10447 = vpop.f32.mrf.mxu0
  %v10448 = vadd.f32 %v1263, %v10447
  %10449 = vdwg.mxu0
  %10450 = vmatprep.subr.bf16.mxu0 %v1657
  %10451 = vmatpush1.bf16.msra.mxu0 %v1656
  %10452 = vmatprep.subr.bf16.mxu0 %v1653
  %10453 = vmatpush1.bf16.msra.mxu0 %v1652
  %10454 = vmatprep.subr.bf16.mxu0 %v1649
  %10455 = vmatpush1.bf16.msra.mxu0 %v1648
  %10456 = vmatprep.subr.bf16.mxu0 %v1645
  %10457 = vmatpush1.bf16.msra.mxu0 %v1644
  %10458 = vmatprep.subr.bf16.mxu0 %v1641
  %10459 = vmatpush1.bf16.msra.mxu0 %v1640
  %10460 = vmatprep.subr.bf16.mxu0 %v1637
  %10461 = vmatpush1.bf16.msra.mxu0 %v1636
  %10462 = vmatprep.subr.bf16.mxu0 %v1633
  %10463 = vmatpush1.bf16.msra.mxu0 %v1632
  %10464 = vmatprep.subr.bf16.mxu0 %v1629
  %10465 = vmatpush1.bf16.msra.mxu0 %v1628
  %10466 = vmatprep.subr.bf16.mxu0 0
  %10467 = vmatpush2.bf16.msra.mxu0 0
  %10468 = vmatprep.subr.bf16.mxu0 0
  %10469 = vmatpush2.bf16.msra.mxu0 0
  %10470 = vmatprep.subr.bf16.mxu0 0
  %10471 = vmatpush2.bf16.msra.mxu0 0
  %10472 = vmatprep.subr.bf16.mxu0 0
  %10473 = vmatpush2.bf16.msra.mxu0 0
  %10474 = vmatprep.subr.bf16.mxu0 0
  %10475 = vmatpush2.bf16.msra.mxu0 0
  %10476 = vmatprep.subr.bf16.mxu0 0
  %10477 = vmatpush2.bf16.msra.mxu0 0
  %10478 = vmatprep.subr.bf16.mxu0 0
  %10479 = vmatpush2.bf16.msra.mxu0 0
  %10480 = vmatprep.subr.bf16.mxu0 0
  %10481 = vmatpush2.bf16.msra.mxu0 0
  %10482 = vmatprep.mubr.bf16.mxu0 0
  %10483 = vmatmul.mubr.bf16.gmra.mxu0 %v9393
  %v10484 = vpop.f32.mrf.mxu0
  %v10485 = vadd.f32 %v10442, %v10484
  %v10486 = vpop.f32.mrf.mxu0
  %v10487 = vadd.f32 %v10444, %v10486
  %v10488 = vpop.f32.mrf.mxu0
  %v10489 = vadd.f32 %v10446, %v10488
  %v10490 = vpop.f32.mrf.mxu0
  %v10491 = vadd.f32 %v10448, %v10490
  %10492 = vdwg.mxu0
  %10493 = vmatprep.subr.bf16.mxu0 %v1595
  %10494 = vmatpush1.bf16.msra.mxu0 %v1594
  %10495 = vmatprep.subr.bf16.mxu0 %v1591
  %10496 = vmatpush1.bf16.msra.mxu0 %v1590
  %10497 = vmatprep.subr.bf16.mxu0 %v1587
  %10498 = vmatpush1.bf16.msra.mxu0 %v1586
  %10499 = vmatprep.subr.bf16.mxu0 %v1583
  %10500 = vmatpush1.bf16.msra.mxu0 %v1582
  %10501 = vmatprep.subr.bf16.mxu0 %v1579
  %10502 = vmatpush1.bf16.msra.mxu0 %v1578
  %10503 = vmatprep.subr.bf16.mxu0 %v1575
  %10504 = vmatpush1.bf16.msra.mxu0 %v1574
  %10505 = vmatprep.subr.bf16.mxu0 %v1571
  %10506 = vmatpush1.bf16.msra.mxu0 %v1570
  %10507 = vmatprep.subr.bf16.mxu0 %v1567
  %10508 = vmatpush1.bf16.msra.mxu0 %v1566
  %10509 = vmatprep.subr.bf16.mxu0 %v1627
  %10510 = vmatpush2.bf16.msra.mxu0 %v1626
  %10511 = vmatprep.subr.bf16.mxu0 %v1623
  %10512 = vmatpush2.bf16.msra.mxu0 %v1622
  %10513 = vmatprep.subr.bf16.mxu0 %v1619
  %10514 = vmatpush2.bf16.msra.mxu0 %v1618
  %10515 = vmatprep.subr.bf16.mxu0 %v1615
  %10516 = vmatpush2.bf16.msra.mxu0 %v1614
  %10517 = vmatprep.subr.bf16.mxu0 %v1611
  %10518 = vmatpush2.bf16.msra.mxu0 %v1610
  %10519 = vmatprep.subr.bf16.mxu0 %v1607
  %10520 = vmatpush2.bf16.msra.mxu0 %v1606
  %10521 = vmatprep.subr.bf16.mxu0 %v1603
  %10522 = vmatpush2.bf16.msra.mxu0 %v1602
  %10523 = vmatprep.subr.bf16.mxu0 %v1599
  %10524 = vmatpush2.bf16.msra.mxu0 %v1598
  %10525 = vmatprep.mubr.bf16.mxu0 %v10405
  %10526 = vmatmul.mubr.bf16.gmra.mxu0 %v10357
  %v10527 = vpop.f32.mrf.mxu0
  %v10528 = vadd.f32 %v1267, %v10527
  %v10529 = vpop.f32.mrf.mxu0
  %v10530 = vadd.f32 %v1271, %v10529
  %v10531 = vpop.f32.mrf.mxu0
  %v10532 = vadd.f32 %v1267, %v10531
  %v10533 = vpop.f32.mrf.mxu0
  %v10534 = vadd.f32 %v1271, %v10533
  %10535 = vdwg.mxu0
  %10536 = vmatprep.subr.bf16.mxu0 %v1659
  %10537 = vmatpush1.bf16.msra.mxu0 %v1658
  %10538 = vmatprep.subr.bf16.mxu0 %v1655
  %10539 = vmatpush1.bf16.msra.mxu0 %v1654
  %10540 = vmatprep.subr.bf16.mxu0 %v1651
  %10541 = vmatpush1.bf16.msra.mxu0 %v1650
  %10542 = vmatprep.subr.bf16.mxu0 %v1647
  %10543 = vmatpush1.bf16.msra.mxu0 %v1646
  %10544 = vmatprep.subr.bf16.mxu0 %v1643
  %10545 = vmatpush1.bf16.msra.mxu0 %v1642
  %10546 = vmatprep.subr.bf16.mxu0 %v1639
  %10547 = vmatpush1.bf16.msra.mxu0 %v1638
  %10548 = vmatprep.subr.bf16.mxu0 %v1635
  %10549 = vmatpush1.bf16.msra.mxu0 %v1634
  %10550 = vmatprep.subr.bf16.mxu0 %v1631
  %10551 = vmatpush1.bf16.msra.mxu0 %v1630
  %10552 = vmatprep.subr.bf16.mxu0 0
  %10553 = vmatpush2.bf16.msra.mxu0 0
  %10554 = vmatprep.subr.bf16.mxu0 0
  %10555 = vmatpush2.bf16.msra.mxu0 0
  %10556 = vmatprep.subr.bf16.mxu0 0
  %10557 = vmatpush2.bf16.msra.mxu0 0
  %10558 = vmatprep.subr.bf16.mxu0 0
  %10559 = vmatpush2.bf16.msra.mxu0 0
  %10560 = vmatprep.subr.bf16.mxu0 0
  %10561 = vmatpush2.bf16.msra.mxu0 0
  %10562 = vmatprep.subr.bf16.mxu0 0
  %10563 = vmatpush2.bf16.msra.mxu0 0
  %10564 = vmatprep.subr.bf16.mxu0 0
  %10565 = vmatpush2.bf16.msra.mxu0 0
  %10566 = vmatprep.subr.bf16.mxu0 0
  %10567 = vmatpush2.bf16.msra.mxu0 0
  %10568 = vmatprep.mubr.bf16.mxu0 0
  %10569 = vmatmul.mubr.bf16.gmra.mxu0 %v9393
  %v10570 = vpop.f32.mrf.mxu0
  %v10571 = vadd.f32 %v10528, %v10570
  %v10572 = vpop.f32.mrf.mxu0
  %v10573 = vadd.f32 %v10530, %v10572
  %v10574 = vpop.f32.mrf.mxu0
  %v10575 = vadd.f32 %v10532, %v10574
  %v10576 = vpop.f32.mrf.mxu0
  %v10577 = vadd.f32 %v10534, %v10576
  %10578 = vdwg.mxu0
  %v10579 = vmul.f32 %v10485, 0.5
  %v10580 = vmul.f32 %v10487, 0.5
  %v10581 = vmul.f32 %v10571, 0.5
  %v10582 = vmul.f32 %v10489, 0.5
  %v10583 = vmul.f32 %v10491, 0.5
  %v10584 = vmul.f32 %v10575, 0.5
  %v10585 = vtanh.pop %v10579
  %v10586 = vtanh.pop %v10580
  %v10587 = vtanh.pop %v10581
  %v10588 = vtanh.pop %v10582
  %v10589 = vtanh.pop %v10583
  %v10590 = vtanh.pop %v10584
  %v10591 = vadd.f32 %v10585, 1.0
  %v10592 = vadd.f32 %v10586, 1.0
  %v10593 = vadd.f32 %v10587, 1.0
  %v10594 = vadd.f32 %v10588, 1.0
  %v10595 = vadd.f32 %v10589, 1.0
  %v10596 = vadd.f32 %v10590, 1.0
  %v10597 = vmul.f32 %v10591, 0.5
  %v10598 = vmul.f32 %v10592, 0.5
  %v10599 = vmul.f32 %v10593, 0.5
  %v10600 = vmul.f32 %v10594, 0.5
  %v10601 = vmul.f32 %v10595, 0.5
  %v10602 = vmul.f32 %v10596, 0.5
  %v10603 = vtanh.pop %v10573
  %v10604 = vtanh.pop %v10577
  %v10605 = vmul.f32 %v10598, %v9391
  %v10606 = vmul.f32 %v10601, %v9392
  %v10607 = vmul.f32 %v10597, %v10603
  %v10608 = vmul.f32 %v10600, %v10604
  %v10609 = vadd.f32 %v10605, %v10607
  %v10610 = vadd.f32 %v10606, %v10608
  %v10611 = vtanh.pop %v10609
  %v10612 = vtanh.pop %v10610
  %v10613 = vmul.f32 %v10599, %v10611
  %v10614 = vmul.f32 %v10602, %v10612
  %s10615 = scalar_lea.vmem %s6, 112
  %10616 = vst [vmem:[%s10615] sm:$0xff] %v10613
  %10617 = vst [vmem:[%s10615 + $0x8] sm:$0xff] %v10614
  %10618 = vst [vmem:[#allocation2] sm:$0xff] %v10613
  %10619 = vst [vmem:[#allocation2 + $0x8] sm:$0xff] %v10614
  %10620 = vst [vmem:[#allocation3] sm:$0xff] %v10609
  %10621 = vst [vmem:[#allocation3 + $0x8] sm:$0xff] %v10610
  // Predicated region
  $region26: #{_forward_impl.6} parent=0 // pred_check
    _
  $region27: #{_forward_impl.6} parent=0 // pred_check_branch
    %10623 = sbr.rel (0) target = $region29
  $region28: #{_forward_impl.6} parent=0 // pred_region
    _
  $region29: #{_forward_impl.6} parent=0 // pred_fallthru
    _
  // Predicated region
  $region30: #{_forward_impl.6} parent=0 // pred_check
    _
  $region31: #{_forward_impl.6} parent=0 // pred_check_branch
    %10625 = sbr.rel (0) target = $region33
  $region32: #{_forward_impl.6} parent=0 // pred_region
    _
  $region33: #{_forward_impl.6} parent=0 // pred_fallthru
    _

</llo_original>
